<compile_context>
chip_gen: v5e
topology: v5e:2x2
jax: 0.10.0
libtpu: 0.0.40
codegen_flags: <defaults>
</compile_context>

<pallas_src>
import functools
import math

import jax
import jax.numpy as jnp
from jax.experimental import pallas as pl
from jax.experimental.pallas import tpu as pltpu


def _round_up(n, m):
    return ((n + m - 1) // m) * m


_TILE_M = 512                      # max rows per grid step
_ROW_ALIGN = 16                    # bf16 sublane tile is (16, 128)
_VMEM_SMALL = 32 * 1024 * 1024     # row-tiled matmul / LN calls
_VMEM_BIG = 40 * 1024 * 1024       # dwconv + fused block tail


def _pick_row_tile(m, align=_ROW_ALIGN, cap=_TILE_M):
    """Largest tile <= cap that divides m (multiple of `align`), else full m."""
    if m <= cap:
        return m, 1
    t = cap - (cap % align)
    while t >= align:
        if m % t == 0:
            return t, m // t
        t -= align
    return m, 1  # rare fallback: whole extent (avoids an HBM pad round trip)


def _gelu_exact(x):
    # torch.nn.GELU() default is the exact (erf-based) GELU.
    return 0.5 * x * (1.0 + jax.lax.erf(x * (1.0 / math.sqrt(2.0))))


# ---------------------------------------------------------------------------
# Pallas kernels
# ---------------------------------------------------------------------------

def _matmul_bias_kernel(x_ref, w_ref, b_ref, o_ref):
    # Patchified conv: (TILE_M, K) @ (K, N) + (1, N).  x/w already bf16,
    # f32 accumulation on the MXU, bf16 lane-dense store.
    o_ref[...] = (jnp.dot(x_ref[...], w_ref[...],
                          preferred_element_type=jnp.float32)
                  + b_ref[...]).astype(o_ref.dtype)


def _layernorm_kernel(x_ref, w_ref, b_ref, o_ref, *, eps, inv_c):
    # Per-row LayerNorm over the real channels (padded lanes are exactly 0,
    # so sum(x)/C and sum(x^2)/C over the padded width are still correct).
    x = x_ref[...].astype(jnp.float32)
    u = jnp.sum(x, axis=-1, keepdims=True) * inv_c
    var = jnp.maximum(
        jnp.sum(x * x, axis=-1, keepdims=True) * inv_c - u * u, 0.0)
    y = (x - u) * jax.lax.rsqrt(var + eps) * w_ref[...] + b_ref[...]
    o_ref[...] = y.astype(o_ref.dtype)


def _dwconv_kernel(x_ref, w_ref, b_ref, o_ref, xpad_ref, *, H, W):
    # Depthwise 7x7 conv, stride 1, pad 3, for ONE image (grid is over batch).
    # x_ref: (H, W, Cp) bf16; w_ref: (49, Cp) f32; b_ref: (1, Cp) f32.
    C = x_ref.shape[-1]
    f32 = jnp.float32
    # Zero only the 3-wide halo border strips (every step, so it stays correct
    # under a megacore split of the batch axis); the interior is overwritten.
    xpad_ref[0:3, :, :] = jnp.zeros((3, W + 6, C), f32)
    xpad_ref[H + 3:H + 6, :, :] = jnp.zeros((3, W + 6, C), f32)
    xpad_ref[3:H + 3, 0:3, :] = jnp.zeros((H, 3, C), f32)
    xpad_ref[3:H + 3, W + 3:W + 6, :] = jnp.zeros((H, 3, C), f32)
    xpad_ref[3:H + 3, 3:W + 3, :] = x_ref[...].astype(f32)

    w = w_ref[...]                                   # (49, Cp)
    # 4 independent accumulator chains -> ILP across the 4 VALU slots.
    # TODO(synk): kw (sublane-axis) slice offsets 1..6 are unaligned; if the
    # bundle dump shows retiling copies, switch to pltpu.roll along W.
    accs = [None, None, None, None]
    for idx in range(49):
        kh, kw = divmod(idx, 7)
        term = xpad_ref[kh:kh + H, kw:kw + W, :] * w[idx]
        j = idx % 4
        accs[j] = term if accs[j] is None else accs[j] + term
    acc = (accs[0] + accs[1]) + (accs[2] + accs[3])
    o_ref[...] = (acc + b_ref[...]).astype(o_ref.dtype)


def _block_tail_kernel(x_ref, res_ref, lnw_ref, lnb_ref, w1_ref, b1_ref,
                       g_ref, bt_ref, w2_ref, b2_ref, o_ref,
                       gsum_ref, h_ref, *, inv_c, inv_c4):
    # Fused block tail, row-tiled with a two-pass GRN.
    # grid = (B, 2, nt): pass 0 -> LN, pwconv1, GELU; stash h (bf16, VMEM)
    # and accumulate per-channel sum(h^2).  pass 1 -> GRN scale, pwconv2,
    # residual, store output tile.
    pass_id = pl.program_id(1)
    t = pl.program_id(2)
    tr = x_ref.shape[0]
    row0 = t * tr
    if tr % 16 == 0:
        row0 = pl.multiple_of(row0, 16)

    @pl.when(pass_id == 0)
    def _compute_h():
        @pl.when(t == 0)
        def _():
            gsum_ref[...] = jnp.zeros_like(gsum_ref)

        x = x_ref[...].astype(jnp.float32)                           # (tr, Cp)
        u = jnp.sum(x, axis=-1, keepdims=True) * inv_c
        var = jnp.maximum(
            jnp.sum(x * x, axis=-1, keepdims=True) * inv_c - u * u, 0.0)
        xn = (x - u) * jax.lax.rsqrt(var + 1e-6) * lnw_ref[...] + lnb_ref[...]

        h = jnp.dot(xn.astype(jnp.bfloat16), w1_ref[...],
                    preferred_element_type=jnp.float32) + b1_ref[...]  # (tr, H4)
        h = _gelu_exact(h)
        gsum_ref[...] += jnp.sum(h * h, axis=0, keepdims=True)
        h_ref[pl.ds(row0, tr), :] = h.astype(jnp.bfloat16)

    @pl.when(pass_id == 1)
    def _finish():
        h = h_ref[pl.ds(row0, tr), :].astype(jnp.float32)            # (tr, H4)
        gx = jnp.sqrt(gsum_ref[...])                                  # (1, H4)
        nx = gx / (jnp.sum(gx, axis=-1, keepdims=True) * inv_c4 + 1e-6)
        hh = g_ref[...] * (h * nx) + bt_ref[...] + h
        y = jnp.dot(hh.astype(jnp.bfloat16), w2_ref[...],
                    preferred_element_type=jnp.float32) + b2_ref[...]  # (tr, Cp)
        o_ref[...] = (res_ref[...].astype(jnp.float32) + y).astype(o_ref.dtype)


# ---------------------------------------------------------------------------
# pallas_call wrappers
# ---------------------------------------------------------------------------

def _row_tiled_call(kernel, x2d, weights, out_cols):
    """Run `kernel(x_tile, *weights, out_tile)` tiled over rows of x2d.

    Weights stay resident (index_map -> (0,0)); the row axis is "parallel".
    The tile is chosen to divide the row count (no HBM pad round trip).
    """
    M, K = x2d.shape
    tm, nt = _pick_row_tile(M)
    in_specs = [pl.BlockSpec((tm, K), lambda i: (i, 0))]
    in_specs += [pl.BlockSpec(w.shape, lambda i: (0, 0)) for w in weights]
    return pl.pallas_call(
        kernel,
        out_shape=jax.ShapeDtypeStruct((M, out_cols), jnp.bfloat16),
        grid=(nt,),
        in_specs=in_specs,
        out_specs=pl.BlockSpec((tm, out_cols), lambda i: (i, 0)),
        compiler_params=pltpu.CompilerParams(
            dimension_semantics=("parallel",),
            vmem_limit_bytes=_VMEM_SMALL),
    )(x2d, *weights)


def patch_conv(x_nhwc, w, b, k):
    """Conv2d(kernel=k, stride=k) as patchify (XLA glue) + tiled Pallas matmul."""
    B, H, W, C = x_nhwc.shape
    Ho, Wo = H // k, W // k
    # TODO(synk): fold the patch extraction into the matmul BlockSpec/index_map
    # to avoid this XLA-side transpose round trip through HBM.
    patches = (x_nhwc.reshape(B, Ho, k, Wo, k, C)
               .transpose(0, 1, 3, 2, 4, 5)
               .reshape(B * Ho * Wo, k * k * C))
    out = _row_tiled_call(_matmul_bias_kernel, patches, [w, b], w.shape[1])
    return out.reshape(B, Ho, Wo, w.shape[1])


def layernorm_nhwc(x_nhwc, w, b, c_real, eps=1e-6):
    """LayerNorm over channels (== channels_first LN of the torch module)."""
    B, H, W, Cp = x_nhwc.shape
    out = _row_tiled_call(
        functools.partial(_layernorm_kernel, eps=eps, inv_c=1.0 / c_real),
        x_nhwc.reshape(B * H * W, Cp), [w, b], Cp)
    return out.reshape(B, H, W, Cp)


def convnext_block(x_nhwc, p, c_real):
    """One ConvNeXtV2 Block: dwconv -> (LN -> MLP -> GRN -> residual) fused."""
    B, H, W, Cp = x_nhwc.shape

    # Depthwise 7x7 conv, one image per grid step (halo padded in VMEM).
    dw = pl.pallas_call(
        functools.partial(_dwconv_kernel, H=H, W=W),
        out_shape=jax.ShapeDtypeStruct((B, H, W, Cp), jnp.bfloat16),
        grid=(B,),
        in_specs=[
            pl.BlockSpec((None, H, W, Cp), lambda b: (b, 0, 0, 0)),
            pl.BlockSpec((49, Cp), lambda b: (0, 0)),
            pl.BlockSpec((1, Cp), lambda b: (0, 0)),
        ],
        out_specs=pl.BlockSpec((None, H, W, Cp), lambda b: (b, 0, 0, 0)),
        scratch_shapes=[pltpu.VMEM((H + 6, W + 6, Cp), jnp.float32)],
        compiler_params=pltpu.CompilerParams(
            dimension_semantics=("parallel",),
            vmem_limit_bytes=_VMEM_BIG),
    )(x_nhwc, p["dw_w"], p["dw_b"])

    # Fused, row-tiled tail with two-pass GRN (pass axis + row-tile axis).
    HW = H * W
    H4 = p["w1"].shape[1]
    tr, nt = _pick_row_tile(HW)
    x3 = dw.reshape(B, HW, Cp)
    res3 = x_nhwc.reshape(B, HW, Cp)

    act_in = pl.BlockSpec((None, tr, Cp), lambda b, s, t: (b, t, 0))
    # pass 0 keeps the output block parked at (b, 0); pass 1 sweeps the tiles,
    # so every output block is written exactly once before its writeback.
    out_spec = pl.BlockSpec((None, tr, Cp), lambda b, s, t: (b, s * t, 0))

    def _wspec(shape):
        return pl.BlockSpec(shape, lambda b, s, t: (0, 0))

    out3 = pl.pallas_call(
        functools.partial(_block_tail_kernel,
                          inv_c=1.0 / c_real, inv_c4=1.0 / (4 * c_real)),
        out_shape=jax.ShapeDtypeStruct((B, HW, Cp), jnp.bfloat16),
        grid=(B, 2, nt),
        in_specs=[
            act_in,                       # dwconv output
            act_in,                       # residual input
            _wspec((1, Cp)),              # ln_w
            _wspec((1, Cp)),              # ln_b
            _wspec((Cp, H4)),             # w1  (bf16)
            _wspec((1, H4)),              # b1
            _wspec((1, H4)),              # gamma
            _wspec((1, H4)),              # beta
            _wspec((H4, Cp)),             # w2  (bf16)
            _wspec((1, Cp)),              # b2
        ],
        out_specs=out_spec,
        scratch_shapes=[pltpu.VMEM((1, H4), jnp.float32),       # sum(h^2)
                        pltpu.VMEM((HW, H4), jnp.bfloat16)],    # h stash
        compiler_params=pltpu.CompilerParams(
            dimension_semantics=("parallel", "arbitrary", "arbitrary"),
            vmem_limit_bytes=_VMEM_BIG),
    )(x3, res3, p["ln_w"], p["ln_b"], p["w1"], p["b1"],
      p["gamma"], p["beta"], p["w2"], p["b2"])
    return out3.reshape(B, H, W, Cp)


# ---------------------------------------------------------------------------
# Parameters (real f32 for the reference; padded / bf16-cast for the kernels)
# ---------------------------------------------------------------------------

def init_params(key, in_chans, depths, dims):
    """Deterministic synthetic parameters with the torch module's shapes."""
    n_keys = 4 * len(depths) + 10 * sum(depths)
    keys = iter(jax.random.split(key, n_keys))

    def nrm(shape, std=0.02):
        return std * jax.random.normal(next(keys), shape, jnp.float32)

    downsample = [{
        "conv_w": nrm((4, 4, in_chans, dims[0])),
        "conv_b": nrm((dims[0],)),
        "ln_w": 1.0 + nrm((dims[0],)),
        "ln_b": nrm((dims[0],)),
    }]
    for i in range(len(depths) - 1):
        downsample.append({
            "ln_w": 1.0 + nrm((dims[i],)),
            "ln_b": nrm((dims[i],)),
            "conv_w": nrm((2, 2, dims[i], dims[i + 1])),
            "conv_b": nrm((dims[i + 1],)),
        })

    stages = []
    for i, depth in enumerate(depths):
        d = dims[i]
        stages.append([{
            "dw_w": nrm((49, d)),          # 7x7 depthwise taps, (49, C)
            "dw_b": nrm((d,)),
            "ln_w": 1.0 + nrm((d,)),
            "ln_b": nrm((d,)),
            "w1": nrm((d, 4 * d)),
            "b1": nrm((4 * d,)),
            "gamma": nrm((4 * d,)),        # torch zero-inits; random here to
            "beta": nrm((4 * d,)),         # exercise the GRN math
            "w2": nrm((4 * d, d)),
            "b2": nrm((d,)),
        } for _ in range(depth)])
    return {"downsample": downsample, "stages": stages}


def _pad_axis(a, axis, target):
    axis = axis % a.ndim
    pad = target - a.shape[axis]
    if pad == 0:
        return a
    widths = [(0, 0)] * a.ndim
    widths[axis] = (0, pad)
    return jnp.pad(a, widths)


def pad_params(rp, in_chans, dims):
    """Lane-pad channel dims to 128 multiples; pre-cast matmul weights to bf16."""
    def bf16(a):
        return a.astype(jnp.bfloat16)

    def row(a, target):
        return _pad_axis(a.reshape(1, -1), -1, target)

    kp = {"downsample": [], "stages": []}

    c0p = _round_up(dims[0], 128)
    ds0 = rp["downsample"][0]
    kp["downsample"].append({
        "conv_w": bf16(_pad_axis(ds0["conv_w"], -1, c0p)
                       .reshape(4 * 4 * in_chans, c0p)),
        "conv_b": row(ds0["conv_b"], c0p),
        "ln_w": row(ds0["ln_w"], c0p),
        "ln_b": row(ds0["ln_b"], c0p),
    })
    for i in range(1, len(dims)):
        ds = rp["downsample"][i]
        cinp = _round_up(dims[i - 1], 128)
        coutp = _round_up(dims[i], 128)
        w = _pad_axis(_pad_axis(ds["conv_w"], 2, cinp), 3, coutp)
        kp["downsample"].append({
            "ln_w": row(ds["ln_w"], cinp),
            "ln_b": row(ds["ln_b"], cinp),
            "conv_w": bf16(w.reshape(2 * 2 * cinp, coutp)),
            "conv_b": row(ds["conv_b"], coutp),
        })

    for i, blocks in enumerate(rp["stages"]):
        cp = _round_up(dims[i], 128)
        h4 = _round_up(4 * dims[i], 128)
        kp["stages"].append([{
            "dw_w": _pad_axis(bp["dw_w"], -1, cp),
            "dw_b": row(bp["dw_b"], cp),
            "ln_w": row(bp["ln_w"], cp),
            "ln_b": row(bp["ln_b"], cp),
            "w1": bf16(_pad_axis(_pad_axis(bp["w1"], 0, cp), 1, h4)),
            "b1": row(bp["b1"], h4),
            "gamma": row(bp["gamma"], h4),
            "beta": row(bp["beta"], h4),
            "w2": bf16(_pad_axis(_pad_axis(bp["w2"], 0, h4), 1, cp)),
            "b2": row(bp["b2"], cp),
        } for bp in blocks])
    return kp


# ---------------------------------------------------------------------------
# Model forward (Pallas) and pure-JAX reference
# ---------------------------------------------------------------------------

def convnextv2_forward(x_nchw, kparams, *, dims):
    # NCHW in (PyTorch convention) -> NHWC bf16 inside -> NCHW f32 out.
    x = jnp.transpose(x_nchw, (0, 2, 3, 1)).astype(jnp.bfloat16)
    for i, stage in enumerate(kparams["stages"]):
        ds = kparams["downsample"][i]
        if i == 0:
            x = patch_conv(x, ds["conv_w"], ds["conv_b"], 4)
            x = layernorm_nhwc(x, ds["ln_w"], ds["ln_b"], dims[0])
        else:
            x = layernorm_nhwc(x, ds["ln_w"], ds["ln_b"], dims[i - 1])
            x = patch_conv(x, ds["conv_w"], ds["conv_b"], 2)
        for bp in stage:
            x = convnext_block(x, bp, dims[i])
    # TODO(synk): ConvNeXtV2 defines self.norm (final nn.LayerNorm) but never
    # applies it in forward(); it is intentionally omitted here.
    x = x[..., :dims[-1]].astype(jnp.float32)
    return jnp.transpose(x, (0, 3, 1, 2))


def _ref_layernorm(x, w, b, eps=1e-6):
    u = x.mean(-1, keepdims=True)
    s = ((x - u) ** 2).mean(-1, keepdims=True)
    return (x - u) / jnp.sqrt(s + eps) * w + b


def _ref_patch_conv(x, w, b, k):
    B, H, W, C = x.shape
    p = (x.reshape(B, H // k, k, W // k, k, C)
         .transpose(0, 1, 3, 2, 4, 5)
         .reshape(B, H // k, W // k, k * k * C))
    return p @ w.reshape(k * k * C, -1) + b


def reference_forward(x_nchw, rp):
    """Pure-JAX f32 reference matching the PyTorch module semantics."""
    x = jnp.transpose(x_nchw, (0, 2, 3, 1)).astype(jnp.float32)
    for i, blocks in enumerate(rp["stages"]):
        ds = rp["downsample"][i]
        if i == 0:
            x = _ref_patch_conv(x, ds["conv_w"], ds["conv_b"], 4)
            x = _ref_layernorm(x, ds["ln_w"], ds["ln_b"])
        else:
            x = _ref_layernorm(x, ds["ln_w"], ds["ln_b"])
            x = _ref_patch_conv(x, ds["conv_w"], ds["conv_b"], 2)
        for bp in blocks:
            inp = x
            _, H, W, _ = x.shape
            xp = jnp.pad(x, ((0, 0), (3, 3), (3, 3), (0, 0)))
            acc = jnp.zeros_like(x)
            for kh in range(7):
                for kw in range(7):
                    acc = acc + xp[:, kh:kh + H, kw:kw + W, :] * bp["dw_w"][kh * 7 + kw]
            x = acc + bp["dw_b"]
            x = _ref_layernorm(x, bp["ln_w"], bp["ln_b"])
            x = x @ bp["w1"] + bp["b1"]
            x = _gelu_exact(x)
            gx = jnp.sqrt(jnp.sum(x * x, axis=(1, 2), keepdims=True))
            nx = gx / (gx.mean(-1, keepdims=True) + 1e-6)
            x = bp["gamma"] * (x * nx) + bp["beta"] + x
            x = x @ bp["w2"] + bp["b2"]
            x = inp + x
    return jnp.transpose(x, (0, 3, 1, 2))


# ---------------------------------------------------------------------------
# main
# ---------------------------------------------------------------------------

if __name__ == "__main__":
    key = jax.random.PRNGKey(0)
    kx, kp = jax.random.split(key)

    in_chans = 3
    depths = [2, 2]          # small version of the default [3, 3, 9, 3]
    dims = [32, 64]          # small version of the default [96, 192, 384, 768]

    x = jax.random.normal(kx, (2, in_chans, 16, 16), jnp.float32)
    rparams = init_params(kp, in_chans, depths, dims)
    kparams = pad_params(rparams, in_chans, dims)

    fwd = jax.jit(functools.partial(convnextv2_forward, dims=tuple(dims)))
    out = jax.block_until_ready(fwd(x, kparams))

    assert out.shape == (2, dims[-1], 2, 2), out.shape
    assert bool(jnp.all(jnp.isfinite(out)))

    # Tolerance check against a pure-JAX f32 reference (bf16 activations /
    # MXU operands inside the kernels -> small deviation expected).
    ref = jax.block_until_ready(jax.jit(reference_forward)(x, rparams))
    err = float(jnp.max(jnp.abs(out - ref)))
    scale = float(jnp.max(jnp.abs(ref)))
    assert err <= 0.08 * scale + 1e-2, ("mismatch vs reference", err, scale)

    print("KERNEL_OK")
</pallas_src>

<mosaic_0001>
module attributes {stable_mosaic.version = 11 : i64} {
  func.func @_matmul_bias_kernel(%arg0: i32, %arg1: memref<32x48xbf16, #tpu.memory_space<vmem>>, %arg2: memref<48x128xbf16, #tpu.memory_space<vmem>>, %arg3: memref<1x128xf32, #tpu.memory_space<vmem>>, %arg4: memref<32x128xbf16, #tpu.memory_space<vmem>>) attributes {dimension_semantics = [#tpu.dimension_semantics<parallel>], iteration_bounds = array<i64: 1>, scalar_prefetch = 0 : i64, scratch_operands = 0 : i64, tpu.core_type = #tpu.core_type<tc>, window_params = [{transform_indices = @transform_0, window_bounds = array<i64: 32, 48>}, {pipeline_mode = #tpu.pipeline_mode<synchronous>, transform_indices = @transform_1, window_bounds = array<i64: 48, 128>}, {pipeline_mode = #tpu.pipeline_mode<synchronous>, transform_indices = @transform_2, window_bounds = array<i64: 1, 128>}, {transform_indices = @transform_3, window_bounds = array<i64: 32, 128>}]} {
    %c0 = arith.constant 0 : index
    %c0_0 = arith.constant 0 : index
    %0 = vector.load %arg1[%c0, %c0_0] : memref<32x48xbf16, #tpu.memory_space<vmem>>, vector<32x48xbf16>
    %c0_1 = arith.constant 0 : index
    %c0_2 = arith.constant 0 : index
    %1 = vector.load %arg2[%c0_1, %c0_2] : memref<48x128xbf16, #tpu.memory_space<vmem>>, vector<48x128xbf16>
    %cst = arith.constant dense<0.000000e+00> : vector<32x128xf32>
    %2 = tpu.matmul %0, %1, %cst {dimension_numbers = #tpu.dot_dimension_numbers<[1], [0], [0], [1], [0, 0, 1, 1], [], []>} : vector<32x48xbf16>, vector<48x128xbf16>, vector<32x128xf32> -> vector<32x128xf32>
    %c0_3 = arith.constant 0 : index
    %c0_4 = arith.constant 0 : index
    %3 = vector.load %arg3[%c0_3, %c0_4] : memref<1x128xf32, #tpu.memory_space<vmem>>, vector<1x128xf32>
    %4 = vector.broadcast %3 : vector<1x128xf32> to vector<32x128xf32>
    %5 = arith.addf %2, %4 : vector<32x128xf32>
    %6 = arith.truncf %5 : vector<32x128xf32> to vector<32x128xbf16>
    %c0_5 = arith.constant 0 : index
    %c0_6 = arith.constant 0 : index
    %7 = vector.load %arg4[%c0_5, %c0_6] : memref<32x128xbf16, #tpu.memory_space<vmem>>, vector<32x128xbf16>
    tpu.vector_store %arg4[%c0_5, %c0_6], %6 {strides = array<i32>} : memref<32x128xbf16, #tpu.memory_space<vmem>>, vector<32x128xbf16>,
    return
  }
  func.func @transform_0(%arg0: i32) -> (i32, i32) {
    %c0_i32 = arith.constant 0 : i32
    %c0_i32_0 = arith.constant 0 : i32
    return %arg0, %c0_i32 : i32, i32
  }
  func.func @transform_1(%arg0: i32) -> (i32, i32) {
    %c0_i32 = arith.constant 0 : i32
    %c0_i32_0 = arith.constant 0 : i32
    %c0_i32_1 = arith.constant 0 : i32
    return %c0_i32, %c0_i32_0 : i32, i32
  }
  func.func @transform_2(%arg0: i32) -> (i32, i32) {
    %c0_i32 = arith.constant 0 : i32
    %c0_i32_0 = arith.constant 0 : i32
    %c0_i32_1 = arith.constant 0 : i32
    return %c0_i32, %c0_i32_0 : i32, i32
  }
  func.func @transform_3(%arg0: i32) -> (i32, i32) {
    %c0_i32 = arith.constant 0 : i32
    %c0_i32_0 = arith.constant 0 : i32
    return %arg0, %c0_i32 : i32, i32
  }
}

module attributes {stable_mosaic.version = 11 : i64} {
  func.func @_layernorm_kernel(%arg0: i32, %arg1: memref<32x128xbf16, #tpu.memory_space<vmem>>, %arg2: memref<1x128xf32, #tpu.memory_space<vmem>>, %arg3: memref<1x128xf32, #tpu.memory_space<vmem>>, %arg4: memref<32x128xbf16, #tpu.memory_space<vmem>>) attributes {dimension_semantics = [#tpu.dimension_semantics<parallel>], iteration_bounds = array<i64: 1>, scalar_prefetch = 0 : i64, scratch_operands = 0 : i64, tpu.core_type = #tpu.core_type<tc>, window_params = [{transform_indices = @transform_0, window_bounds = array<i64: 32, 128>}, {pipeline_mode = #tpu.pipeline_mode<synchronous>, transform_indices = @transform_1, window_bounds = array<i64: 1, 128>}, {pipeline_mode = #tpu.pipeline_mode<synchronous>, transform_indices = @transform_2, window_bounds = array<i64: 1, 128>}, {transform_indices = @transform_3, window_bounds = array<i64: 32, 128>}]} {
    %c0 = arith.constant 0 : index
    %c0_0 = arith.constant 0 : index
    %0 = vector.load %arg1[%c0, %c0_0] : memref<32x128xbf16, #tpu.memory_space<vmem>>, vector<32x128xbf16>
    %1 = arith.extf %0 : vector<32x128xbf16> to vector<32x128xf32>
    %cst = arith.constant dense<0.000000e+00> : vector<32xf32>
    %2 = vector.multi_reduction <add>, %1, %cst [1] : vector<32x128xf32> to vector<32xf32>
    %3 = vector.shape_cast %2 : vector<32xf32> to vector<32x1xf32>
    %cst_1 = arith.constant 3.125000e-02 : f32
    %4 = vector.broadcast %cst_1 : f32 to vector<32x1xf32>
    %5 = arith.mulf %3, %4 : vector<32x1xf32>
    %6 = arith.mulf %1, %1 : vector<32x128xf32>
    %cst_2 = arith.constant dense<0.000000e+00> : vector<32xf32>
    %7 = vector.multi_reduction <add>, %6, %cst_2 [1] : vector<32x128xf32> to vector<32xf32>
    %8 = vector.shape_cast %7 : vector<32xf32> to vector<32x1xf32>
    %cst_3 = arith.constant 3.125000e-02 : f32
    %9 = vector.broadcast %cst_3 : f32 to vector<32x1xf32>
    %10 = arith.mulf %8, %9 : vector<32x1xf32>
    %11 = arith.mulf %5, %5 : vector<32x1xf32>
    %12 = arith.subf %10, %11 : vector<32x1xf32>
    %cst_4 = arith.constant 0.000000e+00 : f32
    %13 = vector.broadcast %cst_4 : f32 to vector<32x1xf32>
    %14 = arith.maximumf %12, %13 : vector<32x1xf32>
    %15 = vector.broadcast %5 : vector<32x1xf32> to vector<32x128xf32>
    %16 = arith.subf %1, %15 : vector<32x128xf32>
    %cst_5 = arith.constant 9.99999997E-7 : f32
    %17 = vector.broadcast %cst_5 : f32 to vector<32x1xf32>
    %18 = arith.addf %14, %17 : vector<32x1xf32>
    %19 = math.rsqrt %18 : vector<32x1xf32>
    %20 = vector.broadcast %19 : vector<32x1xf32> to vector<32x128xf32>
    %21 = arith.mulf %16, %20 : vector<32x128xf32>
    %c0_6 = arith.constant 0 : index
    %c0_7 = arith.constant 0 : index
    %22 = vector.load %arg2[%c0_6, %c0_7] : memref<1x128xf32, #tpu.memory_space<vmem>>, vector<1x128xf32>
    %23 = vector.broadcast %22 : vector<1x128xf32> to vector<32x128xf32>
    %24 = arith.mulf %21, %23 : vector<32x128xf32>
    %c0_8 = arith.constant 0 : index
    %c0_9 = arith.constant 0 : index
    %25 = vector.load %arg3[%c0_8, %c0_9] : memref<1x128xf32, #tpu.memory_space<vmem>>, vector<1x128xf32>
    %26 = vector.broadcast %25 : vector<1x128xf32> to vector<32x128xf32>
    %27 = arith.addf %24, %26 : vector<32x128xf32>
    %28 = arith.truncf %27 : vector<32x128xf32> to vector<32x128xbf16>
    %c0_10 = arith.constant 0 : index
    %c0_11 = arith.constant 0 : index
    %29 = vector.load %arg4[%c0_10, %c0_11] : memref<32x128xbf16, #tpu.memory_space<vmem>>, vector<32x128xbf16>
    tpu.vector_store %arg4[%c0_10, %c0_11], %28 {strides = array<i32>} : memref<32x128xbf16, #tpu.memory_space<vmem>>, vector<32x128xbf16>,
    return
  }
  func.func @transform_0(%arg0: i32) -> (i32, i32) {
    %c0_i32 = arith.constant 0 : i32
    %c0_i32_0 = arith.constant 0 : i32
    return %arg0, %c0_i32 : i32, i32
  }
  func.func @transform_1(%arg0: i32) -> (i32, i32) {
    %c0_i32 = arith.constant 0 : i32
    %c0_i32_0 = arith.constant 0 : i32
    %c0_i32_1 = arith.constant 0 : i32
    return %c0_i32, %c0_i32_0 : i32, i32
  }
  func.func @transform_2(%arg0: i32) -> (i32, i32) {
    %c0_i32 = arith.constant 0 : i32
    %c0_i32_0 = arith.constant 0 : i32
    %c0_i32_1 = arith.constant 0 : i32
    return %c0_i32, %c0_i32_0 : i32, i32
  }
  func.func @transform_3(%arg0: i32) -> (i32, i32) {
    %c0_i32 = arith.constant 0 : i32
    %c0_i32_0 = arith.constant 0 : i32
    return %arg0, %c0_i32 : i32, i32
  }
}

module attributes {stable_mosaic.version = 11 : i64} {
  func.func @_dwconv_kernel(%arg0: i32, %arg1: memref<1x4x4x128xbf16, #tpu.memory_space<vmem>>, %arg2: memref<49x128xf32, #tpu.memory_space<vmem>>, %arg3: memref<1x128xf32, #tpu.memory_space<vmem>>, %arg4: memref<1x4x4x128xbf16, #tpu.memory_space<vmem>>, %arg5: memref<10x10x128xf32, #tpu.memory_space<vmem>>) attributes {dimension_semantics = [#tpu.dimension_semantics<parallel>], iteration_bounds = array<i64: 2>, scalar_prefetch = 0 : i64, scratch_operands = 1 : i64, tpu.core_type = #tpu.core_type<tc>, window_params = [{transform_indices = @transform_0, window_bounds = array<i64: 1, 4, 4, 128>}, {pipeline_mode = #tpu.pipeline_mode<synchronous>, transform_indices = @transform_1, window_bounds = array<i64: 49, 128>}, {pipeline_mode = #tpu.pipeline_mode<synchronous>, transform_indices = @transform_2, window_bounds = array<i64: 1, 128>}, {transform_indices = @transform_3, window_bounds = array<i64: 1, 4, 4, 128>}]} {
    %cst = arith.constant 0.000000e+00 : f32
    %0 = vector.broadcast %cst : f32 to vector<3x10x128xf32>
    %c0 = arith.constant 0 : index
    %c0_0 = arith.constant 0 : index
    %c0_1 = arith.constant 0 : index
    %1 = vector.load %arg5[%c0, %c0_0, %c0_1] : memref<10x10x128xf32, #tpu.memory_space<vmem>>, vector<3x10x128xf32>
    tpu.vector_store %arg5[%c0, %c0_0, %c0_1], %0 {strides = array<i32>} : memref<10x10x128xf32, #tpu.memory_space<vmem>>, vector<3x10x128xf32>,
    %cst_2 = arith.constant 0.000000e+00 : f32
    %2 = vector.broadcast %cst_2 : f32 to vector<3x10x128xf32>
    %c7 = arith.constant 7 : index
    %c0_3 = arith.constant 0 : index
    %c0_4 = arith.constant 0 : index
    %3 = vector.load %arg5[%c7, %c0_3, %c0_4] : memref<10x10x128xf32, #tpu.memory_space<vmem>>, vector<3x10x128xf32>
    tpu.vector_store %arg5[%c7, %c0_3, %c0_4], %2 {strides = array<i32>} : memref<10x10x128xf32, #tpu.memory_space<vmem>>, vector<3x10x128xf32>,
    %cst_5 = arith.constant 0.000000e+00 : f32
    %4 = vector.broadcast %cst_5 : f32 to vector<4x3x128xf32>
    %c3 = arith.constant 3 : index
    %c0_6 = arith.constant 0 : index
    %c0_7 = arith.constant 0 : index
    %5 = vector.load %arg5[%c3, %c0_6, %c0_7] : memref<10x10x128xf32, #tpu.memory_space<vmem>>, vector<4x3x128xf32>
    tpu.vector_store %arg5[%c3, %c0_6, %c0_7], %4 {strides = array<i32>} : memref<10x10x128xf32, #tpu.memory_space<vmem>>, vector<4x3x128xf32>,
    %cst_8 = arith.constant 0.000000e+00 : f32
    %6 = vector.broadcast %cst_8 : f32 to vector<4x3x128xf32>
    %c3_9 = arith.constant 3 : index
    %c7_10 = arith.constant 7 : index
    %c0_11 = arith.constant 0 : index
    %7 = vector.load %arg5[%c3_9, %c7_10, %c0_11] : memref<10x10x128xf32, #tpu.memory_space<vmem>>, vector<4x3x128xf32>
    tpu.vector_store %arg5[%c3_9, %c7_10, %c0_11], %6 {strides = array<i32>} : memref<10x10x128xf32, #tpu.memory_space<vmem>>, vector<4x3x128xf32>,
    %c0_12 = arith.constant 0 : index
    %c0_13 = arith.constant 0 : index
    %c0_14 = arith.constant 0 : index
    %c0_15 = arith.constant 0 : index
    %8 = vector.load %arg1[%c0_12, %c0_13, %c0_14, %c0_15] : memref<1x4x4x128xbf16, #tpu.memory_space<vmem>>, vector<1x4x4x128xbf16>
    %9 = vector.shape_cast %8 : vector<1x4x4x128xbf16> to vector<4x4x128xbf16>
    %10 = arith.extf %9 : vector<4x4x128xbf16> to vector<4x4x128xf32>
    %c3_16 = arith.constant 3 : index
    %c3_17 = arith.constant 3 : index
    %c0_18 = arith.constant 0 : index
    %11 = vector.load %arg5[%c3_16, %c3_17, %c0_18] : memref<10x10x128xf32, #tpu.memory_space<vmem>>, vector<4x4x128xf32>
    tpu.vector_store %arg5[%c3_16, %c3_17, %c0_18], %10 {strides = array<i32>} : memref<10x10x128xf32, #tpu.memory_space<vmem>>, vector<4x4x128xf32>,
    %c0_19 = arith.constant 0 : index
    %c0_20 = arith.constant 0 : index
    %12 = vector.load %arg2[%c0_19, %c0_20] : memref<49x128xf32, #tpu.memory_space<vmem>>, vector<49x128xf32>
    %c0_21 = arith.constant 0 : index
    %c0_22 = arith.constant 0 : index
    %c0_23 = arith.constant 0 : index
    %13 = vector.load %arg5[%c0_21, %c0_22, %c0_23] : memref<10x10x128xf32, #tpu.memory_space<vmem>>, vector<4x4x128xf32>
    %14 = vector.extract_strided_slice %12 {offsets = [0, 0], sizes = [1, 128], strides = [1, 1]} : vector<49x128xf32> to vector<1x128xf32>
    %15 = vector.shape_cast %14 : vector<1x128xf32> to vector<128xf32>
    %16 = vector.shape_cast %15 : vector<128xf32> to vector<1x1x128xf32>
    %17 = vector.broadcast %16 : vector<1x1x128xf32> to vector<4x4x128xf32>
    %18 = arith.mulf %13, %17 : vector<4x4x128xf32>
    %c0_24 = arith.constant 0 : index
    %c1 = arith.constant 1 : index
    %c0_25 = arith.constant 0 : index
    %19 = vector.load %arg5[%c0_24, %c1, %c0_25] : memref<10x10x128xf32, #tpu.memory_space<vmem>>, vector<4x4x128xf32>
    %20 = vector.extract_strided_slice %12 {offsets = [1, 0], sizes = [1, 128], strides = [1, 1]} : vector<49x128xf32> to vector<1x128xf32>
    %21 = vector.shape_cast %20 : vector<1x128xf32> to vector<128xf32>
    %22 = vector.shape_cast %21 : vector<128xf32> to vector<1x1x128xf32>
    %23 = vector.broadcast %22 : vector<1x1x128xf32> to vector<4x4x128xf32>
    %24 = arith.mulf %19, %23 : vector<4x4x128xf32>
    %c0_26 = arith.constant 0 : index
    %c2 = arith.constant 2 : index
    %c0_27 = arith.constant 0 : index
    %25 = vector.load %arg5[%c0_26, %c2, %c0_27] : memref<10x10x128xf32, #tpu.memory_space<vmem>>, vector<4x4x128xf32>
    %26 = vector.extract_strided_slice %12 {offsets = [2, 0], sizes = [1, 128], strides = [1, 1]} : vector<49x128xf32> to vector<1x128xf32>
    %27 = vector.shape_cast %26 : vector<1x128xf32> to vector<128xf32>
    %28 = vector.shape_cast %27 : vector<128xf32> to vector<1x1x128xf32>
    %29 = vector.broadcast %28 : vector<1x1x128xf32> to vector<4x4x128xf32>
    %30 = arith.mulf %25, %29 : vector<4x4x128xf32>
    %c0_28 = arith.constant 0 : index
    %c3_29 = arith.constant 3 : index
    %c0_30 = arith.constant 0 : index
    %31 = vector.load %arg5[%c0_28, %c3_29, %c0_30] : memref<10x10x128xf32, #tpu.memory_space<vmem>>, vector<4x4x128xf32>
    %32 = vector.extract_strided_slice %12 {offsets = [3, 0], sizes = [1, 128], strides = [1, 1]} : vector<49x128xf32> to vector<1x128xf32>
    %33 = vector.shape_cast %32 : vector<1x128xf32> to vector<128xf32>
    %34 = vector.shape_cast %33 : vector<128xf32> to vector<1x1x128xf32>
    %35 = vector.broadcast %34 : vector<1x1x128xf32> to vector<4x4x128xf32>
    %36 = arith.mulf %31, %35 : vector<4x4x128xf32>
    %c0_31 = arith.constant 0 : index
    %c4 = arith.constant 4 : index
    %c0_32 = arith.constant 0 : index
    %37 = vector.load %arg5[%c0_31, %c4, %c0_32] : memref<10x10x128xf32, #tpu.memory_space<vmem>>, vector<4x4x128xf32>
    %38 = vector.extract_strided_slice %12 {offsets = [4, 0], sizes = [1, 128], strides = [1, 1]} : vector<49x128xf32> to vector<1x128xf32>
    %39 = vector.shape_cast %38 : vector<1x128xf32> to vector<128xf32>
    %40 = vector.shape_cast %39 : vector<128xf32> to vector<1x1x128xf32>
    %41 = vector.broadcast %40 : vector<1x1x128xf32> to vector<4x4x128xf32>
    %42 = arith.mulf %37, %41 : vector<4x4x128xf32>
    %43 = arith.addf %18, %42 : vector<4x4x128xf32>
    %c0_33 = arith.constant 0 : index
    %c5 = arith.constant 5 : index
    %c0_34 = arith.constant 0 : index
    %44 = vector.load %arg5[%c0_33, %c5, %c0_34] : memref<10x10x128xf32, #tpu.memory_space<vmem>>, vector<4x4x128xf32>
    %45 = vector.extract_strided_slice %12 {offsets = [5, 0], sizes = [1, 128], strides = [1, 1]} : vector<49x128xf32> to vector<1x128xf32>
    %46 = vector.shape_cast %45 : vector<1x128xf32> to vector<128xf32>
    %47 = vector.shape_cast %46 : vector<128xf32> to vector<1x1x128xf32>
    %48 = vector.broadcast %47 : vector<1x1x128xf32> to vector<4x4x128xf32>
    %49 = arith.mulf %44, %48 : vector<4x4x128xf32>
    %50 = arith.addf %24, %49 : vector<4x4x128xf32>
    %c0_35 = arith.constant 0 : index
    %c6 = arith.constant 6 : index
    %c0_36 = arith.constant 0 : index
    %51 = vector.load %arg5[%c0_35, %c6, %c0_36] : memref<10x10x128xf32, #tpu.memory_space<vmem>>, vector<4x4x128xf32>
    %52 = vector.extract_strided_slice %12 {offsets = [6, 0], sizes = [1, 128], strides = [1, 1]} : vector<49x128xf32> to vector<1x128xf32>
    %53 = vector.shape_cast %52 : vector<1x128xf32> to vector<128xf32>
    %54 = vector.shape_cast %53 : vector<128xf32> to vector<1x1x128xf32>
    %55 = vector.broadcast %54 : vector<1x1x128xf32> to vector<4x4x128xf32>
    %56 = arith.mulf %51, %55 : vector<4x4x128xf32>
    %57 = arith.addf %30, %56 : vector<4x4x128xf32>
    %c1_37 = arith.constant 1 : index
    %c0_38 = arith.constant 0 : index
    %c0_39 = arith.constant 0 : index
    %58 = vector.load %arg5[%c1_37, %c0_38, %c0_39] : memref<10x10x128xf32, #tpu.memory_space<vmem>>, vector<4x4x128xf32>
    %59 = vector.extract_strided_slice %12 {offsets = [7, 0], sizes = [1, 128], strides = [1, 1]} : vector<49x128xf32> to vector<1x128xf32>
    %60 = vector.shape_cast %59 : vector<1x128xf32> to vector<128xf32>
    %61 = vector.shape_cast %60 : vector<128xf32> to vector<1x1x128xf32>
    %62 = vector.broadcast %61 : vector<1x1x128xf32> to vector<4x4x128xf32>
    %63 = arith.mulf %58, %62 : vector<4x4x128xf32>
    %64 = arith.addf %36, %63 : vector<4x4x128xf32>
    %c1_40 = arith.constant 1 : index
    %c1_41 = arith.constant 1 : index
    %c0_42 = arith.constant 0 : index
    %65 = vector.load %arg5[%c1_40, %c1_41, %c0_42] : memref<10x10x128xf32, #tpu.memory_space<vmem>>, vector<4x4x128xf32>
    %66 = vector.extract_strided_slice %12 {offsets = [8, 0], sizes = [1, 128], strides = [1, 1]} : vector<49x128xf32> to vector<1x128xf32>
    %67 = vector.shape_cast %66 : vector<1x128xf32> to vector<128xf32>
    %68 = vector.shape_cast %67 : vector<128xf32> to vector<1x1x128xf32>
    %69 = vector.broadcast %68 : vector<1x1x128xf32> to vector<4x4x128xf32>
    %70 = arith.mulf %65, %69 : vector<4x4x128xf32>
    %71 = arith.addf %43, %70 : vector<4x4x128xf32>
    %c1_43 = arith.constant 1 : index
    %c2_44 = arith.constant 2 : index
    %c0_45 = arith.constant 0 : index
    %72 = vector.load %arg5[%c1_43, %c2_44, %c0_45] : memref<10x10x128xf32, #tpu.memory_space<vmem>>, vector<4x4x128xf32>
    %73 = vector.extract_strided_slice %12 {offsets = [9, 0], sizes = [1, 128], strides = [1, 1]} : vector<49x128xf32> to vector<1x128xf32>
    %74 = vector.shape_cast %73 : vector<1x128xf32> to vector<128xf32>
    %75 = vector.shape_cast %74 : vector<128xf32> to vector<1x1x128xf32>
    %76 = vector.broadcast %75 : vector<1x1x128xf32> to vector<4x4x128xf32>
    %77 = arith.mulf %72, %76 : vector<4x4x128xf32>
    %78 = arith.addf %50, %77 : vector<4x4x128xf32>
    %c1_46 = arith.constant 1 : index
    %c3_47 = arith.constant 3 : index
    %c0_48 = arith.constant 0 : index
    %79 = vector.load %arg5[%c1_46, %c3_47, %c0_48] : memref<10x10x128xf32, #tpu.memory_space<vmem>>, vector<4x4x128xf32>
    %80 = vector.extract_strided_slice %12 {offsets = [10, 0], sizes = [1, 128], strides = [1, 1]} : vector<49x128xf32> to vector<1x128xf32>
    %81 = vector.shape_cast %80 : vector<1x128xf32> to vector<128xf32>
    %82 = vector.shape_cast %81 : vector<128xf32> to vector<1x1x128xf32>
    %83 = vector.broadcast %82 : vector<1x1x128xf32> to vector<4x4x128xf32>
    %84 = arith.mulf %79, %83 : vector<4x4x128xf32>
    %85 = arith.addf %57, %84 : vector<4x4x128xf32>
    %c1_49 = arith.constant 1 : index
    %c4_50 = arith.constant 4 : index
    %c0_51 = arith.constant 0 : index
    %86 = vector.load %arg5[%c1_49, %c4_50, %c0_51] : memref<10x10x128xf32, #tpu.memory_space<vmem>>, vector<4x4x128xf32>
    %87 = vector.extract_strided_slice %12 {offsets = [11, 0], sizes = [1, 128], strides = [1, 1]} : vector<49x128xf32> to vector<1x128xf32>
    %88 = vector.shape_cast %87 : vector<1x128xf32> to vector<128xf32>
    %89 = vector.shape_cast %88 : vector<128xf32> to vector<1x1x128xf32>
    %90 = vector.broadcast %89 : vector<1x1x128xf32> to vector<4x4x128xf32>
    %91 = arith.mulf %86, %90 : vector<4x4x128xf32>
    %92 = arith.addf %64, %91 : vector<4x4x128xf32>
    %c1_52 = arith.constant 1 : index
    %c5_53 = arith.constant 5 : index
    %c0_54 = arith.constant 0 : index
    %93 = vector.load %arg5[%c1_52, %c5_53, %c0_54] : memref<10x10x128xf32, #tpu.memory_space<vmem>>, vector<4x4x128xf32>
    %94 = vector.extract_strided_slice %12 {offsets = [12, 0], sizes = [1, 128], strides = [1, 1]} : vector<49x128xf32> to vector<1x128xf32>
    %95 = vector.shape_cast %94 : vector<1x128xf32> to vector<128xf32>
    %96 = vector.shape_cast %95 : vector<128xf32> to vector<1x1x128xf32>
    %97 = vector.broadcast %96 : vector<1x1x128xf32> to vector<4x4x128xf32>
    %98 = arith.mulf %93, %97 : vector<4x4x128xf32>
    %99 = arith.addf %71, %98 : vector<4x4x128xf32>
    %c1_55 = arith.constant 1 : index
    %c6_56 = arith.constant 6 : index
    %c0_57 = arith.constant 0 : index
    %100 = vector.load %arg5[%c1_55, %c6_56, %c0_57] : memref<10x10x128xf32, #tpu.memory_space<vmem>>, vector<4x4x128xf32>
    %101 = vector.extract_strided_slice %12 {offsets = [13, 0], sizes = [1, 128], strides = [1, 1]} : vector<49x128xf32> to vector<1x128xf32>
    %102 = vector.shape_cast %101 : vector<1x128xf32> to vector<128xf32>
    %103 = vector.shape_cast %102 : vector<128xf32> to vector<1x1x128xf32>
    %104 = vector.broadcast %103 : vector<1x1x128xf32> to vector<4x4x128xf32>
    %105 = arith.mulf %100, %104 : vector<4x4x128xf32>
    %106 = arith.addf %78, %105 : vector<4x4x128xf32>
    %c2_58 = arith.constant 2 : index
    %c0_59 = arith.constant 0 : index
    %c0_60 = arith.constant 0 : index
    %107 = vector.load %arg5[%c2_58, %c0_59, %c0_60] : memref<10x10x128xf32, #tpu.memory_space<vmem>>, vector<4x4x128xf32>
    %108 = vector.extract_strided_slice %12 {offsets = [14, 0], sizes = [1, 128], strides = [1, 1]} : vector<49x128xf32> to vector<1x128xf32>
    %109 = vector.shape_cast %108 : vector<1x128xf32> to vector<128xf32>
    %110 = vector.shape_cast %109 : vector<128xf32> to vector<1x1x128xf32>
    %111 = vector.broadcast %110 : vector<1x1x128xf32> to vector<4x4x128xf32>
    %112 = arith.mulf %107, %111 : vector<4x4x128xf32>
    %113 = arith.addf %85, %112 : vector<4x4x128xf32>
    %c2_61 = arith.constant 2 : index
    %c1_62 = arith.constant 1 : index
    %c0_63 = arith.constant 0 : index
    %114 = vector.load %arg5[%c2_61, %c1_62, %c0_63] : memref<10x10x128xf32, #tpu.memory_space<vmem>>, vector<4x4x128xf32>
    %115 = vector.extract_strided_slice %12 {offsets = [15, 0], sizes = [1, 128], strides = [1, 1]} : vector<49x128xf32> to vector<1x128xf32>
    %116 = vector.shape_cast %115 : vector<1x128xf32> to vector<128xf32>
    %117 = vector.shape_cast %116 : vector<128xf32> to vector<1x1x128xf32>
    %118 = vector.broadcast %117 : vector<1x1x128xf32> to vector<4x4x128xf32>
    %119 = arith.mulf %114, %118 : vector<4x4x128xf32>
    %120 = arith.addf %92, %119 : vector<4x4x128xf32>
    %c2_64 = arith.constant 2 : index
    %c2_65 = arith.constant 2 : index
    %c0_66 = arith.constant 0 : index
    %121 = vector.load %arg5[%c2_64, %c2_65, %c0_66] : memref<10x10x128xf32, #tpu.memory_space<vmem>>, vector<4x4x128xf32>
    %122 = vector.extract_strided_slice %12 {offsets = [16, 0], sizes = [1, 128], strides = [1, 1]} : vector<49x128xf32> to vector<1x128xf32>
    %123 = vector.shape_cast %122 : vector<1x128xf32> to vector<128xf32>
    %124 = vector.shape_cast %123 : vector<128xf32> to vector<1x1x128xf32>
    %125 = vector.broadcast %124 : vector<1x1x128xf32> to vector<4x4x128xf32>
    %126 = arith.mulf %121, %125 : vector<4x4x128xf32>
    %127 = arith.addf %99, %126 : vector<4x4x128xf32>
    %c2_67 = arith.constant 2 : index
    %c3_68 = arith.constant 3 : index
    %c0_69 = arith.constant 0 : index
    %128 = vector.load %arg5[%c2_67, %c3_68, %c0_69] : memref<10x10x128xf32, #tpu.memory_space<vmem>>, vector<4x4x128xf32>
    %129 = vector.extract_strided_slice %12 {offsets = [17, 0], sizes = [1, 128], strides = [1, 1]} : vector<49x128xf32> to vector<1x128xf32>
    %130 = vector.shape_cast %129 : vector<1x128xf32> to vector<128xf32>
    %131 = vector.shape_cast %130 : vector<128xf32> to vector<1x1x128xf32>
    %132 = vector.broadcast %131 : vector<1x1x128xf32> to vector<4x4x128xf32>
    %133 = arith.mulf %128, %132 : vector<4x4x128xf32>
    %134 = arith.addf %106, %133 : vector<4x4x128xf32>
    %c2_70 = arith.constant 2 : index
    %c4_71 = arith.constant 4 : index
    %c0_72 = arith.constant 0 : index
    %135 = vector.load %arg5[%c2_70, %c4_71, %c0_72] : memref<10x10x128xf32, #tpu.memory_space<vmem>>, vector<4x4x128xf32>
    %136 = vector.extract_strided_slice %12 {offsets = [18, 0], sizes = [1, 128], strides = [1, 1]} : vector<49x128xf32> to vector<1x128xf32>
    %137 = vector.shape_cast %136 : vector<1x128xf32> to vector<128xf32>
    %138 = vector.shape_cast %137 : vector<128xf32> to vector<1x1x128xf32>
    %139 = vector.broadcast %138 : vector<1x1x128xf32> to vector<4x4x128xf32>
    %140 = arith.mulf %135, %139 : vector<4x4x128xf32>
    %141 = arith.addf %113, %140 : vector<4x4x128xf32>
    %c2_73 = arith.constant 2 : index
    %c5_74 = arith.constant 5 : index
    %c0_75 = arith.constant 0 : index
    %142 = vector.load %arg5[%c2_73, %c5_74, %c0_75] : memref<10x10x128xf32, #tpu.memory_space<vmem>>, vector<4x4x128xf32>
    %143 = vector.extract_strided_slice %12 {offsets = [19, 0], sizes = [1, 128], strides = [1, 1]} : vector<49x128xf32> to vector<1x128xf32>
    %144 = vector.shape_cast %143 : vector<1x128xf32> to vector<128xf32>
    %145 = vector.shape_cast %144 : vector<128xf32> to vector<1x1x128xf32>
    %146 = vector.broadcast %145 : vector<1x1x128xf32> to vector<4x4x128xf32>
    %147 = arith.mulf %142, %146 : vector<4x4x128xf32>
    %148 = arith.addf %120, %147 : vector<4x4x128xf32>
    %c2_76 = arith.constant 2 : index
    %c6_77 = arith.constant 6 : index
    %c0_78 = arith.constant 0 : index
    %149 = vector.load %arg5[%c2_76, %c6_77, %c0_78] : memref<10x10x128xf32, #tpu.memory_space<vmem>>, vector<4x4x128xf32>
    %150 = vector.extract_strided_slice %12 {offsets = [20, 0], sizes = [1, 128], strides = [1, 1]} : vector<49x128xf32> to vector<1x128xf32>
    %151 = vector.shape_cast %150 : vector<1x128xf32> to vector<128xf32>
    %152 = vector.shape_cast %151 : vector<128xf32> to vector<1x1x128xf32>
    %153 = vector.broadcast %152 : vector<1x1x128xf32> to vector<4x4x128xf32>
    %154 = arith.mulf %149, %153 : vector<4x4x128xf32>
    %155 = arith.addf %127, %154 : vector<4x4x128xf32>
    %c3_79 = arith.constant 3 : index
    %c0_80 = arith.constant 0 : index
    %c0_81 = arith.constant 0 : index
    %156 = vector.load %arg5[%c3_79, %c0_80, %c0_81] : memref<10x10x128xf32, #tpu.memory_space<vmem>>, vector<4x4x128xf32>
    %157 = vector.extract_strided_slice %12 {offsets = [21, 0], sizes = [1, 128], strides = [1, 1]} : vector<49x128xf32> to vector<1x128xf32>
    %158 = vector.shape_cast %157 : vector<1x128xf32> to vector<128xf32>
    %159 = vector.shape_cast %158 : vector<128xf32> to vector<1x1x128xf32>
    %160 = vector.broadcast %159 : vector<1x1x128xf32> to vector<4x4x128xf32>
    %161 = arith.mulf %156, %160 : vector<4x4x128xf32>
    %162 = arith.addf %134, %161 : vector<4x4x128xf32>
    %c3_82 = arith.constant 3 : index
    %c1_83 = arith.constant 1 : index
    %c0_84 = arith.constant 0 : index
    %163 = vector.load %arg5[%c3_82, %c1_83, %c0_84] : memref<10x10x128xf32, #tpu.memory_space<vmem>>, vector<4x4x128xf32>
    %164 = vector.extract_strided_slice %12 {offsets = [22, 0], sizes = [1, 128], strides = [1, 1]} : vector<49x128xf32> to vector<1x128xf32>
    %165 = vector.shape_cast %164 : vector<1x128xf32> to vector<128xf32>
    %166 = vector.shape_cast %165 : vector<128xf32> to vector<1x1x128xf32>
    %167 = vector.broadcast %166 : vector<1x1x128xf32> to vector<4x4x128xf32>
    %168 = arith.mulf %163, %167 : vector<4x4x128xf32>
    %169 = arith.addf %141, %168 : vector<4x4x128xf32>
    %c3_85 = arith.constant 3 : index
    %c2_86 = arith.constant 2 : index
    %c0_87 = arith.constant 0 : index
    %170 = vector.load %arg5[%c3_85, %c2_86, %c0_87] : memref<10x10x128xf32, #tpu.memory_space<vmem>>, vector<4x4x128xf32>
    %171 = vector.extract_strided_slice %12 {offsets = [23, 0], sizes = [1, 128], strides = [1, 1]} : vector<49x128xf32> to vector<1x128xf32>
    %172 = vector.shape_cast %171 : vector<1x128xf32> to vector<128xf32>
    %173 = vector.shape_cast %172 : vector<128xf32> to vector<1x1x128xf32>
    %174 = vector.broadcast %173 : vector<1x1x128xf32> to vector<4x4x128xf32>
    %175 = arith.mulf %170, %174 : vector<4x4x128xf32>
    %176 = arith.addf %148, %175 : vector<4x4x128xf32>
    %c3_88 = arith.constant 3 : index
    %c3_89 = arith.constant 3 : index
    %c0_90 = arith.constant 0 : index
    %177 = vector.load %arg5[%c3_88, %c3_89, %c0_90] : memref<10x10x128xf32, #tpu.memory_space<vmem>>, vector<4x4x128xf32>
    %178 = vector.extract_strided_slice %12 {offsets = [24, 0], sizes = [1, 128], strides = [1, 1]} : vector<49x128xf32> to vector<1x128xf32>
    %179 = vector.shape_cast %178 : vector<1x128xf32> to vector<128xf32>
    %180 = vector.shape_cast %179 : vector<128xf32> to vector<1x1x128xf32>
    %181 = vector.broadcast %180 : vector<1x1x128xf32> to vector<4x4x128xf32>
    %182 = arith.mulf %177, %181 : vector<4x4x128xf32>
    %183 = arith.addf %155, %182 : vector<4x4x128xf32>
    %c3_91 = arith.constant 3 : index
    %c4_92 = arith.constant 4 : index
    %c0_93 = arith.constant 0 : index
    %184 = vector.load %arg5[%c3_91, %c4_92, %c0_93] : memref<10x10x128xf32, #tpu.memory_space<vmem>>, vector<4x4x128xf32>
    %185 = vector.extract_strided_slice %12 {offsets = [25, 0], sizes = [1, 128], strides = [1, 1]} : vector<49x128xf32> to vector<1x128xf32>
    %186 = vector.shape_cast %185 : vector<1x128xf32> to vector<128xf32>
    %187 = vector.shape_cast %186 : vector<128xf32> to vector<1x1x128xf32>
    %188 = vector.broadcast %187 : vector<1x1x128xf32> to vector<4x4x128xf32>
    %189 = arith.mulf %184, %188 : vector<4x4x128xf32>
    %190 = arith.addf %162, %189 : vector<4x4x128xf32>
    %c3_94 = arith.constant 3 : index
    %c5_95 = arith.constant 5 : index
    %c0_96 = arith.constant 0 : index
    %191 = vector.load %arg5[%c3_94, %c5_95, %c0_96] : memref<10x10x128xf32, #tpu.memory_space<vmem>>, vector<4x4x128xf32>
    %192 = vector.extract_strided_slice %12 {offsets = [26, 0], sizes = [1, 128], strides = [1, 1]} : vector<49x128xf32> to vector<1x128xf32>
    %193 = vector.shape_cast %192 : vector<1x128xf32> to vector<128xf32>
    %194 = vector.shape_cast %193 : vector<128xf32> to vector<1x1x128xf32>
    %195 = vector.broadcast %194 : vector<1x1x128xf32> to vector<4x4x128xf32>
    %196 = arith.mulf %191, %195 : vector<4x4x128xf32>
    %197 = arith.addf %169, %196 : vector<4x4x128xf32>
    %c3_97 = arith.constant 3 : index
    %c6_98 = arith.constant 6 : index
    %c0_99 = arith.constant 0 : index
    %198 = vector.load %arg5[%c3_97, %c6_98, %c0_99] : memref<10x10x128xf32, #tpu.memory_space<vmem>>, vector<4x4x128xf32>
    %199 = vector.extract_strided_slice %12 {offsets = [27, 0], sizes = [1, 128], strides = [1, 1]} : vector<49x128xf32> to vector<1x128xf32>
    %200 = vector.shape_cast %199 : vector<1x128xf32> to vector<128xf32>
    %201 = vector.shape_cast %200 : vector<128xf32> to vector<1x1x128xf32>
    %202 = vector.broadcast %201 : vector<1x1x128xf32> to vector<4x4x128xf32>
    %203 = arith.mulf %198, %202 : vector<4x4x128xf32>
    %204 = arith.addf %176, %203 : vector<4x4x128xf32>
    %c4_100 = arith.constant 4 : index
    %c0_101 = arith.constant 0 : index
    %c0_102 = arith.constant 0 : index
    %205 = vector.load %arg5[%c4_100, %c0_101, %c0_102] : memref<10x10x128xf32, #tpu.memory_space<vmem>>, vector<4x4x128xf32>
    %206 = vector.extract_strided_slice %12 {offsets = [28, 0], sizes = [1, 128], strides = [1, 1]} : vector<49x128xf32> to vector<1x128xf32>
    %207 = vector.shape_cast %206 : vector<1x128xf32> to vector<128xf32>
    %208 = vector.shape_cast %207 : vector<128xf32> to vector<1x1x128xf32>
    %209 = vector.broadcast %208 : vector<1x1x128xf32> to vector<4x4x128xf32>
    %210 = arith.mulf %205, %209 : vector<4x4x128xf32>
    %211 = arith.addf %183, %210 : vector<4x4x128xf32>
    %c4_103 = arith.constant 4 : index
    %c1_104 = arith.constant 1 : index
    %c0_105 = arith.constant 0 : index
    %212 = vector.load %arg5[%c4_103, %c1_104, %c0_105] : memref<10x10x128xf32, #tpu.memory_space<vmem>>, vector<4x4x128xf32>
    %213 = vector.extract_strided_slice %12 {offsets = [29, 0], sizes = [1, 128], strides = [1, 1]} : vector<49x128xf32> to vector<1x128xf32>
    %214 = vector.shape_cast %213 : vector<1x128xf32> to vector<128xf32>
    %215 = vector.shape_cast %214 : vector<128xf32> to vector<1x1x128xf32>
    %216 = vector.broadcast %215 : vector<1x1x128xf32> to vector<4x4x128xf32>
    %217 = arith.mulf %212, %216 : vector<4x4x128xf32>
    %218 = arith.addf %190, %217 : vector<4x4x128xf32>
    %c4_106 = arith.constant 4 : index
    %c2_107 = arith.constant 2 : index
    %c0_108 = arith.constant 0 : index
    %219 = vector.load %arg5[%c4_106, %c2_107, %c0_108] : memref<10x10x128xf32, #tpu.memory_space<vmem>>, vector<4x4x128xf32>
    %220 = vector.extract_strided_slice %12 {offsets = [30, 0], sizes = [1, 128], strides = [1, 1]} : vector<49x128xf32> to vector<1x128xf32>
    %221 = vector.shape_cast %220 : vector<1x128xf32> to vector<128xf32>
    %222 = vector.shape_cast %221 : vector<128xf32> to vector<1x1x128xf32>
    %223 = vector.broadcast %222 : vector<1x1x128xf32> to vector<4x4x128xf32>
    %224 = arith.mulf %219, %223 : vector<4x4x128xf32>
    %225 = arith.addf %197, %224 : vector<4x4x128xf32>
    %c4_109 = arith.constant 4 : index
    %c3_110 = arith.constant 3 : index
    %c0_111 = arith.constant 0 : index
    %226 = vector.load %arg5[%c4_109, %c3_110, %c0_111] : memref<10x10x128xf32, #tpu.memory_space<vmem>>, vector<4x4x128xf32>
    %227 = vector.extract_strided_slice %12 {offsets = [31, 0], sizes = [1, 128], strides = [1, 1]} : vector<49x128xf32> to vector<1x128xf32>
    %228 = vector.shape_cast %227 : vector<1x128xf32> to vector<128xf32>
    %229 = vector.shape_cast %228 : vector<128xf32> to vector<1x1x128xf32>
    %230 = vector.broadcast %229 : vector<1x1x128xf32> to vector<4x4x128xf32>
    %231 = arith.mulf %226, %230 : vector<4x4x128xf32>
    %232 = arith.addf %204, %231 : vector<4x4x128xf32>
    %c4_112 = arith.constant 4 : index
    %c4_113 = arith.constant 4 : index
    %c0_114 = arith.constant 0 : index
    %233 = vector.load %arg5[%c4_112, %c4_113, %c0_114] : memref<10x10x128xf32, #tpu.memory_space<vmem>>, vector<4x4x128xf32>
    %234 = vector.extract_strided_slice %12 {offsets = [32, 0], sizes = [1, 128], strides = [1, 1]} : vector<49x128xf32> to vector<1x128xf32>
    %235 = vector.shape_cast %234 : vector<1x128xf32> to vector<128xf32>
    %236 = vector.shape_cast %235 : vector<128xf32> to vector<1x1x128xf32>
    %237 = vector.broadcast %236 : vector<1x1x128xf32> to vector<4x4x128xf32>
    %238 = arith.mulf %233, %237 : vector<4x4x128xf32>
    %239 = arith.addf %211, %238 : vector<4x4x128xf32>
    %c4_115 = arith.constant 4 : index
    %c5_116 = arith.constant 5 : index
    %c0_117 = arith.constant 0 : index
    %240 = vector.load %arg5[%c4_115, %c5_116, %c0_117] : memref<10x10x128xf32, #tpu.memory_space<vmem>>, vector<4x4x128xf32>
    %241 = vector.extract_strided_slice %12 {offsets = [33, 0], sizes = [1, 128], strides = [1, 1]} : vector<49x128xf32> to vector<1x128xf32>
    %242 = vector.shape_cast %241 : vector<1x128xf32> to vector<128xf32>
    %243 = vector.shape_cast %242 : vector<128xf32> to vector<1x1x128xf32>
    %244 = vector.broadcast %243 : vector<1x1x128xf32> to vector<4x4x128xf32>
    %245 = arith.mulf %240, %244 : vector<4x4x128xf32>
    %246 = arith.addf %218, %245 : vector<4x4x128xf32>
    %c4_118 = arith.constant 4 : index
    %c6_119 = arith.constant 6 : index
    %c0_120 = arith.constant 0 : index
    %247 = vector.load %arg5[%c4_118, %c6_119, %c0_120] : memref<10x10x128xf32, #tpu.memory_space<vmem>>, vector<4x4x128xf32>
    %248 = vector.extract_strided_slice %12 {offsets = [34, 0], sizes = [1, 128], strides = [1, 1]} : vector<49x128xf32> to vector<1x128xf32>
    %249 = vector.shape_cast %248 : vector<1x128xf32> to vector<128xf32>
    %250 = vector.shape_cast %249 : vector<128xf32> to vector<1x1x128xf32>
    %251 = vector.broadcast %250 : vector<1x1x128xf32> to vector<4x4x128xf32>
    %252 = arith.mulf %247, %251 : vector<4x4x128xf32>
    %253 = arith.addf %225, %252 : vector<4x4x128xf32>
    %c5_121 = arith.constant 5 : index
    %c0_122 = arith.constant 0 : index
    %c0_123 = arith.constant 0 : index
    %254 = vector.load %arg5[%c5_121, %c0_122, %c0_123] : memref<10x10x128xf32, #tpu.memory_space<vmem>>, vector<4x4x128xf32>
    %255 = vector.extract_strided_slice %12 {offsets = [35, 0], sizes = [1, 128], strides = [1, 1]} : vector<49x128xf32> to vector<1x128xf32>
    %256 = vector.shape_cast %255 : vector<1x128xf32> to vector<128xf32>
    %257 = vector.shape_cast %256 : vector<128xf32> to vector<1x1x128xf32>
    %258 = vector.broadcast %257 : vector<1x1x128xf32> to vector<4x4x128xf32>
    %259 = arith.mulf %254, %258 : vector<4x4x128xf32>
    %260 = arith.addf %232, %259 : vector<4x4x128xf32>
    %c5_124 = arith.constant 5 : index
    %c1_125 = arith.constant 1 : index
    %c0_126 = arith.constant 0 : index
    %261 = vector.load %arg5[%c5_124, %c1_125, %c0_126] : memref<10x10x128xf32, #tpu.memory_space<vmem>>, vector<4x4x128xf32>
    %262 = vector.extract_strided_slice %12 {offsets = [36, 0], sizes = [1, 128], strides = [1, 1]} : vector<49x128xf32> to vector<1x128xf32>
    %263 = vector.shape_cast %262 : vector<1x128xf32> to vector<128xf32>
    %264 = vector.shape_cast %263 : vector<128xf32> to vector<1x1x128xf32>
    %265 = vector.broadcast %264 : vector<1x1x128xf32> to vector<4x4x128xf32>
    %266 = arith.mulf %261, %265 : vector<4x4x128xf32>
    %267 = arith.addf %239, %266 : vector<4x4x128xf32>
    %c5_127 = arith.constant 5 : index
    %c2_128 = arith.constant 2 : index
    %c0_129 = arith.constant 0 : index
    %268 = vector.load %arg5[%c5_127, %c2_128, %c0_129] : memref<10x10x128xf32, #tpu.memory_space<vmem>>, vector<4x4x128xf32>
    %269 = vector.extract_strided_slice %12 {offsets = [37, 0], sizes = [1, 128], strides = [1, 1]} : vector<49x128xf32> to vector<1x128xf32>
    %270 = vector.shape_cast %269 : vector<1x128xf32> to vector<128xf32>
    %271 = vector.shape_cast %270 : vector<128xf32> to vector<1x1x128xf32>
    %272 = vector.broadcast %271 : vector<1x1x128xf32> to vector<4x4x128xf32>
    %273 = arith.mulf %268, %272 : vector<4x4x128xf32>
    %274 = arith.addf %246, %273 : vector<4x4x128xf32>
    %c5_130 = arith.constant 5 : index
    %c3_131 = arith.constant 3 : index
    %c0_132 = arith.constant 0 : index
    %275 = vector.load %arg5[%c5_130, %c3_131, %c0_132] : memref<10x10x128xf32, #tpu.memory_space<vmem>>, vector<4x4x128xf32>
    %276 = vector.extract_strided_slice %12 {offsets = [38, 0], sizes = [1, 128], strides = [1, 1]} : vector<49x128xf32> to vector<1x128xf32>
    %277 = vector.shape_cast %276 : vector<1x128xf32> to vector<128xf32>
    %278 = vector.shape_cast %277 : vector<128xf32> to vector<1x1x128xf32>
    %279 = vector.broadcast %278 : vector<1x1x128xf32> to vector<4x4x128xf32>
    %280 = arith.mulf %275, %279 : vector<4x4x128xf32>
    %281 = arith.addf %253, %280 : vector<4x4x128xf32>
    %c5_133 = arith.constant 5 : index
    %c4_134 = arith.constant 4 : index
    %c0_135 = arith.constant 0 : index
    %282 = vector.load %arg5[%c5_133, %c4_134, %c0_135] : memref<10x10x128xf32, #tpu.memory_space<vmem>>, vector<4x4x128xf32>
    %283 = vector.extract_strided_slice %12 {offsets = [39, 0], sizes = [1, 128], strides = [1, 1]} : vector<49x128xf32> to vector<1x128xf32>
    %284 = vector.shape_cast %283 : vector<1x128xf32> to vector<128xf32>
    %285 = vector.shape_cast %284 : vector<128xf32> to vector<1x1x128xf32>
    %286 = vector.broadcast %285 : vector<1x1x128xf32> to vector<4x4x128xf32>
    %287 = arith.mulf %282, %286 : vector<4x4x128xf32>
    %288 = arith.addf %260, %287 : vector<4x4x128xf32>
    %c5_136 = arith.constant 5 : index
    %c5_137 = arith.constant 5 : index
    %c0_138 = arith.constant 0 : index
    %289 = vector.load %arg5[%c5_136, %c5_137, %c0_138] : memref<10x10x128xf32, #tpu.memory_space<vmem>>, vector<4x4x128xf32>
    %290 = vector.extract_strided_slice %12 {offsets = [40, 0], sizes = [1, 128], strides = [1, 1]} : vector<49x128xf32> to vector<1x128xf32>
    %291 = vector.shape_cast %290 : vector<1x128xf32> to vector<128xf32>
    %292 = vector.shape_cast %291 : vector<128xf32> to vector<1x1x128xf32>
    %293 = vector.broadcast %292 : vector<1x1x128xf32> to vector<4x4x128xf32>
    %294 = arith.mulf %289, %293 : vector<4x4x128xf32>
    %295 = arith.addf %267, %294 : vector<4x4x128xf32>
    %c5_139 = arith.constant 5 : index
    %c6_140 = arith.constant 6 : index
    %c0_141 = arith.constant 0 : index
    %296 = vector.load %arg5[%c5_139, %c6_140, %c0_141] : memref<10x10x128xf32, #tpu.memory_space<vmem>>, vector<4x4x128xf32>
    %297 = vector.extract_strided_slice %12 {offsets = [41, 0], sizes = [1, 128], strides = [1, 1]} : vector<49x128xf32> to vector<1x128xf32>
    %298 = vector.shape_cast %297 : vector<1x128xf32> to vector<128xf32>
    %299 = vector.shape_cast %298 : vector<128xf32> to vector<1x1x128xf32>
    %300 = vector.broadcast %299 : vector<1x1x128xf32> to vector<4x4x128xf32>
    %301 = arith.mulf %296, %300 : vector<4x4x128xf32>
    %302 = arith.addf %274, %301 : vector<4x4x128xf32>
    %c6_142 = arith.constant 6 : index
    %c0_143 = arith.constant 0 : index
    %c0_144 = arith.constant 0 : index
    %303 = vector.load %arg5[%c6_142, %c0_143, %c0_144] : memref<10x10x128xf32, #tpu.memory_space<vmem>>, vector<4x4x128xf32>
    %304 = vector.extract_strided_slice %12 {offsets = [42, 0], sizes = [1, 128], strides = [1, 1]} : vector<49x128xf32> to vector<1x128xf32>
    %305 = vector.shape_cast %304 : vector<1x128xf32> to vector<128xf32>
    %306 = vector.shape_cast %305 : vector<128xf32> to vector<1x1x128xf32>
    %307 = vector.broadcast %306 : vector<1x1x128xf32> to vector<4x4x128xf32>
    %308 = arith.mulf %303, %307 : vector<4x4x128xf32>
    %309 = arith.addf %281, %308 : vector<4x4x128xf32>
    %c6_145 = arith.constant 6 : index
    %c1_146 = arith.constant 1 : index
    %c0_147 = arith.constant 0 : index
    %310 = vector.load %arg5[%c6_145, %c1_146, %c0_147] : memref<10x10x128xf32, #tpu.memory_space<vmem>>, vector<4x4x128xf32>
    %311 = vector.extract_strided_slice %12 {offsets = [43, 0], sizes = [1, 128], strides = [1, 1]} : vector<49x128xf32> to vector<1x128xf32>
    %312 = vector.shape_cast %311 : vector<1x128xf32> to vector<128xf32>
    %313 = vector.shape_cast %312 : vector<128xf32> to vector<1x1x128xf32>
    %314 = vector.broadcast %313 : vector<1x1x128xf32> to vector<4x4x128xf32>
    %315 = arith.mulf %310, %314 : vector<4x4x128xf32>
    %316 = arith.addf %288, %315 : vector<4x4x128xf32>
    %c6_148 = arith.constant 6 : index
    %c2_149 = arith.constant 2 : index
    %c0_150 = arith.constant 0 : index
    %317 = vector.load %arg5[%c6_148, %c2_149, %c0_150] : memref<10x10x128xf32, #tpu.memory_space<vmem>>, vector<4x4x128xf32>
    %318 = vector.extract_strided_slice %12 {offsets = [44, 0], sizes = [1, 128], strides = [1, 1]} : vector<49x128xf32> to vector<1x128xf32>
    %319 = vector.shape_cast %318 : vector<1x128xf32> to vector<128xf32>
    %320 = vector.shape_cast %319 : vector<128xf32> to vector<1x1x128xf32>
    %321 = vector.broadcast %320 : vector<1x1x128xf32> to vector<4x4x128xf32>
    %322 = arith.mulf %317, %321 : vector<4x4x128xf32>
    %323 = arith.addf %295, %322 : vector<4x4x128xf32>
    %c6_151 = arith.constant 6 : index
    %c3_152 = arith.constant 3 : index
    %c0_153 = arith.constant 0 : index
    %324 = vector.load %arg5[%c6_151, %c3_152, %c0_153] : memref<10x10x128xf32, #tpu.memory_space<vmem>>, vector<4x4x128xf32>
    %325 = vector.extract_strided_slice %12 {offsets = [45, 0], sizes = [1, 128], strides = [1, 1]} : vector<49x128xf32> to vector<1x128xf32>
    %326 = vector.shape_cast %325 : vector<1x128xf32> to vector<128xf32>
    %327 = vector.shape_cast %326 : vector<128xf32> to vector<1x1x128xf32>
    %328 = vector.broadcast %327 : vector<1x1x128xf32> to vector<4x4x128xf32>
    %329 = arith.mulf %324, %328 : vector<4x4x128xf32>
    %330 = arith.addf %302, %329 : vector<4x4x128xf32>
    %c6_154 = arith.constant 6 : index
    %c4_155 = arith.constant 4 : index
    %c0_156 = arith.constant 0 : index
    %331 = vector.load %arg5[%c6_154, %c4_155, %c0_156] : memref<10x10x128xf32, #tpu.memory_space<vmem>>, vector<4x4x128xf32>
    %332 = vector.extract_strided_slice %12 {offsets = [46, 0], sizes = [1, 128], strides = [1, 1]} : vector<49x128xf32> to vector<1x128xf32>
    %333 = vector.shape_cast %332 : vector<1x128xf32> to vector<128xf32>
    %334 = vector.shape_cast %333 : vector<128xf32> to vector<1x1x128xf32>
    %335 = vector.broadcast %334 : vector<1x1x128xf32> to vector<4x4x128xf32>
    %336 = arith.mulf %331, %335 : vector<4x4x128xf32>
    %337 = arith.addf %309, %336 : vector<4x4x128xf32>
    %c6_157 = arith.constant 6 : index
    %c5_158 = arith.constant 5 : index
    %c0_159 = arith.constant 0 : index
    %338 = vector.load %arg5[%c6_157, %c5_158, %c0_159] : memref<10x10x128xf32, #tpu.memory_space<vmem>>, vector<4x4x128xf32>
    %339 = vector.extract_strided_slice %12 {offsets = [47, 0], sizes = [1, 128], strides = [1, 1]} : vector<49x128xf32> to vector<1x128xf32>
    %340 = vector.shape_cast %339 : vector<1x128xf32> to vector<128xf32>
    %341 = vector.shape_cast %340 : vector<128xf32> to vector<1x1x128xf32>
    %342 = vector.broadcast %341 : vector<1x1x128xf32> to vector<4x4x128xf32>
    %343 = arith.mulf %338, %342 : vector<4x4x128xf32>
    %344 = arith.addf %316, %343 : vector<4x4x128xf32>
    %c6_160 = arith.constant 6 : index
    %c6_161 = arith.constant 6 : index
    %c0_162 = arith.constant 0 : index
    %345 = vector.load %arg5[%c6_160, %c6_161, %c0_162] : memref<10x10x128xf32, #tpu.memory_space<vmem>>, vector<4x4x128xf32>
    %346 = vector.extract_strided_slice %12 {offsets = [48, 0], sizes = [1, 128], strides = [1, 1]} : vector<49x128xf32> to vector<1x128xf32>
    %347 = vector.shape_cast %346 : vector<1x128xf32> to vector<128xf32>
    %348 = vector.shape_cast %347 : vector<128xf32> to vector<1x1x128xf32>
    %349 = vector.broadcast %348 : vector<1x1x128xf32> to vector<4x4x128xf32>
    %350 = arith.mulf %345, %349 : vector<4x4x128xf32>
    %351 = arith.addf %323, %350 : vector<4x4x128xf32>
    %352 = arith.addf %351, %330 : vector<4x4x128xf32>
    %353 = arith.addf %337, %344 : vector<4x4x128xf32>
    %354 = arith.addf %352, %353 : vector<4x4x128xf32>
    %c0_163 = arith.constant 0 : index
    %c0_164 = arith.constant 0 : index
    %355 = vector.load %arg3[%c0_163, %c0_164] : memref<1x128xf32, #tpu.memory_space<vmem>>, vector<1x128xf32>
    %356 = vector.shape_cast %355 : vector<1x128xf32> to vector<1x1x128xf32>
    %357 = vector.broadcast %356 : vector<1x1x128xf32> to vector<4x4x128xf32>
    %358 = arith.addf %354, %357 : vector<4x4x128xf32>
    %359 = arith.truncf %358 : vector<4x4x128xf32> to vector<4x4x128xbf16>
    %c0_165 = arith.constant 0 : index
    %c0_166 = arith.constant 0 : index
    %c0_167 = arith.constant 0 : index
    %c0_168 = arith.constant 0 : index
    %360 = vector.load %arg4[%c0_165, %c0_166, %c0_167, %c0_168] : memref<1x4x4x128xbf16, #tpu.memory_space<vmem>>, vector<1x4x4x128xbf16>
    %361 = vector.shape_cast %360 : vector<1x4x4x128xbf16> to vector<4x4x128xbf16>
    %362 = vector.shape_cast %359 : vector<4x4x128xbf16> to vector<1x4x4x128xbf16>
    tpu.vector_store %arg4[%c0_165, %c0_166, %c0_167, %c0_168], %362 {strides = array<i32>} : memref<1x4x4x128xbf16, #tpu.memory_space<vmem>>, vector<1x4x4x128xbf16>,
    return
  }
  func.func @transform_0(%arg0: i32) -> (i32, i32, i32, i32) {
    %c0_i32 = arith.constant 0 : i32
    %c0_i32_0 = arith.constant 0 : i32
    %c0_i32_1 = arith.constant 0 : i32
    %c0_i32_2 = arith.constant 0 : i32
    return %arg0, %c0_i32, %c0_i32_0, %c0_i32_1 : i32, i32, i32, i32
  }
  func.func @transform_1(%arg0: i32) -> (i32, i32) {
    %c0_i32 = arith.constant 0 : i32
    %c0_i32_0 = arith.constant 0 : i32
    %c0_i32_1 = arith.constant 0 : i32
    return %c0_i32, %c0_i32_0 : i32, i32
  }
  func.func @transform_2(%arg0: i32) -> (i32, i32) {
    %c0_i32 = arith.constant 0 : i32
    %c0_i32_0 = arith.constant 0 : i32
    %c0_i32_1 = arith.constant 0 : i32
    return %c0_i32, %c0_i32_0 : i32, i32
  }
  func.func @transform_3(%arg0: i32) -> (i32, i32, i32, i32) {
    %c0_i32 = arith.constant 0 : i32
    %c0_i32_0 = arith.constant 0 : i32
    %c0_i32_1 = arith.constant 0 : i32
    %c0_i32_2 = arith.constant 0 : i32
    return %arg0, %c0_i32, %c0_i32_0, %c0_i32_1 : i32, i32, i32, i32
  }
}

module attributes {stable_mosaic.version = 11 : i64} {
  func.func @_block_tail_kernel(%arg0: i32, %arg1: i32, %arg2: i32, %arg3: memref<1x16x128xbf16, #tpu.memory_space<vmem>>, %arg4: memref<1x16x128xbf16, #tpu.memory_space<vmem>>, %arg5: memref<1x128xf32, #tpu.memory_space<vmem>>, %arg6: memref<1x128xf32, #tpu.memory_space<vmem>>, %arg7: memref<128x128xbf16, #tpu.memory_space<vmem>>, %arg8: memref<1x128xf32, #tpu.memory_space<vmem>>, %arg9: memref<1x128xf32, #tpu.memory_space<vmem>>, %arg10: memref<1x128xf32, #tpu.memory_space<vmem>>, %arg11: memref<128x128xbf16, #tpu.memory_space<vmem>>, %arg12: memref<1x128xf32, #tpu.memory_space<vmem>>, %arg13: memref<1x16x128xbf16, #tpu.memory_space<vmem>>, %arg14: memref<1x128xf32, #tpu.memory_space<vmem>>, %arg15: memref<16x128xbf16, #tpu.memory_space<vmem>>) attributes {dimension_semantics = [#tpu.dimension_semantics<parallel>, #tpu.dimension_semantics<arbitrary>, #tpu.dimension_semantics<arbitrary>], iteration_bounds = array<i64: 2, 2, 1>, scalar_prefetch = 0 : i64, scratch_operands = 2 : i64, tpu.core_type = #tpu.core_type<tc>, window_params = [{transform_indices = @transform_0, window_bounds = array<i64: 1, 16, 128>}, {transform_indices = @transform_1, window_bounds = array<i64: 1, 16, 128>}, {pipeline_mode = #tpu.pipeline_mode<synchronous>, transform_indices = @transform_2, window_bounds = array<i64: 1, 128>}, {pipeline_mode = #tpu.pipeline_mode<synchronous>, transform_indices = @transform_3, window_bounds = array<i64: 1, 128>}, {pipeline_mode = #tpu.pipeline_mode<synchronous>, transform_indices = @transform_4, window_bounds = array<i64: 128, 128>}, {pipeline_mode = #tpu.pipeline_mode<synchronous>, transform_indices = @transform_5, window_bounds = array<i64: 1, 128>}, {pipeline_mode = #tpu.pipeline_mode<synchronous>, transform_indices = @transform_6, window_bounds = array<i64: 1, 128>}, {pipeline_mode = #tpu.pipeline_mode<synchronous>, transform_indices = @transform_7, window_bounds = array<i64: 1, 128>}, {pipeline_mode = #tpu.pipeline_mode<synchronous>, transform_indices = @transform_8, window_bounds = array<i64: 128, 128>}, {pipeline_mode = #tpu.pipeline_mode<synchronous>, transform_indices = @transform_9, window_bounds = array<i64: 1, 128>}, {transform_indices = @transform_10, window_bounds = array<i64: 1, 16, 128>}]} {
    %c16_i32 = arith.constant 16 : i32
    %0 = arith.muli %arg2, %c16_i32 : i32
    %1 = tpu.assume_multiple %0, 16 : i32
    %c0_i32 = arith.constant 0 : i32
    %2 = arith.cmpi eq, %arg1, %c0_i32 : i32
    %3 = arith.extui %2 : i1 to i32
    %c0_i32_0 = arith.constant 0 : i32
    %4 = arith.cmpi ne, %3, %c0_i32_0 : i32
    scf.if %4 {
      %c0_i32_2 = arith.constant 0 : i32
      %8 = arith.cmpi eq, %arg2, %c0_i32_2 : i32
      %9 = arith.extui %8 : i1 to i32
      %c0_i32_3 = arith.constant 0 : i32
      %10 = arith.cmpi ne, %9, %c0_i32_3 : i32
      scf.if %10 {
        %cst_29 = arith.constant 0.000000e+00 : f32
        %63 = vector.broadcast %cst_29 : f32 to vector<1x128xf32>
        %c0_30 = arith.constant 0 : index
        %c0_31 = arith.constant 0 : index
        %64 = vector.load %arg14[%c0_30, %c0_31] : memref<1x128xf32, #tpu.memory_space<vmem>>, vector<1x128xf32>
        tpu.vector_store %arg14[%c0_30, %c0_31], %63 {strides = array<i32>} : memref<1x128xf32, #tpu.memory_space<vmem>>, vector<1x128xf32>,
      } else {
      }
      %c0 = arith.constant 0 : index
      %c0_4 = arith.constant 0 : index
      %c0_5 = arith.constant 0 : index
      %11 = vector.load %arg3[%c0, %c0_4, %c0_5] : memref<1x16x128xbf16, #tpu.memory_space<vmem>>, vector<1x16x128xbf16>
      %12 = vector.shape_cast %11 : vector<1x16x128xbf16> to vector<16x128xbf16>
      %13 = arith.extf %12 : vector<16x128xbf16> to vector<16x128xf32>
      %cst = arith.constant dense<0.000000e+00> : vector<16xf32>
      %14 = vector.multi_reduction <add>, %13, %cst [1] : vector<16x128xf32> to vector<16xf32>
      %15 = vector.shape_cast %14 : vector<16xf32> to vector<16x1xf32>
      %cst_6 = arith.constant 3.125000e-02 : f32
      %16 = vector.broadcast %cst_6 : f32 to vector<16x1xf32>
      %17 = arith.mulf %15, %16 : vector<16x1xf32>
      %18 = arith.mulf %13, %13 : vector<16x128xf32>
      %cst_7 = arith.constant dense<0.000000e+00> : vector<16xf32>
      %19 = vector.multi_reduction <add>, %18, %cst_7 [1] : vector<16x128xf32> to vector<16xf32>
      %20 = vector.shape_cast %19 : vector<16xf32> to vector<16x1xf32>
      %cst_8 = arith.constant 3.125000e-02 : f32
      %21 = vector.broadcast %cst_8 : f32 to vector<16x1xf32>
      %22 = arith.mulf %20, %21 : vector<16x1xf32>
      %23 = arith.mulf %17, %17 : vector<16x1xf32>
      %24 = arith.subf %22, %23 : vector<16x1xf32>
      %cst_9 = arith.constant 0.000000e+00 : f32
      %25 = vector.broadcast %cst_9 : f32 to vector<16x1xf32>
      %26 = arith.maximumf %24, %25 : vector<16x1xf32>
      %27 = vector.broadcast %17 : vector<16x1xf32> to vector<16x128xf32>
      %28 = arith.subf %13, %27 : vector<16x128xf32>
      %cst_10 = arith.constant 9.99999997E-7 : f32
      %29 = vector.broadcast %cst_10 : f32 to vector<16x1xf32>
      %30 = arith.addf %26, %29 : vector<16x1xf32>
      %31 = math.rsqrt %30 : vector<16x1xf32>
      %32 = vector.broadcast %31 : vector<16x1xf32> to vector<16x128xf32>
      %33 = arith.mulf %28, %32 : vector<16x128xf32>
      %c0_11 = arith.constant 0 : index
      %c0_12 = arith.constant 0 : index
      %34 = vector.load %arg5[%c0_11, %c0_12] : memref<1x128xf32, #tpu.memory_space<vmem>>, vector<1x128xf32>
      %35 = vector.broadcast %34 : vector<1x128xf32> to vector<16x128xf32>
      %36 = arith.mulf %33, %35 : vector<16x128xf32>
      %c0_13 = arith.constant 0 : index
      %c0_14 = arith.constant 0 : index
      %37 = vector.load %arg6[%c0_13, %c0_14] : memref<1x128xf32, #tpu.memory_space<vmem>>, vector<1x128xf32>
      %38 = vector.broadcast %37 : vector<1x128xf32> to vector<16x128xf32>
      %39 = arith.addf %36, %38 : vector<16x128xf32>
      %40 = arith.truncf %39 : vector<16x128xf32> to vector<16x128xbf16>
      %c0_15 = arith.constant 0 : index
      %c0_16 = arith.constant 0 : index
      %41 = vector.load %arg7[%c0_15, %c0_16] : memref<128x128xbf16, #tpu.memory_space<vmem>>, vector<128x128xbf16>
      %cst_17 = arith.constant dense<0.000000e+00> : vector<16x128xf32>
      %42 = tpu.matmul %40, %41, %cst_17 {dimension_numbers = #tpu.dot_dimension_numbers<[1], [0], [0], [1], [0, 0, 1, 1], [], []>} : vector<16x128xbf16>, vector<128x128xbf16>, vector<16x128xf32> -> vector<16x128xf32>
      %c0_18 = arith.constant 0 : index
      %c0_19 = arith.constant 0 : index
      %43 = vector.load %arg8[%c0_18, %c0_19] : memref<1x128xf32, #tpu.memory_space<vmem>>, vector<1x128xf32>
      %44 = vector.broadcast %43 : vector<1x128xf32> to vector<16x128xf32>
      %45 = arith.addf %42, %44 : vector<16x128xf32>
      %cst_20 = arith.constant 5.000000e-01 : f32
      %46 = vector.broadcast %cst_20 : f32 to vector<16x128xf32>
      %47 = arith.mulf %46, %45 : vector<16x128xf32>
      %cst_21 = arith.constant 0.707106769 : f32
      %48 = vector.broadcast %cst_21 : f32 to vector<16x128xf32>
      %49 = arith.mulf %45, %48 : vector<16x128xf32>
      %50 = math.erf %49 : vector<16x128xf32>
      %cst_22 = arith.constant 1.000000e+00 : f32
      %51 = vector.broadcast %cst_22 : f32 to vector<16x128xf32>
      %52 = arith.addf %51, %50 : vector<16x128xf32>
      %53 = arith.mulf %47, %52 : vector<16x128xf32>
      %c0_23 = arith.constant 0 : index
      %c0_24 = arith.constant 0 : index
      %54 = vector.load %arg14[%c0_23, %c0_24] : memref<1x128xf32, #tpu.memory_space<vmem>>, vector<1x128xf32>
      %55 = arith.mulf %53, %53 : vector<16x128xf32>
      %cst_25 = arith.constant dense<0.000000e+00> : vector<128xf32>
      %56 = vector.multi_reduction <add>, %55, %cst_25 [0] : vector<16x128xf32> to vector<128xf32>
      %57 = vector.shape_cast %56 : vector<128xf32> to vector<1x128xf32>
      %58 = arith.addf %54, %57 : vector<1x128xf32>
      %c0_26 = arith.constant 0 : index
      %c0_27 = arith.constant 0 : index
      %59 = vector.load %arg14[%c0_26, %c0_27] : memref<1x128xf32, #tpu.memory_space<vmem>>, vector<1x128xf32>
      tpu.vector_store %arg14[%c0_26, %c0_27], %58 {strides = array<i32>} : memref<1x128xf32, #tpu.memory_space<vmem>>, vector<1x128xf32>,
      %60 = arith.truncf %53 : vector<16x128xf32> to vector<16x128xbf16>
      %61 = arith.index_cast %1 : i32 to index
      %c0_28 = arith.constant 0 : index
      %62 = vector.load %arg15[%61, %c0_28] : memref<16x128xbf16, #tpu.memory_space<vmem>>, vector<16x128xbf16>
      tpu.vector_store %arg15[%61, %c0_28], %60 {strides = array<i32>} : memref<16x128xbf16, #tpu.memory_space<vmem>>, vector<16x128xbf16>,
    } else {
    }
    %c1_i32 = arith.constant 1 : i32
    %5 = arith.cmpi eq, %arg1, %c1_i32 : i32
    %6 = arith.extui %5 : i1 to i32
    %c0_i32_1 = arith.constant 0 : i32
    %7 = arith.cmpi ne, %6, %c0_i32_1 : i32
    scf.if %7 {
      %8 = arith.index_cast %1 : i32 to index
      %c0 = arith.constant 0 : index
      %9 = vector.load %arg15[%8, %c0] : memref<16x128xbf16, #tpu.memory_space<vmem>>, vector<16x128xbf16>
      %10 = arith.extf %9 : vector<16x128xbf16> to vector<16x128xf32>
      %c0_2 = arith.constant 0 : index
      %c0_3 = arith.constant 0 : index
      %11 = vector.load %arg14[%c0_2, %c0_3] : memref<1x128xf32, #tpu.memory_space<vmem>>, vector<1x128xf32>
      %12 = math.sqrt %11 : vector<1x128xf32>
      %cst = arith.constant dense<0.000000e+00> : vector<1xf32>
      %13 = vector.multi_reduction <add>, %12, %cst [1] : vector<1x128xf32> to vector<1xf32>
      %14 = vector.shape_cast %13 : vector<1xf32> to vector<1x1xf32>
      %cst_4 = arith.constant 7.812500e-03 : f32
      %15 = vector.broadcast %cst_4 : f32 to vector<1x1xf32>
      %16 = arith.mulf %14, %15 : vector<1x1xf32>
      %cst_5 = arith.constant 9.99999997E-7 : f32
      %17 = vector.broadcast %cst_5 : f32 to vector<1x1xf32>
      %18 = arith.addf %16, %17 : vector<1x1xf32>
      %19 = vector.broadcast %18 : vector<1x1xf32> to vector<1x128xf32>
      %20 = arith.divf %12, %19 : vector<1x128xf32>
      %c0_6 = arith.constant 0 : index
      %c0_7 = arith.constant 0 : index
      %21 = vector.load %arg9[%c0_6, %c0_7] : memref<1x128xf32, #tpu.memory_space<vmem>>, vector<1x128xf32>
      %22 = vector.broadcast %20 : vector<1x128xf32> to vector<16x128xf32>
      %23 = arith.mulf %10, %22 : vector<16x128xf32>
      %24 = vector.broadcast %21 : vector<1x128xf32> to vector<16x128xf32>
      %25 = arith.mulf %24, %23 : vector<16x128xf32>
      %c0_8 = arith.constant 0 : index
      %c0_9 = arith.constant 0 : index
      %26 = vector.load %arg10[%c0_8, %c0_9] : memref<1x128xf32, #tpu.memory_space<vmem>>, vector<1x128xf32>
      %27 = vector.broadcast %26 : vector<1x128xf32> to vector<16x128xf32>
      %28 = arith.addf %25, %27 : vector<16x128xf32>
      %29 = arith.addf %28, %10 : vector<16x128xf32>
      %30 = arith.truncf %29 : vector<16x128xf32> to vector<16x128xbf16>
      %c0_10 = arith.constant 0 : index
      %c0_11 = arith.constant 0 : index
      %31 = vector.load %arg11[%c0_10, %c0_11] : memref<128x128xbf16, #tpu.memory_space<vmem>>, vector<128x128xbf16>
      %cst_12 = arith.constant dense<0.000000e+00> : vector<16x128xf32>
      %32 = tpu.matmul %30, %31, %cst_12 {dimension_numbers = #tpu.dot_dimension_numbers<[1], [0], [0], [1], [0, 0, 1, 1], [], []>} : vector<16x128xbf16>, vector<128x128xbf16>, vector<16x128xf32> -> vector<16x128xf32>
      %c0_13 = arith.constant 0 : index
      %c0_14 = arith.constant 0 : index
      %33 = vector.load %arg12[%c0_13, %c0_14] : memref<1x128xf32, #tpu.memory_space<vmem>>, vector<1x128xf32>
      %34 = vector.broadcast %33 : vector<1x128xf32> to vector<16x128xf32>
      %35 = arith.addf %32, %34 : vector<16x128xf32>
      %c0_15 = arith.constant 0 : index
      %c0_16 = arith.constant 0 : index
      %c0_17 = arith.constant 0 : index
      %36 = vector.load %arg4[%c0_15, %c0_16, %c0_17] : memref<1x16x128xbf16, #tpu.memory_space<vmem>>, vector<1x16x128xbf16>
      %37 = vector.shape_cast %36 : vector<1x16x128xbf16> to vector<16x128xbf16>
      %38 = arith.extf %37 : vector<16x128xbf16> to vector<16x128xf32>
      %39 = arith.addf %38, %35 : vector<16x128xf32>
      %40 = arith.truncf %39 : vector<16x128xf32> to vector<16x128xbf16>
      %c0_18 = arith.constant 0 : index
      %c0_19 = arith.constant 0 : index
      %c0_20 = arith.constant 0 : index
      %41 = vector.load %arg13[%c0_18, %c0_19, %c0_20] : memref<1x16x128xbf16, #tpu.memory_space<vmem>>, vector<1x16x128xbf16>
      %42 = vector.shape_cast %41 : vector<1x16x128xbf16> to vector<16x128xbf16>
      %43 = vector.shape_cast %40 : vector<16x128xbf16> to vector<1x16x128xbf16>
      tpu.vector_store %arg13[%c0_18, %c0_19, %c0_20], %43 {strides = array<i32>} : memref<1x16x128xbf16, #tpu.memory_space<vmem>>, vector<1x16x128xbf16>,
    } else {
    }
    return
  }
  func.func @transform_0(%arg0: i32, %arg1: i32, %arg2: i32) -> (i32, i32, i32) {
    %c0_i32 = arith.constant 0 : i32
    %c0_i32_0 = arith.constant 0 : i32
    return %arg0, %arg2, %c0_i32 : i32, i32, i32
  }
  func.func @transform_1(%arg0: i32, %arg1: i32, %arg2: i32) -> (i32, i32, i32) {
    %c0_i32 = arith.constant 0 : i32
    %c0_i32_0 = arith.constant 0 : i32
    return %arg0, %arg2, %c0_i32 : i32, i32, i32
  }
  func.func @transform_2(%arg0: i32, %arg1: i32, %arg2: i32) -> (i32, i32) {
    %c0_i32 = arith.constant 0 : i32
    %c0_i32_0 = arith.constant 0 : i32
    %c0_i32_1 = arith.constant 0 : i32
    return %c0_i32, %c0_i32_0 : i32, i32
  }
  func.func @transform_3(%arg0: i32, %arg1: i32, %arg2: i32) -> (i32, i32) {
    %c0_i32 = arith.constant 0 : i32
    %c0_i32_0 = arith.constant 0 : i32
    %c0_i32_1 = arith.constant 0 : i32
    return %c0_i32, %c0_i32_0 : i32, i32
  }
  func.func @transform_4(%arg0: i32, %arg1: i32, %arg2: i32) -> (i32, i32) {
    %c0_i32 = arith.constant 0 : i32
    %c0_i32_0 = arith.constant 0 : i32
    %c0_i32_1 = arith.constant 0 : i32
    return %c0_i32, %c0_i32_0 : i32, i32
  }
  func.func @transform_5(%arg0: i32, %arg1: i32, %arg2: i32) -> (i32, i32) {
    %c0_i32 = arith.constant 0 : i32
    %c0_i32_0 = arith.constant 0 : i32
    %c0_i32_1 = arith.constant 0 : i32
    return %c0_i32, %c0_i32_0 : i32, i32
  }
  func.func @transform_6(%arg0: i32, %arg1: i32, %arg2: i32) -> (i32, i32) {
    %c0_i32 = arith.constant 0 : i32
    %c0_i32_0 = arith.constant 0 : i32
    %c0_i32_1 = arith.constant 0 : i32
    return %c0_i32, %c0_i32_0 : i32, i32
  }
  func.func @transform_7(%arg0: i32, %arg1: i32, %arg2: i32) -> (i32, i32) {
    %c0_i32 = arith.constant 0 : i32
    %c0_i32_0 = arith.constant 0 : i32
    %c0_i32_1 = arith.constant 0 : i32
    return %c0_i32, %c0_i32_0 : i32, i32
  }
  func.func @transform_8(%arg0: i32, %arg1: i32, %arg2: i32) -> (i32, i32) {
    %c0_i32 = arith.constant 0 : i32
    %c0_i32_0 = arith.constant 0 : i32
    %c0_i32_1 = arith.constant 0 : i32
    return %c0_i32, %c0_i32_0 : i32, i32
  }
  func.func @transform_9(%arg0: i32, %arg1: i32, %arg2: i32) -> (i32, i32) {
    %c0_i32 = arith.constant 0 : i32
    %c0_i32_0 = arith.constant 0 : i32
    %c0_i32_1 = arith.constant 0 : i32
    return %c0_i32, %c0_i32_0 : i32, i32
  }
  func.func @transform_10(%arg0: i32, %arg1: i32, %arg2: i32) -> (i32, i32, i32) {
    %0 = arith.muli %arg1, %arg2 : i32
    %c0_i32 = arith.constant 0 : i32
    %c0_i32_0 = arith.constant 0 : i32
    return %arg0, %0, %c0_i32 : i32, i32, i32
  }
}

module attributes {stable_mosaic.version = 11 : i64} {
  func.func @_dwconv_kernel(%arg0: i32, %arg1: memref<1x4x4x128xbf16, #tpu.memory_space<vmem>>, %arg2: memref<49x128xf32, #tpu.memory_space<vmem>>, %arg3: memref<1x128xf32, #tpu.memory_space<vmem>>, %arg4: memref<1x4x4x128xbf16, #tpu.memory_space<vmem>>, %arg5: memref<10x10x128xf32, #tpu.memory_space<vmem>>) attributes {dimension_semantics = [#tpu.dimension_semantics<parallel>], iteration_bounds = array<i64: 2>, scalar_prefetch = 0 : i64, scratch_operands = 1 : i64, tpu.core_type = #tpu.core_type<tc>, window_params = [{transform_indices = @transform_0, window_bounds = array<i64: 1, 4, 4, 128>}, {pipeline_mode = #tpu.pipeline_mode<synchronous>, transform_indices = @transform_1, window_bounds = array<i64: 49, 128>}, {pipeline_mode = #tpu.pipeline_mode<synchronous>, transform_indices = @transform_2, window_bounds = array<i64: 1, 128>}, {transform_indices = @transform_3, window_bounds = array<i64: 1, 4, 4, 128>}]} {
    %cst = arith.constant 0.000000e+00 : f32
    %0 = vector.broadcast %cst : f32 to vector<3x10x128xf32>
    %c0 = arith.constant 0 : index
    %c0_0 = arith.constant 0 : index
    %c0_1 = arith.constant 0 : index
    %1 = vector.load %arg5[%c0, %c0_0, %c0_1] : memref<10x10x128xf32, #tpu.memory_space<vmem>>, vector<3x10x128xf32>
    tpu.vector_store %arg5[%c0, %c0_0, %c0_1], %0 {strides = array<i32>} : memref<10x10x128xf32, #tpu.memory_space<vmem>>, vector<3x10x128xf32>,
    %cst_2 = arith.constant 0.000000e+00 : f32
    %2 = vector.broadcast %cst_2 : f32 to vector<3x10x128xf32>
    %c7 = arith.constant 7 : index
    %c0_3 = arith.constant 0 : index
    %c0_4 = arith.constant 0 : index
    %3 = vector.load %arg5[%c7, %c0_3, %c0_4] : memref<10x10x128xf32, #tpu.memory_space<vmem>>, vector<3x10x128xf32>
    tpu.vector_store %arg5[%c7, %c0_3, %c0_4], %2 {strides = array<i32>} : memref<10x10x128xf32, #tpu.memory_space<vmem>>, vector<3x10x128xf32>,
    %cst_5 = arith.constant 0.000000e+00 : f32
    %4 = vector.broadcast %cst_5 : f32 to vector<4x3x128xf32>
    %c3 = arith.constant 3 : index
    %c0_6 = arith.constant 0 : index
    %c0_7 = arith.constant 0 : index
    %5 = vector.load %arg5[%c3, %c0_6, %c0_7] : memref<10x10x128xf32, #tpu.memory_space<vmem>>, vector<4x3x128xf32>
    tpu.vector_store %arg5[%c3, %c0_6, %c0_7], %4 {strides = array<i32>} : memref<10x10x128xf32, #tpu.memory_space<vmem>>, vector<4x3x128xf32>,
    %cst_8 = arith.constant 0.000000e+00 : f32
    %6 = vector.broadcast %cst_8 : f32 to vector<4x3x128xf32>
    %c3_9 = arith.constant 3 : index
    %c7_10 = arith.constant 7 : index
    %c0_11 = arith.constant 0 : index
    %7 = vector.load %arg5[%c3_9, %c7_10, %c0_11] : memref<10x10x128xf32, #tpu.memory_space<vmem>>, vector<4x3x128xf32>
    tpu.vector_store %arg5[%c3_9, %c7_10, %c0_11], %6 {strides = array<i32>} : memref<10x10x128xf32, #tpu.memory_space<vmem>>, vector<4x3x128xf32>,
    %c0_12 = arith.constant 0 : index
    %c0_13 = arith.constant 0 : index
    %c0_14 = arith.constant 0 : index
    %c0_15 = arith.constant 0 : index
    %8 = vector.load %arg1[%c0_12, %c0_13, %c0_14, %c0_15] : memref<1x4x4x128xbf16, #tpu.memory_space<vmem>>, vector<1x4x4x128xbf16>
    %9 = vector.shape_cast %8 : vector<1x4x4x128xbf16> to vector<4x4x128xbf16>
    %10 = arith.extf %9 : vector<4x4x128xbf16> to vector<4x4x128xf32>
    %c3_16 = arith.constant 3 : index
    %c3_17 = arith.constant 3 : index
    %c0_18 = arith.constant 0 : index
    %11 = vector.load %arg5[%c3_16, %c3_17, %c0_18] : memref<10x10x128xf32, #tpu.memory_space<vmem>>, vector<4x4x128xf32>
    tpu.vector_store %arg5[%c3_16, %c3_17, %c0_18], %10 {strides = array<i32>} : memref<10x10x128xf32, #tpu.memory_space<vmem>>, vector<4x4x128xf32>,
    %c0_19 = arith.constant 0 : index
    %c0_20 = arith.constant 0 : index
    %12 = vector.load %arg2[%c0_19, %c0_20] : memref<49x128xf32, #tpu.memory_space<vmem>>, vector<49x128xf32>
    %c0_21 = arith.constant 0 : index
    %c0_22 = arith.constant 0 : index
    %c0_23 = arith.constant 0 : index
    %13 = vector.load %arg5[%c0_21, %c0_22, %c0_23] : memref<10x10x128xf32, #tpu.memory_space<vmem>>, vector<4x4x128xf32>
    %14 = vector.extract_strided_slice %12 {offsets = [0, 0], sizes = [1, 128], strides = [1, 1]} : vector<49x128xf32> to vector<1x128xf32>
    %15 = vector.shape_cast %14 : vector<1x128xf32> to vector<128xf32>
    %16 = vector.shape_cast %15 : vector<128xf32> to vector<1x1x128xf32>
    %17 = vector.broadcast %16 : vector<1x1x128xf32> to vector<4x4x128xf32>
    %18 = arith.mulf %13, %17 : vector<4x4x128xf32>
    %c0_24 = arith.constant 0 : index
    %c1 = arith.constant 1 : index
    %c0_25 = arith.constant 0 : index
    %19 = vector.load %arg5[%c0_24, %c1, %c0_25] : memref<10x10x128xf32, #tpu.memory_space<vmem>>, vector<4x4x128xf32>
    %20 = vector.extract_strided_slice %12 {offsets = [1, 0], sizes = [1, 128], strides = [1, 1]} : vector<49x128xf32> to vector<1x128xf32>
    %21 = vector.shape_cast %20 : vector<1x128xf32> to vector<128xf32>
    %22 = vector.shape_cast %21 : vector<128xf32> to vector<1x1x128xf32>
    %23 = vector.broadcast %22 : vector<1x1x128xf32> to vector<4x4x128xf32>
    %24 = arith.mulf %19, %23 : vector<4x4x128xf32>
    %c0_26 = arith.constant 0 : index
    %c2 = arith.constant 2 : index
    %c0_27 = arith.constant 0 : index
    %25 = vector.load %arg5[%c0_26, %c2, %c0_27] : memref<10x10x128xf32, #tpu.memory_space<vmem>>, vector<4x4x128xf32>
    %26 = vector.extract_strided_slice %12 {offsets = [2, 0], sizes = [1, 128], strides = [1, 1]} : vector<49x128xf32> to vector<1x128xf32>
    %27 = vector.shape_cast %26 : vector<1x128xf32> to vector<128xf32>
    %28 = vector.shape_cast %27 : vector<128xf32> to vector<1x1x128xf32>
    %29 = vector.broadcast %28 : vector<1x1x128xf32> to vector<4x4x128xf32>
    %30 = arith.mulf %25, %29 : vector<4x4x128xf32>
    %c0_28 = arith.constant 0 : index
    %c3_29 = arith.constant 3 : index
    %c0_30 = arith.constant 0 : index
    %31 = vector.load %arg5[%c0_28, %c3_29, %c0_30] : memref<10x10x128xf32, #tpu.memory_space<vmem>>, vector<4x4x128xf32>
    %32 = vector.extract_strided_slice %12 {offsets = [3, 0], sizes = [1, 128], strides = [1, 1]} : vector<49x128xf32> to vector<1x128xf32>
    %33 = vector.shape_cast %32 : vector<1x128xf32> to vector<128xf32>
    %34 = vector.shape_cast %33 : vector<128xf32> to vector<1x1x128xf32>
    %35 = vector.broadcast %34 : vector<1x1x128xf32> to vector<4x4x128xf32>
    %36 = arith.mulf %31, %35 : vector<4x4x128xf32>
    %c0_31 = arith.constant 0 : index
    %c4 = arith.constant 4 : index
    %c0_32 = arith.constant 0 : index
    %37 = vector.load %arg5[%c0_31, %c4, %c0_32] : memref<10x10x128xf32, #tpu.memory_space<vmem>>, vector<4x4x128xf32>
    %38 = vector.extract_strided_slice %12 {offsets = [4, 0], sizes = [1, 128], strides = [1, 1]} : vector<49x128xf32> to vector<1x128xf32>
    %39 = vector.shape_cast %38 : vector<1x128xf32> to vector<128xf32>
    %40 = vector.shape_cast %39 : vector<128xf32> to vector<1x1x128xf32>
    %41 = vector.broadcast %40 : vector<1x1x128xf32> to vector<4x4x128xf32>
    %42 = arith.mulf %37, %41 : vector<4x4x128xf32>
    %43 = arith.addf %18, %42 : vector<4x4x128xf32>
    %c0_33 = arith.constant 0 : index
    %c5 = arith.constant 5 : index
    %c0_34 = arith.constant 0 : index
    %44 = vector.load %arg5[%c0_33, %c5, %c0_34] : memref<10x10x128xf32, #tpu.memory_space<vmem>>, vector<4x4x128xf32>
    %45 = vector.extract_strided_slice %12 {offsets = [5, 0], sizes = [1, 128], strides = [1, 1]} : vector<49x128xf32> to vector<1x128xf32>
    %46 = vector.shape_cast %45 : vector<1x128xf32> to vector<128xf32>
    %47 = vector.shape_cast %46 : vector<128xf32> to vector<1x1x128xf32>
    %48 = vector.broadcast %47 : vector<1x1x128xf32> to vector<4x4x128xf32>
    %49 = arith.mulf %44, %48 : vector<4x4x128xf32>
    %50 = arith.addf %24, %49 : vector<4x4x128xf32>
    %c0_35 = arith.constant 0 : index
    %c6 = arith.constant 6 : index
    %c0_36 = arith.constant 0 : index
    %51 = vector.load %arg5[%c0_35, %c6, %c0_36] : memref<10x10x128xf32, #tpu.memory_space<vmem>>, vector<4x4x128xf32>
    %52 = vector.extract_strided_slice %12 {offsets = [6, 0], sizes = [1, 128], strides = [1, 1]} : vector<49x128xf32> to vector<1x128xf32>
    %53 = vector.shape_cast %52 : vector<1x128xf32> to vector<128xf32>
    %54 = vector.shape_cast %53 : vector<128xf32> to vector<1x1x128xf32>
    %55 = vector.broadcast %54 : vector<1x1x128xf32> to vector<4x4x128xf32>
    %56 = arith.mulf %51, %55 : vector<4x4x128xf32>
    %57 = arith.addf %30, %56 : vector<4x4x128xf32>
    %c1_37 = arith.constant 1 : index
    %c0_38 = arith.constant 0 : index
    %c0_39 = arith.constant 0 : index
    %58 = vector.load %arg5[%c1_37, %c0_38, %c0_39] : memref<10x10x128xf32, #tpu.memory_space<vmem>>, vector<4x4x128xf32>
    %59 = vector.extract_strided_slice %12 {offsets = [7, 0], sizes = [1, 128], strides = [1, 1]} : vector<49x128xf32> to vector<1x128xf32>
    %60 = vector.shape_cast %59 : vector<1x128xf32> to vector<128xf32>
    %61 = vector.shape_cast %60 : vector<128xf32> to vector<1x1x128xf32>
    %62 = vector.broadcast %61 : vector<1x1x128xf32> to vector<4x4x128xf32>
    %63 = arith.mulf %58, %62 : vector<4x4x128xf32>
    %64 = arith.addf %36, %63 : vector<4x4x128xf32>
    %c1_40 = arith.constant 1 : index
    %c1_41 = arith.constant 1 : index
    %c0_42 = arith.constant 0 : index
    %65 = vector.load %arg5[%c1_40, %c1_41, %c0_42] : memref<10x10x128xf32, #tpu.memory_space<vmem>>, vector<4x4x128xf32>
    %66 = vector.extract_strided_slice %12 {offsets = [8, 0], sizes = [1, 128], strides = [1, 1]} : vector<49x128xf32> to vector<1x128xf32>
    %67 = vector.shape_cast %66 : vector<1x128xf32> to vector<128xf32>
    %68 = vector.shape_cast %67 : vector<128xf32> to vector<1x1x128xf32>
    %69 = vector.broadcast %68 : vector<1x1x128xf32> to vector<4x4x128xf32>
    %70 = arith.mulf %65, %69 : vector<4x4x128xf32>
    %71 = arith.addf %43, %70 : vector<4x4x128xf32>
    %c1_43 = arith.constant 1 : index
    %c2_44 = arith.constant 2 : index
    %c0_45 = arith.constant 0 : index
    %72 = vector.load %arg5[%c1_43, %c2_44, %c0_45] : memref<10x10x128xf32, #tpu.memory_space<vmem>>, vector<4x4x128xf32>
    %73 = vector.extract_strided_slice %12 {offsets = [9, 0], sizes = [1, 128], strides = [1, 1]} : vector<49x128xf32> to vector<1x128xf32>
    %74 = vector.shape_cast %73 : vector<1x128xf32> to vector<128xf32>
    %75 = vector.shape_cast %74 : vector<128xf32> to vector<1x1x128xf32>
    %76 = vector.broadcast %75 : vector<1x1x128xf32> to vector<4x4x128xf32>
    %77 = arith.mulf %72, %76 : vector<4x4x128xf32>
    %78 = arith.addf %50, %77 : vector<4x4x128xf32>
    %c1_46 = arith.constant 1 : index
    %c3_47 = arith.constant 3 : index
    %c0_48 = arith.constant 0 : index
    %79 = vector.load %arg5[%c1_46, %c3_47, %c0_48] : memref<10x10x128xf32, #tpu.memory_space<vmem>>, vector<4x4x128xf32>
    %80 = vector.extract_strided_slice %12 {offsets = [10, 0], sizes = [1, 128], strides = [1, 1]} : vector<49x128xf32> to vector<1x128xf32>
    %81 = vector.shape_cast %80 : vector<1x128xf32> to vector<128xf32>
    %82 = vector.shape_cast %81 : vector<128xf32> to vector<1x1x128xf32>
    %83 = vector.broadcast %82 : vector<1x1x128xf32> to vector<4x4x128xf32>
    %84 = arith.mulf %79, %83 : vector<4x4x128xf32>
    %85 = arith.addf %57, %84 : vector<4x4x128xf32>
    %c1_49 = arith.constant 1 : index
    %c4_50 = arith.constant 4 : index
    %c0_51 = arith.constant 0 : index
    %86 = vector.load %arg5[%c1_49, %c4_50, %c0_51] : memref<10x10x128xf32, #tpu.memory_space<vmem>>, vector<4x4x128xf32>
    %87 = vector.extract_strided_slice %12 {offsets = [11, 0], sizes = [1, 128], strides = [1, 1]} : vector<49x128xf32> to vector<1x128xf32>
    %88 = vector.shape_cast %87 : vector<1x128xf32> to vector<128xf32>
    %89 = vector.shape_cast %88 : vector<128xf32> to vector<1x1x128xf32>
    %90 = vector.broadcast %89 : vector<1x1x128xf32> to vector<4x4x128xf32>
    %91 = arith.mulf %86, %90 : vector<4x4x128xf32>
    %92 = arith.addf %64, %91 : vector<4x4x128xf32>
    %c1_52 = arith.constant 1 : index
    %c5_53 = arith.constant 5 : index
    %c0_54 = arith.constant 0 : index
    %93 = vector.load %arg5[%c1_52, %c5_53, %c0_54] : memref<10x10x128xf32, #tpu.memory_space<vmem>>, vector<4x4x128xf32>
    %94 = vector.extract_strided_slice %12 {offsets = [12, 0], sizes = [1, 128], strides = [1, 1]} : vector<49x128xf32> to vector<1x128xf32>
    %95 = vector.shape_cast %94 : vector<1x128xf32> to vector<128xf32>
    %96 = vector.shape_cast %95 : vector<128xf32> to vector<1x1x128xf32>
    %97 = vector.broadcast %96 : vector<1x1x128xf32> to vector<4x4x128xf32>
    %98 = arith.mulf %93, %97 : vector<4x4x128xf32>
    %99 = arith.addf %71, %98 : vector<4x4x128xf32>
    %c1_55 = arith.constant 1 : index
    %c6_56 = arith.constant 6 : index
    %c0_57 = arith.constant 0 : index
    %100 = vector.load %arg5[%c1_55, %c6_56, %c0_57] : memref<10x10x128xf32, #tpu.memory_space<vmem>>, vector<4x4x128xf32>
    %101 = vector.extract_strided_slice %12 {offsets = [13, 0], sizes = [1, 128], strides = [1, 1]} : vector<49x128xf32> to vector<1x128xf32>
    %102 = vector.shape_cast %101 : vector<1x128xf32> to vector<128xf32>
    %103 = vector.shape_cast %102 : vector<128xf32> to vector<1x1x128xf32>
    %104 = vector.broadcast %103 : vector<1x1x128xf32> to vector<4x4x128xf32>
    %105 = arith.mulf %100, %104 : vector<4x4x128xf32>
    %106 = arith.addf %78, %105 : vector<4x4x128xf32>
    %c2_58 = arith.constant 2 : index
    %c0_59 = arith.constant 0 : index
    %c0_60 = arith.constant 0 : index
    %107 = vector.load %arg5[%c2_58, %c0_59, %c0_60] : memref<10x10x128xf32, #tpu.memory_space<vmem>>, vector<4x4x128xf32>
    %108 = vector.extract_strided_slice %12 {offsets = [14, 0], sizes = [1, 128], strides = [1, 1]} : vector<49x128xf32> to vector<1x128xf32>
    %109 = vector.shape_cast %108 : vector<1x128xf32> to vector<128xf32>
    %110 = vector.shape_cast %109 : vector<128xf32> to vector<1x1x128xf32>
    %111 = vector.broadcast %110 : vector<1x1x128xf32> to vector<4x4x128xf32>
    %112 = arith.mulf %107, %111 : vector<4x4x128xf32>
    %113 = arith.addf %85, %112 : vector<4x4x128xf32>
    %c2_61 = arith.constant 2 : index
    %c1_62 = arith.constant 1 : index
    %c0_63 = arith.constant 0 : index
    %114 = vector.load %arg5[%c2_61, %c1_62, %c0_63] : memref<10x10x128xf32, #tpu.memory_space<vmem>>, vector<4x4x128xf32>
    %115 = vector.extract_strided_slice %12 {offsets = [15, 0], sizes = [1, 128], strides = [1, 1]} : vector<49x128xf32> to vector<1x128xf32>
    %116 = vector.shape_cast %115 : vector<1x128xf32> to vector<128xf32>
    %117 = vector.shape_cast %116 : vector<128xf32> to vector<1x1x128xf32>
    %118 = vector.broadcast %117 : vector<1x1x128xf32> to vector<4x4x128xf32>
    %119 = arith.mulf %114, %118 : vector<4x4x128xf32>
    %120 = arith.addf %92, %119 : vector<4x4x128xf32>
    %c2_64 = arith.constant 2 : index
    %c2_65 = arith.constant 2 : index
    %c0_66 = arith.constant 0 : index
    %121 = vector.load %arg5[%c2_64, %c2_65, %c0_66] : memref<10x10x128xf32, #tpu.memory_space<vmem>>, vector<4x4x128xf32>
    %122 = vector.extract_strided_slice %12 {offsets = [16, 0], sizes = [1, 128], strides = [1, 1]} : vector<49x128xf32> to vector<1x128xf32>
    %123 = vector.shape_cast %122 : vector<1x128xf32> to vector<128xf32>
    %124 = vector.shape_cast %123 : vector<128xf32> to vector<1x1x128xf32>
    %125 = vector.broadcast %124 : vector<1x1x128xf32> to vector<4x4x128xf32>
    %126 = arith.mulf %121, %125 : vector<4x4x128xf32>
    %127 = arith.addf %99, %126 : vector<4x4x128xf32>
    %c2_67 = arith.constant 2 : index
    %c3_68 = arith.constant 3 : index
    %c0_69 = arith.constant 0 : index
    %128 = vector.load %arg5[%c2_67, %c3_68, %c0_69] : memref<10x10x128xf32, #tpu.memory_space<vmem>>, vector<4x4x128xf32>
    %129 = vector.extract_strided_slice %12 {offsets = [17, 0], sizes = [1, 128], strides = [1, 1]} : vector<49x128xf32> to vector<1x128xf32>
    %130 = vector.shape_cast %129 : vector<1x128xf32> to vector<128xf32>
    %131 = vector.shape_cast %130 : vector<128xf32> to vector<1x1x128xf32>
    %132 = vector.broadcast %131 : vector<1x1x128xf32> to vector<4x4x128xf32>
    %133 = arith.mulf %128, %132 : vector<4x4x128xf32>
    %134 = arith.addf %106, %133 : vector<4x4x128xf32>
    %c2_70 = arith.constant 2 : index
    %c4_71 = arith.constant 4 : index
    %c0_72 = arith.constant 0 : index
    %135 = vector.load %arg5[%c2_70, %c4_71, %c0_72] : memref<10x10x128xf32, #tpu.memory_space<vmem>>, vector<4x4x128xf32>
    %136 = vector.extract_strided_slice %12 {offsets = [18, 0], sizes = [1, 128], strides = [1, 1]} : vector<49x128xf32> to vector<1x128xf32>
    %137 = vector.shape_cast %136 : vector<1x128xf32> to vector<128xf32>
    %138 = vector.shape_cast %137 : vector<128xf32> to vector<1x1x128xf32>
    %139 = vector.broadcast %138 : vector<1x1x128xf32> to vector<4x4x128xf32>
    %140 = arith.mulf %135, %139 : vector<4x4x128xf32>
    %141 = arith.addf %113, %140 : vector<4x4x128xf32>
    %c2_73 = arith.constant 2 : index
    %c5_74 = arith.constant 5 : index
    %c0_75 = arith.constant 0 : index
    %142 = vector.load %arg5[%c2_73, %c5_74, %c0_75] : memref<10x10x128xf32, #tpu.memory_space<vmem>>, vector<4x4x128xf32>
    %143 = vector.extract_strided_slice %12 {offsets = [19, 0], sizes = [1, 128], strides = [1, 1]} : vector<49x128xf32> to vector<1x128xf32>
    %144 = vector.shape_cast %143 : vector<1x128xf32> to vector<128xf32>
    %145 = vector.shape_cast %144 : vector<128xf32> to vector<1x1x128xf32>
    %146 = vector.broadcast %145 : vector<1x1x128xf32> to vector<4x4x128xf32>
    %147 = arith.mulf %142, %146 : vector<4x4x128xf32>
    %148 = arith.addf %120, %147 : vector<4x4x128xf32>
    %c2_76 = arith.constant 2 : index
    %c6_77 = arith.constant 6 : index
    %c0_78 = arith.constant 0 : index
    %149 = vector.load %arg5[%c2_76, %c6_77, %c0_78] : memref<10x10x128xf32, #tpu.memory_space<vmem>>, vector<4x4x128xf32>
    %150 = vector.extract_strided_slice %12 {offsets = [20, 0], sizes = [1, 128], strides = [1, 1]} : vector<49x128xf32> to vector<1x128xf32>
    %151 = vector.shape_cast %150 : vector<1x128xf32> to vector<128xf32>
    %152 = vector.shape_cast %151 : vector<128xf32> to vector<1x1x128xf32>
    %153 = vector.broadcast %152 : vector<1x1x128xf32> to vector<4x4x128xf32>
    %154 = arith.mulf %149, %153 : vector<4x4x128xf32>
    %155 = arith.addf %127, %154 : vector<4x4x128xf32>
    %c3_79 = arith.constant 3 : index
    %c0_80 = arith.constant 0 : index
    %c0_81 = arith.constant 0 : index
    %156 = vector.load %arg5[%c3_79, %c0_80, %c0_81] : memref<10x10x128xf32, #tpu.memory_space<vmem>>, vector<4x4x128xf32>
    %157 = vector.extract_strided_slice %12 {offsets = [21, 0], sizes = [1, 128], strides = [1, 1]} : vector<49x128xf32> to vector<1x128xf32>
    %158 = vector.shape_cast %157 : vector<1x128xf32> to vector<128xf32>
    %159 = vector.shape_cast %158 : vector<128xf32> to vector<1x1x128xf32>
    %160 = vector.broadcast %159 : vector<1x1x128xf32> to vector<4x4x128xf32>
    %161 = arith.mulf %156, %160 : vector<4x4x128xf32>
    %162 = arith.addf %134, %161 : vector<4x4x128xf32>
    %c3_82 = arith.constant 3 : index
    %c1_83 = arith.constant 1 : index
    %c0_84 = arith.constant 0 : index
    %163 = vector.load %arg5[%c3_82, %c1_83, %c0_84] : memref<10x10x128xf32, #tpu.memory_space<vmem>>, vector<4x4x128xf32>
    %164 = vector.extract_strided_slice %12 {offsets = [22, 0], sizes = [1, 128], strides = [1, 1]} : vector<49x128xf32> to vector<1x128xf32>
    %165 = vector.shape_cast %164 : vector<1x128xf32> to vector<128xf32>
    %166 = vector.shape_cast %165 : vector<128xf32> to vector<1x1x128xf32>
    %167 = vector.broadcast %166 : vector<1x1x128xf32> to vector<4x4x128xf32>
    %168 = arith.mulf %163, %167 : vector<4x4x128xf32>
    %169 = arith.addf %141, %168 : vector<4x4x128xf32>
    %c3_85 = arith.constant 3 : index
    %c2_86 = arith.constant 2 : index
    %c0_87 = arith.constant 0 : index
    %170 = vector.load %arg5[%c3_85, %c2_86, %c0_87] : memref<10x10x128xf32, #tpu.memory_space<vmem>>, vector<4x4x128xf32>
    %171 = vector.extract_strided_slice %12 {offsets = [23, 0], sizes = [1, 128], strides = [1, 1]} : vector<49x128xf32> to vector<1x128xf32>
    %172 = vector.shape_cast %171 : vector<1x128xf32> to vector<128xf32>
    %173 = vector.shape_cast %172 : vector<128xf32> to vector<1x1x128xf32>
    %174 = vector.broadcast %173 : vector<1x1x128xf32> to vector<4x4x128xf32>
    %175 = arith.mulf %170, %174 : vector<4x4x128xf32>
    %176 = arith.addf %148, %175 : vector<4x4x128xf32>
    %c3_88 = arith.constant 3 : index
    %c3_89 = arith.constant 3 : index
    %c0_90 = arith.constant 0 : index
    %177 = vector.load %arg5[%c3_88, %c3_89, %c0_90] : memref<10x10x128xf32, #tpu.memory_space<vmem>>, vector<4x4x128xf32>
    %178 = vector.extract_strided_slice %12 {offsets = [24, 0], sizes = [1, 128], strides = [1, 1]} : vector<49x128xf32> to vector<1x128xf32>
    %179 = vector.shape_cast %178 : vector<1x128xf32> to vector<128xf32>
    %180 = vector.shape_cast %179 : vector<128xf32> to vector<1x1x128xf32>
    %181 = vector.broadcast %180 : vector<1x1x128xf32> to vector<4x4x128xf32>
    %182 = arith.mulf %177, %181 : vector<4x4x128xf32>
    %183 = arith.addf %155, %182 : vector<4x4x128xf32>
    %c3_91 = arith.constant 3 : index
    %c4_92 = arith.constant 4 : index
    %c0_93 = arith.constant 0 : index
    %184 = vector.load %arg5[%c3_91, %c4_92, %c0_93] : memref<10x10x128xf32, #tpu.memory_space<vmem>>, vector<4x4x128xf32>
    %185 = vector.extract_strided_slice %12 {offsets = [25, 0], sizes = [1, 128], strides = [1, 1]} : vector<49x128xf32> to vector<1x128xf32>
    %186 = vector.shape_cast %185 : vector<1x128xf32> to vector<128xf32>
    %187 = vector.shape_cast %186 : vector<128xf32> to vector<1x1x128xf32>
    %188 = vector.broadcast %187 : vector<1x1x128xf32> to vector<4x4x128xf32>
    %189 = arith.mulf %184, %188 : vector<4x4x128xf32>
    %190 = arith.addf %162, %189 : vector<4x4x128xf32>
    %c3_94 = arith.constant 3 : index
    %c5_95 = arith.constant 5 : index
    %c0_96 = arith.constant 0 : index
    %191 = vector.load %arg5[%c3_94, %c5_95, %c0_96] : memref<10x10x128xf32, #tpu.memory_space<vmem>>, vector<4x4x128xf32>
    %192 = vector.extract_strided_slice %12 {offsets = [26, 0], sizes = [1, 128], strides = [1, 1]} : vector<49x128xf32> to vector<1x128xf32>
    %193 = vector.shape_cast %192 : vector<1x128xf32> to vector<128xf32>
    %194 = vector.shape_cast %193 : vector<128xf32> to vector<1x1x128xf32>
    %195 = vector.broadcast %194 : vector<1x1x128xf32> to vector<4x4x128xf32>
    %196 = arith.mulf %191, %195 : vector<4x4x128xf32>
    %197 = arith.addf %169, %196 : vector<4x4x128xf32>
    %c3_97 = arith.constant 3 : index
    %c6_98 = arith.constant 6 : index
    %c0_99 = arith.constant 0 : index
    %198 = vector.load %arg5[%c3_97, %c6_98, %c0_99] : memref<10x10x128xf32, #tpu.memory_space<vmem>>, vector<4x4x128xf32>
    %199 = vector.extract_strided_slice %12 {offsets = [27, 0], sizes = [1, 128], strides = [1, 1]} : vector<49x128xf32> to vector<1x128xf32>
    %200 = vector.shape_cast %199 : vector<1x128xf32> to vector<128xf32>
    %201 = vector.shape_cast %200 : vector<128xf32> to vector<1x1x128xf32>
    %202 = vector.broadcast %201 : vector<1x1x128xf32> to vector<4x4x128xf32>
    %203 = arith.mulf %198, %202 : vector<4x4x128xf32>
    %204 = arith.addf %176, %203 : vector<4x4x128xf32>
    %c4_100 = arith.constant 4 : index
    %c0_101 = arith.constant 0 : index
    %c0_102 = arith.constant 0 : index
    %205 = vector.load %arg5[%c4_100, %c0_101, %c0_102] : memref<10x10x128xf32, #tpu.memory_space<vmem>>, vector<4x4x128xf32>
    %206 = vector.extract_strided_slice %12 {offsets = [28, 0], sizes = [1, 128], strides = [1, 1]} : vector<49x128xf32> to vector<1x128xf32>
    %207 = vector.shape_cast %206 : vector<1x128xf32> to vector<128xf32>
    %208 = vector.shape_cast %207 : vector<128xf32> to vector<1x1x128xf32>
    %209 = vector.broadcast %208 : vector<1x1x128xf32> to vector<4x4x128xf32>
    %210 = arith.mulf %205, %209 : vector<4x4x128xf32>
    %211 = arith.addf %183, %210 : vector<4x4x128xf32>
    %c4_103 = arith.constant 4 : index
    %c1_104 = arith.constant 1 : index
    %c0_105 = arith.constant 0 : index
    %212 = vector.load %arg5[%c4_103, %c1_104, %c0_105] : memref<10x10x128xf32, #tpu.memory_space<vmem>>, vector<4x4x128xf32>
    %213 = vector.extract_strided_slice %12 {offsets = [29, 0], sizes = [1, 128], strides = [1, 1]} : vector<49x128xf32> to vector<1x128xf32>
    %214 = vector.shape_cast %213 : vector<1x128xf32> to vector<128xf32>
    %215 = vector.shape_cast %214 : vector<128xf32> to vector<1x1x128xf32>
    %216 = vector.broadcast %215 : vector<1x1x128xf32> to vector<4x4x128xf32>
    %217 = arith.mulf %212, %216 : vector<4x4x128xf32>
    %218 = arith.addf %190, %217 : vector<4x4x128xf32>
    %c4_106 = arith.constant 4 : index
    %c2_107 = arith.constant 2 : index
    %c0_108 = arith.constant 0 : index
    %219 = vector.load %arg5[%c4_106, %c2_107, %c0_108] : memref<10x10x128xf32, #tpu.memory_space<vmem>>, vector<4x4x128xf32>
    %220 = vector.extract_strided_slice %12 {offsets = [30, 0], sizes = [1, 128], strides = [1, 1]} : vector<49x128xf32> to vector<1x128xf32>
    %221 = vector.shape_cast %220 : vector<1x128xf32> to vector<128xf32>
    %222 = vector.shape_cast %221 : vector<128xf32> to vector<1x1x128xf32>
    %223 = vector.broadcast %222 : vector<1x1x128xf32> to vector<4x4x128xf32>
    %224 = arith.mulf %219, %223 : vector<4x4x128xf32>
    %225 = arith.addf %197, %224 : vector<4x4x128xf32>
    %c4_109 = arith.constant 4 : index
    %c3_110 = arith.constant 3 : index
    %c0_111 = arith.constant 0 : index
    %226 = vector.load %arg5[%c4_109, %c3_110, %c0_111] : memref<10x10x128xf32, #tpu.memory_space<vmem>>, vector<4x4x128xf32>
    %227 = vector.extract_strided_slice %12 {offsets = [31, 0], sizes = [1, 128], strides = [1, 1]} : vector<49x128xf32> to vector<1x128xf32>
    %228 = vector.shape_cast %227 : vector<1x128xf32> to vector<128xf32>
    %229 = vector.shape_cast %228 : vector<128xf32> to vector<1x1x128xf32>
    %230 = vector.broadcast %229 : vector<1x1x128xf32> to vector<4x4x128xf32>
    %231 = arith.mulf %226, %230 : vector<4x4x128xf32>
    %232 = arith.addf %204, %231 : vector<4x4x128xf32>
    %c4_112 = arith.constant 4 : index
    %c4_113 = arith.constant 4 : index
    %c0_114 = arith.constant 0 : index
    %233 = vector.load %arg5[%c4_112, %c4_113, %c0_114] : memref<10x10x128xf32, #tpu.memory_space<vmem>>, vector<4x4x128xf32>
    %234 = vector.extract_strided_slice %12 {offsets = [32, 0], sizes = [1, 128], strides = [1, 1]} : vector<49x128xf32> to vector<1x128xf32>
    %235 = vector.shape_cast %234 : vector<1x128xf32> to vector<128xf32>
    %236 = vector.shape_cast %235 : vector<128xf32> to vector<1x1x128xf32>
    %237 = vector.broadcast %236 : vector<1x1x128xf32> to vector<4x4x128xf32>
    %238 = arith.mulf %233, %237 : vector<4x4x128xf32>
    %239 = arith.addf %211, %238 : vector<4x4x128xf32>
    %c4_115 = arith.constant 4 : index
    %c5_116 = arith.constant 5 : index
    %c0_117 = arith.constant 0 : index
    %240 = vector.load %arg5[%c4_115, %c5_116, %c0_117] : memref<10x10x128xf32, #tpu.memory_space<vmem>>, vector<4x4x128xf32>
    %241 = vector.extract_strided_slice %12 {offsets = [33, 0], sizes = [1, 128], strides = [1, 1]} : vector<49x128xf32> to vector<1x128xf32>
    %242 = vector.shape_cast %241 : vector<1x128xf32> to vector<128xf32>
    %243 = vector.shape_cast %242 : vector<128xf32> to vector<1x1x128xf32>
    %244 = vector.broadcast %243 : vector<1x1x128xf32> to vector<4x4x128xf32>
    %245 = arith.mulf %240, %244 : vector<4x4x128xf32>
    %246 = arith.addf %218, %245 : vector<4x4x128xf32>
    %c4_118 = arith.constant 4 : index
    %c6_119 = arith.constant 6 : index
    %c0_120 = arith.constant 0 : index
    %247 = vector.load %arg5[%c4_118, %c6_119, %c0_120] : memref<10x10x128xf32, #tpu.memory_space<vmem>>, vector<4x4x128xf32>
    %248 = vector.extract_strided_slice %12 {offsets = [34, 0], sizes = [1, 128], strides = [1, 1]} : vector<49x128xf32> to vector<1x128xf32>
    %249 = vector.shape_cast %248 : vector<1x128xf32> to vector<128xf32>
    %250 = vector.shape_cast %249 : vector<128xf32> to vector<1x1x128xf32>
    %251 = vector.broadcast %250 : vector<1x1x128xf32> to vector<4x4x128xf32>
    %252 = arith.mulf %247, %251 : vector<4x4x128xf32>
    %253 = arith.addf %225, %252 : vector<4x4x128xf32>
    %c5_121 = arith.constant 5 : index
    %c0_122 = arith.constant 0 : index
    %c0_123 = arith.constant 0 : index
    %254 = vector.load %arg5[%c5_121, %c0_122, %c0_123] : memref<10x10x128xf32, #tpu.memory_space<vmem>>, vector<4x4x128xf32>
    %255 = vector.extract_strided_slice %12 {offsets = [35, 0], sizes = [1, 128], strides = [1, 1]} : vector<49x128xf32> to vector<1x128xf32>
    %256 = vector.shape_cast %255 : vector<1x128xf32> to vector<128xf32>
    %257 = vector.shape_cast %256 : vector<128xf32> to vector<1x1x128xf32>
    %258 = vector.broadcast %257 : vector<1x1x128xf32> to vector<4x4x128xf32>
    %259 = arith.mulf %254, %258 : vector<4x4x128xf32>
    %260 = arith.addf %232, %259 : vector<4x4x128xf32>
    %c5_124 = arith.constant 5 : index
    %c1_125 = arith.constant 1 : index
    %c0_126 = arith.constant 0 : index
    %261 = vector.load %arg5[%c5_124, %c1_125, %c0_126] : memref<10x10x128xf32, #tpu.memory_space<vmem>>, vector<4x4x128xf32>
    %262 = vector.extract_strided_slice %12 {offsets = [36, 0], sizes = [1, 128], strides = [1, 1]} : vector<49x128xf32> to vector<1x128xf32>
    %263 = vector.shape_cast %262 : vector<1x128xf32> to vector<128xf32>
    %264 = vector.shape_cast %263 : vector<128xf32> to vector<1x1x128xf32>
    %265 = vector.broadcast %264 : vector<1x1x128xf32> to vector<4x4x128xf32>
    %266 = arith.mulf %261, %265 : vector<4x4x128xf32>
    %267 = arith.addf %239, %266 : vector<4x4x128xf32>
    %c5_127 = arith.constant 5 : index
    %c2_128 = arith.constant 2 : index
    %c0_129 = arith.constant 0 : index
    %268 = vector.load %arg5[%c5_127, %c2_128, %c0_129] : memref<10x10x128xf32, #tpu.memory_space<vmem>>, vector<4x4x128xf32>
    %269 = vector.extract_strided_slice %12 {offsets = [37, 0], sizes = [1, 128], strides = [1, 1]} : vector<49x128xf32> to vector<1x128xf32>
    %270 = vector.shape_cast %269 : vector<1x128xf32> to vector<128xf32>
    %271 = vector.shape_cast %270 : vector<128xf32> to vector<1x1x128xf32>
    %272 = vector.broadcast %271 : vector<1x1x128xf32> to vector<4x4x128xf32>
    %273 = arith.mulf %268, %272 : vector<4x4x128xf32>
    %274 = arith.addf %246, %273 : vector<4x4x128xf32>
    %c5_130 = arith.constant 5 : index
    %c3_131 = arith.constant 3 : index
    %c0_132 = arith.constant 0 : index
    %275 = vector.load %arg5[%c5_130, %c3_131, %c0_132] : memref<10x10x128xf32, #tpu.memory_space<vmem>>, vector<4x4x128xf32>
    %276 = vector.extract_strided_slice %12 {offsets = [38, 0], sizes = [1, 128], strides = [1, 1]} : vector<49x128xf32> to vector<1x128xf32>
    %277 = vector.shape_cast %276 : vector<1x128xf32> to vector<128xf32>
    %278 = vector.shape_cast %277 : vector<128xf32> to vector<1x1x128xf32>
    %279 = vector.broadcast %278 : vector<1x1x128xf32> to vector<4x4x128xf32>
    %280 = arith.mulf %275, %279 : vector<4x4x128xf32>
    %281 = arith.addf %253, %280 : vector<4x4x128xf32>
    %c5_133 = arith.constant 5 : index
    %c4_134 = arith.constant 4 : index
    %c0_135 = arith.constant 0 : index
    %282 = vector.load %arg5[%c5_133, %c4_134, %c0_135] : memref<10x10x128xf32, #tpu.memory_space<vmem>>, vector<4x4x128xf32>
    %283 = vector.extract_strided_slice %12 {offsets = [39, 0], sizes = [1, 128], strides = [1, 1]} : vector<49x128xf32> to vector<1x128xf32>
    %284 = vector.shape_cast %283 : vector<1x128xf32> to vector<128xf32>
    %285 = vector.shape_cast %284 : vector<128xf32> to vector<1x1x128xf32>
    %286 = vector.broadcast %285 : vector<1x1x128xf32> to vector<4x4x128xf32>
    %287 = arith.mulf %282, %286 : vector<4x4x128xf32>
    %288 = arith.addf %260, %287 : vector<4x4x128xf32>
    %c5_136 = arith.constant 5 : index
    %c5_137 = arith.constant 5 : index
    %c0_138 = arith.constant 0 : index
    %289 = vector.load %arg5[%c5_136, %c5_137, %c0_138] : memref<10x10x128xf32, #tpu.memory_space<vmem>>, vector<4x4x128xf32>
    %290 = vector.extract_strided_slice %12 {offsets = [40, 0], sizes = [1, 128], strides = [1, 1]} : vector<49x128xf32> to vector<1x128xf32>
    %291 = vector.shape_cast %290 : vector<1x128xf32> to vector<128xf32>
    %292 = vector.shape_cast %291 : vector<128xf32> to vector<1x1x128xf32>
    %293 = vector.broadcast %292 : vector<1x1x128xf32> to vector<4x4x128xf32>
    %294 = arith.mulf %289, %293 : vector<4x4x128xf32>
    %295 = arith.addf %267, %294 : vector<4x4x128xf32>
    %c5_139 = arith.constant 5 : index
    %c6_140 = arith.constant 6 : index
    %c0_141 = arith.constant 0 : index
    %296 = vector.load %arg5[%c5_139, %c6_140, %c0_141] : memref<10x10x128xf32, #tpu.memory_space<vmem>>, vector<4x4x128xf32>
    %297 = vector.extract_strided_slice %12 {offsets = [41, 0], sizes = [1, 128], strides = [1, 1]} : vector<49x128xf32> to vector<1x128xf32>
    %298 = vector.shape_cast %297 : vector<1x128xf32> to vector<128xf32>
    %299 = vector.shape_cast %298 : vector<128xf32> to vector<1x1x128xf32>
    %300 = vector.broadcast %299 : vector<1x1x128xf32> to vector<4x4x128xf32>
    %301 = arith.mulf %296, %300 : vector<4x4x128xf32>
    %302 = arith.addf %274, %301 : vector<4x4x128xf32>
    %c6_142 = arith.constant 6 : index
    %c0_143 = arith.constant 0 : index
    %c0_144 = arith.constant 0 : index
    %303 = vector.load %arg5[%c6_142, %c0_143, %c0_144] : memref<10x10x128xf32, #tpu.memory_space<vmem>>, vector<4x4x128xf32>
    %304 = vector.extract_strided_slice %12 {offsets = [42, 0], sizes = [1, 128], strides = [1, 1]} : vector<49x128xf32> to vector<1x128xf32>
    %305 = vector.shape_cast %304 : vector<1x128xf32> to vector<128xf32>
    %306 = vector.shape_cast %305 : vector<128xf32> to vector<1x1x128xf32>
    %307 = vector.broadcast %306 : vector<1x1x128xf32> to vector<4x4x128xf32>
    %308 = arith.mulf %303, %307 : vector<4x4x128xf32>
    %309 = arith.addf %281, %308 : vector<4x4x128xf32>
    %c6_145 = arith.constant 6 : index
    %c1_146 = arith.constant 1 : index
    %c0_147 = arith.constant 0 : index
    %310 = vector.load %arg5[%c6_145, %c1_146, %c0_147] : memref<10x10x128xf32, #tpu.memory_space<vmem>>, vector<4x4x128xf32>
    %311 = vector.extract_strided_slice %12 {offsets = [43, 0], sizes = [1, 128], strides = [1, 1]} : vector<49x128xf32> to vector<1x128xf32>
    %312 = vector.shape_cast %311 : vector<1x128xf32> to vector<128xf32>
    %313 = vector.shape_cast %312 : vector<128xf32> to vector<1x1x128xf32>
    %314 = vector.broadcast %313 : vector<1x1x128xf32> to vector<4x4x128xf32>
    %315 = arith.mulf %310, %314 : vector<4x4x128xf32>
    %316 = arith.addf %288, %315 : vector<4x4x128xf32>
    %c6_148 = arith.constant 6 : index
    %c2_149 = arith.constant 2 : index
    %c0_150 = arith.constant 0 : index
    %317 = vector.load %arg5[%c6_148, %c2_149, %c0_150] : memref<10x10x128xf32, #tpu.memory_space<vmem>>, vector<4x4x128xf32>
    %318 = vector.extract_strided_slice %12 {offsets = [44, 0], sizes = [1, 128], strides = [1, 1]} : vector<49x128xf32> to vector<1x128xf32>
    %319 = vector.shape_cast %318 : vector<1x128xf32> to vector<128xf32>
    %320 = vector.shape_cast %319 : vector<128xf32> to vector<1x1x128xf32>
    %321 = vector.broadcast %320 : vector<1x1x128xf32> to vector<4x4x128xf32>
    %322 = arith.mulf %317, %321 : vector<4x4x128xf32>
    %323 = arith.addf %295, %322 : vector<4x4x128xf32>
    %c6_151 = arith.constant 6 : index
    %c3_152 = arith.constant 3 : index
    %c0_153 = arith.constant 0 : index
    %324 = vector.load %arg5[%c6_151, %c3_152, %c0_153] : memref<10x10x128xf32, #tpu.memory_space<vmem>>, vector<4x4x128xf32>
    %325 = vector.extract_strided_slice %12 {offsets = [45, 0], sizes = [1, 128], strides = [1, 1]} : vector<49x128xf32> to vector<1x128xf32>
    %326 = vector.shape_cast %325 : vector<1x128xf32> to vector<128xf32>
    %327 = vector.shape_cast %326 : vector<128xf32> to vector<1x1x128xf32>
    %328 = vector.broadcast %327 : vector<1x1x128xf32> to vector<4x4x128xf32>
    %329 = arith.mulf %324, %328 : vector<4x4x128xf32>
    %330 = arith.addf %302, %329 : vector<4x4x128xf32>
    %c6_154 = arith.constant 6 : index
    %c4_155 = arith.constant 4 : index
    %c0_156 = arith.constant 0 : index
    %331 = vector.load %arg5[%c6_154, %c4_155, %c0_156] : memref<10x10x128xf32, #tpu.memory_space<vmem>>, vector<4x4x128xf32>
    %332 = vector.extract_strided_slice %12 {offsets = [46, 0], sizes = [1, 128], strides = [1, 1]} : vector<49x128xf32> to vector<1x128xf32>
    %333 = vector.shape_cast %332 : vector<1x128xf32> to vector<128xf32>
    %334 = vector.shape_cast %333 : vector<128xf32> to vector<1x1x128xf32>
    %335 = vector.broadcast %334 : vector<1x1x128xf32> to vector<4x4x128xf32>
    %336 = arith.mulf %331, %335 : vector<4x4x128xf32>
    %337 = arith.addf %309, %336 : vector<4x4x128xf32>
    %c6_157 = arith.constant 6 : index
    %c5_158 = arith.constant 5 : index
    %c0_159 = arith.constant 0 : index
    %338 = vector.load %arg5[%c6_157, %c5_158, %c0_159] : memref<10x10x128xf32, #tpu.memory_space<vmem>>, vector<4x4x128xf32>
    %339 = vector.extract_strided_slice %12 {offsets = [47, 0], sizes = [1, 128], strides = [1, 1]} : vector<49x128xf32> to vector<1x128xf32>
    %340 = vector.shape_cast %339 : vector<1x128xf32> to vector<128xf32>
    %341 = vector.shape_cast %340 : vector<128xf32> to vector<1x1x128xf32>
    %342 = vector.broadcast %341 : vector<1x1x128xf32> to vector<4x4x128xf32>
    %343 = arith.mulf %338, %342 : vector<4x4x128xf32>
    %344 = arith.addf %316, %343 : vector<4x4x128xf32>
    %c6_160 = arith.constant 6 : index
    %c6_161 = arith.constant 6 : index
    %c0_162 = arith.constant 0 : index
    %345 = vector.load %arg5[%c6_160, %c6_161, %c0_162] : memref<10x10x128xf32, #tpu.memory_space<vmem>>, vector<4x4x128xf32>
    %346 = vector.extract_strided_slice %12 {offsets = [48, 0], sizes = [1, 128], strides = [1, 1]} : vector<49x128xf32> to vector<1x128xf32>
    %347 = vector.shape_cast %346 : vector<1x128xf32> to vector<128xf32>
    %348 = vector.shape_cast %347 : vector<128xf32> to vector<1x1x128xf32>
    %349 = vector.broadcast %348 : vector<1x1x128xf32> to vector<4x4x128xf32>
    %350 = arith.mulf %345, %349 : vector<4x4x128xf32>
    %351 = arith.addf %323, %350 : vector<4x4x128xf32>
    %352 = arith.addf %351, %330 : vector<4x4x128xf32>
    %353 = arith.addf %337, %344 : vector<4x4x128xf32>
    %354 = arith.addf %352, %353 : vector<4x4x128xf32>
    %c0_163 = arith.constant 0 : index
    %c0_164 = arith.constant 0 : index
    %355 = vector.load %arg3[%c0_163, %c0_164] : memref<1x128xf32, #tpu.memory_space<vmem>>, vector<1x128xf32>
    %356 = vector.shape_cast %355 : vector<1x128xf32> to vector<1x1x128xf32>
    %357 = vector.broadcast %356 : vector<1x1x128xf32> to vector<4x4x128xf32>
    %358 = arith.addf %354, %357 : vector<4x4x128xf32>
    %359 = arith.truncf %358 : vector<4x4x128xf32> to vector<4x4x128xbf16>
    %c0_165 = arith.constant 0 : index
    %c0_166 = arith.constant 0 : index
    %c0_167 = arith.constant 0 : index
    %c0_168 = arith.constant 0 : index
    %360 = vector.load %arg4[%c0_165, %c0_166, %c0_167, %c0_168] : memref<1x4x4x128xbf16, #tpu.memory_space<vmem>>, vector<1x4x4x128xbf16>
    %361 = vector.shape_cast %360 : vector<1x4x4x128xbf16> to vector<4x4x128xbf16>
    %362 = vector.shape_cast %359 : vector<4x4x128xbf16> to vector<1x4x4x128xbf16>
    tpu.vector_store %arg4[%c0_165, %c0_166, %c0_167, %c0_168], %362 {strides = array<i32>} : memref<1x4x4x128xbf16, #tpu.memory_space<vmem>>, vector<1x4x4x128xbf16>,
    return
  }
  func.func @transform_0(%arg0: i32) -> (i32, i32, i32, i32) {
    %c0_i32 = arith.constant 0 : i32
    %c0_i32_0 = arith.constant 0 : i32
    %c0_i32_1 = arith.constant 0 : i32
    %c0_i32_2 = arith.constant 0 : i32
    return %arg0, %c0_i32, %c0_i32_0, %c0_i32_1 : i32, i32, i32, i32
  }
  func.func @transform_1(%arg0: i32) -> (i32, i32) {
    %c0_i32 = arith.constant 0 : i32
    %c0_i32_0 = arith.constant 0 : i32
    %c0_i32_1 = arith.constant 0 : i32
    return %c0_i32, %c0_i32_0 : i32, i32
  }
  func.func @transform_2(%arg0: i32) -> (i32, i32) {
    %c0_i32 = arith.constant 0 : i32
    %c0_i32_0 = arith.constant 0 : i32
    %c0_i32_1 = arith.constant 0 : i32
    return %c0_i32, %c0_i32_0 : i32, i32
  }
  func.func @transform_3(%arg0: i32) -> (i32, i32, i32, i32) {
    %c0_i32 = arith.constant 0 : i32
    %c0_i32_0 = arith.constant 0 : i32
    %c0_i32_1 = arith.constant 0 : i32
    %c0_i32_2 = arith.constant 0 : i32
    return %arg0, %c0_i32, %c0_i32_0, %c0_i32_1 : i32, i32, i32, i32
  }
}

module attributes {stable_mosaic.version = 11 : i64} {
  func.func @_matmul_bias_kernel(%arg0: i32, %arg1: memref<8x512xbf16, #tpu.memory_space<vmem>>, %arg2: memref<512x128xbf16, #tpu.memory_space<vmem>>, %arg3: memref<1x128xf32, #tpu.memory_space<vmem>>, %arg4: memref<8x128xbf16, #tpu.memory_space<vmem>>) attributes {dimension_semantics = [#tpu.dimension_semantics<parallel>], iteration_bounds = array<i64: 1>, scalar_prefetch = 0 : i64, scratch_operands = 0 : i64, tpu.core_type = #tpu.core_type<tc>, window_params = [{transform_indices = @transform_0, window_bounds = array<i64: 8, 512>}, {pipeline_mode = #tpu.pipeline_mode<synchronous>, transform_indices = @transform_1, window_bounds = array<i64: 512, 128>}, {pipeline_mode = #tpu.pipeline_mode<synchronous>, transform_indices = @transform_2, window_bounds = array<i64: 1, 128>}, {transform_indices = @transform_3, window_bounds = array<i64: 8, 128>}]} {
    %c0 = arith.constant 0 : index
    %c0_0 = arith.constant 0 : index
    %0 = vector.load %arg1[%c0, %c0_0] : memref<8x512xbf16, #tpu.memory_space<vmem>>, vector<8x512xbf16>
    %c0_1 = arith.constant 0 : index
    %c0_2 = arith.constant 0 : index
    %1 = vector.load %arg2[%c0_1, %c0_2] : memref<512x128xbf16, #tpu.memory_space<vmem>>, vector<512x128xbf16>
    %cst = arith.constant dense<0.000000e+00> : vector<8x128xf32>
    %2 = tpu.matmul %0, %1, %cst {dimension_numbers = #tpu.dot_dimension_numbers<[1], [0], [0], [1], [0, 0, 1, 1], [], []>} : vector<8x512xbf16>, vector<512x128xbf16>, vector<8x128xf32> -> vector<8x128xf32>
    %c0_3 = arith.constant 0 : index
    %c0_4 = arith.constant 0 : index
    %3 = vector.load %arg3[%c0_3, %c0_4] : memref<1x128xf32, #tpu.memory_space<vmem>>, vector<1x128xf32>
    %4 = vector.broadcast %3 : vector<1x128xf32> to vector<8x128xf32>
    %5 = arith.addf %2, %4 : vector<8x128xf32>
    %6 = arith.truncf %5 : vector<8x128xf32> to vector<8x128xbf16>
    %c0_5 = arith.constant 0 : index
    %c0_6 = arith.constant 0 : index
    %7 = vector.load %arg4[%c0_5, %c0_6] : memref<8x128xbf16, #tpu.memory_space<vmem>>, vector<8x128xbf16>
    tpu.vector_store %arg4[%c0_5, %c0_6], %6 {strides = array<i32>} : memref<8x128xbf16, #tpu.memory_space<vmem>>, vector<8x128xbf16>,
    return
  }
  func.func @transform_0(%arg0: i32) -> (i32, i32) {
    %c0_i32 = arith.constant 0 : i32
    %c0_i32_0 = arith.constant 0 : i32
    return %arg0, %c0_i32 : i32, i32
  }
  func.func @transform_1(%arg0: i32) -> (i32, i32) {
    %c0_i32 = arith.constant 0 : i32
    %c0_i32_0 = arith.constant 0 : i32
    %c0_i32_1 = arith.constant 0 : i32
    return %c0_i32, %c0_i32_0 : i32, i32
  }
  func.func @transform_2(%arg0: i32) -> (i32, i32) {
    %c0_i32 = arith.constant 0 : i32
    %c0_i32_0 = arith.constant 0 : i32
    %c0_i32_1 = arith.constant 0 : i32
    return %c0_i32, %c0_i32_0 : i32, i32
  }
  func.func @transform_3(%arg0: i32) -> (i32, i32) {
    %c0_i32 = arith.constant 0 : i32
    %c0_i32_0 = arith.constant 0 : i32
    return %arg0, %c0_i32 : i32, i32
  }
}

module attributes {stable_mosaic.version = 11 : i64} {
  func.func @_dwconv_kernel(%arg0: i32, %arg1: memref<1x2x2x128xbf16, #tpu.memory_space<vmem>>, %arg2: memref<49x128xf32, #tpu.memory_space<vmem>>, %arg3: memref<1x128xf32, #tpu.memory_space<vmem>>, %arg4: memref<1x2x2x128xbf16, #tpu.memory_space<vmem>>, %arg5: memref<8x8x128xf32, #tpu.memory_space<vmem>>) attributes {dimension_semantics = [#tpu.dimension_semantics<parallel>], iteration_bounds = array<i64: 2>, scalar_prefetch = 0 : i64, scratch_operands = 1 : i64, tpu.core_type = #tpu.core_type<tc>, window_params = [{transform_indices = @transform_0, window_bounds = array<i64: 1, 2, 2, 128>}, {pipeline_mode = #tpu.pipeline_mode<synchronous>, transform_indices = @transform_1, window_bounds = array<i64: 49, 128>}, {pipeline_mode = #tpu.pipeline_mode<synchronous>, transform_indices = @transform_2, window_bounds = array<i64: 1, 128>}, {transform_indices = @transform_3, window_bounds = array<i64: 1, 2, 2, 128>}]} {
    %cst = arith.constant 0.000000e+00 : f32
    %0 = vector.broadcast %cst : f32 to vector<3x8x128xf32>
    %c0 = arith.constant 0 : index
    %c0_0 = arith.constant 0 : index
    %c0_1 = arith.constant 0 : index
    %1 = vector.load %arg5[%c0, %c0_0, %c0_1] : memref<8x8x128xf32, #tpu.memory_space<vmem>>, vector<3x8x128xf32>
    tpu.vector_store %arg5[%c0, %c0_0, %c0_1], %0 {strides = array<i32>} : memref<8x8x128xf32, #tpu.memory_space<vmem>>, vector<3x8x128xf32>,
    %cst_2 = arith.constant 0.000000e+00 : f32
    %2 = vector.broadcast %cst_2 : f32 to vector<3x8x128xf32>
    %c5 = arith.constant 5 : index
    %c0_3 = arith.constant 0 : index
    %c0_4 = arith.constant 0 : index
    %3 = vector.load %arg5[%c5, %c0_3, %c0_4] : memref<8x8x128xf32, #tpu.memory_space<vmem>>, vector<3x8x128xf32>
    tpu.vector_store %arg5[%c5, %c0_3, %c0_4], %2 {strides = array<i32>} : memref<8x8x128xf32, #tpu.memory_space<vmem>>, vector<3x8x128xf32>,
    %cst_5 = arith.constant 0.000000e+00 : f32
    %4 = vector.broadcast %cst_5 : f32 to vector<2x3x128xf32>
    %c3 = arith.constant 3 : index
    %c0_6 = arith.constant 0 : index
    %c0_7 = arith.constant 0 : index
    %5 = vector.load %arg5[%c3, %c0_6, %c0_7] : memref<8x8x128xf32, #tpu.memory_space<vmem>>, vector<2x3x128xf32>
    tpu.vector_store %arg5[%c3, %c0_6, %c0_7], %4 {strides = array<i32>} : memref<8x8x128xf32, #tpu.memory_space<vmem>>, vector<2x3x128xf32>,
    %cst_8 = arith.constant 0.000000e+00 : f32
    %6 = vector.broadcast %cst_8 : f32 to vector<2x3x128xf32>
    %c3_9 = arith.constant 3 : index
    %c5_10 = arith.constant 5 : index
    %c0_11 = arith.constant 0 : index
    %7 = vector.load %arg5[%c3_9, %c5_10, %c0_11] : memref<8x8x128xf32, #tpu.memory_space<vmem>>, vector<2x3x128xf32>
    tpu.vector_store %arg5[%c3_9, %c5_10, %c0_11], %6 {strides = array<i32>} : memref<8x8x128xf32, #tpu.memory_space<vmem>>, vector<2x3x128xf32>,
    %c0_12 = arith.constant 0 : index
    %c0_13 = arith.constant 0 : index
    %c0_14 = arith.constant 0 : index
    %c0_15 = arith.constant 0 : index
    %8 = vector.load %arg1[%c0_12, %c0_13, %c0_14, %c0_15] : memref<1x2x2x128xbf16, #tpu.memory_space<vmem>>, vector<1x2x2x128xbf16>
    %9 = vector.shape_cast %8 : vector<1x2x2x128xbf16> to vector<2x2x128xbf16>
    %10 = arith.extf %9 : vector<2x2x128xbf16> to vector<2x2x128xf32>
    %c3_16 = arith.constant 3 : index
    %c3_17 = arith.constant 3 : index
    %c0_18 = arith.constant 0 : index
    %11 = vector.load %arg5[%c3_16, %c3_17, %c0_18] : memref<8x8x128xf32, #tpu.memory_space<vmem>>, vector<2x2x128xf32>
    tpu.vector_store %arg5[%c3_16, %c3_17, %c0_18], %10 {strides = array<i32>} : memref<8x8x128xf32, #tpu.memory_space<vmem>>, vector<2x2x128xf32>,
    %c0_19 = arith.constant 0 : index
    %c0_20 = arith.constant 0 : index
    %12 = vector.load %arg2[%c0_19, %c0_20] : memref<49x128xf32, #tpu.memory_space<vmem>>, vector<49x128xf32>
    %c0_21 = arith.constant 0 : index
    %c0_22 = arith.constant 0 : index
    %c0_23 = arith.constant 0 : index
    %13 = vector.load %arg5[%c0_21, %c0_22, %c0_23] : memref<8x8x128xf32, #tpu.memory_space<vmem>>, vector<2x2x128xf32>
    %14 = vector.extract_strided_slice %12 {offsets = [0, 0], sizes = [1, 128], strides = [1, 1]} : vector<49x128xf32> to vector<1x128xf32>
    %15 = vector.shape_cast %14 : vector<1x128xf32> to vector<128xf32>
    %16 = vector.shape_cast %15 : vector<128xf32> to vector<1x1x128xf32>
    %17 = vector.broadcast %16 : vector<1x1x128xf32> to vector<2x2x128xf32>
    %18 = arith.mulf %13, %17 : vector<2x2x128xf32>
    %c0_24 = arith.constant 0 : index
    %c1 = arith.constant 1 : index
    %c0_25 = arith.constant 0 : index
    %19 = vector.load %arg5[%c0_24, %c1, %c0_25] : memref<8x8x128xf32, #tpu.memory_space<vmem>>, vector<2x2x128xf32>
    %20 = vector.extract_strided_slice %12 {offsets = [1, 0], sizes = [1, 128], strides = [1, 1]} : vector<49x128xf32> to vector<1x128xf32>
    %21 = vector.shape_cast %20 : vector<1x128xf32> to vector<128xf32>
    %22 = vector.shape_cast %21 : vector<128xf32> to vector<1x1x128xf32>
    %23 = vector.broadcast %22 : vector<1x1x128xf32> to vector<2x2x128xf32>
    %24 = arith.mulf %19, %23 : vector<2x2x128xf32>
    %c0_26 = arith.constant 0 : index
    %c2 = arith.constant 2 : index
    %c0_27 = arith.constant 0 : index
    %25 = vector.load %arg5[%c0_26, %c2, %c0_27] : memref<8x8x128xf32, #tpu.memory_space<vmem>>, vector<2x2x128xf32>
    %26 = vector.extract_strided_slice %12 {offsets = [2, 0], sizes = [1, 128], strides = [1, 1]} : vector<49x128xf32> to vector<1x128xf32>
    %27 = vector.shape_cast %26 : vector<1x128xf32> to vector<128xf32>
    %28 = vector.shape_cast %27 : vector<128xf32> to vector<1x1x128xf32>
    %29 = vector.broadcast %28 : vector<1x1x128xf32> to vector<2x2x128xf32>
    %30 = arith.mulf %25, %29 : vector<2x2x128xf32>
    %c0_28 = arith.constant 0 : index
    %c3_29 = arith.constant 3 : index
    %c0_30 = arith.constant 0 : index
    %31 = vector.load %arg5[%c0_28, %c3_29, %c0_30] : memref<8x8x128xf32, #tpu.memory_space<vmem>>, vector<2x2x128xf32>
    %32 = vector.extract_strided_slice %12 {offsets = [3, 0], sizes = [1, 128], strides = [1, 1]} : vector<49x128xf32> to vector<1x128xf32>
    %33 = vector.shape_cast %32 : vector<1x128xf32> to vector<128xf32>
    %34 = vector.shape_cast %33 : vector<128xf32> to vector<1x1x128xf32>
    %35 = vector.broadcast %34 : vector<1x1x128xf32> to vector<2x2x128xf32>
    %36 = arith.mulf %31, %35 : vector<2x2x128xf32>
    %c0_31 = arith.constant 0 : index
    %c4 = arith.constant 4 : index
    %c0_32 = arith.constant 0 : index
    %37 = vector.load %arg5[%c0_31, %c4, %c0_32] : memref<8x8x128xf32, #tpu.memory_space<vmem>>, vector<2x2x128xf32>
    %38 = vector.extract_strided_slice %12 {offsets = [4, 0], sizes = [1, 128], strides = [1, 1]} : vector<49x128xf32> to vector<1x128xf32>
    %39 = vector.shape_cast %38 : vector<1x128xf32> to vector<128xf32>
    %40 = vector.shape_cast %39 : vector<128xf32> to vector<1x1x128xf32>
    %41 = vector.broadcast %40 : vector<1x1x128xf32> to vector<2x2x128xf32>
    %42 = arith.mulf %37, %41 : vector<2x2x128xf32>
    %43 = arith.addf %18, %42 : vector<2x2x128xf32>
    %c0_33 = arith.constant 0 : index
    %c5_34 = arith.constant 5 : index
    %c0_35 = arith.constant 0 : index
    %44 = vector.load %arg5[%c0_33, %c5_34, %c0_35] : memref<8x8x128xf32, #tpu.memory_space<vmem>>, vector<2x2x128xf32>
    %45 = vector.extract_strided_slice %12 {offsets = [5, 0], sizes = [1, 128], strides = [1, 1]} : vector<49x128xf32> to vector<1x128xf32>
    %46 = vector.shape_cast %45 : vector<1x128xf32> to vector<128xf32>
    %47 = vector.shape_cast %46 : vector<128xf32> to vector<1x1x128xf32>
    %48 = vector.broadcast %47 : vector<1x1x128xf32> to vector<2x2x128xf32>
    %49 = arith.mulf %44, %48 : vector<2x2x128xf32>
    %50 = arith.addf %24, %49 : vector<2x2x128xf32>
    %c0_36 = arith.constant 0 : index
    %c6 = arith.constant 6 : index
    %c0_37 = arith.constant 0 : index
    %51 = vector.load %arg5[%c0_36, %c6, %c0_37] : memref<8x8x128xf32, #tpu.memory_space<vmem>>, vector<2x2x128xf32>
    %52 = vector.extract_strided_slice %12 {offsets = [6, 0], sizes = [1, 128], strides = [1, 1]} : vector<49x128xf32> to vector<1x128xf32>
    %53 = vector.shape_cast %52 : vector<1x128xf32> to vector<128xf32>
    %54 = vector.shape_cast %53 : vector<128xf32> to vector<1x1x128xf32>
    %55 = vector.broadcast %54 : vector<1x1x128xf32> to vector<2x2x128xf32>
    %56 = arith.mulf %51, %55 : vector<2x2x128xf32>
    %57 = arith.addf %30, %56 : vector<2x2x128xf32>
    %c1_38 = arith.constant 1 : index
    %c0_39 = arith.constant 0 : index
    %c0_40 = arith.constant 0 : index
    %58 = vector.load %arg5[%c1_38, %c0_39, %c0_40] : memref<8x8x128xf32, #tpu.memory_space<vmem>>, vector<2x2x128xf32>
    %59 = vector.extract_strided_slice %12 {offsets = [7, 0], sizes = [1, 128], strides = [1, 1]} : vector<49x128xf32> to vector<1x128xf32>
    %60 = vector.shape_cast %59 : vector<1x128xf32> to vector<128xf32>
    %61 = vector.shape_cast %60 : vector<128xf32> to vector<1x1x128xf32>
    %62 = vector.broadcast %61 : vector<1x1x128xf32> to vector<2x2x128xf32>
    %63 = arith.mulf %58, %62 : vector<2x2x128xf32>
    %64 = arith.addf %36, %63 : vector<2x2x128xf32>
    %c1_41 = arith.constant 1 : index
    %c1_42 = arith.constant 1 : index
    %c0_43 = arith.constant 0 : index
    %65 = vector.load %arg5[%c1_41, %c1_42, %c0_43] : memref<8x8x128xf32, #tpu.memory_space<vmem>>, vector<2x2x128xf32>
    %66 = vector.extract_strided_slice %12 {offsets = [8, 0], sizes = [1, 128], strides = [1, 1]} : vector<49x128xf32> to vector<1x128xf32>
    %67 = vector.shape_cast %66 : vector<1x128xf32> to vector<128xf32>
    %68 = vector.shape_cast %67 : vector<128xf32> to vector<1x1x128xf32>
    %69 = vector.broadcast %68 : vector<1x1x128xf32> to vector<2x2x128xf32>
    %70 = arith.mulf %65, %69 : vector<2x2x128xf32>
    %71 = arith.addf %43, %70 : vector<2x2x128xf32>
    %c1_44 = arith.constant 1 : index
    %c2_45 = arith.constant 2 : index
    %c0_46 = arith.constant 0 : index
    %72 = vector.load %arg5[%c1_44, %c2_45, %c0_46] : memref<8x8x128xf32, #tpu.memory_space<vmem>>, vector<2x2x128xf32>
    %73 = vector.extract_strided_slice %12 {offsets = [9, 0], sizes = [1, 128], strides = [1, 1]} : vector<49x128xf32> to vector<1x128xf32>
    %74 = vector.shape_cast %73 : vector<1x128xf32> to vector<128xf32>
    %75 = vector.shape_cast %74 : vector<128xf32> to vector<1x1x128xf32>
    %76 = vector.broadcast %75 : vector<1x1x128xf32> to vector<2x2x128xf32>
    %77 = arith.mulf %72, %76 : vector<2x2x128xf32>
    %78 = arith.addf %50, %77 : vector<2x2x128xf32>
    %c1_47 = arith.constant 1 : index
    %c3_48 = arith.constant 3 : index
    %c0_49 = arith.constant 0 : index
    %79 = vector.load %arg5[%c1_47, %c3_48, %c0_49] : memref<8x8x128xf32, #tpu.memory_space<vmem>>, vector<2x2x128xf32>
    %80 = vector.extract_strided_slice %12 {offsets = [10, 0], sizes = [1, 128], strides = [1, 1]} : vector<49x128xf32> to vector<1x128xf32>
    %81 = vector.shape_cast %80 : vector<1x128xf32> to vector<128xf32>
    %82 = vector.shape_cast %81 : vector<128xf32> to vector<1x1x128xf32>
    %83 = vector.broadcast %82 : vector<1x1x128xf32> to vector<2x2x128xf32>
    %84 = arith.mulf %79, %83 : vector<2x2x128xf32>
    %85 = arith.addf %57, %84 : vector<2x2x128xf32>
    %c1_50 = arith.constant 1 : index
    %c4_51 = arith.constant 4 : index
    %c0_52 = arith.constant 0 : index
    %86 = vector.load %arg5[%c1_50, %c4_51, %c0_52] : memref<8x8x128xf32, #tpu.memory_space<vmem>>, vector<2x2x128xf32>
    %87 = vector.extract_strided_slice %12 {offsets = [11, 0], sizes = [1, 128], strides = [1, 1]} : vector<49x128xf32> to vector<1x128xf32>
    %88 = vector.shape_cast %87 : vector<1x128xf32> to vector<128xf32>
    %89 = vector.shape_cast %88 : vector<128xf32> to vector<1x1x128xf32>
    %90 = vector.broadcast %89 : vector<1x1x128xf32> to vector<2x2x128xf32>
    %91 = arith.mulf %86, %90 : vector<2x2x128xf32>
    %92 = arith.addf %64, %91 : vector<2x2x128xf32>
    %c1_53 = arith.constant 1 : index
    %c5_54 = arith.constant 5 : index
    %c0_55 = arith.constant 0 : index
    %93 = vector.load %arg5[%c1_53, %c5_54, %c0_55] : memref<8x8x128xf32, #tpu.memory_space<vmem>>, vector<2x2x128xf32>
    %94 = vector.extract_strided_slice %12 {offsets = [12, 0], sizes = [1, 128], strides = [1, 1]} : vector<49x128xf32> to vector<1x128xf32>
    %95 = vector.shape_cast %94 : vector<1x128xf32> to vector<128xf32>
    %96 = vector.shape_cast %95 : vector<128xf32> to vector<1x1x128xf32>
    %97 = vector.broadcast %96 : vector<1x1x128xf32> to vector<2x2x128xf32>
    %98 = arith.mulf %93, %97 : vector<2x2x128xf32>
    %99 = arith.addf %71, %98 : vector<2x2x128xf32>
    %c1_56 = arith.constant 1 : index
    %c6_57 = arith.constant 6 : index
    %c0_58 = arith.constant 0 : index
    %100 = vector.load %arg5[%c1_56, %c6_57, %c0_58] : memref<8x8x128xf32, #tpu.memory_space<vmem>>, vector<2x2x128xf32>
    %101 = vector.extract_strided_slice %12 {offsets = [13, 0], sizes = [1, 128], strides = [1, 1]} : vector<49x128xf32> to vector<1x128xf32>
    %102 = vector.shape_cast %101 : vector<1x128xf32> to vector<128xf32>
    %103 = vector.shape_cast %102 : vector<128xf32> to vector<1x1x128xf32>
    %104 = vector.broadcast %103 : vector<1x1x128xf32> to vector<2x2x128xf32>
    %105 = arith.mulf %100, %104 : vector<2x2x128xf32>
    %106 = arith.addf %78, %105 : vector<2x2x128xf32>
    %c2_59 = arith.constant 2 : index
    %c0_60 = arith.constant 0 : index
    %c0_61 = arith.constant 0 : index
    %107 = vector.load %arg5[%c2_59, %c0_60, %c0_61] : memref<8x8x128xf32, #tpu.memory_space<vmem>>, vector<2x2x128xf32>
    %108 = vector.extract_strided_slice %12 {offsets = [14, 0], sizes = [1, 128], strides = [1, 1]} : vector<49x128xf32> to vector<1x128xf32>
    %109 = vector.shape_cast %108 : vector<1x128xf32> to vector<128xf32>
    %110 = vector.shape_cast %109 : vector<128xf32> to vector<1x1x128xf32>
    %111 = vector.broadcast %110 : vector<1x1x128xf32> to vector<2x2x128xf32>
    %112 = arith.mulf %107, %111 : vector<2x2x128xf32>
    %113 = arith.addf %85, %112 : vector<2x2x128xf32>
    %c2_62 = arith.constant 2 : index
    %c1_63 = arith.constant 1 : index
    %c0_64 = arith.constant 0 : index
    %114 = vector.load %arg5[%c2_62, %c1_63, %c0_64] : memref<8x8x128xf32, #tpu.memory_space<vmem>>, vector<2x2x128xf32>
    %115 = vector.extract_strided_slice %12 {offsets = [15, 0], sizes = [1, 128], strides = [1, 1]} : vector<49x128xf32> to vector<1x128xf32>
    %116 = vector.shape_cast %115 : vector<1x128xf32> to vector<128xf32>
    %117 = vector.shape_cast %116 : vector<128xf32> to vector<1x1x128xf32>
    %118 = vector.broadcast %117 : vector<1x1x128xf32> to vector<2x2x128xf32>
    %119 = arith.mulf %114, %118 : vector<2x2x128xf32>
    %120 = arith.addf %92, %119 : vector<2x2x128xf32>
    %c2_65 = arith.constant 2 : index
    %c2_66 = arith.constant 2 : index
    %c0_67 = arith.constant 0 : index
    %121 = vector.load %arg5[%c2_65, %c2_66, %c0_67] : memref<8x8x128xf32, #tpu.memory_space<vmem>>, vector<2x2x128xf32>
    %122 = vector.extract_strided_slice %12 {offsets = [16, 0], sizes = [1, 128], strides = [1, 1]} : vector<49x128xf32> to vector<1x128xf32>
    %123 = vector.shape_cast %122 : vector<1x128xf32> to vector<128xf32>
    %124 = vector.shape_cast %123 : vector<128xf32> to vector<1x1x128xf32>
    %125 = vector.broadcast %124 : vector<1x1x128xf32> to vector<2x2x128xf32>
    %126 = arith.mulf %121, %125 : vector<2x2x128xf32>
    %127 = arith.addf %99, %126 : vector<2x2x128xf32>
    %c2_68 = arith.constant 2 : index
    %c3_69 = arith.constant 3 : index
    %c0_70 = arith.constant 0 : index
    %128 = vector.load %arg5[%c2_68, %c3_69, %c0_70] : memref<8x8x128xf32, #tpu.memory_space<vmem>>, vector<2x2x128xf32>
    %129 = vector.extract_strided_slice %12 {offsets = [17, 0], sizes = [1, 128], strides = [1, 1]} : vector<49x128xf32> to vector<1x128xf32>
    %130 = vector.shape_cast %129 : vector<1x128xf32> to vector<128xf32>
    %131 = vector.shape_cast %130 : vector<128xf32> to vector<1x1x128xf32>
    %132 = vector.broadcast %131 : vector<1x1x128xf32> to vector<2x2x128xf32>
    %133 = arith.mulf %128, %132 : vector<2x2x128xf32>
    %134 = arith.addf %106, %133 : vector<2x2x128xf32>
    %c2_71 = arith.constant 2 : index
    %c4_72 = arith.constant 4 : index
    %c0_73 = arith.constant 0 : index
    %135 = vector.load %arg5[%c2_71, %c4_72, %c0_73] : memref<8x8x128xf32, #tpu.memory_space<vmem>>, vector<2x2x128xf32>
    %136 = vector.extract_strided_slice %12 {offsets = [18, 0], sizes = [1, 128], strides = [1, 1]} : vector<49x128xf32> to vector<1x128xf32>
    %137 = vector.shape_cast %136 : vector<1x128xf32> to vector<128xf32>
    %138 = vector.shape_cast %137 : vector<128xf32> to vector<1x1x128xf32>
    %139 = vector.broadcast %138 : vector<1x1x128xf32> to vector<2x2x128xf32>
    %140 = arith.mulf %135, %139 : vector<2x2x128xf32>
    %141 = arith.addf %113, %140 : vector<2x2x128xf32>
    %c2_74 = arith.constant 2 : index
    %c5_75 = arith.constant 5 : index
    %c0_76 = arith.constant 0 : index
    %142 = vector.load %arg5[%c2_74, %c5_75, %c0_76] : memref<8x8x128xf32, #tpu.memory_space<vmem>>, vector<2x2x128xf32>
    %143 = vector.extract_strided_slice %12 {offsets = [19, 0], sizes = [1, 128], strides = [1, 1]} : vector<49x128xf32> to vector<1x128xf32>
    %144 = vector.shape_cast %143 : vector<1x128xf32> to vector<128xf32>
    %145 = vector.shape_cast %144 : vector<128xf32> to vector<1x1x128xf32>
    %146 = vector.broadcast %145 : vector<1x1x128xf32> to vector<2x2x128xf32>
    %147 = arith.mulf %142, %146 : vector<2x2x128xf32>
    %148 = arith.addf %120, %147 : vector<2x2x128xf32>
    %c2_77 = arith.constant 2 : index
    %c6_78 = arith.constant 6 : index
    %c0_79 = arith.constant 0 : index
    %149 = vector.load %arg5[%c2_77, %c6_78, %c0_79] : memref<8x8x128xf32, #tpu.memory_space<vmem>>, vector<2x2x128xf32>
    %150 = vector.extract_strided_slice %12 {offsets = [20, 0], sizes = [1, 128], strides = [1, 1]} : vector<49x128xf32> to vector<1x128xf32>
    %151 = vector.shape_cast %150 : vector<1x128xf32> to vector<128xf32>
    %152 = vector.shape_cast %151 : vector<128xf32> to vector<1x1x128xf32>
    %153 = vector.broadcast %152 : vector<1x1x128xf32> to vector<2x2x128xf32>
    %154 = arith.mulf %149, %153 : vector<2x2x128xf32>
    %155 = arith.addf %127, %154 : vector<2x2x128xf32>
    %c3_80 = arith.constant 3 : index
    %c0_81 = arith.constant 0 : index
    %c0_82 = arith.constant 0 : index
    %156 = vector.load %arg5[%c3_80, %c0_81, %c0_82] : memref<8x8x128xf32, #tpu.memory_space<vmem>>, vector<2x2x128xf32>
    %157 = vector.extract_strided_slice %12 {offsets = [21, 0], sizes = [1, 128], strides = [1, 1]} : vector<49x128xf32> to vector<1x128xf32>
    %158 = vector.shape_cast %157 : vector<1x128xf32> to vector<128xf32>
    %159 = vector.shape_cast %158 : vector<128xf32> to vector<1x1x128xf32>
    %160 = vector.broadcast %159 : vector<1x1x128xf32> to vector<2x2x128xf32>
    %161 = arith.mulf %156, %160 : vector<2x2x128xf32>
    %162 = arith.addf %134, %161 : vector<2x2x128xf32>
    %c3_83 = arith.constant 3 : index
    %c1_84 = arith.constant 1 : index
    %c0_85 = arith.constant 0 : index
    %163 = vector.load %arg5[%c3_83, %c1_84, %c0_85] : memref<8x8x128xf32, #tpu.memory_space<vmem>>, vector<2x2x128xf32>
    %164 = vector.extract_strided_slice %12 {offsets = [22, 0], sizes = [1, 128], strides = [1, 1]} : vector<49x128xf32> to vector<1x128xf32>
    %165 = vector.shape_cast %164 : vector<1x128xf32> to vector<128xf32>
    %166 = vector.shape_cast %165 : vector<128xf32> to vector<1x1x128xf32>
    %167 = vector.broadcast %166 : vector<1x1x128xf32> to vector<2x2x128xf32>
    %168 = arith.mulf %163, %167 : vector<2x2x128xf32>
    %169 = arith.addf %141, %168 : vector<2x2x128xf32>
    %c3_86 = arith.constant 3 : index
    %c2_87 = arith.constant 2 : index
    %c0_88 = arith.constant 0 : index
    %170 = vector.load %arg5[%c3_86, %c2_87, %c0_88] : memref<8x8x128xf32, #tpu.memory_space<vmem>>, vector<2x2x128xf32>
    %171 = vector.extract_strided_slice %12 {offsets = [23, 0], sizes = [1, 128], strides = [1, 1]} : vector<49x128xf32> to vector<1x128xf32>
    %172 = vector.shape_cast %171 : vector<1x128xf32> to vector<128xf32>
    %173 = vector.shape_cast %172 : vector<128xf32> to vector<1x1x128xf32>
    %174 = vector.broadcast %173 : vector<1x1x128xf32> to vector<2x2x128xf32>
    %175 = arith.mulf %170, %174 : vector<2x2x128xf32>
    %176 = arith.addf %148, %175 : vector<2x2x128xf32>
    %c3_89 = arith.constant 3 : index
    %c3_90 = arith.constant 3 : index
    %c0_91 = arith.constant 0 : index
    %177 = vector.load %arg5[%c3_89, %c3_90, %c0_91] : memref<8x8x128xf32, #tpu.memory_space<vmem>>, vector<2x2x128xf32>
    %178 = vector.extract_strided_slice %12 {offsets = [24, 0], sizes = [1, 128], strides = [1, 1]} : vector<49x128xf32> to vector<1x128xf32>
    %179 = vector.shape_cast %178 : vector<1x128xf32> to vector<128xf32>
    %180 = vector.shape_cast %179 : vector<128xf32> to vector<1x1x128xf32>
    %181 = vector.broadcast %180 : vector<1x1x128xf32> to vector<2x2x128xf32>
    %182 = arith.mulf %177, %181 : vector<2x2x128xf32>
    %183 = arith.addf %155, %182 : vector<2x2x128xf32>
    %c3_92 = arith.constant 3 : index
    %c4_93 = arith.constant 4 : index
    %c0_94 = arith.constant 0 : index
    %184 = vector.load %arg5[%c3_92, %c4_93, %c0_94] : memref<8x8x128xf32, #tpu.memory_space<vmem>>, vector<2x2x128xf32>
    %185 = vector.extract_strided_slice %12 {offsets = [25, 0], sizes = [1, 128], strides = [1, 1]} : vector<49x128xf32> to vector<1x128xf32>
    %186 = vector.shape_cast %185 : vector<1x128xf32> to vector<128xf32>
    %187 = vector.shape_cast %186 : vector<128xf32> to vector<1x1x128xf32>
    %188 = vector.broadcast %187 : vector<1x1x128xf32> to vector<2x2x128xf32>
    %189 = arith.mulf %184, %188 : vector<2x2x128xf32>
    %190 = arith.addf %162, %189 : vector<2x2x128xf32>
    %c3_95 = arith.constant 3 : index
    %c5_96 = arith.constant 5 : index
    %c0_97 = arith.constant 0 : index
    %191 = vector.load %arg5[%c3_95, %c5_96, %c0_97] : memref<8x8x128xf32, #tpu.memory_space<vmem>>, vector<2x2x128xf32>
    %192 = vector.extract_strided_slice %12 {offsets = [26, 0], sizes = [1, 128], strides = [1, 1]} : vector<49x128xf32> to vector<1x128xf32>
    %193 = vector.shape_cast %192 : vector<1x128xf32> to vector<128xf32>
    %194 = vector.shape_cast %193 : vector<128xf32> to vector<1x1x128xf32>
    %195 = vector.broadcast %194 : vector<1x1x128xf32> to vector<2x2x128xf32>
    %196 = arith.mulf %191, %195 : vector<2x2x128xf32>
    %197 = arith.addf %169, %196 : vector<2x2x128xf32>
    %c3_98 = arith.constant 3 : index
    %c6_99 = arith.constant 6 : index
    %c0_100 = arith.constant 0 : index
    %198 = vector.load %arg5[%c3_98, %c6_99, %c0_100] : memref<8x8x128xf32, #tpu.memory_space<vmem>>, vector<2x2x128xf32>
    %199 = vector.extract_strided_slice %12 {offsets = [27, 0], sizes = [1, 128], strides = [1, 1]} : vector<49x128xf32> to vector<1x128xf32>
    %200 = vector.shape_cast %199 : vector<1x128xf32> to vector<128xf32>
    %201 = vector.shape_cast %200 : vector<128xf32> to vector<1x1x128xf32>
    %202 = vector.broadcast %201 : vector<1x1x128xf32> to vector<2x2x128xf32>
    %203 = arith.mulf %198, %202 : vector<2x2x128xf32>
    %204 = arith.addf %176, %203 : vector<2x2x128xf32>
    %c4_101 = arith.constant 4 : index
    %c0_102 = arith.constant 0 : index
    %c0_103 = arith.constant 0 : index
    %205 = vector.load %arg5[%c4_101, %c0_102, %c0_103] : memref<8x8x128xf32, #tpu.memory_space<vmem>>, vector<2x2x128xf32>
    %206 = vector.extract_strided_slice %12 {offsets = [28, 0], sizes = [1, 128], strides = [1, 1]} : vector<49x128xf32> to vector<1x128xf32>
    %207 = vector.shape_cast %206 : vector<1x128xf32> to vector<128xf32>
    %208 = vector.shape_cast %207 : vector<128xf32> to vector<1x1x128xf32>
    %209 = vector.broadcast %208 : vector<1x1x128xf32> to vector<2x2x128xf32>
    %210 = arith.mulf %205, %209 : vector<2x2x128xf32>
    %211 = arith.addf %183, %210 : vector<2x2x128xf32>
    %c4_104 = arith.constant 4 : index
    %c1_105 = arith.constant 1 : index
    %c0_106 = arith.constant 0 : index
    %212 = vector.load %arg5[%c4_104, %c1_105, %c0_106] : memref<8x8x128xf32, #tpu.memory_space<vmem>>, vector<2x2x128xf32>
    %213 = vector.extract_strided_slice %12 {offsets = [29, 0], sizes = [1, 128], strides = [1, 1]} : vector<49x128xf32> to vector<1x128xf32>
    %214 = vector.shape_cast %213 : vector<1x128xf32> to vector<128xf32>
    %215 = vector.shape_cast %214 : vector<128xf32> to vector<1x1x128xf32>
    %216 = vector.broadcast %215 : vector<1x1x128xf32> to vector<2x2x128xf32>
    %217 = arith.mulf %212, %216 : vector<2x2x128xf32>
    %218 = arith.addf %190, %217 : vector<2x2x128xf32>
    %c4_107 = arith.constant 4 : index
    %c2_108 = arith.constant 2 : index
    %c0_109 = arith.constant 0 : index
    %219 = vector.load %arg5[%c4_107, %c2_108, %c0_109] : memref<8x8x128xf32, #tpu.memory_space<vmem>>, vector<2x2x128xf32>
    %220 = vector.extract_strided_slice %12 {offsets = [30, 0], sizes = [1, 128], strides = [1, 1]} : vector<49x128xf32> to vector<1x128xf32>
    %221 = vector.shape_cast %220 : vector<1x128xf32> to vector<128xf32>
    %222 = vector.shape_cast %221 : vector<128xf32> to vector<1x1x128xf32>
    %223 = vector.broadcast %222 : vector<1x1x128xf32> to vector<2x2x128xf32>
    %224 = arith.mulf %219, %223 : vector<2x2x128xf32>
    %225 = arith.addf %197, %224 : vector<2x2x128xf32>
    %c4_110 = arith.constant 4 : index
    %c3_111 = arith.constant 3 : index
    %c0_112 = arith.constant 0 : index
    %226 = vector.load %arg5[%c4_110, %c3_111, %c0_112] : memref<8x8x128xf32, #tpu.memory_space<vmem>>, vector<2x2x128xf32>
    %227 = vector.extract_strided_slice %12 {offsets = [31, 0], sizes = [1, 128], strides = [1, 1]} : vector<49x128xf32> to vector<1x128xf32>
    %228 = vector.shape_cast %227 : vector<1x128xf32> to vector<128xf32>
    %229 = vector.shape_cast %228 : vector<128xf32> to vector<1x1x128xf32>
    %230 = vector.broadcast %229 : vector<1x1x128xf32> to vector<2x2x128xf32>
    %231 = arith.mulf %226, %230 : vector<2x2x128xf32>
    %232 = arith.addf %204, %231 : vector<2x2x128xf32>
    %c4_113 = arith.constant 4 : index
    %c4_114 = arith.constant 4 : index
    %c0_115 = arith.constant 0 : index
    %233 = vector.load %arg5[%c4_113, %c4_114, %c0_115] : memref<8x8x128xf32, #tpu.memory_space<vmem>>, vector<2x2x128xf32>
    %234 = vector.extract_strided_slice %12 {offsets = [32, 0], sizes = [1, 128], strides = [1, 1]} : vector<49x128xf32> to vector<1x128xf32>
    %235 = vector.shape_cast %234 : vector<1x128xf32> to vector<128xf32>
    %236 = vector.shape_cast %235 : vector<128xf32> to vector<1x1x128xf32>
    %237 = vector.broadcast %236 : vector<1x1x128xf32> to vector<2x2x128xf32>
    %238 = arith.mulf %233, %237 : vector<2x2x128xf32>
    %239 = arith.addf %211, %238 : vector<2x2x128xf32>
    %c4_116 = arith.constant 4 : index
    %c5_117 = arith.constant 5 : index
    %c0_118 = arith.constant 0 : index
    %240 = vector.load %arg5[%c4_116, %c5_117, %c0_118] : memref<8x8x128xf32, #tpu.memory_space<vmem>>, vector<2x2x128xf32>
    %241 = vector.extract_strided_slice %12 {offsets = [33, 0], sizes = [1, 128], strides = [1, 1]} : vector<49x128xf32> to vector<1x128xf32>
    %242 = vector.shape_cast %241 : vector<1x128xf32> to vector<128xf32>
    %243 = vector.shape_cast %242 : vector<128xf32> to vector<1x1x128xf32>
    %244 = vector.broadcast %243 : vector<1x1x128xf32> to vector<2x2x128xf32>
    %245 = arith.mulf %240, %244 : vector<2x2x128xf32>
    %246 = arith.addf %218, %245 : vector<2x2x128xf32>
    %c4_119 = arith.constant 4 : index
    %c6_120 = arith.constant 6 : index
    %c0_121 = arith.constant 0 : index
    %247 = vector.load %arg5[%c4_119, %c6_120, %c0_121] : memref<8x8x128xf32, #tpu.memory_space<vmem>>, vector<2x2x128xf32>
    %248 = vector.extract_strided_slice %12 {offsets = [34, 0], sizes = [1, 128], strides = [1, 1]} : vector<49x128xf32> to vector<1x128xf32>
    %249 = vector.shape_cast %248 : vector<1x128xf32> to vector<128xf32>
    %250 = vector.shape_cast %249 : vector<128xf32> to vector<1x1x128xf32>
    %251 = vector.broadcast %250 : vector<1x1x128xf32> to vector<2x2x128xf32>
    %252 = arith.mulf %247, %251 : vector<2x2x128xf32>
    %253 = arith.addf %225, %252 : vector<2x2x128xf32>
    %c5_122 = arith.constant 5 : index
    %c0_123 = arith.constant 0 : index
    %c0_124 = arith.constant 0 : index
    %254 = vector.load %arg5[%c5_122, %c0_123, %c0_124] : memref<8x8x128xf32, #tpu.memory_space<vmem>>, vector<2x2x128xf32>
    %255 = vector.extract_strided_slice %12 {offsets = [35, 0], sizes = [1, 128], strides = [1, 1]} : vector<49x128xf32> to vector<1x128xf32>
    %256 = vector.shape_cast %255 : vector<1x128xf32> to vector<128xf32>
    %257 = vector.shape_cast %256 : vector<128xf32> to vector<1x1x128xf32>
    %258 = vector.broadcast %257 : vector<1x1x128xf32> to vector<2x2x128xf32>
    %259 = arith.mulf %254, %258 : vector<2x2x128xf32>
    %260 = arith.addf %232, %259 : vector<2x2x128xf32>
    %c5_125 = arith.constant 5 : index
    %c1_126 = arith.constant 1 : index
    %c0_127 = arith.constant 0 : index
    %261 = vector.load %arg5[%c5_125, %c1_126, %c0_127] : memref<8x8x128xf32, #tpu.memory_space<vmem>>, vector<2x2x128xf32>
    %262 = vector.extract_strided_slice %12 {offsets = [36, 0], sizes = [1, 128], strides = [1, 1]} : vector<49x128xf32> to vector<1x128xf32>
    %263 = vector.shape_cast %262 : vector<1x128xf32> to vector<128xf32>
    %264 = vector.shape_cast %263 : vector<128xf32> to vector<1x1x128xf32>
    %265 = vector.broadcast %264 : vector<1x1x128xf32> to vector<2x2x128xf32>
    %266 = arith.mulf %261, %265 : vector<2x2x128xf32>
    %267 = arith.addf %239, %266 : vector<2x2x128xf32>
    %c5_128 = arith.constant 5 : index
    %c2_129 = arith.constant 2 : index
    %c0_130 = arith.constant 0 : index
    %268 = vector.load %arg5[%c5_128, %c2_129, %c0_130] : memref<8x8x128xf32, #tpu.memory_space<vmem>>, vector<2x2x128xf32>
    %269 = vector.extract_strided_slice %12 {offsets = [37, 0], sizes = [1, 128], strides = [1, 1]} : vector<49x128xf32> to vector<1x128xf32>
    %270 = vector.shape_cast %269 : vector<1x128xf32> to vector<128xf32>
    %271 = vector.shape_cast %270 : vector<128xf32> to vector<1x1x128xf32>
    %272 = vector.broadcast %271 : vector<1x1x128xf32> to vector<2x2x128xf32>
    %273 = arith.mulf %268, %272 : vector<2x2x128xf32>
    %274 = arith.addf %246, %273 : vector<2x2x128xf32>
    %c5_131 = arith.constant 5 : index
    %c3_132 = arith.constant 3 : index
    %c0_133 = arith.constant 0 : index
    %275 = vector.load %arg5[%c5_131, %c3_132, %c0_133] : memref<8x8x128xf32, #tpu.memory_space<vmem>>, vector<2x2x128xf32>
    %276 = vector.extract_strided_slice %12 {offsets = [38, 0], sizes = [1, 128], strides = [1, 1]} : vector<49x128xf32> to vector<1x128xf32>
    %277 = vector.shape_cast %276 : vector<1x128xf32> to vector<128xf32>
    %278 = vector.shape_cast %277 : vector<128xf32> to vector<1x1x128xf32>
    %279 = vector.broadcast %278 : vector<1x1x128xf32> to vector<2x2x128xf32>
    %280 = arith.mulf %275, %279 : vector<2x2x128xf32>
    %281 = arith.addf %253, %280 : vector<2x2x128xf32>
    %c5_134 = arith.constant 5 : index
    %c4_135 = arith.constant 4 : index
    %c0_136 = arith.constant 0 : index
    %282 = vector.load %arg5[%c5_134, %c4_135, %c0_136] : memref<8x8x128xf32, #tpu.memory_space<vmem>>, vector<2x2x128xf32>
    %283 = vector.extract_strided_slice %12 {offsets = [39, 0], sizes = [1, 128], strides = [1, 1]} : vector<49x128xf32> to vector<1x128xf32>
    %284 = vector.shape_cast %283 : vector<1x128xf32> to vector<128xf32>
    %285 = vector.shape_cast %284 : vector<128xf32> to vector<1x1x128xf32>
    %286 = vector.broadcast %285 : vector<1x1x128xf32> to vector<2x2x128xf32>
    %287 = arith.mulf %282, %286 : vector<2x2x128xf32>
    %288 = arith.addf %260, %287 : vector<2x2x128xf32>
    %c5_137 = arith.constant 5 : index
    %c5_138 = arith.constant 5 : index
    %c0_139 = arith.constant 0 : index
    %289 = vector.load %arg5[%c5_137, %c5_138, %c0_139] : memref<8x8x128xf32, #tpu.memory_space<vmem>>, vector<2x2x128xf32>
    %290 = vector.extract_strided_slice %12 {offsets = [40, 0], sizes = [1, 128], strides = [1, 1]} : vector<49x128xf32> to vector<1x128xf32>
    %291 = vector.shape_cast %290 : vector<1x128xf32> to vector<128xf32>
    %292 = vector.shape_cast %291 : vector<128xf32> to vector<1x1x128xf32>
    %293 = vector.broadcast %292 : vector<1x1x128xf32> to vector<2x2x128xf32>
    %294 = arith.mulf %289, %293 : vector<2x2x128xf32>
    %295 = arith.addf %267, %294 : vector<2x2x128xf32>
    %c5_140 = arith.constant 5 : index
    %c6_141 = arith.constant 6 : index
    %c0_142 = arith.constant 0 : index
    %296 = vector.load %arg5[%c5_140, %c6_141, %c0_142] : memref<8x8x128xf32, #tpu.memory_space<vmem>>, vector<2x2x128xf32>
    %297 = vector.extract_strided_slice %12 {offsets = [41, 0], sizes = [1, 128], strides = [1, 1]} : vector<49x128xf32> to vector<1x128xf32>
    %298 = vector.shape_cast %297 : vector<1x128xf32> to vector<128xf32>
    %299 = vector.shape_cast %298 : vector<128xf32> to vector<1x1x128xf32>
    %300 = vector.broadcast %299 : vector<1x1x128xf32> to vector<2x2x128xf32>
    %301 = arith.mulf %296, %300 : vector<2x2x128xf32>
    %302 = arith.addf %274, %301 : vector<2x2x128xf32>
    %c6_143 = arith.constant 6 : index
    %c0_144 = arith.constant 0 : index
    %c0_145 = arith.constant 0 : index
    %303 = vector.load %arg5[%c6_143, %c0_144, %c0_145] : memref<8x8x128xf32, #tpu.memory_space<vmem>>, vector<2x2x128xf32>
    %304 = vector.extract_strided_slice %12 {offsets = [42, 0], sizes = [1, 128], strides = [1, 1]} : vector<49x128xf32> to vector<1x128xf32>
    %305 = vector.shape_cast %304 : vector<1x128xf32> to vector<128xf32>
    %306 = vector.shape_cast %305 : vector<128xf32> to vector<1x1x128xf32>
    %307 = vector.broadcast %306 : vector<1x1x128xf32> to vector<2x2x128xf32>
    %308 = arith.mulf %303, %307 : vector<2x2x128xf32>
    %309 = arith.addf %281, %308 : vector<2x2x128xf32>
    %c6_146 = arith.constant 6 : index
    %c1_147 = arith.constant 1 : index
    %c0_148 = arith.constant 0 : index
    %310 = vector.load %arg5[%c6_146, %c1_147, %c0_148] : memref<8x8x128xf32, #tpu.memory_space<vmem>>, vector<2x2x128xf32>
    %311 = vector.extract_strided_slice %12 {offsets = [43, 0], sizes = [1, 128], strides = [1, 1]} : vector<49x128xf32> to vector<1x128xf32>
    %312 = vector.shape_cast %311 : vector<1x128xf32> to vector<128xf32>
    %313 = vector.shape_cast %312 : vector<128xf32> to vector<1x1x128xf32>
    %314 = vector.broadcast %313 : vector<1x1x128xf32> to vector<2x2x128xf32>
    %315 = arith.mulf %310, %314 : vector<2x2x128xf32>
    %316 = arith.addf %288, %315 : vector<2x2x128xf32>
    %c6_149 = arith.constant 6 : index
    %c2_150 = arith.constant 2 : index
    %c0_151 = arith.constant 0 : index
    %317 = vector.load %arg5[%c6_149, %c2_150, %c0_151] : memref<8x8x128xf32, #tpu.memory_space<vmem>>, vector<2x2x128xf32>
    %318 = vector.extract_strided_slice %12 {offsets = [44, 0], sizes = [1, 128], strides = [1, 1]} : vector<49x128xf32> to vector<1x128xf32>
    %319 = vector.shape_cast %318 : vector<1x128xf32> to vector<128xf32>
    %320 = vector.shape_cast %319 : vector<128xf32> to vector<1x1x128xf32>
    %321 = vector.broadcast %320 : vector<1x1x128xf32> to vector<2x2x128xf32>
    %322 = arith.mulf %317, %321 : vector<2x2x128xf32>
    %323 = arith.addf %295, %322 : vector<2x2x128xf32>
    %c6_152 = arith.constant 6 : index
    %c3_153 = arith.constant 3 : index
    %c0_154 = arith.constant 0 : index
    %324 = vector.load %arg5[%c6_152, %c3_153, %c0_154] : memref<8x8x128xf32, #tpu.memory_space<vmem>>, vector<2x2x128xf32>
    %325 = vector.extract_strided_slice %12 {offsets = [45, 0], sizes = [1, 128], strides = [1, 1]} : vector<49x128xf32> to vector<1x128xf32>
    %326 = vector.shape_cast %325 : vector<1x128xf32> to vector<128xf32>
    %327 = vector.shape_cast %326 : vector<128xf32> to vector<1x1x128xf32>
    %328 = vector.broadcast %327 : vector<1x1x128xf32> to vector<2x2x128xf32>
    %329 = arith.mulf %324, %328 : vector<2x2x128xf32>
    %330 = arith.addf %302, %329 : vector<2x2x128xf32>
    %c6_155 = arith.constant 6 : index
    %c4_156 = arith.constant 4 : index
    %c0_157 = arith.constant 0 : index
    %331 = vector.load %arg5[%c6_155, %c4_156, %c0_157] : memref<8x8x128xf32, #tpu.memory_space<vmem>>, vector<2x2x128xf32>
    %332 = vector.extract_strided_slice %12 {offsets = [46, 0], sizes = [1, 128], strides = [1, 1]} : vector<49x128xf32> to vector<1x128xf32>
    %333 = vector.shape_cast %332 : vector<1x128xf32> to vector<128xf32>
    %334 = vector.shape_cast %333 : vector<128xf32> to vector<1x1x128xf32>
    %335 = vector.broadcast %334 : vector<1x1x128xf32> to vector<2x2x128xf32>
    %336 = arith.mulf %331, %335 : vector<2x2x128xf32>
    %337 = arith.addf %309, %336 : vector<2x2x128xf32>
    %c6_158 = arith.constant 6 : index
    %c5_159 = arith.constant 5 : index
    %c0_160 = arith.constant 0 : index
    %338 = vector.load %arg5[%c6_158, %c5_159, %c0_160] : memref<8x8x128xf32, #tpu.memory_space<vmem>>, vector<2x2x128xf32>
    %339 = vector.extract_strided_slice %12 {offsets = [47, 0], sizes = [1, 128], strides = [1, 1]} : vector<49x128xf32> to vector<1x128xf32>
    %340 = vector.shape_cast %339 : vector<1x128xf32> to vector<128xf32>
    %341 = vector.shape_cast %340 : vector<128xf32> to vector<1x1x128xf32>
    %342 = vector.broadcast %341 : vector<1x1x128xf32> to vector<2x2x128xf32>
    %343 = arith.mulf %338, %342 : vector<2x2x128xf32>
    %344 = arith.addf %316, %343 : vector<2x2x128xf32>
    %c6_161 = arith.constant 6 : index
    %c6_162 = arith.constant 6 : index
    %c0_163 = arith.constant 0 : index
    %345 = vector.load %arg5[%c6_161, %c6_162, %c0_163] : memref<8x8x128xf32, #tpu.memory_space<vmem>>, vector<2x2x128xf32>
    %346 = vector.extract_strided_slice %12 {offsets = [48, 0], sizes = [1, 128], strides = [1, 1]} : vector<49x128xf32> to vector<1x128xf32>
    %347 = vector.shape_cast %346 : vector<1x128xf32> to vector<128xf32>
    %348 = vector.shape_cast %347 : vector<128xf32> to vector<1x1x128xf32>
    %349 = vector.broadcast %348 : vector<1x1x128xf32> to vector<2x2x128xf32>
    %350 = arith.mulf %345, %349 : vector<2x2x128xf32>
    %351 = arith.addf %323, %350 : vector<2x2x128xf32>
    %352 = arith.addf %351, %330 : vector<2x2x128xf32>
    %353 = arith.addf %337, %344 : vector<2x2x128xf32>
    %354 = arith.addf %352, %353 : vector<2x2x128xf32>
    %c0_164 = arith.constant 0 : index
    %c0_165 = arith.constant 0 : index
    %355 = vector.load %arg3[%c0_164, %c0_165] : memref<1x128xf32, #tpu.memory_space<vmem>>, vector<1x128xf32>
    %356 = vector.shape_cast %355 : vector<1x128xf32> to vector<1x1x128xf32>
    %357 = vector.broadcast %356 : vector<1x1x128xf32> to vector<2x2x128xf32>
    %358 = arith.addf %354, %357 : vector<2x2x128xf32>
    %359 = arith.truncf %358 : vector<2x2x128xf32> to vector<2x2x128xbf16>
    %c0_166 = arith.constant 0 : index
    %c0_167 = arith.constant 0 : index
    %c0_168 = arith.constant 0 : index
    %c0_169 = arith.constant 0 : index
    %360 = vector.load %arg4[%c0_166, %c0_167, %c0_168, %c0_169] : memref<1x2x2x128xbf16, #tpu.memory_space<vmem>>, vector<1x2x2x128xbf16>
    %361 = vector.shape_cast %360 : vector<1x2x2x128xbf16> to vector<2x2x128xbf16>
    %362 = vector.shape_cast %359 : vector<2x2x128xbf16> to vector<1x2x2x128xbf16>
    tpu.vector_store %arg4[%c0_166, %c0_167, %c0_168, %c0_169], %362 {strides = array<i32>} : memref<1x2x2x128xbf16, #tpu.memory_space<vmem>>, vector<1x2x2x128xbf16>,
    return
  }
  func.func @transform_0(%arg0: i32) -> (i32, i32, i32, i32) {
    %c0_i32 = arith.constant 0 : i32
    %c0_i32_0 = arith.constant 0 : i32
    %c0_i32_1 = arith.constant 0 : i32
    %c0_i32_2 = arith.constant 0 : i32
    return %arg0, %c0_i32, %c0_i32_0, %c0_i32_1 : i32, i32, i32, i32
  }
  func.func @transform_1(%arg0: i32) -> (i32, i32) {
    %c0_i32 = arith.constant 0 : i32
    %c0_i32_0 = arith.constant 0 : i32
    %c0_i32_1 = arith.constant 0 : i32
    return %c0_i32, %c0_i32_0 : i32, i32
  }
  func.func @transform_2(%arg0: i32) -> (i32, i32) {
    %c0_i32 = arith.constant 0 : i32
    %c0_i32_0 = arith.constant 0 : i32
    %c0_i32_1 = arith.constant 0 : i32
    return %c0_i32, %c0_i32_0 : i32, i32
  }
  func.func @transform_3(%arg0: i32) -> (i32, i32, i32, i32) {
    %c0_i32 = arith.constant 0 : i32
    %c0_i32_0 = arith.constant 0 : i32
    %c0_i32_1 = arith.constant 0 : i32
    %c0_i32_2 = arith.constant 0 : i32
    return %arg0, %c0_i32, %c0_i32_0, %c0_i32_1 : i32, i32, i32, i32
  }
}

module attributes {stable_mosaic.version = 11 : i64} {
  func.func @_block_tail_kernel(%arg0: i32, %arg1: i32, %arg2: i32, %arg3: memref<1x4x128xbf16, #tpu.memory_space<vmem>>, %arg4: memref<1x4x128xbf16, #tpu.memory_space<vmem>>, %arg5: memref<1x128xf32, #tpu.memory_space<vmem>>, %arg6: memref<1x128xf32, #tpu.memory_space<vmem>>, %arg7: memref<128x256xbf16, #tpu.memory_space<vmem>>, %arg8: memref<1x256xf32, #tpu.memory_space<vmem>>, %arg9: memref<1x256xf32, #tpu.memory_space<vmem>>, %arg10: memref<1x256xf32, #tpu.memory_space<vmem>>, %arg11: memref<256x128xbf16, #tpu.memory_space<vmem>>, %arg12: memref<1x128xf32, #tpu.memory_space<vmem>>, %arg13: memref<1x4x128xbf16, #tpu.memory_space<vmem>>, %arg14: memref<1x256xf32, #tpu.memory_space<vmem>>, %arg15: memref<4x256xbf16, #tpu.memory_space<vmem>>) attributes {dimension_semantics = [#tpu.dimension_semantics<parallel>, #tpu.dimension_semantics<arbitrary>, #tpu.dimension_semantics<arbitrary>], iteration_bounds = array<i64: 2, 2, 1>, scalar_prefetch = 0 : i64, scratch_operands = 2 : i64, tpu.core_type = #tpu.core_type<tc>, window_params = [{transform_indices = @transform_0, window_bounds = array<i64: 1, 4, 128>}, {transform_indices = @transform_1, window_bounds = array<i64: 1, 4, 128>}, {pipeline_mode = #tpu.pipeline_mode<synchronous>, transform_indices = @transform_2, window_bounds = array<i64: 1, 128>}, {pipeline_mode = #tpu.pipeline_mode<synchronous>, transform_indices = @transform_3, window_bounds = array<i64: 1, 128>}, {pipeline_mode = #tpu.pipeline_mode<synchronous>, transform_indices = @transform_4, window_bounds = array<i64: 128, 256>}, {pipeline_mode = #tpu.pipeline_mode<synchronous>, transform_indices = @transform_5, window_bounds = array<i64: 1, 256>}, {pipeline_mode = #tpu.pipeline_mode<synchronous>, transform_indices = @transform_6, window_bounds = array<i64: 1, 256>}, {pipeline_mode = #tpu.pipeline_mode<synchronous>, transform_indices = @transform_7, window_bounds = array<i64: 1, 256>}, {pipeline_mode = #tpu.pipeline_mode<synchronous>, transform_indices = @transform_8, window_bounds = array<i64: 256, 128>}, {pipeline_mode = #tpu.pipeline_mode<synchronous>, transform_indices = @transform_9, window_bounds = array<i64: 1, 128>}, {transform_indices = @transform_10, window_bounds = array<i64: 1, 4, 128>}]} {
    %c4_i32 = arith.constant 4 : i32
    %0 = arith.muli %arg2, %c4_i32 : i32
    %c0_i32 = arith.constant 0 : i32
    %1 = arith.cmpi eq, %arg1, %c0_i32 : i32
    %2 = arith.extui %1 : i1 to i32
    %c0_i32_0 = arith.constant 0 : i32
    %3 = arith.cmpi ne, %2, %c0_i32_0 : i32
    scf.if %3 {
      %c0_i32_2 = arith.constant 0 : i32
      %7 = arith.cmpi eq, %arg2, %c0_i32_2 : i32
      %8 = arith.extui %7 : i1 to i32
      %c0_i32_3 = arith.constant 0 : i32
      %9 = arith.cmpi ne, %8, %c0_i32_3 : i32
      scf.if %9 {
        %cst_29 = arith.constant 0.000000e+00 : f32
        %62 = vector.broadcast %cst_29 : f32 to vector<1x256xf32>
        %c0_30 = arith.constant 0 : index
        %c0_31 = arith.constant 0 : index
        %63 = vector.load %arg14[%c0_30, %c0_31] : memref<1x256xf32, #tpu.memory_space<vmem>>, vector<1x256xf32>
        tpu.vector_store %arg14[%c0_30, %c0_31], %62 {strides = array<i32>} : memref<1x256xf32, #tpu.memory_space<vmem>>, vector<1x256xf32>,
      } else {
      }
      %c0 = arith.constant 0 : index
      %c0_4 = arith.constant 0 : index
      %c0_5 = arith.constant 0 : index
      %10 = vector.load %arg3[%c0, %c0_4, %c0_5] : memref<1x4x128xbf16, #tpu.memory_space<vmem>>, vector<1x4x128xbf16>
      %11 = vector.shape_cast %10 : vector<1x4x128xbf16> to vector<4x128xbf16>
      %12 = arith.extf %11 : vector<4x128xbf16> to vector<4x128xf32>
      %cst = arith.constant dense<0.000000e+00> : vector<4xf32>
      %13 = vector.multi_reduction <add>, %12, %cst [1] : vector<4x128xf32> to vector<4xf32>
      %14 = vector.shape_cast %13 : vector<4xf32> to vector<4x1xf32>
      %cst_6 = arith.constant 1.562500e-02 : f32
      %15 = vector.broadcast %cst_6 : f32 to vector<4x1xf32>
      %16 = arith.mulf %14, %15 : vector<4x1xf32>
      %17 = arith.mulf %12, %12 : vector<4x128xf32>
      %cst_7 = arith.constant dense<0.000000e+00> : vector<4xf32>
      %18 = vector.multi_reduction <add>, %17, %cst_7 [1] : vector<4x128xf32> to vector<4xf32>
      %19 = vector.shape_cast %18 : vector<4xf32> to vector<4x1xf32>
      %cst_8 = arith.constant 1.562500e-02 : f32
      %20 = vector.broadcast %cst_8 : f32 to vector<4x1xf32>
      %21 = arith.mulf %19, %20 : vector<4x1xf32>
      %22 = arith.mulf %16, %16 : vector<4x1xf32>
      %23 = arith.subf %21, %22 : vector<4x1xf32>
      %cst_9 = arith.constant 0.000000e+00 : f32
      %24 = vector.broadcast %cst_9 : f32 to vector<4x1xf32>
      %25 = arith.maximumf %23, %24 : vector<4x1xf32>
      %26 = vector.broadcast %16 : vector<4x1xf32> to vector<4x128xf32>
      %27 = arith.subf %12, %26 : vector<4x128xf32>
      %cst_10 = arith.constant 9.99999997E-7 : f32
      %28 = vector.broadcast %cst_10 : f32 to vector<4x1xf32>
      %29 = arith.addf %25, %28 : vector<4x1xf32>
      %30 = math.rsqrt %29 : vector<4x1xf32>
      %31 = vector.broadcast %30 : vector<4x1xf32> to vector<4x128xf32>
      %32 = arith.mulf %27, %31 : vector<4x128xf32>
      %c0_11 = arith.constant 0 : index
      %c0_12 = arith.constant 0 : index
      %33 = vector.load %arg5[%c0_11, %c0_12] : memref<1x128xf32, #tpu.memory_space<vmem>>, vector<1x128xf32>
      %34 = vector.broadcast %33 : vector<1x128xf32> to vector<4x128xf32>
      %35 = arith.mulf %32, %34 : vector<4x128xf32>
      %c0_13 = arith.constant 0 : index
      %c0_14 = arith.constant 0 : index
      %36 = vector.load %arg6[%c0_13, %c0_14] : memref<1x128xf32, #tpu.memory_space<vmem>>, vector<1x128xf32>
      %37 = vector.broadcast %36 : vector<1x128xf32> to vector<4x128xf32>
      %38 = arith.addf %35, %37 : vector<4x128xf32>
      %39 = arith.truncf %38 : vector<4x128xf32> to vector<4x128xbf16>
      %c0_15 = arith.constant 0 : index
      %c0_16 = arith.constant 0 : index
      %40 = vector.load %arg7[%c0_15, %c0_16] : memref<128x256xbf16, #tpu.memory_space<vmem>>, vector<128x256xbf16>
      %cst_17 = arith.constant dense<0.000000e+00> : vector<4x256xf32>
      %41 = tpu.matmul %39, %40, %cst_17 {dimension_numbers = #tpu.dot_dimension_numbers<[1], [0], [0], [1], [0, 0, 1, 1], [], []>} : vector<4x128xbf16>, vector<128x256xbf16>, vector<4x256xf32> -> vector<4x256xf32>
      %c0_18 = arith.constant 0 : index
      %c0_19 = arith.constant 0 : index
      %42 = vector.load %arg8[%c0_18, %c0_19] : memref<1x256xf32, #tpu.memory_space<vmem>>, vector<1x256xf32>
      %43 = vector.broadcast %42 : vector<1x256xf32> to vector<4x256xf32>
      %44 = arith.addf %41, %43 : vector<4x256xf32>
      %cst_20 = arith.constant 5.000000e-01 : f32
      %45 = vector.broadcast %cst_20 : f32 to vector<4x256xf32>
      %46 = arith.mulf %45, %44 : vector<4x256xf32>
      %cst_21 = arith.constant 0.707106769 : f32
      %47 = vector.broadcast %cst_21 : f32 to vector<4x256xf32>
      %48 = arith.mulf %44, %47 : vector<4x256xf32>
      %49 = math.erf %48 : vector<4x256xf32>
      %cst_22 = arith.constant 1.000000e+00 : f32
      %50 = vector.broadcast %cst_22 : f32 to vector<4x256xf32>
      %51 = arith.addf %50, %49 : vector<4x256xf32>
      %52 = arith.mulf %46, %51 : vector<4x256xf32>
      %c0_23 = arith.constant 0 : index
      %c0_24 = arith.constant 0 : index
      %53 = vector.load %arg14[%c0_23, %c0_24] : memref<1x256xf32, #tpu.memory_space<vmem>>, vector<1x256xf32>
      %54 = arith.mulf %52, %52 : vector<4x256xf32>
      %cst_25 = arith.constant dense<0.000000e+00> : vector<256xf32>
      %55 = vector.multi_reduction <add>, %54, %cst_25 [0] : vector<4x256xf32> to vector<256xf32>
      %56 = vector.shape_cast %55 : vector<256xf32> to vector<1x256xf32>
      %57 = arith.addf %53, %56 : vector<1x256xf32>
      %c0_26 = arith.constant 0 : index
      %c0_27 = arith.constant 0 : index
      %58 = vector.load %arg14[%c0_26, %c0_27] : memref<1x256xf32, #tpu.memory_space<vmem>>, vector<1x256xf32>
      tpu.vector_store %arg14[%c0_26, %c0_27], %57 {strides = array<i32>} : memref<1x256xf32, #tpu.memory_space<vmem>>, vector<1x256xf32>,
      %59 = arith.truncf %52 : vector<4x256xf32> to vector<4x256xbf16>
      %60 = arith.index_cast %0 : i32 to index
      %c0_28 = arith.constant 0 : index
      %61 = vector.load %arg15[%60, %c0_28] : memref<4x256xbf16, #tpu.memory_space<vmem>>, vector<4x256xbf16>
      tpu.vector_store %arg15[%60, %c0_28], %59 {strides = array<i32>} : memref<4x256xbf16, #tpu.memory_space<vmem>>, vector<4x256xbf16>,
    } else {
    }
    %c1_i32 = arith.constant 1 : i32
    %4 = arith.cmpi eq, %arg1, %c1_i32 : i32
    %5 = arith.extui %4 : i1 to i32
    %c0_i32_1 = arith.constant 0 : i32
    %6 = arith.cmpi ne, %5, %c0_i32_1 : i32
    scf.if %6 {
      %7 = arith.index_cast %0 : i32 to index
      %c0 = arith.constant 0 : index
      %8 = vector.load %arg15[%7, %c0] : memref<4x256xbf16, #tpu.memory_space<vmem>>, vector<4x256xbf16>
      %9 = arith.extf %8 : vector<4x256xbf16> to vector<4x256xf32>
      %c0_2 = arith.constant 0 : index
      %c0_3 = arith.constant 0 : index
      %10 = vector.load %arg14[%c0_2, %c0_3] : memref<1x256xf32, #tpu.memory_space<vmem>>, vector<1x256xf32>
      %11 = math.sqrt %10 : vector<1x256xf32>
      %cst = arith.constant dense<0.000000e+00> : vector<1xf32>
      %12 = vector.multi_reduction <add>, %11, %cst [1] : vector<1x256xf32> to vector<1xf32>
      %13 = vector.shape_cast %12 : vector<1xf32> to vector<1x1xf32>
      %cst_4 = arith.constant 3.906250e-03 : f32
      %14 = vector.broadcast %cst_4 : f32 to vector<1x1xf32>
      %15 = arith.mulf %13, %14 : vector<1x1xf32>
      %cst_5 = arith.constant 9.99999997E-7 : f32
      %16 = vector.broadcast %cst_5 : f32 to vector<1x1xf32>
      %17 = arith.addf %15, %16 : vector<1x1xf32>
      %18 = vector.broadcast %17 : vector<1x1xf32> to vector<1x256xf32>
      %19 = arith.divf %11, %18 : vector<1x256xf32>
      %c0_6 = arith.constant 0 : index
      %c0_7 = arith.constant 0 : index
      %20 = vector.load %arg9[%c0_6, %c0_7] : memref<1x256xf32, #tpu.memory_space<vmem>>, vector<1x256xf32>
      %21 = vector.broadcast %19 : vector<1x256xf32> to vector<4x256xf32>
      %22 = arith.mulf %9, %21 : vector<4x256xf32>
      %23 = vector.broadcast %20 : vector<1x256xf32> to vector<4x256xf32>
      %24 = arith.mulf %23, %22 : vector<4x256xf32>
      %c0_8 = arith.constant 0 : index
      %c0_9 = arith.constant 0 : index
      %25 = vector.load %arg10[%c0_8, %c0_9] : memref<1x256xf32, #tpu.memory_space<vmem>>, vector<1x256xf32>
      %26 = vector.broadcast %25 : vector<1x256xf32> to vector<4x256xf32>
      %27 = arith.addf %24, %26 : vector<4x256xf32>
      %28 = arith.addf %27, %9 : vector<4x256xf32>
      %29 = arith.truncf %28 : vector<4x256xf32> to vector<4x256xbf16>
      %c0_10 = arith.constant 0 : index
      %c0_11 = arith.constant 0 : index
      %30 = vector.load %arg11[%c0_10, %c0_11] : memref<256x128xbf16, #tpu.memory_space<vmem>>, vector<256x128xbf16>
      %cst_12 = arith.constant dense<0.000000e+00> : vector<4x128xf32>
      %31 = tpu.matmul %29, %30, %cst_12 {dimension_numbers = #tpu.dot_dimension_numbers<[1], [0], [0], [1], [0, 0, 1, 1], [], []>} : vector<4x256xbf16>, vector<256x128xbf16>, vector<4x128xf32> -> vector<4x128xf32>
      %c0_13 = arith.constant 0 : index
      %c0_14 = arith.constant 0 : index
      %32 = vector.load %arg12[%c0_13, %c0_14] : memref<1x128xf32, #tpu.memory_space<vmem>>, vector<1x128xf32>
      %33 = vector.broadcast %32 : vector<1x128xf32> to vector<4x128xf32>
      %34 = arith.addf %31, %33 : vector<4x128xf32>
      %c0_15 = arith.constant 0 : index
      %c0_16 = arith.constant 0 : index
      %c0_17 = arith.constant 0 : index
      %35 = vector.load %arg4[%c0_15, %c0_16, %c0_17] : memref<1x4x128xbf16, #tpu.memory_space<vmem>>, vector<1x4x128xbf16>
      %36 = vector.shape_cast %35 : vector<1x4x128xbf16> to vector<4x128xbf16>
      %37 = arith.extf %36 : vector<4x128xbf16> to vector<4x128xf32>
      %38 = arith.addf %37, %34 : vector<4x128xf32>
      %39 = arith.truncf %38 : vector<4x128xf32> to vector<4x128xbf16>
      %c0_18 = arith.constant 0 : index
      %c0_19 = arith.constant 0 : index
      %c0_20 = arith.constant 0 : index
      %40 = vector.load %arg13[%c0_18, %c0_19, %c0_20] : memref<1x4x128xbf16, #tpu.memory_space<vmem>>, vector<1x4x128xbf16>
      %41 = vector.shape_cast %40 : vector<1x4x128xbf16> to vector<4x128xbf16>
      %42 = vector.shape_cast %39 : vector<4x128xbf16> to vector<1x4x128xbf16>
      tpu.vector_store %arg13[%c0_18, %c0_19, %c0_20], %42 {strides = array<i32>} : memref<1x4x128xbf16, #tpu.memory_space<vmem>>, vector<1x4x128xbf16>,
    } else {
    }
    return
  }
  func.func @transform_0(%arg0: i32, %arg1: i32, %arg2: i32) -> (i32, i32, i32) {
    %c0_i32 = arith.constant 0 : i32
    %c0_i32_0 = arith.constant 0 : i32
    return %arg0, %arg2, %c0_i32 : i32, i32, i32
  }
  func.func @transform_1(%arg0: i32, %arg1: i32, %arg2: i32) -> (i32, i32, i32) {
    %c0_i32 = arith.constant 0 : i32
    %c0_i32_0 = arith.constant 0 : i32
    return %arg0, %arg2, %c0_i32 : i32, i32, i32
  }
  func.func @transform_2(%arg0: i32, %arg1: i32, %arg2: i32) -> (i32, i32) {
    %c0_i32 = arith.constant 0 : i32
    %c0_i32_0 = arith.constant 0 : i32
    %c0_i32_1 = arith.constant 0 : i32
    return %c0_i32, %c0_i32_0 : i32, i32
  }
  func.func @transform_3(%arg0: i32, %arg1: i32, %arg2: i32) -> (i32, i32) {
    %c0_i32 = arith.constant 0 : i32
    %c0_i32_0 = arith.constant 0 : i32
    %c0_i32_1 = arith.constant 0 : i32
    return %c0_i32, %c0_i32_0 : i32, i32
  }
  func.func @transform_4(%arg0: i32, %arg1: i32, %arg2: i32) -> (i32, i32) {
    %c0_i32 = arith.constant 0 : i32
    %c0_i32_0 = arith.constant 0 : i32
    %c0_i32_1 = arith.constant 0 : i32
    return %c0_i32, %c0_i32_0 : i32, i32
  }
  func.func @transform_5(%arg0: i32, %arg1: i32, %arg2: i32) -> (i32, i32) {
    %c0_i32 = arith.constant 0 : i32
    %c0_i32_0 = arith.constant 0 : i32
    %c0_i32_1 = arith.constant 0 : i32
    return %c0_i32, %c0_i32_0 : i32, i32
  }
  func.func @transform_6(%arg0: i32, %arg1: i32, %arg2: i32) -> (i32, i32) {
    %c0_i32 = arith.constant 0 : i32
    %c0_i32_0 = arith.constant 0 : i32
    %c0_i32_1 = arith.constant 0 : i32
    return %c0_i32, %c0_i32_0 : i32, i32
  }
  func.func @transform_7(%arg0: i32, %arg1: i32, %arg2: i32) -> (i32, i32) {
    %c0_i32 = arith.constant 0 : i32
    %c0_i32_0 = arith.constant 0 : i32
    %c0_i32_1 = arith.constant 0 : i32
    return %c0_i32, %c0_i32_0 : i32, i32
  }
  func.func @transform_8(%arg0: i32, %arg1: i32, %arg2: i32) -> (i32, i32) {
    %c0_i32 = arith.constant 0 : i32
    %c0_i32_0 = arith.constant 0 : i32
    %c0_i32_1 = arith.constant 0 : i32
    return %c0_i32, %c0_i32_0 : i32, i32
  }
  func.func @transform_9(%arg0: i32, %arg1: i32, %arg2: i32) -> (i32, i32) {
    %c0_i32 = arith.constant 0 : i32
    %c0_i32_0 = arith.constant 0 : i32
    %c0_i32_1 = arith.constant 0 : i32
    return %c0_i32, %c0_i32_0 : i32, i32
  }
  func.func @transform_10(%arg0: i32, %arg1: i32, %arg2: i32) -> (i32, i32, i32) {
    %0 = arith.muli %arg1, %arg2 : i32
    %c0_i32 = arith.constant 0 : i32
    %c0_i32_0 = arith.constant 0 : i32
    return %arg0, %0, %c0_i32 : i32, i32, i32
  }
}

module attributes {stable_mosaic.version = 11 : i64} {
  func.func @_block_tail_kernel(%arg0: i32, %arg1: i32, %arg2: i32, %arg3: memref<1x4x128xbf16, #tpu.memory_space<vmem>>, %arg4: memref<1x4x128xbf16, #tpu.memory_space<vmem>>, %arg5: memref<1x128xf32, #tpu.memory_space<vmem>>, %arg6: memref<1x128xf32, #tpu.memory_space<vmem>>, %arg7: memref<128x256xbf16, #tpu.memory_space<vmem>>, %arg8: memref<1x256xf32, #tpu.memory_space<vmem>>, %arg9: memref<1x256xf32, #tpu.memory_space<vmem>>, %arg10: memref<1x256xf32, #tpu.memory_space<vmem>>, %arg11: memref<256x128xbf16, #tpu.memory_space<vmem>>, %arg12: memref<1x128xf32, #tpu.memory_space<vmem>>, %arg13: memref<1x4x128xbf16, #tpu.memory_space<vmem>>, %arg14: memref<1x256xf32, #tpu.memory_space<vmem>>, %arg15: memref<4x256xbf16, #tpu.memory_space<vmem>>) attributes {dimension_semantics = [#tpu.dimension_semantics<parallel>, #tpu.dimension_semantics<arbitrary>, #tpu.dimension_semantics<arbitrary>], iteration_bounds = array<i64: 2, 2, 1>, scalar_prefetch = 0 : i64, scratch_operands = 2 : i64, tpu.core_type = #tpu.core_type<tc>, window_params = [{transform_indices = @transform_0, window_bounds = array<i64: 1, 4, 128>}, {transform_indices = @transform_1, window_bounds = array<i64: 1, 4, 128>}, {pipeline_mode = #tpu.pipeline_mode<synchronous>, transform_indices = @transform_2, window_bounds = array<i64: 1, 128>}, {pipeline_mode = #tpu.pipeline_mode<synchronous>, transform_indices = @transform_3, window_bounds = array<i64: 1, 128>}, {pipeline_mode = #tpu.pipeline_mode<synchronous>, transform_indices = @transform_4, window_bounds = array<i64: 128, 256>}, {pipeline_mode = #tpu.pipeline_mode<synchronous>, transform_indices = @transform_5, window_bounds = array<i64: 1, 256>}, {pipeline_mode = #tpu.pipeline_mode<synchronous>, transform_indices = @transform_6, window_bounds = array<i64: 1, 256>}, {pipeline_mode = #tpu.pipeline_mode<synchronous>, transform_indices = @transform_7, window_bounds = array<i64: 1, 256>}, {pipeline_mode = #tpu.pipeline_mode<synchronous>, transform_indices = @transform_8, window_bounds = array<i64: 256, 128>}, {pipeline_mode = #tpu.pipeline_mode<synchronous>, transform_indices = @transform_9, window_bounds = array<i64: 1, 128>}, {transform_indices = @transform_10, window_bounds = array<i64: 1, 4, 128>}]} {
    %c4_i32 = arith.constant 4 : i32
    %0 = arith.muli %arg2, %c4_i32 : i32
    %c0_i32 = arith.constant 0 : i32
    %1 = arith.cmpi eq, %arg1, %c0_i32 : i32
    %2 = arith.extui %1 : i1 to i32
    %c0_i32_0 = arith.constant 0 : i32
    %3 = arith.cmpi ne, %2, %c0_i32_0 : i32
    scf.if %3 {
      %c0_i32_2 = arith.constant 0 : i32
      %7 = arith.cmpi eq, %arg2, %c0_i32_2 : i32
      %8 = arith.extui %7 : i1 to i32
      %c0_i32_3 = arith.constant 0 : i32
      %9 = arith.cmpi ne, %8, %c0_i32_3 : i32
      scf.if %9 {
        %cst_29 = arith.constant 0.000000e+00 : f32
        %62 = vector.broadcast %cst_29 : f32 to vector<1x256xf32>
        %c0_30 = arith.constant 0 : index
        %c0_31 = arith.constant 0 : index
        %63 = vector.load %arg14[%c0_30, %c0_31] : memref<1x256xf32, #tpu.memory_space<vmem>>, vector<1x256xf32>
        tpu.vector_store %arg14[%c0_30, %c0_31], %62 {strides = array<i32>} : memref<1x256xf32, #tpu.memory_space<vmem>>, vector<1x256xf32>,
      } else {
      }
      %c0 = arith.constant 0 : index
      %c0_4 = arith.constant 0 : index
      %c0_5 = arith.constant 0 : index
      %10 = vector.load %arg3[%c0, %c0_4, %c0_5] : memref<1x4x128xbf16, #tpu.memory_space<vmem>>, vector<1x4x128xbf16>
      %11 = vector.shape_cast %10 : vector<1x4x128xbf16> to vector<4x128xbf16>
      %12 = arith.extf %11 : vector<4x128xbf16> to vector<4x128xf32>
      %cst = arith.constant dense<0.000000e+00> : vector<4xf32>
      %13 = vector.multi_reduction <add>, %12, %cst [1] : vector<4x128xf32> to vector<4xf32>
      %14 = vector.shape_cast %13 : vector<4xf32> to vector<4x1xf32>
      %cst_6 = arith.constant 1.562500e-02 : f32
      %15 = vector.broadcast %cst_6 : f32 to vector<4x1xf32>
      %16 = arith.mulf %14, %15 : vector<4x1xf32>
      %17 = arith.mulf %12, %12 : vector<4x128xf32>
      %cst_7 = arith.constant dense<0.000000e+00> : vector<4xf32>
      %18 = vector.multi_reduction <add>, %17, %cst_7 [1] : vector<4x128xf32> to vector<4xf32>
      %19 = vector.shape_cast %18 : vector<4xf32> to vector<4x1xf32>
      %cst_8 = arith.constant 1.562500e-02 : f32
      %20 = vector.broadcast %cst_8 : f32 to vector<4x1xf32>
      %21 = arith.mulf %19, %20 : vector<4x1xf32>
      %22 = arith.mulf %16, %16 : vector<4x1xf32>
      %23 = arith.subf %21, %22 : vector<4x1xf32>
      %cst_9 = arith.constant 0.000000e+00 : f32
      %24 = vector.broadcast %cst_9 : f32 to vector<4x1xf32>
      %25 = arith.maximumf %23, %24 : vector<4x1xf32>
      %26 = vector.broadcast %16 : vector<4x1xf32> to vector<4x128xf32>
      %27 = arith.subf %12, %26 : vector<4x128xf32>
      %cst_10 = arith.constant 9.99999997E-7 : f32
      %28 = vector.broadcast %cst_10 : f32 to vector<4x1xf32>
      %29 = arith.addf %25, %28 : vector<4x1xf32>
      %30 = math.rsqrt %29 : vector<4x1xf32>
      %31 = vector.broadcast %30 : vector<4x1xf32> to vector<4x128xf32>
      %32 = arith.mulf %27, %31 : vector<4x128xf32>
      %c0_11 = arith.constant 0 : index
      %c0_12 = arith.constant 0 : index
      %33 = vector.load %arg5[%c0_11, %c0_12] : memref<1x128xf32, #tpu.memory_space<vmem>>, vector<1x128xf32>
      %34 = vector.broadcast %33 : vector<1x128xf32> to vector<4x128xf32>
      %35 = arith.mulf %32, %34 : vector<4x128xf32>
      %c0_13 = arith.constant 0 : index
      %c0_14 = arith.constant 0 : index
      %36 = vector.load %arg6[%c0_13, %c0_14] : memref<1x128xf32, #tpu.memory_space<vmem>>, vector<1x128xf32>
      %37 = vector.broadcast %36 : vector<1x128xf32> to vector<4x128xf32>
      %38 = arith.addf %35, %37 : vector<4x128xf32>
      %39 = arith.truncf %38 : vector<4x128xf32> to vector<4x128xbf16>
      %c0_15 = arith.constant 0 : index
      %c0_16 = arith.constant 0 : index
      %40 = vector.load %arg7[%c0_15, %c0_16] : memref<128x256xbf16, #tpu.memory_space<vmem>>, vector<128x256xbf16>
      %cst_17 = arith.constant dense<0.000000e+00> : vector<4x256xf32>
      %41 = tpu.matmul %39, %40, %cst_17 {dimension_numbers = #tpu.dot_dimension_numbers<[1], [0], [0], [1], [0, 0, 1, 1], [], []>} : vector<4x128xbf16>, vector<128x256xbf16>, vector<4x256xf32> -> vector<4x256xf32>
      %c0_18 = arith.constant 0 : index
      %c0_19 = arith.constant 0 : index
      %42 = vector.load %arg8[%c0_18, %c0_19] : memref<1x256xf32, #tpu.memory_space<vmem>>, vector<1x256xf32>
      %43 = vector.broadcast %42 : vector<1x256xf32> to vector<4x256xf32>
      %44 = arith.addf %41, %43 : vector<4x256xf32>
      %cst_20 = arith.constant 5.000000e-01 : f32
      %45 = vector.broadcast %cst_20 : f32 to vector<4x256xf32>
      %46 = arith.mulf %45, %44 : vector<4x256xf32>
      %cst_21 = arith.constant 0.707106769 : f32
      %47 = vector.broadcast %cst_21 : f32 to vector<4x256xf32>
      %48 = arith.mulf %44, %47 : vector<4x256xf32>
      %49 = math.erf %48 : vector<4x256xf32>
      %cst_22 = arith.constant 1.000000e+00 : f32
      %50 = vector.broadcast %cst_22 : f32 to vector<4x256xf32>
      %51 = arith.addf %50, %49 : vector<4x256xf32>
      %52 = arith.mulf %46, %51 : vector<4x256xf32>
      %c0_23 = arith.constant 0 : index
      %c0_24 = arith.constant 0 : index
      %53 = vector.load %arg14[%c0_23, %c0_24] : memref<1x256xf32, #tpu.memory_space<vmem>>, vector<1x256xf32>
      %54 = arith.mulf %52, %52 : vector<4x256xf32>
      %cst_25 = arith.constant dense<0.000000e+00> : vector<256xf32>
      %55 = vector.multi_reduction <add>, %54, %cst_25 [0] : vector<4x256xf32> to vector<256xf32>
      %56 = vector.shape_cast %55 : vector<256xf32> to vector<1x256xf32>
      %57 = arith.addf %53, %56 : vector<1x256xf32>
      %c0_26 = arith.constant 0 : index
      %c0_27 = arith.constant 0 : index
      %58 = vector.load %arg14[%c0_26, %c0_27] : memref<1x256xf32, #tpu.memory_space<vmem>>, vector<1x256xf32>
      tpu.vector_store %arg14[%c0_26, %c0_27], %57 {strides = array<i32>} : memref<1x256xf32, #tpu.memory_space<vmem>>, vector<1x256xf32>,
      %59 = arith.truncf %52 : vector<4x256xf32> to vector<4x256xbf16>
      %60 = arith.index_cast %0 : i32 to index
      %c0_28 = arith.constant 0 : index
      %61 = vector.load %arg15[%60, %c0_28] : memref<4x256xbf16, #tpu.memory_space<vmem>>, vector<4x256xbf16>
      tpu.vector_store %arg15[%60, %c0_28], %59 {strides = array<i32>} : memref<4x256xbf16, #tpu.memory_space<vmem>>, vector<4x256xbf16>,
    } else {
    }
    %c1_i32 = arith.constant 1 : i32
    %4 = arith.cmpi eq, %arg1, %c1_i32 : i32
    %5 = arith.extui %4 : i1 to i32
    %c0_i32_1 = arith.constant 0 : i32
    %6 = arith.cmpi ne, %5, %c0_i32_1 : i32
    scf.if %6 {
      %7 = arith.index_cast %0 : i32 to index
      %c0 = arith.constant 0 : index
      %8 = vector.load %arg15[%7, %c0] : memref<4x256xbf16, #tpu.memory_space<vmem>>, vector<4x256xbf16>
      %9 = arith.extf %8 : vector<4x256xbf16> to vector<4x256xf32>
      %c0_2 = arith.constant 0 : index
      %c0_3 = arith.constant 0 : index
      %10 = vector.load %arg14[%c0_2, %c0_3] : memref<1x256xf32, #tpu.memory_space<vmem>>, vector<1x256xf32>
      %11 = math.sqrt %10 : vector<1x256xf32>
      %cst = arith.constant dense<0.000000e+00> : vector<1xf32>
      %12 = vector.multi_reduction <add>, %11, %cst [1] : vector<1x256xf32> to vector<1xf32>
      %13 = vector.shape_cast %12 : vector<1xf32> to vector<1x1xf32>
      %cst_4 = arith.constant 3.906250e-03 : f32
      %14 = vector.broadcast %cst_4 : f32 to vector<1x1xf32>
      %15 = arith.mulf %13, %14 : vector<1x1xf32>
      %cst_5 = arith.constant 9.99999997E-7 : f32
      %16 = vector.broadcast %cst_5 : f32 to vector<1x1xf32>
      %17 = arith.addf %15, %16 : vector<1x1xf32>
      %18 = vector.broadcast %17 : vector<1x1xf32> to vector<1x256xf32>
      %19 = arith.divf %11, %18 : vector<1x256xf32>
      %c0_6 = arith.constant 0 : index
      %c0_7 = arith.constant 0 : index
      %20 = vector.load %arg9[%c0_6, %c0_7] : memref<1x256xf32, #tpu.memory_space<vmem>>, vector<1x256xf32>
      %21 = vector.broadcast %19 : vector<1x256xf32> to vector<4x256xf32>
      %22 = arith.mulf %9, %21 : vector<4x256xf32>
      %23 = vector.broadcast %20 : vector<1x256xf32> to vector<4x256xf32>
      %24 = arith.mulf %23, %22 : vector<4x256xf32>
      %c0_8 = arith.constant 0 : index
      %c0_9 = arith.constant 0 : index
      %25 = vector.load %arg10[%c0_8, %c0_9] : memref<1x256xf32, #tpu.memory_space<vmem>>, vector<1x256xf32>
      %26 = vector.broadcast %25 : vector<1x256xf32> to vector<4x256xf32>
      %27 = arith.addf %24, %26 : vector<4x256xf32>
      %28 = arith.addf %27, %9 : vector<4x256xf32>
      %29 = arith.truncf %28 : vector<4x256xf32> to vector<4x256xbf16>
      %c0_10 = arith.constant 0 : index
      %c0_11 = arith.constant 0 : index
      %30 = vector.load %arg11[%c0_10, %c0_11] : memref<256x128xbf16, #tpu.memory_space<vmem>>, vector<256x128xbf16>
      %cst_12 = arith.constant dense<0.000000e+00> : vector<4x128xf32>
      %31 = tpu.matmul %29, %30, %cst_12 {dimension_numbers = #tpu.dot_dimension_numbers<[1], [0], [0], [1], [0, 0, 1, 1], [], []>} : vector<4x256xbf16>, vector<256x128xbf16>, vector<4x128xf32> -> vector<4x128xf32>
      %c0_13 = arith.constant 0 : index
      %c0_14 = arith.constant 0 : index
      %32 = vector.load %arg12[%c0_13, %c0_14] : memref<1x128xf32, #tpu.memory_space<vmem>>, vector<1x128xf32>
      %33 = vector.broadcast %32 : vector<1x128xf32> to vector<4x128xf32>
      %34 = arith.addf %31, %33 : vector<4x128xf32>
      %c0_15 = arith.constant 0 : index
      %c0_16 = arith.constant 0 : index
      %c0_17 = arith.constant 0 : index
      %35 = vector.load %arg4[%c0_15, %c0_16, %c0_17] : memref<1x4x128xbf16, #tpu.memory_space<vmem>>, vector<1x4x128xbf16>
      %36 = vector.shape_cast %35 : vector<1x4x128xbf16> to vector<4x128xbf16>
      %37 = arith.extf %36 : vector<4x128xbf16> to vector<4x128xf32>
      %38 = arith.addf %37, %34 : vector<4x128xf32>
      %39 = arith.truncf %38 : vector<4x128xf32> to vector<4x128xbf16>
      %c0_18 = arith.constant 0 : index
      %c0_19 = arith.constant 0 : index
      %c0_20 = arith.constant 0 : index
      %40 = vector.load %arg13[%c0_18, %c0_19, %c0_20] : memref<1x4x128xbf16, #tpu.memory_space<vmem>>, vector<1x4x128xbf16>
      %41 = vector.shape_cast %40 : vector<1x4x128xbf16> to vector<4x128xbf16>
      %42 = vector.shape_cast %39 : vector<4x128xbf16> to vector<1x4x128xbf16>
      tpu.vector_store %arg13[%c0_18, %c0_19, %c0_20], %42 {strides = array<i32>} : memref<1x4x128xbf16, #tpu.memory_space<vmem>>, vector<1x4x128xbf16>,
    } else {
    }
    return
  }
  func.func @transform_0(%arg0: i32, %arg1: i32, %arg2: i32) -> (i32, i32, i32) {
    %c0_i32 = arith.constant 0 : i32
    %c0_i32_0 = arith.constant 0 : i32
    return %arg0, %arg2, %c0_i32 : i32, i32, i32
  }
  func.func @transform_1(%arg0: i32, %arg1: i32, %arg2: i32) -> (i32, i32, i32) {
    %c0_i32 = arith.constant 0 : i32
    %c0_i32_0 = arith.constant 0 : i32
    return %arg0, %arg2, %c0_i32 : i32, i32, i32
  }
  func.func @transform_2(%arg0: i32, %arg1: i32, %arg2: i32) -> (i32, i32) {
    %c0_i32 = arith.constant 0 : i32
    %c0_i32_0 = arith.constant 0 : i32
    %c0_i32_1 = arith.constant 0 : i32
    return %c0_i32, %c0_i32_0 : i32, i32
  }
  func.func @transform_3(%arg0: i32, %arg1: i32, %arg2: i32) -> (i32, i32) {
    %c0_i32 = arith.constant 0 : i32
    %c0_i32_0 = arith.constant 0 : i32
    %c0_i32_1 = arith.constant 0 : i32
    return %c0_i32, %c0_i32_0 : i32, i32
  }
  func.func @transform_4(%arg0: i32, %arg1: i32, %arg2: i32) -> (i32, i32) {
    %c0_i32 = arith.constant 0 : i32
    %c0_i32_0 = arith.constant 0 : i32
    %c0_i32_1 = arith.constant 0 : i32
    return %c0_i32, %c0_i32_0 : i32, i32
  }
  func.func @transform_5(%arg0: i32, %arg1: i32, %arg2: i32) -> (i32, i32) {
    %c0_i32 = arith.constant 0 : i32
    %c0_i32_0 = arith.constant 0 : i32
    %c0_i32_1 = arith.constant 0 : i32
    return %c0_i32, %c0_i32_0 : i32, i32
  }
  func.func @transform_6(%arg0: i32, %arg1: i32, %arg2: i32) -> (i32, i32) {
    %c0_i32 = arith.constant 0 : i32
    %c0_i32_0 = arith.constant 0 : i32
    %c0_i32_1 = arith.constant 0 : i32
    return %c0_i32, %c0_i32_0 : i32, i32
  }
  func.func @transform_7(%arg0: i32, %arg1: i32, %arg2: i32) -> (i32, i32) {
    %c0_i32 = arith.constant 0 : i32
    %c0_i32_0 = arith.constant 0 : i32
    %c0_i32_1 = arith.constant 0 : i32
    return %c0_i32, %c0_i32_0 : i32, i32
  }
  func.func @transform_8(%arg0: i32, %arg1: i32, %arg2: i32) -> (i32, i32) {
    %c0_i32 = arith.constant 0 : i32
    %c0_i32_0 = arith.constant 0 : i32
    %c0_i32_1 = arith.constant 0 : i32
    return %c0_i32, %c0_i32_0 : i32, i32
  }
  func.func @transform_9(%arg0: i32, %arg1: i32, %arg2: i32) -> (i32, i32) {
    %c0_i32 = arith.constant 0 : i32
    %c0_i32_0 = arith.constant 0 : i32
    %c0_i32_1 = arith.constant 0 : i32
    return %c0_i32, %c0_i32_0 : i32, i32
  }
  func.func @transform_10(%arg0: i32, %arg1: i32, %arg2: i32) -> (i32, i32, i32) {
    %0 = arith.muli %arg1, %arg2 : i32
    %c0_i32 = arith.constant 0 : i32
    %c0_i32_0 = arith.constant 0 : i32
    return %arg0, %0, %c0_i32 : i32, i32, i32
  }
}

</mosaic_0001>

<llo_original>
// kernel: convnextv2_forward.13
$region0: #{convnextv2_forward.13}
  #allocation0 [shape = 'u32[]', space=smem, size = 0x4, offset = 0x4, fixed_abs, tag = 'smem constant byte address 0x4 - core index']
  #allocation1 [shape = 'u32[72,128]{1,0:T(1,128)}', space=vmem, size = 0x9000, scoped, tag = 'internal scratch']
  %s0 = inlined_call_operand.vmem [shape: bf16[32,128], index: 0, kind: input, shape index: {}]
  %s1 = inlined_call_operand.vmem [shape: f32[1,128], index: 1, kind: input, shape index: {}]
  %s2 = inlined_call_operand.vmem [shape: f32[1,128], index: 2, kind: input, shape index: {}]
  %s3 = inlined_call_operand.vmem [shape: bf16[32,128], index: 3, kind: output, shape index: {}]
  %s4 = sld [smem:[#allocation0]]
  $region22: #{convnextv2_forward.13} parent=0
    _
  %s6 = ssub.s32 1, %s4
  %s7 = scalar_select 0, %s6, %s4
  // Predicated region
  $region2: #{convnextv2_forward.13} parent=0 // pred_check
    _
  $region3: #{convnextv2_forward.13} parent=0 // pred_check_branch
    %9 = sbr.rel (0) target = $region5
  $region4: #{convnextv2_forward.13} parent=0 // pred_region
    _
  $region5: #{convnextv2_forward.13} parent=0 // pred_fallthru
    _
  // Predicated region
  $region6: #{convnextv2_forward.13} parent=0 // pred_check
    _
  $region7: #{convnextv2_forward.13} parent=0 // pred_check_branch
    %11 = sbr.rel (0) target = $region9
  $region8: #{convnextv2_forward.13} parent=0 // pred_region
    _
  $region9: #{convnextv2_forward.13} parent=0 // pred_fallthru
    _
  // Predicated region
  $region10: #{convnextv2_forward.13} parent=0 // pred_check
    _
  $region11: #{convnextv2_forward.13} parent=0 // pred_check_branch
    %13 = sbr.rel (0) target = $region13
  $region12: #{convnextv2_forward.13} parent=0 // pred_region
    _
  $region13: #{convnextv2_forward.13} parent=0 // pred_fallthru
    _
  %v14 = vld [vmem:[%s0] sm:$0xf]
  %v15 = vld [vmem:[%s0 + $0x4] sm:$0xf]
  %v16 = vld [vmem:[%s0 + $0x8] sm:$0xf]
  %v17 = vld [vmem:[%s0 + $0xc] sm:$0xf]
  %v18 = vunpack.c.l.bf16 %v14
  %v19 = vunpack.c.l.bf16 %v15
  %v20 = vunpack.c.l.bf16 %v16
  %v21 = vunpack.c.l.bf16 %v17
  %22 = vadd.xlane.f32.xlu0 %v18
  %v23 = vpop.xlane.xlu0 %22
  %24 = vadd.xlane.f32.xlu0 %v19
  %v25 = vpop.xlane.xlu0 %24
  %26 = vadd.xlane.f32.xlu0 %v20
  %v27 = vpop.xlane.xlu0 %26
  %28 = vadd.xlane.f32.xlu0 %v21
  %v29 = vpop.xlane.xlu0 %28
  %v30 = vmul.f32 %v23, 0.03125
  %v31 = vmul.f32 %v25, 0.03125
  %v32 = vmul.f32 %v27, 0.03125
  %v33 = vmul.f32 %v29, 0.03125
  %v34 = vmul.f32 %v18, %v18
  %v35 = vmul.f32 %v19, %v19
  %v36 = vmul.f32 %v20, %v20
  %v37 = vmul.f32 %v21, %v21
  %38 = vadd.xlane.f32.xlu0 %v34
  %v39 = vpop.xlane.xlu0 %38
  %40 = vadd.xlane.f32.xlu0 %v35
  %v41 = vpop.xlane.xlu0 %40
  %42 = vadd.xlane.f32.xlu0 %v36
  %v43 = vpop.xlane.xlu0 %42
  %44 = vadd.xlane.f32.xlu0 %v37
  %v45 = vpop.xlane.xlu0 %44
  %v46 = vmul.f32 %v39, 0.03125
  %v47 = vmul.f32 %v41, 0.03125
  %v48 = vmul.f32 %v43, 0.03125
  %v49 = vmul.f32 %v45, 0.03125
  %v50 = vmul.f32 %v30, %v30
  %v51 = vmul.f32 %v31, %v31
  %v52 = vmul.f32 %v32, %v32
  %v53 = vmul.f32 %v33, %v33
  %v54 = vsub.f32 %v46, %v50
  %v55 = vsub.f32 %v47, %v51
  %v56 = vsub.f32 %v48, %v52
  %v57 = vsub.f32 %v49, %v53
  %v58 = vmax.f32 %v54, 0.0
  %v59 = vmax.f32 %v55, 0.0
  %v60 = vmax.f32 %v56, 0.0
  %v61 = vmax.f32 %v57, 0.0
  %v62 = vsub.f32 %v18, %v30
  %v63 = vsub.f32 %v19, %v31
  %v64 = vsub.f32 %v20, %v32
  %v65 = vsub.f32 %v21, %v33
  %v66 = vadd.f32 %v58, 1e-06
  %v67 = vadd.f32 %v59, 1e-06
  %v68 = vadd.f32 %v60, 1e-06
  %v69 = vadd.f32 %v61, 1e-06
  %v70 = vrsqrt.pop %v66
  %v71 = vmul.f32 %v70, %v66
  %v72 = vmul.f32 %v71, %v70
  %v73 = vmul.f32 0.5, %v72
  %v74 = vsub.f32 1.5, %v73
  %v75 = vmul.f32 %v70, %v74
  %vm76 = vweird.f32 %v66
  %vm77 = vweird.f32 %v70
  %vm78 = vmor %vm76, %vm77
  %v79 = vsel %vm78, %v70, %v75
  %v80 = vrsqrt.pop %v67
  %v81 = vmul.f32 %v80, %v67
  %v82 = vmul.f32 %v81, %v80
  %v83 = vmul.f32 0.5, %v82
  %v84 = vsub.f32 1.5, %v83
  %v85 = vmul.f32 %v80, %v84
  %vm86 = vweird.f32 %v67
  %vm87 = vweird.f32 %v80
  %vm88 = vmor %vm86, %vm87
  %v89 = vsel %vm88, %v80, %v85
  %v90 = vrsqrt.pop %v68
  %v91 = vmul.f32 %v90, %v68
  %v92 = vmul.f32 %v91, %v90
  %v93 = vmul.f32 0.5, %v92
  %v94 = vsub.f32 1.5, %v93
  %v95 = vmul.f32 %v90, %v94
  %vm96 = vweird.f32 %v68
  %vm97 = vweird.f32 %v90
  %vm98 = vmor %vm96, %vm97
  %v99 = vsel %vm98, %v90, %v95
  %v100 = vrsqrt.pop %v69
  %v101 = vmul.f32 %v100, %v69
  %v102 = vmul.f32 %v101, %v100
  %v103 = vmul.f32 0.5, %v102
  %v104 = vsub.f32 1.5, %v103
  %v105 = vmul.f32 %v100, %v104
  %vm106 = vweird.f32 %v69
  %vm107 = vweird.f32 %v100
  %vm108 = vmor %vm106, %vm107
  %v109 = vsel %vm108, %v100, %v105
  %v110 = vmul.f32 %v62, %v79
  %v111 = vmul.f32 %v63, %v89
  %v112 = vmul.f32 %v64, %v99
  %v113 = vmul.f32 %v65, %v109
  %v114 = vld [vmem:[%s1] sm:$0x1]
  %v116 = vperm.slane %v114, 0
  %v118 = vmul.f32 %v110, %v116
  %v119 = vmul.f32 %v111, %v116
  %v120 = vmul.f32 %v112, %v116
  %v121 = vmul.f32 %v113, %v116
  %v122 = vld [vmem:[%s2] sm:$0x1]
  %v124 = vperm.slane %v122, 0
  %v126 = vadd.f32 %v118, %v124
  %v127 = vadd.f32 %v119, %v124
  %v128 = vadd.f32 %v120, %v124
  %v129 = vadd.f32 %v121, %v124
  %v130 = vpack.c.bf16 %v126, %v126
  %v131 = vpack.c.bf16 %v127, %v127
  %v132 = vpack.c.bf16 %v128, %v128
  %v133 = vpack.c.bf16 %v129, %v129
  %134 = vst [vmem:[%s3] sm:$0xf] %v130
  %135 = vst [vmem:[%s3 + $0x4] sm:$0xf] %v131
  %136 = vst [vmem:[%s3 + $0x8] sm:$0xf] %v132
  %137 = vst [vmem:[%s3 + $0xc] sm:$0xf] %v133
  // Predicated region
  $region14: #{convnextv2_forward.13} parent=0 // pred_check
    _
  $region15: #{convnextv2_forward.13} parent=0 // pred_check_branch
    %139 = sbr.rel (0) target = $region17
  $region16: #{convnextv2_forward.13} parent=0 // pred_region
    _
  $region17: #{convnextv2_forward.13} parent=0 // pred_fallthru
    _
  // Predicated region
  $region18: #{convnextv2_forward.13} parent=0 // pred_check
    _
  $region19: #{convnextv2_forward.13} parent=0 // pred_check_branch
    %141 = sbr.rel (0) target = $region21
  $region20: #{convnextv2_forward.13} parent=0 // pred_region
    _
  $region21: #{convnextv2_forward.13} parent=0 // pred_fallthru
    _

// kernel: convnextv2_forward.12
$region0: #{convnextv2_forward.12}
  #allocation0 [shape = 'u32[]', space=smem, size = 0x4, offset = 0x4, fixed_abs, tag = 'smem constant byte address 0x4 - core index']
  #allocation1 [shape = 'u32[72,128]{1,0:T(1,128)}', space=vmem, size = 0x9000, scoped, tag = 'internal scratch']
  %s0 = inlined_call_operand.vmem [shape: bf16[32,48], index: 0, kind: input, shape index: {}]
  %s1 = inlined_call_operand.hbm [shape: bf16[48,128], index: 1, kind: input, shape index: {}]
  %s2 = inlined_call_operand.vmem [shape: f32[1,128], index: 2, kind: input, shape index: {}]
  %s3 = inlined_call_operand.vmem [shape: bf16[32,128], index: 3, kind: output, shape index: {}]
  %s4 = sld [smem:[#allocation0]]
  $region26: #{convnextv2_forward.12} parent=0
    _
  %s6 = ssub.s32 1, %s4
  %s7 = scalar_select 0, %s6, %s4
  $region1: #{convnextv2_forward.12} parent=0
    #allocation2 [shape = 'u8[12288]{0}', space=vmem, size = 0x3000, scoped, tag = 'input window, operand 1, single buffered']
    #allocation3 [shape = 's32[1]{0}', space=sflag, size = 0x4, scoped, tag = 'scoped memory for convnextv2_forward.12']
    %8 = vsyncpa [#allocation3], 0
    // Predicated region
    $region2: #{convnextv2_forward.12} parent=1 // pred_check
      _
    $region3: #{convnextv2_forward.12} parent=1 // pred_check_branch
      %10 = sbr.rel (0) target = $region5
    $region4: #{convnextv2_forward.12} parent=1 // pred_region
      _
    $region5: #{convnextv2_forward.12} parent=1 // pred_fallthru
      _
    // Predicated region
    $region6: #{convnextv2_forward.12} parent=1 // pred_check
      _
    $region7: #{convnextv2_forward.12} parent=1 // pred_check_branch
      %12 = sbr.rel (0) target = $region9
    $region8: #{convnextv2_forward.12} parent=1 // pred_region
      %14 = vsyncadd [#allocation3], 0
      %s15 = sshll.u32 %s1, 4
      %s16 = int_to_ptr.hbm [resolvable:$true] %s15
      %s17 = sshll.u32 [#allocation2], 4
      %s18 = int_to_ptr.vmem [resolvable:$true] %s17
      %23 = dma.hbm_to_vmem [thread:$0]  %s16, 384, %s18, [#allocation3], 64, 64, 4
    $region9: #{convnextv2_forward.12} parent=1 // pred_fallthru
      _
    // Predicated region
    $region10: #{convnextv2_forward.12} parent=1 // pred_check
      _
    $region11: #{convnextv2_forward.12} parent=1 // pred_check_branch
      %25 = sbr.rel (0) target = $region13
    $region12: #{convnextv2_forward.12} parent=1 // pred_region
      _
    $region13: #{convnextv2_forward.12} parent=1 // pred_fallthru
      _
    // Predicated region
    $region14: #{convnextv2_forward.12} parent=1 // pred_check
      _
    $region15: #{convnextv2_forward.12} parent=1 // pred_check_branch
      %27 = sbr.rel (0) target = $region17
    $region16: #{convnextv2_forward.12} parent=1 // pred_region
      %29 = dma.done [#allocation3], 384
    $region17: #{convnextv2_forward.12} parent=1 // pred_fallthru
      _
    %v31 = vld [vmem:[%s0] sm:$0xf]
    %v32 = vld [vmem:[%s0 + $0x4] sm:$0xf]
    %v33 = vld [vmem:[%s0 + $0x8] sm:$0xf]
    %v34 = vld [vmem:[%s0 + $0xc] sm:$0xf]
    %v35 = vld [vmem:[#allocation2] sm:$0xf]
    %v36 = vld [vmem:[#allocation2 + $0x4] sm:$0xf]
    %v37 = vld [vmem:[#allocation2 + $0x8] sm:$0xf]
    %v38 = vld [vmem:[#allocation2 + $0xc] sm:$0xf]
    %v39 = vld [vmem:[#allocation2 + $0x10] sm:$0xf]
    %v40 = vld [vmem:[#allocation2 + $0x14] sm:$0xf]
    %v41 = vld [vmem:[%s2] sm:$0x1]
    %v43 = vperm.slane %v41, 0
    %v49 = vunpack.c.l.b16 %v31
    %v50 = vunpack.c.l.b16 %v32
    %v51 = vunpack.c.l.b16 %v33
    %v52 = vunpack.c.l.b16 %v34
    %v53 = vpack.c.b16 %v50, %v49
    %v54 = vpack.c.b16 %v52, %v51
    %v61 = vunpack.c.l.b16 %v35
    %v62 = vunpack.c.l.b16 %v36
    %v63 = vunpack.c.l.b16 %v37
    %v64 = vunpack.c.l.b16 %v38
    %v65 = vunpack.c.l.b16 %v39
    %v66 = vunpack.c.l.b16 %v40
    %v67 = vpack.c.b16 %v62, %v61
    %v68 = vpack.c.b16 %v64, %v63
    %v69 = vpack.c.b16 %v66, %v65
    %vm73 = vcmask 392192
    %v75 = vsel %vm73, %v53, 0
    %v78 = vsel %vm73, %v54, 0
    %80 = vmatpush.bf16.msra.mxu0 0
    %81 = vmatpush.bf16.msra.mxu0 0
    %82 = vmatpush.bf16.msra.mxu0 0
    %83 = vmatpush.bf16.msra.mxu0 0
    %84 = vmatpush.bf16.msra.mxu0 0
    %85 = vmatpush.bf16.msra.mxu0 %v69
    %86 = vmatpush.bf16.msra.mxu0 %v68
    %87 = vmatpush.bf16.msra.mxu0 %v67
    %88 = vmatmul.bf16.gmra.mxu0 %v75
    %v89 = vpop.f32.mrf.mxu0
    %v90 = vadd.f32 %v43, %v89
    %v91 = vpop.f32.mrf.mxu0
    %v92 = vadd.f32 %v43, %v91
    %93 = vmatmul.bf16.gmra.mxu0 %v78
    %v94 = vpop.f32.mrf.mxu0
    %v95 = vadd.f32 %v43, %v94
    %v96 = vpop.f32.mrf.mxu0
    %v97 = vadd.f32 %v43, %v96
    %98 = vdwg.mxu0
    %v99 = vpack.c.bf16 %v90, %v90
    %v100 = vpack.c.bf16 %v92, %v92
    %v101 = vpack.c.bf16 %v95, %v95
    %v102 = vpack.c.bf16 %v97, %v97
    %103 = vst [vmem:[%s3] sm:$0xf] %v99
    %104 = vst [vmem:[%s3 + $0x4] sm:$0xf] %v100
    %105 = vst [vmem:[%s3 + $0x8] sm:$0xf] %v101
    %106 = vst [vmem:[%s3 + $0xc] sm:$0xf] %v102
    // Predicated region
    $region18: #{convnextv2_forward.12} parent=1 // pred_check
      _
    $region19: #{convnextv2_forward.12} parent=1 // pred_check_branch
      %108 = sbr.rel (0) target = $region21
    $region20: #{convnextv2_forward.12} parent=1 // pred_region
      _
    $region21: #{convnextv2_forward.12} parent=1 // pred_fallthru
      _
    // Predicated region
    $region22: #{convnextv2_forward.12} parent=1 // pred_check
      _
    $region23: #{convnextv2_forward.12} parent=1 // pred_check_branch
      %110 = sbr.rel (0) target = $region25
    $region24: #{convnextv2_forward.12} parent=1 // pred_region
      _
    $region25: #{convnextv2_forward.12} parent=1 // pred_fallthru
      _
    %111 = vsyncpa [#allocation3], 1

// kernel: convnextv2_forward.15
$region0: #{convnextv2_forward.15}
  #allocation0 [shape = 'u32[]', space=smem, size = 0x4, offset = 0x4, fixed_abs, tag = 'smem constant byte address 0x4 - core index']
  #allocation1 [shape = 'u32[72,128]{1,0:T(1,128)}', space=vmem, size = 0x9000, scoped, tag = 'internal scratch']
  #allocation2 [shape = 'f32[1,128]{1,0:T(1,128)}', space=vmem, size = 0x200, scoped, tag = 'scratch operand']
  #allocation3 [shape = 'bf16[16,128]{1,0:T(8,128)(2,1)}', space=vmem, size = 0x1000, scoped, tag = 'scratch operand']
  %s0 = inlined_call_operand.vmem [shape: bf16[2,16,128], index: 0, kind: input, shape index: {}]
  %s1 = inlined_call_operand.vmem [shape: bf16[2,16,128], index: 1, kind: input, shape index: {}]
  %s2 = inlined_call_operand.vmem [shape: f32[1,128], index: 2, kind: input, shape index: {}]
  %s3 = inlined_call_operand.vmem [shape: f32[1,128], index: 3, kind: input, shape index: {}]
  %s4 = inlined_call_operand.vmem [shape: bf16[128,128], index: 4, kind: input, shape index: {}]
  %s5 = inlined_call_operand.vmem [shape: f32[1,128], index: 5, kind: input, shape index: {}]
  %s6 = inlined_call_operand.vmem [shape: f32[1,128], index: 6, kind: input, shape index: {}]
  %s7 = inlined_call_operand.vmem [shape: f32[1,128], index: 7, kind: input, shape index: {}]
  %s8 = inlined_call_operand.vmem [shape: bf16[128,128], index: 8, kind: input, shape index: {}]
  %s9 = inlined_call_operand.vmem [shape: f32[1,128], index: 9, kind: input, shape index: {}]
  %s10 = inlined_call_operand.vmem [shape: bf16[2,16,128], index: 10, kind: output, shape index: {}]
  %s11 = sld [smem:[#allocation0]]
  $region85: #{convnextv2_forward.15} parent=0
    _
  %s13 = ssub.s32 1, %s11
  %s14 = scalar_select 0, %s13, %s11
  loop: start=0, step=1, limit=6
  $region2: #{convnextv2_forward.15} parent=0 // loop_pre_header
    _
  $region3: #{convnextv2_forward.15} parent=0 // loop_header
    %s16 = sphi 0, %s20
    %p17 = scmp.ge.s32.totalorder %s16, 6
    %s23 = sphi 0, %s42
    %s24 = sphi 0, %s38
    %s25 = sphi 0, %s34
    %s26 = sphi 0, %s23
    %s27 = sphi 0, %s24
    %s28 = sphi 0, %s25
    %s29 = sphi 0, %s26
    %s30 = sphi 0, %s27
    %s31 = sphi 0, %s28
    %s47 = sphi 0, %s49
    %s50 = sphi 0, %s47
    %s51 = sphi 0, %s50
    %s67 = sphi 0, %s51
    %s75 = sphi 0, %s77
    %s78 = sphi 0, %s75
    %s79 = sphi 0, %s78
    %s95 = sphi 0, %s79
    %s99 = sphi 0, %s99
    %s101 = sphi 0, %s99
    %s102 = sphi 0, %s101
    %s116 = sphi 0, %s102
    %s120 = sphi 0, %s120
    %s122 = sphi 0, %s120
    %s123 = sphi 0, %s122
    %s137 = sphi 0, %s123
    %s141 = sphi 0, %s141
    %s143 = sphi 0, %s141
    %s144 = sphi 0, %s143
    %s158 = sphi 0, %s144
    %s162 = sphi 0, %s162
    %s164 = sphi 0, %s162
    %s165 = sphi 0, %s164
    %s179 = sphi 0, %s165
    %s183 = sphi 0, %s183
    %s185 = sphi 0, %s183
    %s186 = sphi 0, %s185
    %s200 = sphi 0, %s186
    %s204 = sphi 0, %s204
    %s206 = sphi 0, %s204
    %s207 = sphi 0, %s206
    %s221 = sphi 0, %s207
    %s225 = sphi 0, %s225
    %s227 = sphi 0, %s225
    %s228 = sphi 0, %s227
    %s242 = sphi 0, %s228
    %s246 = sphi 0, %s246
    %s248 = sphi 0, %s246
    %s249 = sphi 0, %s248
    %s263 = sphi 0, %s249
    %s273 = sphi 0, %s275
    %s276 = sphi 0, %s273
    %s277 = sphi 0, %s276
    %s293 = sphi 0, %s277
  $region4: #{convnextv2_forward.15} parent=0 // loop_header_branch
    %19 = sbr.rel (%p17) target = $region8
  $region5: #{convnextv2_forward.15} parent=0 // loop_body
    %s21 = ssub.s32 %s16, 1
    %s22 = ssub.s32 %s16, 2
    %s32 = sadd.s32 1, %s25
    %p33 = scmp.ge.s32.totalorder %s32, 1
    %s34 = scalar_select %p33, 0, %s32
    %s35 = sadd.s32 1, %s24
    %s36 = scalar_select %p33, %s35, %s24
    %p37 = scmp.ge.s32.totalorder %s36, 2
    %s38 = scalar_select %p37, 0, %s36
    %s39 = sadd.s32 1, %s23
    %s40 = scalar_select %p37, %s39, %s23
    %p41 = scmp.ge.s32.totalorder %s40, 2
    %s42 = scalar_select %p41, 0, %s40
    %s43 = ssub.s32 %s23, %s42
    %s44 = ssub.s32 %s25, %s34
    %s45 = sor.u32 %s43, %s44
    %p46 = scmp.eq.s32.totalorder %s45, 0
    %s48 = sadd.s32 %s47, 1
    %s49 = scalar_select %p46, %s47, %s48
    %p52 = pneg %p46
    %p53 = scmp.eq.s32.totalorder %s16, 3
    %p54 = por %p52, %p53
    %p55 = scmp.ne.s32.totalorder %s47, %s50
    %p56 = scmp.eq.s32.totalorder %s16, 0
    %p57 = por %p55, %p56
    %p58 = scmp.ne.s32.totalorder %s47, %s50
    %p59 = scmp.eq.s32.totalorder %s21, 3
    %p60 = por %p58, %p59
    %p61 = scmp.ne.s32.totalorder %s50, %s51
    %p62 = scmp.eq.s32.totalorder %s21, 0
    %p63 = por %p61, %p62
    %p64 = scmp.ne.s32.totalorder %s50, %s51
    %p65 = scmp.eq.s32.totalorder %s22, 3
    %p66 = por %p64, %p65
    %p68 = scmp.ne.s32.totalorder %s51, %s67
    %p69 = scmp.eq.s32.totalorder %s22, 0
    %p70 = por %p68, %p69
    %s71 = ssub.s32 %s23, %s42
    %s72 = ssub.s32 %s25, %s34
    %s73 = sor.u32 %s71, %s72
    %p74 = scmp.eq.s32.totalorder %s73, 0
    %s76 = sadd.s32 %s75, 1
    %s77 = scalar_select %p74, %s75, %s76
    %p80 = pneg %p74
    %p81 = scmp.eq.s32.totalorder %s16, 3
    %p82 = por %p80, %p81
    %p83 = scmp.ne.s32.totalorder %s75, %s78
    %p84 = scmp.eq.s32.totalorder %s16, 0
    %p85 = por %p83, %p84
    %p86 = scmp.ne.s32.totalorder %s75, %s78
    %p87 = scmp.eq.s32.totalorder %s21, 3
    %p88 = por %p86, %p87
    %p89 = scmp.ne.s32.totalorder %s78, %s79
    %p90 = scmp.eq.s32.totalorder %s21, 0
    %p91 = por %p89, %p90
    %p92 = scmp.ne.s32.totalorder %s78, %s79
    %p93 = scmp.eq.s32.totalorder %s22, 3
    %p94 = por %p92, %p93
    %p96 = scmp.ne.s32.totalorder %s79, %s95
    %p97 = scmp.eq.s32.totalorder %s22, 0
    %p98 = por %p96, %p97
    %s100 = sadd.s32 %s99, 1
    %p103 = scmp.eq.s32.totalorder %s16, 3
    %p104 = scmp.ne.s32.totalorder %s99, %s101
    %p105 = scmp.eq.s32.totalorder %s16, 0
    %p106 = por %p104, %p105
    %p107 = scmp.ne.s32.totalorder %s99, %s101
    %p108 = scmp.eq.s32.totalorder %s21, 3
    %p109 = por %p107, %p108
    %p110 = scmp.ne.s32.totalorder %s101, %s102
    %p111 = scmp.eq.s32.totalorder %s21, 0
    %p112 = por %p110, %p111
    %p113 = scmp.ne.s32.totalorder %s101, %s102
    %p114 = scmp.eq.s32.totalorder %s22, 3
    %p115 = por %p113, %p114
    %p117 = scmp.ne.s32.totalorder %s102, %s116
    %p118 = scmp.eq.s32.totalorder %s22, 0
    %p119 = por %p117, %p118
    %s121 = sadd.s32 %s120, 1
    %p124 = scmp.eq.s32.totalorder %s16, 3
    %p125 = scmp.ne.s32.totalorder %s120, %s122
    %p126 = scmp.eq.s32.totalorder %s16, 0
    %p127 = por %p125, %p126
    %p128 = scmp.ne.s32.totalorder %s120, %s122
    %p129 = scmp.eq.s32.totalorder %s21, 3
    %p130 = por %p128, %p129
    %p131 = scmp.ne.s32.totalorder %s122, %s123
    %p132 = scmp.eq.s32.totalorder %s21, 0
    %p133 = por %p131, %p132
    %p134 = scmp.ne.s32.totalorder %s122, %s123
    %p135 = scmp.eq.s32.totalorder %s22, 3
    %p136 = por %p134, %p135
    %p138 = scmp.ne.s32.totalorder %s123, %s137
    %p139 = scmp.eq.s32.totalorder %s22, 0
    %p140 = por %p138, %p139
    %s142 = sadd.s32 %s141, 1
    %p145 = scmp.eq.s32.totalorder %s16, 3
    %p146 = scmp.ne.s32.totalorder %s141, %s143
    %p147 = scmp.eq.s32.totalorder %s16, 0
    %p148 = por %p146, %p147
    %p149 = scmp.ne.s32.totalorder %s141, %s143
    %p150 = scmp.eq.s32.totalorder %s21, 3
    %p151 = por %p149, %p150
    %p152 = scmp.ne.s32.totalorder %s143, %s144
    %p153 = scmp.eq.s32.totalorder %s21, 0
    %p154 = por %p152, %p153
    %p155 = scmp.ne.s32.totalorder %s143, %s144
    %p156 = scmp.eq.s32.totalorder %s22, 3
    %p157 = por %p155, %p156
    %p159 = scmp.ne.s32.totalorder %s144, %s158
    %p160 = scmp.eq.s32.totalorder %s22, 0
    %p161 = por %p159, %p160
    %s163 = sadd.s32 %s162, 1
    %p166 = scmp.eq.s32.totalorder %s16, 3
    %p167 = scmp.ne.s32.totalorder %s162, %s164
    %p168 = scmp.eq.s32.totalorder %s16, 0
    %p169 = por %p167, %p168
    %p170 = scmp.ne.s32.totalorder %s162, %s164
    %p171 = scmp.eq.s32.totalorder %s21, 3
    %p172 = por %p170, %p171
    %p173 = scmp.ne.s32.totalorder %s164, %s165
    %p174 = scmp.eq.s32.totalorder %s21, 0
    %p175 = por %p173, %p174
    %p176 = scmp.ne.s32.totalorder %s164, %s165
    %p177 = scmp.eq.s32.totalorder %s22, 3
    %p178 = por %p176, %p177
    %p180 = scmp.ne.s32.totalorder %s165, %s179
    %p181 = scmp.eq.s32.totalorder %s22, 0
    %p182 = por %p180, %p181
    %s184 = sadd.s32 %s183, 1
    %p187 = scmp.eq.s32.totalorder %s16, 3
    %p188 = scmp.ne.s32.totalorder %s183, %s185
    %p189 = scmp.eq.s32.totalorder %s16, 0
    %p190 = por %p188, %p189
    %p191 = scmp.ne.s32.totalorder %s183, %s185
    %p192 = scmp.eq.s32.totalorder %s21, 3
    %p193 = por %p191, %p192
    %p194 = scmp.ne.s32.totalorder %s185, %s186
    %p195 = scmp.eq.s32.totalorder %s21, 0
    %p196 = por %p194, %p195
    %p197 = scmp.ne.s32.totalorder %s185, %s186
    %p198 = scmp.eq.s32.totalorder %s22, 3
    %p199 = por %p197, %p198
    %p201 = scmp.ne.s32.totalorder %s186, %s200
    %p202 = scmp.eq.s32.totalorder %s22, 0
    %p203 = por %p201, %p202
    %s205 = sadd.s32 %s204, 1
    %p208 = scmp.eq.s32.totalorder %s16, 3
    %p209 = scmp.ne.s32.totalorder %s204, %s206
    %p210 = scmp.eq.s32.totalorder %s16, 0
    %p211 = por %p209, %p210
    %p212 = scmp.ne.s32.totalorder %s204, %s206
    %p213 = scmp.eq.s32.totalorder %s21, 3
    %p214 = por %p212, %p213
    %p215 = scmp.ne.s32.totalorder %s206, %s207
    %p216 = scmp.eq.s32.totalorder %s21, 0
    %p217 = por %p215, %p216
    %p218 = scmp.ne.s32.totalorder %s206, %s207
    %p219 = scmp.eq.s32.totalorder %s22, 3
    %p220 = por %p218, %p219
    %p222 = scmp.ne.s32.totalorder %s207, %s221
    %p223 = scmp.eq.s32.totalorder %s22, 0
    %p224 = por %p222, %p223
    %s226 = sadd.s32 %s225, 1
    %p229 = scmp.eq.s32.totalorder %s16, 3
    %p230 = scmp.ne.s32.totalorder %s225, %s227
    %p231 = scmp.eq.s32.totalorder %s16, 0
    %p232 = por %p230, %p231
    %p233 = scmp.ne.s32.totalorder %s225, %s227
    %p234 = scmp.eq.s32.totalorder %s21, 3
    %p235 = por %p233, %p234
    %p236 = scmp.ne.s32.totalorder %s227, %s228
    %p237 = scmp.eq.s32.totalorder %s21, 0
    %p238 = por %p236, %p237
    %p239 = scmp.ne.s32.totalorder %s227, %s228
    %p240 = scmp.eq.s32.totalorder %s22, 3
    %p241 = por %p239, %p240
    %p243 = scmp.ne.s32.totalorder %s228, %s242
    %p244 = scmp.eq.s32.totalorder %s22, 0
    %p245 = por %p243, %p244
    %s247 = sadd.s32 %s246, 1
    %p250 = scmp.eq.s32.totalorder %s16, 3
    %p251 = scmp.ne.s32.totalorder %s246, %s248
    %p252 = scmp.eq.s32.totalorder %s16, 0
    %p253 = por %p251, %p252
    %p254 = scmp.ne.s32.totalorder %s246, %s248
    %p255 = scmp.eq.s32.totalorder %s21, 3
    %p256 = por %p254, %p255
    %p257 = scmp.ne.s32.totalorder %s248, %s249
    %p258 = scmp.eq.s32.totalorder %s21, 0
    %p259 = por %p257, %p258
    %p260 = scmp.ne.s32.totalorder %s248, %s249
    %p261 = scmp.eq.s32.totalorder %s22, 3
    %p262 = por %p260, %p261
    %p264 = scmp.ne.s32.totalorder %s249, %s263
    %p265 = scmp.eq.s32.totalorder %s22, 0
    %p266 = por %p264, %p265
    %s267 = smul.u32 %s24, %s25
    %s268 = smul.u32 %s38, %s34
    %s269 = ssub.s32 %s23, %s42
    %s270 = ssub.s32 %s267, %s268
    %s271 = sor.u32 %s269, %s270
    %p272 = scmp.eq.s32.totalorder %s271, 0
    %s274 = sadd.s32 %s273, 1
    %s275 = scalar_select %p272, %s273, %s274
    %p278 = pneg %p272
    %p279 = scmp.eq.s32.totalorder %s16, 3
    %p280 = por %p278, %p279
    %p281 = scmp.ne.s32.totalorder %s273, %s276
    %p282 = scmp.eq.s32.totalorder %s16, 0
    %p283 = por %p281, %p282
    %p284 = scmp.ne.s32.totalorder %s273, %s276
    %p285 = scmp.eq.s32.totalorder %s21, 3
    %p286 = por %p284, %p285
    %p287 = scmp.ne.s32.totalorder %s276, %s277
    %p288 = scmp.eq.s32.totalorder %s21, 0
    %p289 = por %p287, %p288
    %p290 = scmp.ne.s32.totalorder %s276, %s277
    %p291 = scmp.eq.s32.totalorder %s22, 3
    %p292 = por %p290, %p291
    %p294 = scmp.ne.s32.totalorder %s277, %s293
    %p295 = scmp.eq.s32.totalorder %s22, 0
    %p296 = por %p294, %p295
    %p297 = scmp.le.s32.totalorder 1, %s16
    %p298 = scmp.lt.s32.totalorder %s16, 5
    %p299 = pnand %p297, %p298
    %p300 = pneg %p299
    // Predicated region
    $region9: #{convnextv2_forward.15} parent=5 // pred_check
      _
    $region10: #{convnextv2_forward.15} parent=5 // pred_check_branch
      %302 = sbr.rel (%p299) target = $region12
    $region11: #{convnextv2_forward.15} parent=5 // pred_region
      %s303 = ssub.s32 %s16, 1
      // Predicated region
      $region13: #{convnextv2_forward.15} parent=11 // pred_check
        %p304 = pneg %p112
      $region14: #{convnextv2_forward.15} parent=11 // pred_check_branch
        %306 = sbr.rel (%p304) target = $region16
      $region15: #{convnextv2_forward.15} parent=11 // pred_region
        _
      $region16: #{convnextv2_forward.15} parent=11 // pred_fallthru
        _
      // Predicated region
      $region17: #{convnextv2_forward.15} parent=11 // pred_check
        %p307 = pneg %p133
      $region18: #{convnextv2_forward.15} parent=11 // pred_check_branch
        %309 = sbr.rel (%p307) target = $region20
      $region19: #{convnextv2_forward.15} parent=11 // pred_region
        _
      $region20: #{convnextv2_forward.15} parent=11 // pred_fallthru
        _
      // Predicated region
      $region21: #{convnextv2_forward.15} parent=11 // pred_check
        %p310 = pneg %p154
      $region22: #{convnextv2_forward.15} parent=11 // pred_check_branch
        %312 = sbr.rel (%p310) target = $region24
      $region23: #{convnextv2_forward.15} parent=11 // pred_region
        _
      $region24: #{convnextv2_forward.15} parent=11 // pred_fallthru
        _
      // Predicated region
      $region25: #{convnextv2_forward.15} parent=11 // pred_check
        %p313 = pneg %p175
      $region26: #{convnextv2_forward.15} parent=11 // pred_check_branch
        %315 = sbr.rel (%p313) target = $region28
      $region27: #{convnextv2_forward.15} parent=11 // pred_region
        _
      $region28: #{convnextv2_forward.15} parent=11 // pred_fallthru
        _
      // Predicated region
      $region29: #{convnextv2_forward.15} parent=11 // pred_check
        %p316 = pneg %p196
      $region30: #{convnextv2_forward.15} parent=11 // pred_check_branch
        %318 = sbr.rel (%p316) target = $region32
      $region31: #{convnextv2_forward.15} parent=11 // pred_region
        _
      $region32: #{convnextv2_forward.15} parent=11 // pred_fallthru
        _
      // Predicated region
      $region33: #{convnextv2_forward.15} parent=11 // pred_check
        %p319 = pneg %p217
      $region34: #{convnextv2_forward.15} parent=11 // pred_check_branch
        %321 = sbr.rel (%p319) target = $region36
      $region35: #{convnextv2_forward.15} parent=11 // pred_region
        _
      $region36: #{convnextv2_forward.15} parent=11 // pred_fallthru
        _
      // Predicated region
      $region37: #{convnextv2_forward.15} parent=11 // pred_check
        %p322 = pneg %p238
      $region38: #{convnextv2_forward.15} parent=11 // pred_check_branch
        %324 = sbr.rel (%p322) target = $region40
      $region39: #{convnextv2_forward.15} parent=11 // pred_region
        _
      $region40: #{convnextv2_forward.15} parent=11 // pred_fallthru
        _
      // Predicated region
      $region41: #{convnextv2_forward.15} parent=11 // pred_check
        %p325 = pneg %p259
      $region42: #{convnextv2_forward.15} parent=11 // pred_check_branch
        %327 = sbr.rel (%p325) target = $region44
      $region43: #{convnextv2_forward.15} parent=11 // pred_region
        _
      $region44: #{convnextv2_forward.15} parent=11 // pred_fallthru
        _
    $region12: #{convnextv2_forward.15} parent=5 // pred_fallthru
      _
    %p328 = scmp.lt.s32.totalorder %s16, 4
    // Predicated region
    $region45: #{convnextv2_forward.15} parent=5 // pred_check
      %p329 = pneg %p328
    $region46: #{convnextv2_forward.15} parent=5 // pred_check_branch
      %331 = sbr.rel (%p329) target = $region48
    $region47: #{convnextv2_forward.15} parent=5 // pred_region
      // Predicated region
      $region49: #{convnextv2_forward.15} parent=47 // pred_check
        %p332 = pneg %p57
      $region50: #{convnextv2_forward.15} parent=47 // pred_check_branch
        %334 = sbr.rel (%p332) target = $region52
      $region51: #{convnextv2_forward.15} parent=47 // pred_region
        %s335 = smul.u32 2, %s25
        %p336 = scmp.lt.s32.totalorder %s23, 1
        %s337 = scalar_select %p336, %s23, 1
        %p338 = scmp.lt.s32.totalorder %s335, 1
        %s339 = scalar_select %p338, %s335, 1
        %s340 = smul.addr %s337, 2
        %s341 = sadd.s32 %s339, %s340
        %s342 = smul.addr %s341, 4
        %s343 = scalar_lea.vmem %s0, %s342
        %s344 = smul.u32 2, %s25
      $region52: #{convnextv2_forward.15} parent=47 // pred_fallthru
        _
      // Predicated region
      $region53: #{convnextv2_forward.15} parent=47 // pred_check
        %p345 = pneg %p85
      $region54: #{convnextv2_forward.15} parent=47 // pred_check_branch
        %347 = sbr.rel (%p345) target = $region56
      $region55: #{convnextv2_forward.15} parent=47 // pred_region
        %s348 = smul.u32 2, %s25
        %p349 = scmp.lt.s32.totalorder %s23, 1
        %s350 = scalar_select %p349, %s23, 1
        %p351 = scmp.lt.s32.totalorder %s348, 1
        %s352 = scalar_select %p351, %s348, 1
        %s353 = smul.addr %s350, 2
        %s354 = sadd.s32 %s352, %s353
        %s355 = smul.addr %s354, 4
        %s356 = scalar_lea.vmem %s1, %s355
        %s357 = smul.u32 2, %s25
      $region56: #{convnextv2_forward.15} parent=47 // pred_fallthru
        _
    $region48: #{convnextv2_forward.15} parent=5 // pred_fallthru
      _
    %p358 = scmp.le.s32.totalorder 1, %s16
    %p359 = scmp.lt.s32.totalorder %s16, 5
    %p360 = pnand %p358, %p359
    %p361 = pneg %p360
    // Predicated region
    $region57: #{convnextv2_forward.15} parent=5 // pred_check
      _
    $region58: #{convnextv2_forward.15} parent=5 // pred_check_branch
      %363 = sbr.rel (%p360) target = $region60
    $region59: #{convnextv2_forward.15} parent=5 // pred_region
      %s364 = ssub.s32 %s16, 1
      %s365 = smul.u32 2, %s28
      %p366 = scmp.lt.s32.totalorder %s26, 1
      %s367 = scalar_select %p366, %s26, 1
      %p368 = scmp.lt.s32.totalorder %s365, 1
      %s369 = scalar_select %p368, %s365, 1
      %s370 = smul.addr %s367, 2
      %s371 = sadd.s32 %s369, %s370
      %s372 = smul.addr %s371, 4
      %s373 = scalar_lea.vmem %s0, %s372
      %p374 = pneg %p63
      %p375 = pneg %p60
      %s376 = smul.u32 2, %s28
      %p377 = scmp.lt.s32.totalorder %s26, 1
      %s378 = scalar_select %p377, %s26, 1
      %p379 = scmp.lt.s32.totalorder %s376, 1
      %s380 = scalar_select %p379, %s376, 1
      %s381 = smul.addr %s378, 2
      %s382 = sadd.s32 %s380, %s381
      %s383 = smul.addr %s382, 4
      %s384 = scalar_lea.vmem %s1, %s383
      %p385 = pneg %p91
      %p386 = pneg %p88
      %p387 = pneg %p112
      %p388 = pneg %p109
      %p389 = pneg %p133
      %p390 = pneg %p130
      %p391 = pneg %p154
      %p392 = pneg %p151
      %p393 = pneg %p175
      %p394 = pneg %p172
      %p395 = pneg %p196
      %p396 = pneg %p193
      %p397 = pneg %p217
      %p398 = pneg %p214
      %p399 = pneg %p238
      %p400 = pneg %p235
      %p401 = pneg %p259
      %p402 = pneg %p256
      %p403 = pneg %p289
      %p404 = pneg %p286
      %s405 = smul.u32 %s27, %s28
      %s406 = smul.u32 2, %s405
      %p407 = scmp.lt.s32.totalorder %s26, 1
      %s408 = scalar_select %p407, %s26, 1
      %p409 = scmp.lt.s32.totalorder %s406, 1
      %s410 = scalar_select %p409, %s406, 1
      %s411 = smul.addr %s408, 2
      %s412 = sadd.s32 %s410, %s411
      %s413 = smul.addr %s412, 4
      %s414 = scalar_lea.vmem %s10, %s413
      %s415 = smul.u32 2, %s28
      %p416 = scmp.lt.s32.totalorder %s26, 1
      %s417 = scalar_select %p416, %s26, 1
      %p418 = scmp.lt.s32.totalorder %s415, 1
      %s419 = scalar_select %p418, %s415, 1
      %s420 = smul.addr %s417, 2
      %s421 = sadd.s32 %s419, %s420
      %s422 = smul.addr %s421, 4
      %s423 = scalar_lea.vmem %s0, %s422
      %s424 = smul.u32 2, %s28
      %s425 = smul.u32 2, %s28
      %p426 = scmp.lt.s32.totalorder %s26, 1
      %s427 = scalar_select %p426, %s26, 1
      %p428 = scmp.lt.s32.totalorder %s425, 1
      %s429 = scalar_select %p428, %s425, 1
      %s430 = smul.addr %s427, 2
      %s431 = sadd.s32 %s429, %s430
      %s432 = smul.addr %s431, 4
      %s433 = scalar_lea.vmem %s1, %s432
      %s434 = smul.u32 2, %s28
      %s435 = smul.u32 %s27, %s28
      %s436 = smul.u32 2, %s435
      %p437 = scmp.lt.s32.totalorder %s26, 1
      %s438 = scalar_select %p437, %s26, 1
      %p439 = scmp.lt.s32.totalorder %s436, 1
      %s440 = scalar_select %p439, %s436, 1
      %s441 = smul.addr %s438, 2
      %s442 = sadd.s32 %s440, %s441
      %s443 = smul.addr %s442, 4
      %s444 = scalar_lea.vmem %s10, %s443
      %s445 = smul.u32 %s27, %s28
      %s446 = smul.u32 2, %s445
      %s447 = smul.u32 %s28, 16
      %p448 = scmp.eq.s32.totalorder %s27, 0
      // Predicated region
      $region61: #{convnextv2_forward.15} parent=59 // pred_check
        %p449 = pneg %p448
      $region62: #{convnextv2_forward.15} parent=59 // pred_check_branch
        %451 = sbr.rel (%p449) target = $region64
      $region63: #{convnextv2_forward.15} parent=59 // pred_region
        %p452 = scmp.eq.s32.totalorder %s28, 0
        // Predicated region
        $region65: #{convnextv2_forward.15} parent=63 // pred_check
          %p453 = pneg %p452
        $region66: #{convnextv2_forward.15} parent=63 // pred_check_branch
          %455 = sbr.rel (%p453) target = $region68
        $region67: #{convnextv2_forward.15} parent=63 // pred_region
          %456 = vst [vmem:[#allocation2] sm:$0x1] 0.0
        $region68: #{convnextv2_forward.15} parent=63 // pred_fallthru
          _
        %v457 = vld [vmem:[%s423] sm:$0xf]
        %v458 = vld [vmem:[%s423 + $0x4] sm:$0xf]
        %v459 = vunpack.c.l.bf16 %v457
        %v460 = vunpack.c.l.bf16 %v458
        %461 = vadd.xlane.f32.xlu0 %v459
        %v462 = vpop.xlane.xlu0 %461
        %463 = vadd.xlane.f32.xlu0 %v460
        %v464 = vpop.xlane.xlu0 %463
        %v465 = vmul.f32 %v462, 0.03125
        %v466 = vmul.f32 %v464, 0.03125
        %v467 = vmul.f32 %v459, %v459
        %v468 = vmul.f32 %v460, %v460
        %469 = vadd.xlane.f32.xlu0 %v467
        %v470 = vpop.xlane.xlu0 %469
        %471 = vadd.xlane.f32.xlu0 %v468
        %v472 = vpop.xlane.xlu0 %471
        %v473 = vmul.f32 %v470, 0.03125
        %v474 = vmul.f32 %v472, 0.03125
        %v475 = vmul.f32 %v465, %v465
        %v476 = vmul.f32 %v466, %v466
        %v477 = vsub.f32 %v473, %v475
        %v478 = vsub.f32 %v474, %v476
        %v479 = vmax.f32 %v477, 0.0
        %v480 = vmax.f32 %v478, 0.0
        %v481 = vsub.f32 %v459, %v465
        %v482 = vsub.f32 %v460, %v466
        %v483 = vadd.f32 %v479, 1e-06
        %v484 = vadd.f32 %v480, 1e-06
        %v485 = vrsqrt.pop %v483
        %v486 = vmul.f32 %v485, %v483
        %v487 = vmul.f32 %v486, %v485
        %v488 = vmul.f32 0.5, %v487
        %v489 = vsub.f32 1.5, %v488
        %v490 = vmul.f32 %v485, %v489
        %vm491 = vweird.f32 %v483
        %vm492 = vweird.f32 %v485
        %vm493 = vmor %vm491, %vm492
        %v494 = vsel %vm493, %v485, %v490
        %v495 = vrsqrt.pop %v484
        %v496 = vmul.f32 %v495, %v484
        %v497 = vmul.f32 %v496, %v495
        %v498 = vmul.f32 0.5, %v497
        %v499 = vsub.f32 1.5, %v498
        %v500 = vmul.f32 %v495, %v499
        %vm501 = vweird.f32 %v484
        %vm502 = vweird.f32 %v495
        %vm503 = vmor %vm501, %vm502
        %v504 = vsel %vm503, %v495, %v500
        %v505 = vmul.f32 %v481, %v494
        %v506 = vmul.f32 %v482, %v504
        %v507 = vld [vmem:[%s2] sm:$0x1]
        %v509 = vperm.slane %v507, 0
        %v511 = vmul.f32 %v505, %v509
        %v512 = vmul.f32 %v506, %v509
        %v513 = vld [vmem:[%s3] sm:$0x1]
        %v515 = vperm.slane %v513, 0
        %v517 = vadd.f32 %v511, %v515
        %v518 = vadd.f32 %v512, %v515
        %v519 = vpack.c.bf16 %v518, %v517
        %v520 = vld [vmem:[%s4] sm:$0xf]
        %v521 = vld [vmem:[%s4 + $0x4] sm:$0xf]
        %v522 = vld [vmem:[%s4 + $0x8] sm:$0xf]
        %v523 = vld [vmem:[%s4 + $0xc] sm:$0xf]
        %v524 = vld [vmem:[%s4 + $0x10] sm:$0xf]
        %v525 = vld [vmem:[%s4 + $0x14] sm:$0xf]
        %v526 = vld [vmem:[%s4 + $0x18] sm:$0xf]
        %v527 = vld [vmem:[%s4 + $0x1c] sm:$0xf]
        %v528 = vld [vmem:[%s4 + $0x20] sm:$0xf]
        %v529 = vld [vmem:[%s4 + $0x24] sm:$0xf]
        %v530 = vld [vmem:[%s4 + $0x28] sm:$0xf]
        %v531 = vld [vmem:[%s4 + $0x2c] sm:$0xf]
        %v532 = vld [vmem:[%s4 + $0x30] sm:$0xf]
        %v533 = vld [vmem:[%s4 + $0x34] sm:$0xf]
        %v534 = vld [vmem:[%s4 + $0x38] sm:$0xf]
        %v535 = vld [vmem:[%s4 + $0x3c] sm:$0xf]
        %v536 = vld [vmem:[%s5] sm:$0x1]
        %v538 = vperm.slane %v536, 0
        %v556 = vunpack.c.l.b16 %v520
        %v557 = vunpack.c.l.b16 %v521
        %v558 = vunpack.c.l.b16 %v522
        %v559 = vunpack.c.l.b16 %v523
        %v560 = vunpack.c.l.b16 %v524
        %v561 = vunpack.c.l.b16 %v525
        %v562 = vunpack.c.l.b16 %v526
        %v563 = vunpack.c.l.b16 %v527
        %v564 = vunpack.c.l.b16 %v528
        %v565 = vunpack.c.l.b16 %v529
        %v566 = vunpack.c.l.b16 %v530
        %v567 = vunpack.c.l.b16 %v531
        %v568 = vunpack.c.l.b16 %v532
        %v569 = vunpack.c.l.b16 %v533
        %v570 = vunpack.c.l.b16 %v534
        %v571 = vunpack.c.l.b16 %v535
        %v572 = vpack.c.b16 %v557, %v556
        %v573 = vpack.c.b16 %v559, %v558
        %v574 = vpack.c.b16 %v561, %v560
        %v575 = vpack.c.b16 %v563, %v562
        %v576 = vpack.c.b16 %v565, %v564
        %v577 = vpack.c.b16 %v567, %v566
        %v578 = vpack.c.b16 %v569, %v568
        %v579 = vpack.c.b16 %v571, %v570
        %588 = vmatpush.bf16.msra.mxu0 %v579
        %589 = vmatpush.bf16.msra.mxu0 %v578
        %590 = vmatpush.bf16.msra.mxu0 %v577
        %591 = vmatpush.bf16.msra.mxu0 %v576
        %592 = vmatpush.bf16.msra.mxu0 %v575
        %593 = vmatpush.bf16.msra.mxu0 %v574
        %594 = vmatpush.bf16.msra.mxu0 %v573
        %595 = vmatpush.bf16.msra.mxu0 %v572
        %596 = vmatmul.bf16.gmra.mxu0 %v519
        %v597 = vpop.f32.mrf.mxu0
        %v598 = vadd.f32 %v538, %v597
        %v599 = vpop.f32.mrf.mxu0
        %v600 = vadd.f32 %v538, %v599
        %601 = vdwg.mxu0
        %v602 = vmul.f32 %v598, 0.5
        %v603 = vmul.f32 %v600, 0.5
        %v604 = vmul.f32 %v598, 0.70710677
        %v605 = vmul.f32 %v600, 0.70710677
        %v606 = vmul.f32 %v604, %v604
        %v607 = vmin.f32 16.0, %v606
        %v608 = vmul.f32 %v607, 2.1237322e-06
        %v609 = vadd.f32 %v608, 0.00028619796
        %v610 = vmul.f32 %v607, %v609
        %v611 = vadd.f32 %v610, 0.0036580483
        %v612 = vmul.f32 %v607, %v611
        %v613 = vadd.f32 %v612, 0.05243302
        %v614 = vmul.f32 %v607, %v613
        %v615 = vadd.f32 %v614, 0.18741608
        %v616 = vmul.f32 %v607, %v615
        %v617 = vadd.f32 %v616, 1.1283791
        %v618 = vmul.f32 %v604, %v617
        %v619 = vmul.f32 %v607, 3.8918573e-05
        %v620 = vadd.f32 %v619, 0.001143296
        %v621 = vmul.f32 %v607, %v620
        %v622 = vadd.f32 %v621, 0.014752088
        %v623 = vmul.f32 %v607, %v622
        %v624 = vadd.f32 %v623, 0.112945676
        %v625 = vmul.f32 %v607, %v624
        %v626 = vadd.f32 %v625, 0.4994258
        %v627 = vmul.f32 %v607, %v626
        %v628 = vadd.f32 %v627, 1.0
        %v629 = vrcp.pop %v628
        %v630 = vmul.f32 %v628, %v629
        %v631 = vsub.f32 1.0, %v630
        %v632 = vmul.f32 %v629, %v631
        %v633 = vadd.f32 %v629, %v632
        %vm634 = vweird.f32 %v628
        %vm635 = vweird.f32 %v629
        %vm636 = vmor %vm634, %vm635
        %v637 = vsel %vm636, %v629, %v633
        %v638 = vand.u32 2147483647, %v628
        %vm639 = vcmp.eq.f32.partialorder %v638, 8.507059e+37
        %v640 = vand.u32 %v628, 2147483648
        %v641 = vor.u32 1.1754944e-38, %v640
        %v642 = vsel %vm639, %v641, %v637
        %v643 = vmul.f32 %v618, %v642
        %v644 = vmin.f32 %v643, 1.0
        %v645 = vmax.f32 %v644, -1.0
        %v646 = vmul.f32 %v605, %v605
        %v647 = vmin.f32 16.0, %v646
        %v648 = vmul.f32 %v647, 2.1237322e-06
        %v649 = vadd.f32 %v648, 0.00028619796
        %v650 = vmul.f32 %v647, %v649
        %v651 = vadd.f32 %v650, 0.0036580483
        %v652 = vmul.f32 %v647, %v651
        %v653 = vadd.f32 %v652, 0.05243302
        %v654 = vmul.f32 %v647, %v653
        %v655 = vadd.f32 %v654, 0.18741608
        %v656 = vmul.f32 %v647, %v655
        %v657 = vadd.f32 %v656, 1.1283791
        %v658 = vmul.f32 %v605, %v657
        %v659 = vmul.f32 %v647, 3.8918573e-05
        %v660 = vadd.f32 %v659, 0.001143296
        %v661 = vmul.f32 %v647, %v660
        %v662 = vadd.f32 %v661, 0.014752088
        %v663 = vmul.f32 %v647, %v662
        %v664 = vadd.f32 %v663, 0.112945676
        %v665 = vmul.f32 %v647, %v664
        %v666 = vadd.f32 %v665, 0.4994258
        %v667 = vmul.f32 %v647, %v666
        %v668 = vadd.f32 %v667, 1.0
        %v669 = vrcp.pop %v668
        %v670 = vmul.f32 %v668, %v669
        %v671 = vsub.f32 1.0, %v670
        %v672 = vmul.f32 %v669, %v671
        %v673 = vadd.f32 %v669, %v672
        %vm674 = vweird.f32 %v668
        %vm675 = vweird.f32 %v669
        %vm676 = vmor %vm674, %vm675
        %v677 = vsel %vm676, %v669, %v673
        %v678 = vand.u32 2147483647, %v668
        %vm679 = vcmp.eq.f32.partialorder %v678, 8.507059e+37
        %v680 = vand.u32 %v668, 2147483648
        %v681 = vor.u32 1.1754944e-38, %v680
        %v682 = vsel %vm679, %v681, %v677
        %v683 = vmul.f32 %v658, %v682
        %v684 = vmin.f32 %v683, 1.0
        %v685 = vmax.f32 %v684, -1.0
        %v686 = vadd.f32 %v645, 1.0
        %v687 = vadd.f32 %v685, 1.0
        %v688 = vmul.f32 %v602, %v686
        %v689 = vmul.f32 %v603, %v687
        %v690 = vld [vmem:[#allocation2] sm:$0x1]
        %v691 = vmul.f32 %v688, %v688
        %v692 = vmul.f32 %v689, %v689
        %v693 = vadd.f32 %v691, %v692
        %v694 = vrot.slane %v693, 4
        %v695 = vadd.f32 %v693, %v694
        %v696 = vrot.slane %v695, 2
        %v697 = vadd.f32 %v695, %v696
        %v698 = vrot.slane %v697, 1
        %v699 = vadd.f32 %v697, %v698
        %v700 = vadd.f32 %v690, %v699
        %701 = vst [vmem:[#allocation2] sm:$0x1] %v700
        %v702 = vpack.c.bf16 %v688, %v688
        %v703 = vpack.c.bf16 %v689, %v689
        %s704 = sshra.s32 %s447, 3
        %s705 = sand.u32 %s447, 7
        %s706 = smul.addr %s704, 4
        %s707 = scalar_lea.vmem [#allocation3], %s706
        %708 = vst [vmem:[%s707] sm:$0xf] %v702
        %709 = vst [vmem:[%s707 + $0x4] sm:$0xf] %v703
      $region64: #{convnextv2_forward.15} parent=59 // pred_fallthru
        _
      %p710 = scmp.eq.s32.totalorder %s27, 1
      // Predicated region
      $region69: #{convnextv2_forward.15} parent=59 // pred_check
        %p711 = pneg %p710
      $region70: #{convnextv2_forward.15} parent=59 // pred_check_branch
        %713 = sbr.rel (%p711) target = $region72
      $region71: #{convnextv2_forward.15} parent=59 // pred_region
        %s714 = sshra.s32 %s447, 3
        %s715 = sand.u32 %s447, 7
        %s716 = smul.addr %s714, 4
        %s717 = scalar_lea.vmem [#allocation3], %s716
        %v718 = vld [vmem:[%s717] sm:$0xf]
        %v719 = vld [vmem:[%s717 + $0x4] sm:$0xf]
        %v720 = vunpack.c.l.bf16 %v718
        %v721 = vunpack.c.l.bf16 %v719
        %v722 = vld [vmem:[#allocation2] sm:$0x1]
        %v723 = vrsqrt.pop %v722
        %v724 = vmul.f32 %v723, %v722
        %v725 = vmul.f32 %v724, %v723
        %v726 = vmul.f32 0.5, %v725
        %v727 = vsub.f32 1.5, %v726
        %v728 = vmul.f32 %v723, %v727
        %v729 = vmul.f32 %v722, %v728
        %vm730 = vcmp.eq.f32.partialorder %v722, inf
        %v731 = vsel %vm730, %v722, %v729
        %vm732 = vcmp.eq.f32.partialorder %v722, 0.0
        %v733 = vand.u32 %v722, 2147483648
        %v734 = vsel %vm732, %v733, %v731
        %vm735 = vcmask 1040384
        %v736 = vsel %vm735, %v734, 0.0
        %737 = vadd.xlane.f32.xlu0 %v736
        %v738 = vpop.xlane.xlu0 %737
        %v739 = vmul.f32 %v738, 0.0078125
        %v740 = vadd.f32 %v739, 1e-06
        %v741 = vrcp.pop %v740
        %v742 = vmul.f32 %v740, %v741
        %v743 = vsub.f32 1.0, %v742
        %v744 = vmul.f32 %v741, %v743
        %v745 = vadd.f32 %v741, %v744
        %vm746 = vweird.f32 %v740
        %vm747 = vweird.f32 %v741
        %vm748 = vmor %vm746, %vm747
        %v749 = vsel %vm748, %v741, %v745
        %v750 = vand.u32 2147483647, %v740
        %vm751 = vcmp.eq.f32.partialorder %v750, 8.507059e+37
        %v752 = vand.u32 %v740, 2147483648
        %v753 = vor.u32 1.1754944e-38, %v752
        %v754 = vsel %vm751, %v753, %v749
        %v755 = vmul.f32 %v734, %v754
        %v756 = vld [vmem:[%s6] sm:$0x1]
        %v758 = vperm.slane %v755, 0
        %v760 = vmul.f32 %v720, %v758
        %v761 = vmul.f32 %v721, %v758
        %v763 = vperm.slane %v756, 0
        %v765 = vmul.f32 %v763, %v760
        %v766 = vmul.f32 %v763, %v761
        %v767 = vld [vmem:[%s7] sm:$0x1]
        %v769 = vperm.slane %v767, 0
        %v771 = vadd.f32 %v765, %v769
        %v772 = vadd.f32 %v766, %v769
        %v773 = vadd.f32 %v771, %v720
        %v774 = vadd.f32 %v772, %v721
        %v775 = vpack.c.bf16 %v774, %v773
        %v776 = vld [vmem:[%s8] sm:$0xf]
        %v777 = vld [vmem:[%s8 + $0x4] sm:$0xf]
        %v778 = vld [vmem:[%s8 + $0x8] sm:$0xf]
        %v779 = vld [vmem:[%s8 + $0xc] sm:$0xf]
        %v780 = vld [vmem:[%s8 + $0x10] sm:$0xf]
        %v781 = vld [vmem:[%s8 + $0x14] sm:$0xf]
        %v782 = vld [vmem:[%s8 + $0x18] sm:$0xf]
        %v783 = vld [vmem:[%s8 + $0x1c] sm:$0xf]
        %v784 = vld [vmem:[%s8 + $0x20] sm:$0xf]
        %v785 = vld [vmem:[%s8 + $0x24] sm:$0xf]
        %v786 = vld [vmem:[%s8 + $0x28] sm:$0xf]
        %v787 = vld [vmem:[%s8 + $0x2c] sm:$0xf]
        %v788 = vld [vmem:[%s8 + $0x30] sm:$0xf]
        %v789 = vld [vmem:[%s8 + $0x34] sm:$0xf]
        %v790 = vld [vmem:[%s8 + $0x38] sm:$0xf]
        %v791 = vld [vmem:[%s8 + $0x3c] sm:$0xf]
        %v792 = vld [vmem:[%s9] sm:$0x1]
        %v794 = vperm.slane %v792, 0
        %v812 = vunpack.c.l.b16 %v776
        %v813 = vunpack.c.l.b16 %v777
        %v814 = vunpack.c.l.b16 %v778
        %v815 = vunpack.c.l.b16 %v779
        %v816 = vunpack.c.l.b16 %v780
        %v817 = vunpack.c.l.b16 %v781
        %v818 = vunpack.c.l.b16 %v782
        %v819 = vunpack.c.l.b16 %v783
        %v820 = vunpack.c.l.b16 %v784
        %v821 = vunpack.c.l.b16 %v785
        %v822 = vunpack.c.l.b16 %v786
        %v823 = vunpack.c.l.b16 %v787
        %v824 = vunpack.c.l.b16 %v788
        %v825 = vunpack.c.l.b16 %v789
        %v826 = vunpack.c.l.b16 %v790
        %v827 = vunpack.c.l.b16 %v791
        %v828 = vpack.c.b16 %v813, %v812
        %v829 = vpack.c.b16 %v815, %v814
        %v830 = vpack.c.b16 %v817, %v816
        %v831 = vpack.c.b16 %v819, %v818
        %v832 = vpack.c.b16 %v821, %v820
        %v833 = vpack.c.b16 %v823, %v822
        %v834 = vpack.c.b16 %v825, %v824
        %v835 = vpack.c.b16 %v827, %v826
        %844 = vmatpush.bf16.msra.mxu0 %v835
        %845 = vmatpush.bf16.msra.mxu0 %v834
        %846 = vmatpush.bf16.msra.mxu0 %v833
        %847 = vmatpush.bf16.msra.mxu0 %v832
        %848 = vmatpush.bf16.msra.mxu0 %v831
        %849 = vmatpush.bf16.msra.mxu0 %v830
        %850 = vmatpush.bf16.msra.mxu0 %v829
        %851 = vmatpush.bf16.msra.mxu0 %v828
        %852 = vmatmul.bf16.gmra.mxu0 %v775
        %v853 = vpop.f32.mrf.mxu0
        %v854 = vadd.f32 %v794, %v853
        %v855 = vpop.f32.mrf.mxu0
        %v856 = vadd.f32 %v794, %v855
        %857 = vdwg.mxu0
        %v858 = vld [vmem:[%s433] sm:$0xf]
        %v859 = vld [vmem:[%s433 + $0x4] sm:$0xf]
        %v860 = vunpack.c.l.bf16 %v858
        %v861 = vunpack.c.l.bf16 %v859
        %v862 = vadd.f32 %v860, %v854
        %v863 = vadd.f32 %v861, %v856
        %v864 = vpack.c.bf16 %v862, %v862
        %v865 = vpack.c.bf16 %v863, %v863
        %866 = vst [vmem:[%s444] sm:$0xf] %v864
        %867 = vst [vmem:[%s444 + $0x4] sm:$0xf] %v865
      $region72: #{convnextv2_forward.15} parent=59 // pred_fallthru
        _
      %s868 = smul.u32 %s27, %s28
      %s869 = smul.u32 2, %s868
      %p870 = scmp.lt.s32.totalorder %s26, 1
      %s871 = scalar_select %p870, %s26, 1
      %p872 = scmp.lt.s32.totalorder %s869, 1
      %s873 = scalar_select %p872, %s869, 1
      %s874 = smul.addr %s871, 2
      %s875 = sadd.s32 %s873, %s874
      %s876 = smul.addr %s875, 4
      %s877 = scalar_lea.vmem %s10, %s876
      // Predicated region
      $region73: #{convnextv2_forward.15} parent=59 // pred_check
        %p878 = pneg %p286
      $region74: #{convnextv2_forward.15} parent=59 // pred_check_branch
        %880 = sbr.rel (%p878) target = $region76
      $region75: #{convnextv2_forward.15} parent=59 // pred_region
        %s881 = smul.u32 %s27, %s28
        %s882 = smul.u32 2, %s881
      $region76: #{convnextv2_forward.15} parent=59 // pred_fallthru
        _
    $region60: #{convnextv2_forward.15} parent=5 // pred_fallthru
      _
    %p883 = scmp.le.s32.totalorder 2, %s16
    // Predicated region
    $region77: #{convnextv2_forward.15} parent=5 // pred_check
      %p884 = pneg %p883
    $region78: #{convnextv2_forward.15} parent=5 // pred_check_branch
      %886 = sbr.rel (%p884) target = $region80
    $region79: #{convnextv2_forward.15} parent=5 // pred_region
      %s887 = ssub.s32 %s16, 2
      // Predicated region
      $region81: #{convnextv2_forward.15} parent=79 // pred_check
        %p888 = pneg %p292
      $region82: #{convnextv2_forward.15} parent=79 // pred_check_branch
        %890 = sbr.rel (%p888) target = $region84
      $region83: #{convnextv2_forward.15} parent=79 // pred_region
        %s891 = smul.u32 %s30, %s31
        %s892 = smul.u32 2, %s891
        %p893 = scmp.lt.s32.totalorder %s29, 1
        %s894 = scalar_select %p893, %s29, 1
        %p895 = scmp.lt.s32.totalorder %s892, 1
        %s896 = scalar_select %p895, %s892, 1
        %s897 = smul.addr %s894, 2
        %s898 = sadd.s32 %s896, %s897
        %s899 = smul.addr %s898, 4
        %s900 = scalar_lea.vmem %s10, %s899
      $region84: #{convnextv2_forward.15} parent=79 // pred_fallthru
        _
    $region80: #{convnextv2_forward.15} parent=5 // pred_fallthru
      _
  $region6: #{convnextv2_forward.15} parent=0 // loop_footer
    %s20 = sadd.s32 1, %s16
  $region7: #{convnextv2_forward.15} parent=0 // loop_footer_branch
    %15 = sbr.rel target = $region3
  $region8: #{convnextv2_forward.15} parent=0 // loop_exit
    _

// kernel: convnextv2_forward.14
$region0: #{convnextv2_forward.14}
  #allocation0 [shape = 'u32[]', space=smem, size = 0x4, offset = 0x4, fixed_abs, tag = 'smem constant byte address 0x4 - core index']
  #allocation1 [shape = 'u32[72,128]{1,0:T(1,128)}', space=vmem, size = 0x9000, scoped, tag = 'internal scratch']
  #allocation2 [shape = 'f32[10,10,128]{2,1,0:T(8,128)}', space=vmem, size = 0x14000, scoped, tag = 'scratch operand']
  %s0 = inlined_call_operand.vmem [shape: bf16[2,4,4,128], index: 0, kind: input, shape index: {}]
  %s1 = inlined_call_operand.vmem [shape: f32[49,128], index: 1, kind: input, shape index: {}]
  %s2 = inlined_call_operand.vmem [shape: f32[1,128], index: 2, kind: input, shape index: {}]
  %s3 = inlined_call_operand.vmem [shape: bf16[2,4,4,128], index: 3, kind: output, shape index: {}]
  %s4 = sld [smem:[#allocation0]]
  $region45: #{convnextv2_forward.14} parent=0
    _
  %s6 = ssub.s32 1, %s4
  %s7 = scalar_select 0, %s6, %s4
  loop: start=0, step=1, limit=4
  $region2: #{convnextv2_forward.14} parent=0 // loop_pre_header
    _
  $region3: #{convnextv2_forward.14} parent=0 // loop_header
    %s9 = sphi 0, %s13
    %p10 = scmp.ge.s32.totalorder %s9, 4
    %s19 = sphi 0, %s21
    %s22 = sphi 0, %s19
    %s23 = sphi 0, %s22
    %s39 = sphi 0, %s23
    %s43 = sphi 0, %s43
    %s45 = sphi 0, %s43
    %s46 = sphi 0, %s45
    %s60 = sphi 0, %s46
    %s64 = sphi 0, %s64
    %s66 = sphi 0, %s64
    %s67 = sphi 0, %s66
    %s81 = sphi 0, %s67
    %s87 = sphi 0, %s89
    %s90 = sphi 0, %s87
    %s91 = sphi 0, %s90
    %s107 = sphi 0, %s91
  $region4: #{convnextv2_forward.14} parent=0 // loop_header_branch
    %12 = sbr.rel (%p10) target = $region8
  $region5: #{convnextv2_forward.14} parent=0 // loop_body
    %s14 = ssub.s32 %s9, 1
    %s15 = ssub.s32 %s9, 2
    %s16 = sadd.s32 %s9, 1
    %s17 = ssub.s32 %s9, %s16
    %p18 = scmp.eq.s32.totalorder %s17, 0
    %s20 = sadd.s32 %s19, 1
    %s21 = scalar_select %p18, %s19, %s20
    %p24 = pneg %p18
    %p25 = scmp.eq.s32.totalorder %s9, 1
    %p26 = por %p24, %p25
    %p27 = scmp.ne.s32.totalorder %s19, %s22
    %p28 = scmp.eq.s32.totalorder %s9, 0
    %p29 = por %p27, %p28
    %p30 = scmp.ne.s32.totalorder %s19, %s22
    %p31 = scmp.eq.s32.totalorder %s14, 1
    %p32 = por %p30, %p31
    %p33 = scmp.ne.s32.totalorder %s22, %s23
    %p34 = scmp.eq.s32.totalorder %s14, 0
    %p35 = por %p33, %p34
    %p36 = scmp.ne.s32.totalorder %s22, %s23
    %p37 = scmp.eq.s32.totalorder %s15, 1
    %p38 = por %p36, %p37
    %p40 = scmp.ne.s32.totalorder %s23, %s39
    %p41 = scmp.eq.s32.totalorder %s15, 0
    %p42 = por %p40, %p41
    %s44 = sadd.s32 %s43, 1
    %p47 = scmp.eq.s32.totalorder %s9, 1
    %p48 = scmp.ne.s32.totalorder %s43, %s45
    %p49 = scmp.eq.s32.totalorder %s9, 0
    %p50 = por %p48, %p49
    %p51 = scmp.ne.s32.totalorder %s43, %s45
    %p52 = scmp.eq.s32.totalorder %s14, 1
    %p53 = por %p51, %p52
    %p54 = scmp.ne.s32.totalorder %s45, %s46
    %p55 = scmp.eq.s32.totalorder %s14, 0
    %p56 = por %p54, %p55
    %p57 = scmp.ne.s32.totalorder %s45, %s46
    %p58 = scmp.eq.s32.totalorder %s15, 1
    %p59 = por %p57, %p58
    %p61 = scmp.ne.s32.totalorder %s46, %s60
    %p62 = scmp.eq.s32.totalorder %s15, 0
    %p63 = por %p61, %p62
    %s65 = sadd.s32 %s64, 1
    %p68 = scmp.eq.s32.totalorder %s9, 1
    %p69 = scmp.ne.s32.totalorder %s64, %s66
    %p70 = scmp.eq.s32.totalorder %s9, 0
    %p71 = por %p69, %p70
    %p72 = scmp.ne.s32.totalorder %s64, %s66
    %p73 = scmp.eq.s32.totalorder %s14, 1
    %p74 = por %p72, %p73
    %p75 = scmp.ne.s32.totalorder %s66, %s67
    %p76 = scmp.eq.s32.totalorder %s14, 0
    %p77 = por %p75, %p76
    %p78 = scmp.ne.s32.totalorder %s66, %s67
    %p79 = scmp.eq.s32.totalorder %s15, 1
    %p80 = por %p78, %p79
    %p82 = scmp.ne.s32.totalorder %s67, %s81
    %p83 = scmp.eq.s32.totalorder %s15, 0
    %p84 = por %p82, %p83
    %s85 = ssub.s32 %s9, %s16
    %p86 = scmp.eq.s32.totalorder %s85, 0
    %s88 = sadd.s32 %s87, 1
    %s89 = scalar_select %p86, %s87, %s88
    %p92 = pneg %p86
    %p93 = scmp.eq.s32.totalorder %s9, 1
    %p94 = por %p92, %p93
    %p95 = scmp.ne.s32.totalorder %s87, %s90
    %p96 = scmp.eq.s32.totalorder %s9, 0
    %p97 = por %p95, %p96
    %p98 = scmp.ne.s32.totalorder %s87, %s90
    %p99 = scmp.eq.s32.totalorder %s14, 1
    %p100 = por %p98, %p99
    %p101 = scmp.ne.s32.totalorder %s90, %s91
    %p102 = scmp.eq.s32.totalorder %s14, 0
    %p103 = por %p101, %p102
    %p104 = scmp.ne.s32.totalorder %s90, %s91
    %p105 = scmp.eq.s32.totalorder %s15, 1
    %p106 = por %p104, %p105
    %p108 = scmp.ne.s32.totalorder %s91, %s107
    %p109 = scmp.eq.s32.totalorder %s15, 0
    %p110 = por %p108, %p109
    %p111 = scmp.le.s32.totalorder 1, %s9
    %p112 = scmp.lt.s32.totalorder %s9, 3
    %p113 = pnand %p111, %p112
    %p114 = pneg %p113
    // Predicated region
    $region9: #{convnextv2_forward.14} parent=5 // pred_check
      _
    $region10: #{convnextv2_forward.14} parent=5 // pred_check_branch
      %116 = sbr.rel (%p113) target = $region12
    $region11: #{convnextv2_forward.14} parent=5 // pred_region
      %s117 = ssub.s32 %s9, 1
      // Predicated region
      $region13: #{convnextv2_forward.14} parent=11 // pred_check
        %p118 = pneg %p56
      $region14: #{convnextv2_forward.14} parent=11 // pred_check_branch
        %120 = sbr.rel (%p118) target = $region16
      $region15: #{convnextv2_forward.14} parent=11 // pred_region
        _
      $region16: #{convnextv2_forward.14} parent=11 // pred_fallthru
        _
      // Predicated region
      $region17: #{convnextv2_forward.14} parent=11 // pred_check
        %p121 = pneg %p77
      $region18: #{convnextv2_forward.14} parent=11 // pred_check_branch
        %123 = sbr.rel (%p121) target = $region20
      $region19: #{convnextv2_forward.14} parent=11 // pred_region
        _
      $region20: #{convnextv2_forward.14} parent=11 // pred_fallthru
        _
    $region12: #{convnextv2_forward.14} parent=5 // pred_fallthru
      _
    %p124 = scmp.lt.s32.totalorder %s9, 2
    // Predicated region
    $region21: #{convnextv2_forward.14} parent=5 // pred_check
      %p125 = pneg %p124
    $region22: #{convnextv2_forward.14} parent=5 // pred_check_branch
      %127 = sbr.rel (%p125) target = $region24
    $region23: #{convnextv2_forward.14} parent=5 // pred_region
      // Predicated region
      $region25: #{convnextv2_forward.14} parent=23 // pred_check
        %p128 = pneg %p29
      $region26: #{convnextv2_forward.14} parent=23 // pred_check_branch
        %130 = sbr.rel (%p128) target = $region28
      $region27: #{convnextv2_forward.14} parent=23 // pred_region
        %p131 = scmp.lt.s32.totalorder %s9, 1
        %s132 = scalar_select %p131, %s9, 1
        %s133 = smul.addr %s132, 4
        %s134 = smul.addr %s133, 2
        %s135 = scalar_lea.vmem %s0, %s134
      $region28: #{convnextv2_forward.14} parent=23 // pred_fallthru
        _
    $region24: #{convnextv2_forward.14} parent=5 // pred_fallthru
      _
    %p136 = scmp.le.s32.totalorder 1, %s9
    %p137 = scmp.lt.s32.totalorder %s9, 3
    %p138 = pnand %p136, %p137
    %p139 = pneg %p138
    // Predicated region
    $region29: #{convnextv2_forward.14} parent=5 // pred_check
      _
    $region30: #{convnextv2_forward.14} parent=5 // pred_check_branch
      %141 = sbr.rel (%p138) target = $region32
    $region31: #{convnextv2_forward.14} parent=5 // pred_region
      %s142 = ssub.s32 %s9, 1
      %p143 = scmp.lt.s32.totalorder %s14, 1
      %s144 = scalar_select %p143, %s14, 1
      %s145 = smul.addr %s144, 4
      %s146 = smul.addr %s145, 2
      %s147 = scalar_lea.vmem %s0, %s146
      %p148 = pneg %p35
      %p149 = pneg %p32
      %p150 = pneg %p56
      %p151 = pneg %p53
      %p152 = pneg %p77
      %p153 = pneg %p74
      %p154 = pneg %p103
      %p155 = pneg %p100
      %p156 = scmp.lt.s32.totalorder %s14, 1
      %s157 = scalar_select %p156, %s14, 1
      %s158 = smul.addr %s157, 4
      %s159 = smul.addr %s158, 2
      %s160 = scalar_lea.vmem %s3, %s159
      %p161 = scmp.lt.s32.totalorder %s14, 1
      %s162 = scalar_select %p161, %s14, 1
      %s163 = smul.addr %s162, 4
      %s164 = smul.addr %s163, 2
      %s165 = scalar_lea.vmem %s0, %s164
      %p166 = scmp.lt.s32.totalorder %s14, 1
      %s167 = scalar_select %p166, %s14, 1
      %s168 = smul.addr %s167, 4
      %s169 = smul.addr %s168, 2
      %s170 = scalar_lea.vmem %s3, %s169
      %171 = vst [vmem:[#allocation2] sm:$0xff] 0.0
      %172 = vst [vmem:[#allocation2 + $0x8] sm:$0x3] 0.0
      %173 = vst [vmem:[#allocation2 + $0x10] sm:$0xff] 0.0
      %174 = vst [vmem:[#allocation2 + $0x18] sm:$0x3] 0.0
      %175 = vst [vmem:[#allocation2 + $0x20] sm:$0xff] 0.0
      %176 = vst [vmem:[#allocation2 + $0x28] sm:$0x3] 0.0
      %s177 = scalar_lea.vmem [#allocation2], 112
      %178 = vst [vmem:[%s177] sm:$0xff] 0.0
      %179 = vst [vmem:[%s177 + $0x8] sm:$0x3] 0.0
      %180 = vst [vmem:[%s177 + $0x10] sm:$0xff] 0.0
      %181 = vst [vmem:[%s177 + $0x18] sm:$0x3] 0.0
      %182 = vst [vmem:[%s177 + $0x20] sm:$0xff] 0.0
      %183 = vst [vmem:[%s177 + $0x28] sm:$0x3] 0.0
      %s184 = scalar_lea.vmem [#allocation2], 48
      %185 = vst [vmem:[%s184] sm:$0x7] 0.0
      %186 = vst [vmem:[%s184 + $0x10] sm:$0x7] 0.0
      %187 = vst [vmem:[%s184 + $0x20] sm:$0x7] 0.0
      %188 = vst [vmem:[%s184 + $0x30] sm:$0x7] 0.0
      %189 = vst [vmem:[%s184 + $0x7] sm:$0x7] 0.0
      %190 = vst [vmem:[%s184 + $0x17] sm:$0x7] 0.0
      %191 = vst [vmem:[%s184 + $0x27] sm:$0x7] 0.0
      %192 = vst [vmem:[%s184 + $0x37] sm:$0x7] 0.0
      %v193 = vld [vmem:[%s165] sm:$0x3]
      %v194 = vld [vmem:[%s165 + $0x2] sm:$0x3]
      %v195 = vld [vmem:[%s165 + $0x4] sm:$0x3]
      %v196 = vld [vmem:[%s165 + $0x6] sm:$0x3]
      %v197 = vunpack.c.l.bf16 %v193
      %v198 = vunpack.c.l.bf16 %v194
      %v199 = vunpack.c.l.bf16 %v195
      %v200 = vunpack.c.l.bf16 %v196
      %201 = vst [vmem:[%s184 + $0x3] sm:$0xf] %v197
      %202 = vst [vmem:[%s184 + $0x13] sm:$0xf] %v198
      %203 = vst [vmem:[%s184 + $0x23] sm:$0xf] %v199
      %204 = vst [vmem:[%s184 + $0x33] sm:$0xf] %v200
      %v205 = vld [vmem:[%s1] sm:$0xff]
      %v206 = vld [vmem:[%s1 + $0x8] sm:$0xff]
      %v207 = vld [vmem:[%s1 + $0x10] sm:$0xff]
      %v208 = vld [vmem:[%s1 + $0x18] sm:$0xff]
      %v209 = vld [vmem:[%s1 + $0x20] sm:$0xff]
      %v210 = vld [vmem:[%s1 + $0x28] sm:$0xff]
      %v211 = vld [vmem:[%s1 + $0x30] sm:$0x1]
      %v212 = vld [vmem:[#allocation2] sm:$0xf]
      %v213 = vld [vmem:[#allocation2 + $0x10] sm:$0xf]
      %v214 = vld [vmem:[#allocation2 + $0x20] sm:$0xf]
      %v215 = vld [vmem:[#allocation2 + $0x30] sm:$0xf]
      %v216 = vperm.slane %v205, 0
      %v217 = vmul.f32 %v212, %v216
      %v218 = vmul.f32 %v213, %v216
      %v219 = vmul.f32 %v214, %v216
      %v220 = vmul.f32 %v215, %v216
      %v221 = vld [vmem:[#allocation2 + $0x1] sm:$0xf]
      %v222 = vld [vmem:[#allocation2 + $0x11] sm:$0xf]
      %v223 = vld [vmem:[#allocation2 + $0x21] sm:$0xf]
      %v224 = vld [vmem:[#allocation2 + $0x31] sm:$0xf]
      %v225 = vperm.slane %v205, 1
      %v226 = vmul.f32 %v221, %v225
      %v227 = vmul.f32 %v222, %v225
      %v228 = vmul.f32 %v223, %v225
      %v229 = vmul.f32 %v224, %v225
      %v230 = vld [vmem:[#allocation2 + $0x2] sm:$0xf]
      %v231 = vld [vmem:[#allocation2 + $0x12] sm:$0xf]
      %v232 = vld [vmem:[#allocation2 + $0x22] sm:$0xf]
      %v233 = vld [vmem:[#allocation2 + $0x32] sm:$0xf]
      %v234 = vperm.slane %v205, 2
      %v235 = vmul.f32 %v230, %v234
      %v236 = vmul.f32 %v231, %v234
      %v237 = vmul.f32 %v232, %v234
      %v238 = vmul.f32 %v233, %v234
      %v239 = vld [vmem:[#allocation2 + $0x3] sm:$0xf]
      %v240 = vld [vmem:[#allocation2 + $0x13] sm:$0xf]
      %v241 = vld [vmem:[#allocation2 + $0x23] sm:$0xf]
      %v242 = vld [vmem:[#allocation2 + $0x33] sm:$0xf]
      %v243 = vperm.slane %v205, 3
      %v244 = vmul.f32 %v239, %v243
      %v245 = vmul.f32 %v240, %v243
      %v246 = vmul.f32 %v241, %v243
      %v247 = vmul.f32 %v242, %v243
      %v248 = vld [vmem:[#allocation2 + $0x4] sm:$0xf]
      %v249 = vld [vmem:[#allocation2 + $0x14] sm:$0xf]
      %v250 = vld [vmem:[#allocation2 + $0x24] sm:$0xf]
      %v251 = vld [vmem:[#allocation2 + $0x34] sm:$0xf]
      %v252 = vperm.slane %v205, 4
      %v253 = vmul.f32 %v248, %v252
      %v254 = vmul.f32 %v249, %v252
      %v255 = vmul.f32 %v250, %v252
      %v256 = vmul.f32 %v251, %v252
      %v257 = vadd.f32 %v217, %v253
      %v258 = vadd.f32 %v218, %v254
      %v259 = vadd.f32 %v219, %v255
      %v260 = vadd.f32 %v220, %v256
      %v261 = vld [vmem:[#allocation2 + $0x5] sm:$0xf]
      %v262 = vld [vmem:[#allocation2 + $0x15] sm:$0xf]
      %v263 = vld [vmem:[#allocation2 + $0x25] sm:$0xf]
      %v264 = vld [vmem:[#allocation2 + $0x35] sm:$0xf]
      %v265 = vperm.slane %v205, 5
      %v266 = vmul.f32 %v261, %v265
      %v267 = vmul.f32 %v262, %v265
      %v268 = vmul.f32 %v263, %v265
      %v269 = vmul.f32 %v264, %v265
      %v270 = vadd.f32 %v226, %v266
      %v271 = vadd.f32 %v227, %v267
      %v272 = vadd.f32 %v228, %v268
      %v273 = vadd.f32 %v229, %v269
      %v274 = vld [vmem:[#allocation2 + $0x6] sm:$0xf]
      %v275 = vld [vmem:[#allocation2 + $0x16] sm:$0xf]
      %v276 = vld [vmem:[#allocation2 + $0x26] sm:$0xf]
      %v277 = vld [vmem:[#allocation2 + $0x36] sm:$0xf]
      %v278 = vperm.slane %v205, 6
      %v279 = vmul.f32 %v274, %v278
      %v280 = vmul.f32 %v275, %v278
      %v281 = vmul.f32 %v276, %v278
      %v282 = vmul.f32 %v277, %v278
      %v283 = vadd.f32 %v235, %v279
      %v284 = vadd.f32 %v236, %v280
      %v285 = vadd.f32 %v237, %v281
      %v286 = vadd.f32 %v238, %v282
      %s287 = scalar_lea.vmem [#allocation2], 16
      %v288 = vld [vmem:[%s287] sm:$0xf]
      %v289 = vld [vmem:[%s287 + $0x10] sm:$0xf]
      %v290 = vld [vmem:[%s287 + $0x20] sm:$0xf]
      %v291 = vld [vmem:[%s287 + $0x30] sm:$0xf]
      %v292 = vperm.slane %v205, 7
      %v293 = vmul.f32 %v288, %v292
      %v294 = vmul.f32 %v289, %v292
      %v295 = vmul.f32 %v290, %v292
      %v296 = vmul.f32 %v291, %v292
      %v297 = vadd.f32 %v244, %v293
      %v298 = vadd.f32 %v245, %v294
      %v299 = vadd.f32 %v246, %v295
      %v300 = vadd.f32 %v247, %v296
      %v301 = vld [vmem:[%s287 + $0x1] sm:$0xf]
      %v302 = vld [vmem:[%s287 + $0x11] sm:$0xf]
      %v303 = vld [vmem:[%s287 + $0x21] sm:$0xf]
      %v304 = vld [vmem:[%s287 + $0x31] sm:$0xf]
      %v305 = vperm.slane %v206, 0
      %v306 = vmul.f32 %v301, %v305
      %v307 = vmul.f32 %v302, %v305
      %v308 = vmul.f32 %v303, %v305
      %v309 = vmul.f32 %v304, %v305
      %v310 = vadd.f32 %v257, %v306
      %v311 = vadd.f32 %v258, %v307
      %v312 = vadd.f32 %v259, %v308
      %v313 = vadd.f32 %v260, %v309
      %v314 = vld [vmem:[%s287 + $0x2] sm:$0xf]
      %v315 = vld [vmem:[%s287 + $0x12] sm:$0xf]
      %v316 = vld [vmem:[%s287 + $0x22] sm:$0xf]
      %v317 = vld [vmem:[%s287 + $0x32] sm:$0xf]
      %v318 = vperm.slane %v206, 1
      %v319 = vmul.f32 %v314, %v318
      %v320 = vmul.f32 %v315, %v318
      %v321 = vmul.f32 %v316, %v318
      %v322 = vmul.f32 %v317, %v318
      %v323 = vadd.f32 %v270, %v319
      %v324 = vadd.f32 %v271, %v320
      %v325 = vadd.f32 %v272, %v321
      %v326 = vadd.f32 %v273, %v322
      %v327 = vld [vmem:[%s287 + $0x3] sm:$0xf]
      %v328 = vld [vmem:[%s287 + $0x13] sm:$0xf]
      %v329 = vld [vmem:[%s287 + $0x23] sm:$0xf]
      %v330 = vld [vmem:[%s287 + $0x33] sm:$0xf]
      %v331 = vperm.slane %v206, 2
      %v332 = vmul.f32 %v327, %v331
      %v333 = vmul.f32 %v328, %v331
      %v334 = vmul.f32 %v329, %v331
      %v335 = vmul.f32 %v330, %v331
      %v336 = vadd.f32 %v283, %v332
      %v337 = vadd.f32 %v284, %v333
      %v338 = vadd.f32 %v285, %v334
      %v339 = vadd.f32 %v286, %v335
      %v340 = vld [vmem:[%s287 + $0x4] sm:$0xf]
      %v341 = vld [vmem:[%s287 + $0x14] sm:$0xf]
      %v342 = vld [vmem:[%s287 + $0x24] sm:$0xf]
      %v343 = vld [vmem:[%s287 + $0x34] sm:$0xf]
      %v344 = vperm.slane %v206, 3
      %v345 = vmul.f32 %v340, %v344
      %v346 = vmul.f32 %v341, %v344
      %v347 = vmul.f32 %v342, %v344
      %v348 = vmul.f32 %v343, %v344
      %v349 = vadd.f32 %v297, %v345
      %v350 = vadd.f32 %v298, %v346
      %v351 = vadd.f32 %v299, %v347
      %v352 = vadd.f32 %v300, %v348
      %v353 = vld [vmem:[%s287 + $0x5] sm:$0xf]
      %v354 = vld [vmem:[%s287 + $0x15] sm:$0xf]
      %v355 = vld [vmem:[%s287 + $0x25] sm:$0xf]
      %v356 = vld [vmem:[%s287 + $0x35] sm:$0xf]
      %v357 = vperm.slane %v206, 4
      %v358 = vmul.f32 %v353, %v357
      %v359 = vmul.f32 %v354, %v357
      %v360 = vmul.f32 %v355, %v357
      %v361 = vmul.f32 %v356, %v357
      %v362 = vadd.f32 %v310, %v358
      %v363 = vadd.f32 %v311, %v359
      %v364 = vadd.f32 %v312, %v360
      %v365 = vadd.f32 %v313, %v361
      %v366 = vld [vmem:[%s287 + $0x6] sm:$0xf]
      %v367 = vld [vmem:[%s287 + $0x16] sm:$0xf]
      %v368 = vld [vmem:[%s287 + $0x26] sm:$0xf]
      %v369 = vld [vmem:[%s287 + $0x36] sm:$0xf]
      %v370 = vperm.slane %v206, 5
      %v371 = vmul.f32 %v366, %v370
      %v372 = vmul.f32 %v367, %v370
      %v373 = vmul.f32 %v368, %v370
      %v374 = vmul.f32 %v369, %v370
      %v375 = vadd.f32 %v323, %v371
      %v376 = vadd.f32 %v324, %v372
      %v377 = vadd.f32 %v325, %v373
      %v378 = vadd.f32 %v326, %v374
      %s379 = scalar_lea.vmem [#allocation2], 32
      %v380 = vld [vmem:[%s379] sm:$0xf]
      %v381 = vld [vmem:[%s379 + $0x10] sm:$0xf]
      %v382 = vld [vmem:[%s379 + $0x20] sm:$0xf]
      %v383 = vld [vmem:[%s379 + $0x30] sm:$0xf]
      %v384 = vperm.slane %v206, 6
      %v385 = vmul.f32 %v380, %v384
      %v386 = vmul.f32 %v381, %v384
      %v387 = vmul.f32 %v382, %v384
      %v388 = vmul.f32 %v383, %v384
      %v389 = vadd.f32 %v336, %v385
      %v390 = vadd.f32 %v337, %v386
      %v391 = vadd.f32 %v338, %v387
      %v392 = vadd.f32 %v339, %v388
      %v393 = vld [vmem:[%s379 + $0x1] sm:$0xf]
      %v394 = vld [vmem:[%s379 + $0x11] sm:$0xf]
      %v395 = vld [vmem:[%s379 + $0x21] sm:$0xf]
      %v396 = vld [vmem:[%s379 + $0x31] sm:$0xf]
      %v397 = vperm.slane %v206, 7
      %v398 = vmul.f32 %v393, %v397
      %v399 = vmul.f32 %v394, %v397
      %v400 = vmul.f32 %v395, %v397
      %v401 = vmul.f32 %v396, %v397
      %v402 = vadd.f32 %v349, %v398
      %v403 = vadd.f32 %v350, %v399
      %v404 = vadd.f32 %v351, %v400
      %v405 = vadd.f32 %v352, %v401
      %v406 = vld [vmem:[%s379 + $0x2] sm:$0xf]
      %v407 = vld [vmem:[%s379 + $0x12] sm:$0xf]
      %v408 = vld [vmem:[%s379 + $0x22] sm:$0xf]
      %v409 = vld [vmem:[%s379 + $0x32] sm:$0xf]
      %v410 = vperm.slane %v207, 0
      %v411 = vmul.f32 %v406, %v410
      %v412 = vmul.f32 %v407, %v410
      %v413 = vmul.f32 %v408, %v410
      %v414 = vmul.f32 %v409, %v410
      %v415 = vadd.f32 %v362, %v411
      %v416 = vadd.f32 %v363, %v412
      %v417 = vadd.f32 %v364, %v413
      %v418 = vadd.f32 %v365, %v414
      %v419 = vld [vmem:[%s379 + $0x3] sm:$0xf]
      %v420 = vld [vmem:[%s379 + $0x13] sm:$0xf]
      %v421 = vld [vmem:[%s379 + $0x23] sm:$0xf]
      %v422 = vld [vmem:[%s379 + $0x33] sm:$0xf]
      %v423 = vperm.slane %v207, 1
      %v424 = vmul.f32 %v419, %v423
      %v425 = vmul.f32 %v420, %v423
      %v426 = vmul.f32 %v421, %v423
      %v427 = vmul.f32 %v422, %v423
      %v428 = vadd.f32 %v375, %v424
      %v429 = vadd.f32 %v376, %v425
      %v430 = vadd.f32 %v377, %v426
      %v431 = vadd.f32 %v378, %v427
      %v432 = vld [vmem:[%s379 + $0x4] sm:$0xf]
      %v433 = vld [vmem:[%s379 + $0x14] sm:$0xf]
      %v434 = vld [vmem:[%s379 + $0x24] sm:$0xf]
      %v435 = vld [vmem:[%s379 + $0x34] sm:$0xf]
      %v436 = vperm.slane %v207, 2
      %v437 = vmul.f32 %v432, %v436
      %v438 = vmul.f32 %v433, %v436
      %v439 = vmul.f32 %v434, %v436
      %v440 = vmul.f32 %v435, %v436
      %v441 = vadd.f32 %v389, %v437
      %v442 = vadd.f32 %v390, %v438
      %v443 = vadd.f32 %v391, %v439
      %v444 = vadd.f32 %v392, %v440
      %v445 = vld [vmem:[%s379 + $0x5] sm:$0xf]
      %v446 = vld [vmem:[%s379 + $0x15] sm:$0xf]
      %v447 = vld [vmem:[%s379 + $0x25] sm:$0xf]
      %v448 = vld [vmem:[%s379 + $0x35] sm:$0xf]
      %v449 = vperm.slane %v207, 3
      %v450 = vmul.f32 %v445, %v449
      %v451 = vmul.f32 %v446, %v449
      %v452 = vmul.f32 %v447, %v449
      %v453 = vmul.f32 %v448, %v449
      %v454 = vadd.f32 %v402, %v450
      %v455 = vadd.f32 %v403, %v451
      %v456 = vadd.f32 %v404, %v452
      %v457 = vadd.f32 %v405, %v453
      %v458 = vld [vmem:[%s379 + $0x6] sm:$0xf]
      %v459 = vld [vmem:[%s379 + $0x16] sm:$0xf]
      %v460 = vld [vmem:[%s379 + $0x26] sm:$0xf]
      %v461 = vld [vmem:[%s379 + $0x36] sm:$0xf]
      %v462 = vperm.slane %v207, 4
      %v463 = vmul.f32 %v458, %v462
      %v464 = vmul.f32 %v459, %v462
      %v465 = vmul.f32 %v460, %v462
      %v466 = vmul.f32 %v461, %v462
      %v467 = vadd.f32 %v415, %v463
      %v468 = vadd.f32 %v416, %v464
      %v469 = vadd.f32 %v417, %v465
      %v470 = vadd.f32 %v418, %v466
      %v471 = vld [vmem:[%s184] sm:$0xf]
      %v472 = vld [vmem:[%s184 + $0x10] sm:$0xf]
      %v473 = vld [vmem:[%s184 + $0x20] sm:$0xf]
      %v474 = vld [vmem:[%s184 + $0x30] sm:$0xf]
      %v475 = vperm.slane %v207, 5
      %v476 = vmul.f32 %v471, %v475
      %v477 = vmul.f32 %v472, %v475
      %v478 = vmul.f32 %v473, %v475
      %v479 = vmul.f32 %v474, %v475
      %v480 = vadd.f32 %v428, %v476
      %v481 = vadd.f32 %v429, %v477
      %v482 = vadd.f32 %v430, %v478
      %v483 = vadd.f32 %v431, %v479
      %v484 = vld [vmem:[%s184 + $0x1] sm:$0xf]
      %v485 = vld [vmem:[%s184 + $0x11] sm:$0xf]
      %v486 = vld [vmem:[%s184 + $0x21] sm:$0xf]
      %v487 = vld [vmem:[%s184 + $0x31] sm:$0xf]
      %v488 = vperm.slane %v207, 6
      %v489 = vmul.f32 %v484, %v488
      %v490 = vmul.f32 %v485, %v488
      %v491 = vmul.f32 %v486, %v488
      %v492 = vmul.f32 %v487, %v488
      %v493 = vadd.f32 %v441, %v489
      %v494 = vadd.f32 %v442, %v490
      %v495 = vadd.f32 %v443, %v491
      %v496 = vadd.f32 %v444, %v492
      %v497 = vld [vmem:[%s184 + $0x2] sm:$0xf]
      %v498 = vld [vmem:[%s184 + $0x12] sm:$0xf]
      %v499 = vld [vmem:[%s184 + $0x22] sm:$0xf]
      %v500 = vld [vmem:[%s184 + $0x32] sm:$0xf]
      %v501 = vperm.slane %v207, 7
      %v502 = vmul.f32 %v497, %v501
      %v503 = vmul.f32 %v498, %v501
      %v504 = vmul.f32 %v499, %v501
      %v505 = vmul.f32 %v500, %v501
      %v506 = vadd.f32 %v454, %v502
      %v507 = vadd.f32 %v455, %v503
      %v508 = vadd.f32 %v456, %v504
      %v509 = vadd.f32 %v457, %v505
      %v510 = vld [vmem:[%s184 + $0x3] sm:$0xf]
      %v511 = vld [vmem:[%s184 + $0x13] sm:$0xf]
      %v512 = vld [vmem:[%s184 + $0x23] sm:$0xf]
      %v513 = vld [vmem:[%s184 + $0x33] sm:$0xf]
      %v514 = vperm.slane %v208, 0
      %v515 = vmul.f32 %v510, %v514
      %v516 = vmul.f32 %v511, %v514
      %v517 = vmul.f32 %v512, %v514
      %v518 = vmul.f32 %v513, %v514
      %v519 = vadd.f32 %v467, %v515
      %v520 = vadd.f32 %v468, %v516
      %v521 = vadd.f32 %v469, %v517
      %v522 = vadd.f32 %v470, %v518
      %v523 = vld [vmem:[%s184 + $0x4] sm:$0xf]
      %v524 = vld [vmem:[%s184 + $0x14] sm:$0xf]
      %v525 = vld [vmem:[%s184 + $0x24] sm:$0xf]
      %v526 = vld [vmem:[%s184 + $0x34] sm:$0xf]
      %v527 = vperm.slane %v208, 1
      %v528 = vmul.f32 %v523, %v527
      %v529 = vmul.f32 %v524, %v527
      %v530 = vmul.f32 %v525, %v527
      %v531 = vmul.f32 %v526, %v527
      %v532 = vadd.f32 %v480, %v528
      %v533 = vadd.f32 %v481, %v529
      %v534 = vadd.f32 %v482, %v530
      %v535 = vadd.f32 %v483, %v531
      %v536 = vld [vmem:[%s184 + $0x5] sm:$0xf]
      %v537 = vld [vmem:[%s184 + $0x15] sm:$0xf]
      %v538 = vld [vmem:[%s184 + $0x25] sm:$0xf]
      %v539 = vld [vmem:[%s184 + $0x35] sm:$0xf]
      %v540 = vperm.slane %v208, 2
      %v541 = vmul.f32 %v536, %v540
      %v542 = vmul.f32 %v537, %v540
      %v543 = vmul.f32 %v538, %v540
      %v544 = vmul.f32 %v539, %v540
      %v545 = vadd.f32 %v493, %v541
      %v546 = vadd.f32 %v494, %v542
      %v547 = vadd.f32 %v495, %v543
      %v548 = vadd.f32 %v496, %v544
      %v549 = vld [vmem:[%s184 + $0x6] sm:$0xf]
      %v550 = vld [vmem:[%s184 + $0x16] sm:$0xf]
      %v551 = vld [vmem:[%s184 + $0x26] sm:$0xf]
      %v552 = vld [vmem:[%s184 + $0x36] sm:$0xf]
      %v553 = vperm.slane %v208, 3
      %v554 = vmul.f32 %v549, %v553
      %v555 = vmul.f32 %v550, %v553
      %v556 = vmul.f32 %v551, %v553
      %v557 = vmul.f32 %v552, %v553
      %v558 = vadd.f32 %v506, %v554
      %v559 = vadd.f32 %v507, %v555
      %v560 = vadd.f32 %v508, %v556
      %v561 = vadd.f32 %v509, %v557
      %s562 = scalar_lea.vmem [#allocation2], 64
      %v563 = vld [vmem:[%s562] sm:$0xf]
      %v564 = vld [vmem:[%s562 + $0x10] sm:$0xf]
      %v565 = vld [vmem:[%s562 + $0x20] sm:$0xf]
      %v566 = vld [vmem:[%s562 + $0x30] sm:$0xf]
      %v567 = vperm.slane %v208, 4
      %v568 = vmul.f32 %v563, %v567
      %v569 = vmul.f32 %v564, %v567
      %v570 = vmul.f32 %v565, %v567
      %v571 = vmul.f32 %v566, %v567
      %v572 = vadd.f32 %v519, %v568
      %v573 = vadd.f32 %v520, %v569
      %v574 = vadd.f32 %v521, %v570
      %v575 = vadd.f32 %v522, %v571
      %v576 = vld [vmem:[%s562 + $0x1] sm:$0xf]
      %v577 = vld [vmem:[%s562 + $0x11] sm:$0xf]
      %v578 = vld [vmem:[%s562 + $0x21] sm:$0xf]
      %v579 = vld [vmem:[%s562 + $0x31] sm:$0xf]
      %v580 = vperm.slane %v208, 5
      %v581 = vmul.f32 %v576, %v580
      %v582 = vmul.f32 %v577, %v580
      %v583 = vmul.f32 %v578, %v580
      %v584 = vmul.f32 %v579, %v580
      %v585 = vadd.f32 %v532, %v581
      %v586 = vadd.f32 %v533, %v582
      %v587 = vadd.f32 %v534, %v583
      %v588 = vadd.f32 %v535, %v584
      %v589 = vld [vmem:[%s562 + $0x2] sm:$0xf]
      %v590 = vld [vmem:[%s562 + $0x12] sm:$0xf]
      %v591 = vld [vmem:[%s562 + $0x22] sm:$0xf]
      %v592 = vld [vmem:[%s562 + $0x32] sm:$0xf]
      %v593 = vperm.slane %v208, 6
      %v594 = vmul.f32 %v589, %v593
      %v595 = vmul.f32 %v590, %v593
      %v596 = vmul.f32 %v591, %v593
      %v597 = vmul.f32 %v592, %v593
      %v598 = vadd.f32 %v545, %v594
      %v599 = vadd.f32 %v546, %v595
      %v600 = vadd.f32 %v547, %v596
      %v601 = vadd.f32 %v548, %v597
      %v602 = vld [vmem:[%s562 + $0x3] sm:$0xf]
      %v603 = vld [vmem:[%s562 + $0x13] sm:$0xf]
      %v604 = vld [vmem:[%s562 + $0x23] sm:$0xf]
      %v605 = vld [vmem:[%s562 + $0x33] sm:$0xf]
      %v606 = vperm.slane %v208, 7
      %v607 = vmul.f32 %v602, %v606
      %v608 = vmul.f32 %v603, %v606
      %v609 = vmul.f32 %v604, %v606
      %v610 = vmul.f32 %v605, %v606
      %v611 = vadd.f32 %v558, %v607
      %v612 = vadd.f32 %v559, %v608
      %v613 = vadd.f32 %v560, %v609
      %v614 = vadd.f32 %v561, %v610
      %v615 = vld [vmem:[%s562 + $0x4] sm:$0xf]
      %v616 = vld [vmem:[%s562 + $0x14] sm:$0xf]
      %v617 = vld [vmem:[%s562 + $0x24] sm:$0xf]
      %v618 = vld [vmem:[%s562 + $0x34] sm:$0xf]
      %v619 = vperm.slane %v209, 0
      %v620 = vmul.f32 %v615, %v619
      %v621 = vmul.f32 %v616, %v619
      %v622 = vmul.f32 %v617, %v619
      %v623 = vmul.f32 %v618, %v619
      %v624 = vadd.f32 %v572, %v620
      %v625 = vadd.f32 %v573, %v621
      %v626 = vadd.f32 %v574, %v622
      %v627 = vadd.f32 %v575, %v623
      %v628 = vld [vmem:[%s562 + $0x5] sm:$0xf]
      %v629 = vld [vmem:[%s562 + $0x15] sm:$0xf]
      %v630 = vld [vmem:[%s562 + $0x25] sm:$0xf]
      %v631 = vld [vmem:[%s562 + $0x35] sm:$0xf]
      %v632 = vperm.slane %v209, 1
      %v633 = vmul.f32 %v628, %v632
      %v634 = vmul.f32 %v629, %v632
      %v635 = vmul.f32 %v630, %v632
      %v636 = vmul.f32 %v631, %v632
      %v637 = vadd.f32 %v585, %v633
      %v638 = vadd.f32 %v586, %v634
      %v639 = vadd.f32 %v587, %v635
      %v640 = vadd.f32 %v588, %v636
      %v641 = vld [vmem:[%s562 + $0x6] sm:$0xf]
      %v642 = vld [vmem:[%s562 + $0x16] sm:$0xf]
      %v643 = vld [vmem:[%s562 + $0x26] sm:$0xf]
      %v644 = vld [vmem:[%s562 + $0x36] sm:$0xf]
      %v645 = vperm.slane %v209, 2
      %v646 = vmul.f32 %v641, %v645
      %v647 = vmul.f32 %v642, %v645
      %v648 = vmul.f32 %v643, %v645
      %v649 = vmul.f32 %v644, %v645
      %v650 = vadd.f32 %v598, %v646
      %v651 = vadd.f32 %v599, %v647
      %v652 = vadd.f32 %v600, %v648
      %v653 = vadd.f32 %v601, %v649
      %s654 = scalar_lea.vmem [#allocation2], 80
      %v655 = vld [vmem:[%s654] sm:$0xf]
      %v656 = vld [vmem:[%s654 + $0x10] sm:$0xf]
      %v657 = vld [vmem:[%s654 + $0x20] sm:$0xf]
      %v658 = vld [vmem:[%s654 + $0x30] sm:$0xf]
      %v659 = vperm.slane %v209, 3
      %v660 = vmul.f32 %v655, %v659
      %v661 = vmul.f32 %v656, %v659
      %v662 = vmul.f32 %v657, %v659
      %v663 = vmul.f32 %v658, %v659
      %v664 = vadd.f32 %v611, %v660
      %v665 = vadd.f32 %v612, %v661
      %v666 = vadd.f32 %v613, %v662
      %v667 = vadd.f32 %v614, %v663
      %v668 = vld [vmem:[%s654 + $0x1] sm:$0xf]
      %v669 = vld [vmem:[%s654 + $0x11] sm:$0xf]
      %v670 = vld [vmem:[%s654 + $0x21] sm:$0xf]
      %v671 = vld [vmem:[%s654 + $0x31] sm:$0xf]
      %v672 = vperm.slane %v209, 4
      %v673 = vmul.f32 %v668, %v672
      %v674 = vmul.f32 %v669, %v672
      %v675 = vmul.f32 %v670, %v672
      %v676 = vmul.f32 %v671, %v672
      %v677 = vadd.f32 %v624, %v673
      %v678 = vadd.f32 %v625, %v674
      %v679 = vadd.f32 %v626, %v675
      %v680 = vadd.f32 %v627, %v676
      %v681 = vld [vmem:[%s654 + $0x2] sm:$0xf]
      %v682 = vld [vmem:[%s654 + $0x12] sm:$0xf]
      %v683 = vld [vmem:[%s654 + $0x22] sm:$0xf]
      %v684 = vld [vmem:[%s654 + $0x32] sm:$0xf]
      %v685 = vperm.slane %v209, 5
      %v686 = vmul.f32 %v681, %v685
      %v687 = vmul.f32 %v682, %v685
      %v688 = vmul.f32 %v683, %v685
      %v689 = vmul.f32 %v684, %v685
      %v690 = vadd.f32 %v637, %v686
      %v691 = vadd.f32 %v638, %v687
      %v692 = vadd.f32 %v639, %v688
      %v693 = vadd.f32 %v640, %v689
      %v694 = vld [vmem:[%s654 + $0x3] sm:$0xf]
      %v695 = vld [vmem:[%s654 + $0x13] sm:$0xf]
      %v696 = vld [vmem:[%s654 + $0x23] sm:$0xf]
      %v697 = vld [vmem:[%s654 + $0x33] sm:$0xf]
      %v698 = vperm.slane %v209, 6
      %v699 = vmul.f32 %v694, %v698
      %v700 = vmul.f32 %v695, %v698
      %v701 = vmul.f32 %v696, %v698
      %v702 = vmul.f32 %v697, %v698
      %v703 = vadd.f32 %v650, %v699
      %v704 = vadd.f32 %v651, %v700
      %v705 = vadd.f32 %v652, %v701
      %v706 = vadd.f32 %v653, %v702
      %v707 = vld [vmem:[%s654 + $0x4] sm:$0xf]
      %v708 = vld [vmem:[%s654 + $0x14] sm:$0xf]
      %v709 = vld [vmem:[%s654 + $0x24] sm:$0xf]
      %v710 = vld [vmem:[%s654 + $0x34] sm:$0xf]
      %v711 = vperm.slane %v209, 7
      %v712 = vmul.f32 %v707, %v711
      %v713 = vmul.f32 %v708, %v711
      %v714 = vmul.f32 %v709, %v711
      %v715 = vmul.f32 %v710, %v711
      %v716 = vadd.f32 %v664, %v712
      %v717 = vadd.f32 %v665, %v713
      %v718 = vadd.f32 %v666, %v714
      %v719 = vadd.f32 %v667, %v715
      %v720 = vld [vmem:[%s654 + $0x5] sm:$0xf]
      %v721 = vld [vmem:[%s654 + $0x15] sm:$0xf]
      %v722 = vld [vmem:[%s654 + $0x25] sm:$0xf]
      %v723 = vld [vmem:[%s654 + $0x35] sm:$0xf]
      %v724 = vperm.slane %v210, 0
      %v725 = vmul.f32 %v720, %v724
      %v726 = vmul.f32 %v721, %v724
      %v727 = vmul.f32 %v722, %v724
      %v728 = vmul.f32 %v723, %v724
      %v729 = vadd.f32 %v677, %v725
      %v730 = vadd.f32 %v678, %v726
      %v731 = vadd.f32 %v679, %v727
      %v732 = vadd.f32 %v680, %v728
      %v733 = vld [vmem:[%s654 + $0x6] sm:$0xf]
      %v734 = vld [vmem:[%s654 + $0x16] sm:$0xf]
      %v735 = vld [vmem:[%s654 + $0x26] sm:$0xf]
      %v736 = vld [vmem:[%s654 + $0x36] sm:$0xf]
      %v737 = vperm.slane %v210, 1
      %v738 = vmul.f32 %v733, %v737
      %v739 = vmul.f32 %v734, %v737
      %v740 = vmul.f32 %v735, %v737
      %v741 = vmul.f32 %v736, %v737
      %v742 = vadd.f32 %v690, %v738
      %v743 = vadd.f32 %v691, %v739
      %v744 = vadd.f32 %v692, %v740
      %v745 = vadd.f32 %v693, %v741
      %s746 = scalar_lea.vmem [#allocation2], 96
      %v747 = vld [vmem:[%s746] sm:$0xf]
      %v748 = vld [vmem:[%s746 + $0x10] sm:$0xf]
      %v749 = vld [vmem:[%s746 + $0x20] sm:$0xf]
      %v750 = vld [vmem:[%s746 + $0x30] sm:$0xf]
      %v751 = vperm.slane %v210, 2
      %v752 = vmul.f32 %v747, %v751
      %v753 = vmul.f32 %v748, %v751
      %v754 = vmul.f32 %v749, %v751
      %v755 = vmul.f32 %v750, %v751
      %v756 = vadd.f32 %v703, %v752
      %v757 = vadd.f32 %v704, %v753
      %v758 = vadd.f32 %v705, %v754
      %v759 = vadd.f32 %v706, %v755
      %v760 = vld [vmem:[%s746 + $0x1] sm:$0xf]
      %v761 = vld [vmem:[%s746 + $0x11] sm:$0xf]
      %v762 = vld [vmem:[%s746 + $0x21] sm:$0xf]
      %v763 = vld [vmem:[%s746 + $0x31] sm:$0xf]
      %v764 = vperm.slane %v210, 3
      %v765 = vmul.f32 %v760, %v764
      %v766 = vmul.f32 %v761, %v764
      %v767 = vmul.f32 %v762, %v764
      %v768 = vmul.f32 %v763, %v764
      %v769 = vadd.f32 %v716, %v765
      %v770 = vadd.f32 %v717, %v766
      %v771 = vadd.f32 %v718, %v767
      %v772 = vadd.f32 %v719, %v768
      %v773 = vld [vmem:[%s746 + $0x2] sm:$0xf]
      %v774 = vld [vmem:[%s746 + $0x12] sm:$0xf]
      %v775 = vld [vmem:[%s746 + $0x22] sm:$0xf]
      %v776 = vld [vmem:[%s746 + $0x32] sm:$0xf]
      %v777 = vperm.slane %v210, 4
      %v778 = vmul.f32 %v773, %v777
      %v779 = vmul.f32 %v774, %v777
      %v780 = vmul.f32 %v775, %v777
      %v781 = vmul.f32 %v776, %v777
      %v782 = vadd.f32 %v729, %v778
      %v783 = vadd.f32 %v730, %v779
      %v784 = vadd.f32 %v731, %v780
      %v785 = vadd.f32 %v732, %v781
      %v786 = vld [vmem:[%s746 + $0x3] sm:$0xf]
      %v787 = vld [vmem:[%s746 + $0x13] sm:$0xf]
      %v788 = vld [vmem:[%s746 + $0x23] sm:$0xf]
      %v789 = vld [vmem:[%s746 + $0x33] sm:$0xf]
      %v790 = vperm.slane %v210, 5
      %v791 = vmul.f32 %v786, %v790
      %v792 = vmul.f32 %v787, %v790
      %v793 = vmul.f32 %v788, %v790
      %v794 = vmul.f32 %v789, %v790
      %v795 = vadd.f32 %v742, %v791
      %v796 = vadd.f32 %v743, %v792
      %v797 = vadd.f32 %v744, %v793
      %v798 = vadd.f32 %v745, %v794
      %v799 = vld [vmem:[%s746 + $0x4] sm:$0xf]
      %v800 = vld [vmem:[%s746 + $0x14] sm:$0xf]
      %v801 = vld [vmem:[%s746 + $0x24] sm:$0xf]
      %v802 = vld [vmem:[%s746 + $0x34] sm:$0xf]
      %v803 = vperm.slane %v210, 6
      %v804 = vmul.f32 %v799, %v803
      %v805 = vmul.f32 %v800, %v803
      %v806 = vmul.f32 %v801, %v803
      %v807 = vmul.f32 %v802, %v803
      %v808 = vadd.f32 %v756, %v804
      %v809 = vadd.f32 %v757, %v805
      %v810 = vadd.f32 %v758, %v806
      %v811 = vadd.f32 %v759, %v807
      %v812 = vld [vmem:[%s746 + $0x5] sm:$0xf]
      %v813 = vld [vmem:[%s746 + $0x15] sm:$0xf]
      %v814 = vld [vmem:[%s746 + $0x25] sm:$0xf]
      %v815 = vld [vmem:[%s746 + $0x35] sm:$0xf]
      %v816 = vperm.slane %v210, 7
      %v817 = vmul.f32 %v812, %v816
      %v818 = vmul.f32 %v813, %v816
      %v819 = vmul.f32 %v814, %v816
      %v820 = vmul.f32 %v815, %v816
      %v821 = vadd.f32 %v769, %v817
      %v822 = vadd.f32 %v770, %v818
      %v823 = vadd.f32 %v771, %v819
      %v824 = vadd.f32 %v772, %v820
      %v825 = vld [vmem:[%s746 + $0x6] sm:$0xf]
      %v826 = vld [vmem:[%s746 + $0x16] sm:$0xf]
      %v827 = vld [vmem:[%s746 + $0x26] sm:$0xf]
      %v828 = vld [vmem:[%s746 + $0x36] sm:$0xf]
      %v829 = vperm.slane %v211, 0
      %v830 = vmul.f32 %v825, %v829
      %v831 = vmul.f32 %v826, %v829
      %v832 = vmul.f32 %v827, %v829
      %v833 = vmul.f32 %v828, %v829
      %v834 = vadd.f32 %v782, %v830
      %v835 = vadd.f32 %v783, %v831
      %v836 = vadd.f32 %v784, %v832
      %v837 = vadd.f32 %v785, %v833
      %v838 = vadd.f32 %v834, %v795
      %v839 = vadd.f32 %v835, %v796
      %v840 = vadd.f32 %v836, %v797
      %v841 = vadd.f32 %v837, %v798
      %v842 = vadd.f32 %v808, %v821
      %v843 = vadd.f32 %v809, %v822
      %v844 = vadd.f32 %v810, %v823
      %v845 = vadd.f32 %v811, %v824
      %v846 = vadd.f32 %v838, %v842
      %v847 = vadd.f32 %v839, %v843
      %v848 = vadd.f32 %v840, %v844
      %v849 = vadd.f32 %v841, %v845
      %v850 = vld [vmem:[%s2] sm:$0x1]
      %v852 = vperm.slane %v850, 0
      %v854 = vadd.f32 %v846, %v852
      %v855 = vadd.f32 %v847, %v852
      %v856 = vadd.f32 %v848, %v852
      %v857 = vadd.f32 %v849, %v852
      %v858 = vpack.c.bf16 %v854, %v854
      %v859 = vpack.c.bf16 %v855, %v855
      %v860 = vpack.c.bf16 %v856, %v856
      %v861 = vpack.c.bf16 %v857, %v857
      %862 = vst [vmem:[%s170] sm:$0x3] %v858
      %863 = vst [vmem:[%s170 + $0x2] sm:$0x3] %v859
      %864 = vst [vmem:[%s170 + $0x4] sm:$0x3] %v860
      %865 = vst [vmem:[%s170 + $0x6] sm:$0x3] %v861
      %p866 = scmp.lt.s32.totalorder %s14, 1
      %s867 = scalar_select %p866, %s14, 1
      %s868 = smul.addr %s867, 4
      %s869 = smul.addr %s868, 2
      %s870 = scalar_lea.vmem %s3, %s869
      // Predicated region
      $region33: #{convnextv2_forward.14} parent=31 // pred_check
        %p871 = pneg %p100
      $region34: #{convnextv2_forward.14} parent=31 // pred_check_branch
        %873 = sbr.rel (%p871) target = $region36
      $region35: #{convnextv2_forward.14} parent=31 // pred_region
        _
      $region36: #{convnextv2_forward.14} parent=31 // pred_fallthru
        _
    $region32: #{convnextv2_forward.14} parent=5 // pred_fallthru
      _
    %p874 = scmp.le.s32.totalorder 2, %s9
    // Predicated region
    $region37: #{convnextv2_forward.14} parent=5 // pred_check
      %p875 = pneg %p874
    $region38: #{convnextv2_forward.14} parent=5 // pred_check_branch
      %877 = sbr.rel (%p875) target = $region40
    $region39: #{convnextv2_forward.14} parent=5 // pred_region
      %s878 = ssub.s32 %s9, 2
      // Predicated region
      $region41: #{convnextv2_forward.14} parent=39 // pred_check
        %p879 = pneg %p106
      $region42: #{convnextv2_forward.14} parent=39 // pred_check_branch
        %881 = sbr.rel (%p879) target = $region44
      $region43: #{convnextv2_forward.14} parent=39 // pred_region
        %p882 = scmp.lt.s32.totalorder %s15, 1
        %s883 = scalar_select %p882, %s15, 1
        %s884 = smul.addr %s883, 4
        %s885 = smul.addr %s884, 2
        %s886 = scalar_lea.vmem %s3, %s885
      $region44: #{convnextv2_forward.14} parent=39 // pred_fallthru
        _
    $region40: #{convnextv2_forward.14} parent=5 // pred_fallthru
      _
  $region6: #{convnextv2_forward.14} parent=0 // loop_footer
    %s13 = sadd.s32 1, %s9
  $region7: #{convnextv2_forward.14} parent=0 // loop_footer_branch
    %8 = sbr.rel target = $region3
  $region8: #{convnextv2_forward.14} parent=0 // loop_exit
    _

// kernel: convnextv2_forward.19
$region0: #{convnextv2_forward.19}
  #allocation0 [shape = 'u32[]', space=smem, size = 0x4, offset = 0x4, fixed_abs, tag = 'smem constant byte address 0x4 - core index']
  #allocation1 [shape = 'u32[72,128]{1,0:T(1,128)}', space=vmem, size = 0x9000, scoped, tag = 'internal scratch']
  %s0 = inlined_call_operand.vmem [shape: bf16[8,512], index: 0, kind: input, shape index: {}]
  %s1 = inlined_call_operand.vmem [shape: bf16[512,128], index: 1, kind: input, shape index: {}]
  %s2 = inlined_call_operand.hbm [shape: f32[1,128], index: 2, kind: input, shape index: {}]
  %s3 = inlined_call_operand.vmem [shape: bf16[8,128], index: 3, kind: output, shape index: {}]
  %s4 = sld [smem:[#allocation0]]
  $region26: #{convnextv2_forward.19} parent=0
    _
  %s6 = ssub.s32 1, %s4
  %s7 = scalar_select 0, %s6, %s4
  $region1: #{convnextv2_forward.19} parent=0
    #allocation2 [shape = 'u8[512]{0}', space=vmem, size = 0x400, scoped, tag = 'input window, operand 2, single buffered']
    #allocation3 [shape = 's32[1]{0}', space=sflag, size = 0x4, scoped, tag = 'scoped memory for convnextv2_forward.19']
    %8 = vsyncpa [#allocation3], 0
    // Predicated region
    $region2: #{convnextv2_forward.19} parent=1 // pred_check
      _
    $region3: #{convnextv2_forward.19} parent=1 // pred_check_branch
      %10 = sbr.rel (0) target = $region5
    $region4: #{convnextv2_forward.19} parent=1 // pred_region
      _
    $region5: #{convnextv2_forward.19} parent=1 // pred_fallthru
      _
    // Predicated region
    $region6: #{convnextv2_forward.19} parent=1 // pred_check
      _
    $region7: #{convnextv2_forward.19} parent=1 // pred_check_branch
      %12 = sbr.rel (0) target = $region9
    $region8: #{convnextv2_forward.19} parent=1 // pred_region
      _
    $region9: #{convnextv2_forward.19} parent=1 // pred_fallthru
      _
    // Predicated region
    $region10: #{convnextv2_forward.19} parent=1 // pred_check
      _
    $region11: #{convnextv2_forward.19} parent=1 // pred_check_branch
      %14 = sbr.rel (0) target = $region13
    $region12: #{convnextv2_forward.19} parent=1 // pred_region
      %16 = vsyncadd [#allocation3], 0
      %s18 = sshll.u32 %s2, 4
      %s19 = int_to_ptr.hbm [resolvable:$true] %s18
      %s20 = sshll.u32 [#allocation2], 4
      %s21 = int_to_ptr.vmem [resolvable:$true] %s20
      %23 = dma.hbm_to_vmem [thread:$0]  %s19, 16, %s21, [#allocation3]
    $region13: #{convnextv2_forward.19} parent=1 // pred_fallthru
      _
    // Predicated region
    $region14: #{convnextv2_forward.19} parent=1 // pred_check
      _
    $region15: #{convnextv2_forward.19} parent=1 // pred_check_branch
      %25 = sbr.rel (0) target = $region17
    $region16: #{convnextv2_forward.19} parent=1 // pred_region
      %27 = dma.done [#allocation3], 16
    $region17: #{convnextv2_forward.19} parent=1 // pred_fallthru
      _
    %v28 = vld [vmem:[%s0] sm:$0xff]
    %v29 = vld [vmem:[%s0 + $0x8] sm:$0xff]
    %v30 = vld [vmem:[%s1] sm:$0xf]
    %v31 = vld [vmem:[%s1 + $0x4] sm:$0xf]
    %v32 = vld [vmem:[%s1 + $0x8] sm:$0xf]
    %v33 = vld [vmem:[%s1 + $0xc] sm:$0xf]
    %v34 = vld [vmem:[%s1 + $0x10] sm:$0xf]
    %v35 = vld [vmem:[%s1 + $0x14] sm:$0xf]
    %v36 = vld [vmem:[%s1 + $0x18] sm:$0xf]
    %v37 = vld [vmem:[%s1 + $0x1c] sm:$0xf]
    %v38 = vld [vmem:[%s1 + $0x20] sm:$0xf]
    %v39 = vld [vmem:[%s1 + $0x24] sm:$0xf]
    %v40 = vld [vmem:[%s1 + $0x28] sm:$0xf]
    %v41 = vld [vmem:[%s1 + $0x2c] sm:$0xf]
    %v42 = vld [vmem:[%s1 + $0x30] sm:$0xf]
    %v43 = vld [vmem:[%s1 + $0x34] sm:$0xf]
    %v44 = vld [vmem:[%s1 + $0x38] sm:$0xf]
    %v45 = vld [vmem:[%s1 + $0x3c] sm:$0xf]
    %v46 = vld [vmem:[%s1 + $0x40] sm:$0xf]
    %v47 = vld [vmem:[%s1 + $0x44] sm:$0xf]
    %v48 = vld [vmem:[%s1 + $0x48] sm:$0xf]
    %v49 = vld [vmem:[%s1 + $0x4c] sm:$0xf]
    %v50 = vld [vmem:[%s1 + $0x50] sm:$0xf]
    %v51 = vld [vmem:[%s1 + $0x54] sm:$0xf]
    %v52 = vld [vmem:[%s1 + $0x58] sm:$0xf]
    %v53 = vld [vmem:[%s1 + $0x5c] sm:$0xf]
    %v54 = vld [vmem:[%s1 + $0x60] sm:$0xf]
    %v55 = vld [vmem:[%s1 + $0x64] sm:$0xf]
    %v56 = vld [vmem:[%s1 + $0x68] sm:$0xf]
    %v57 = vld [vmem:[%s1 + $0x6c] sm:$0xf]
    %v58 = vld [vmem:[%s1 + $0x70] sm:$0xf]
    %v59 = vld [vmem:[%s1 + $0x74] sm:$0xf]
    %v60 = vld [vmem:[%s1 + $0x78] sm:$0xf]
    %v61 = vld [vmem:[%s1 + $0x7c] sm:$0xf]
    %v62 = vld [vmem:[%s1 + $0x80] sm:$0xf]
    %v63 = vld [vmem:[%s1 + $0x84] sm:$0xf]
    %v64 = vld [vmem:[%s1 + $0x88] sm:$0xf]
    %v65 = vld [vmem:[%s1 + $0x8c] sm:$0xf]
    %v66 = vld [vmem:[%s1 + $0x90] sm:$0xf]
    %v67 = vld [vmem:[%s1 + $0x94] sm:$0xf]
    %v68 = vld [vmem:[%s1 + $0x98] sm:$0xf]
    %v69 = vld [vmem:[%s1 + $0x9c] sm:$0xf]
    %v70 = vld [vmem:[%s1 + $0xa0] sm:$0xf]
    %v71 = vld [vmem:[%s1 + $0xa4] sm:$0xf]
    %v72 = vld [vmem:[%s1 + $0xa8] sm:$0xf]
    %v73 = vld [vmem:[%s1 + $0xac] sm:$0xf]
    %v74 = vld [vmem:[%s1 + $0xb0] sm:$0xf]
    %v75 = vld [vmem:[%s1 + $0xb4] sm:$0xf]
    %v76 = vld [vmem:[%s1 + $0xb8] sm:$0xf]
    %v77 = vld [vmem:[%s1 + $0xbc] sm:$0xf]
    %v78 = vld [vmem:[%s1 + $0xc0] sm:$0xf]
    %v79 = vld [vmem:[%s1 + $0xc4] sm:$0xf]
    %v80 = vld [vmem:[%s1 + $0xc8] sm:$0xf]
    %v81 = vld [vmem:[%s1 + $0xcc] sm:$0xf]
    %v82 = vld [vmem:[%s1 + $0xd0] sm:$0xf]
    %v83 = vld [vmem:[%s1 + $0xd4] sm:$0xf]
    %v84 = vld [vmem:[%s1 + $0xd8] sm:$0xf]
    %v85 = vld [vmem:[%s1 + $0xdc] sm:$0xf]
    %v86 = vld [vmem:[%s1 + $0xe0] sm:$0xf]
    %v87 = vld [vmem:[%s1 + $0xe4] sm:$0xf]
    %v88 = vld [vmem:[%s1 + $0xe8] sm:$0xf]
    %v89 = vld [vmem:[%s1 + $0xec] sm:$0xf]
    %v90 = vld [vmem:[%s1 + $0xf0] sm:$0xf]
    %v91 = vld [vmem:[%s1 + $0xf4] sm:$0xf]
    %v92 = vld [vmem:[%s1 + $0xf8] sm:$0xf]
    %v93 = vld [vmem:[%s1 + $0xfc] sm:$0xf]
    %v94 = vld [vmem:[#allocation2] sm:$0x1]
    %v96 = vperm.slane %v94, 0
    %v100 = vunpack.c.l.b16 %v28
    %v101 = vunpack.c.h.b16 %v28
    %v102 = vunpack.c.l.b16 %v29
    %v103 = vunpack.c.h.b16 %v29
    %v104 = vpack.c.b16 %v100, %v100
    %v105 = vpack.c.b16 %v101, %v101
    %v106 = vpack.c.b16 %v102, %v102
    %v107 = vpack.c.b16 %v103, %v103
    %v176 = vunpack.c.l.b16 %v30
    %v177 = vunpack.c.l.b16 %v31
    %v178 = vunpack.c.l.b16 %v32
    %v179 = vunpack.c.l.b16 %v33
    %v180 = vunpack.c.l.b16 %v34
    %v181 = vunpack.c.l.b16 %v35
    %v182 = vunpack.c.l.b16 %v36
    %v183 = vunpack.c.l.b16 %v37
    %v184 = vunpack.c.l.b16 %v38
    %v185 = vunpack.c.l.b16 %v39
    %v186 = vunpack.c.l.b16 %v40
    %v187 = vunpack.c.l.b16 %v41
    %v188 = vunpack.c.l.b16 %v42
    %v189 = vunpack.c.l.b16 %v43
    %v190 = vunpack.c.l.b16 %v44
    %v191 = vunpack.c.l.b16 %v45
    %v192 = vunpack.c.l.b16 %v46
    %v193 = vunpack.c.l.b16 %v47
    %v194 = vunpack.c.l.b16 %v48
    %v195 = vunpack.c.l.b16 %v49
    %v196 = vunpack.c.l.b16 %v50
    %v197 = vunpack.c.l.b16 %v51
    %v198 = vunpack.c.l.b16 %v52
    %v199 = vunpack.c.l.b16 %v53
    %v200 = vunpack.c.l.b16 %v54
    %v201 = vunpack.c.l.b16 %v55
    %v202 = vunpack.c.l.b16 %v56
    %v203 = vunpack.c.l.b16 %v57
    %v204 = vunpack.c.l.b16 %v58
    %v205 = vunpack.c.l.b16 %v59
    %v206 = vunpack.c.l.b16 %v60
    %v207 = vunpack.c.l.b16 %v61
    %v208 = vunpack.c.l.b16 %v62
    %v209 = vunpack.c.l.b16 %v63
    %v210 = vunpack.c.l.b16 %v64
    %v211 = vunpack.c.l.b16 %v65
    %v212 = vunpack.c.l.b16 %v66
    %v213 = vunpack.c.l.b16 %v67
    %v214 = vunpack.c.l.b16 %v68
    %v215 = vunpack.c.l.b16 %v69
    %v216 = vunpack.c.l.b16 %v70
    %v217 = vunpack.c.l.b16 %v71
    %v218 = vunpack.c.l.b16 %v72
    %v219 = vunpack.c.l.b16 %v73
    %v220 = vunpack.c.l.b16 %v74
    %v221 = vunpack.c.l.b16 %v75
    %v222 = vunpack.c.l.b16 %v76
    %v223 = vunpack.c.l.b16 %v77
    %v224 = vunpack.c.l.b16 %v78
    %v225 = vunpack.c.l.b16 %v79
    %v226 = vunpack.c.l.b16 %v80
    %v227 = vunpack.c.l.b16 %v81
    %v228 = vunpack.c.l.b16 %v82
    %v229 = vunpack.c.l.b16 %v83
    %v230 = vunpack.c.l.b16 %v84
    %v231 = vunpack.c.l.b16 %v85
    %v232 = vunpack.c.l.b16 %v86
    %v233 = vunpack.c.l.b16 %v87
    %v234 = vunpack.c.l.b16 %v88
    %v235 = vunpack.c.l.b16 %v89
    %v236 = vunpack.c.l.b16 %v90
    %v237 = vunpack.c.l.b16 %v91
    %v238 = vunpack.c.l.b16 %v92
    %v239 = vunpack.c.l.b16 %v93
    %v240 = vpack.c.b16 %v177, %v176
    %v241 = vpack.c.b16 %v179, %v178
    %v242 = vpack.c.b16 %v181, %v180
    %v243 = vpack.c.b16 %v183, %v182
    %v244 = vpack.c.b16 %v185, %v184
    %v245 = vpack.c.b16 %v187, %v186
    %v246 = vpack.c.b16 %v189, %v188
    %v247 = vpack.c.b16 %v191, %v190
    %v248 = vpack.c.b16 %v193, %v192
    %v249 = vpack.c.b16 %v195, %v194
    %v250 = vpack.c.b16 %v197, %v196
    %v251 = vpack.c.b16 %v199, %v198
    %v252 = vpack.c.b16 %v201, %v200
    %v253 = vpack.c.b16 %v203, %v202
    %v254 = vpack.c.b16 %v205, %v204
    %v255 = vpack.c.b16 %v207, %v206
    %v256 = vpack.c.b16 %v209, %v208
    %v257 = vpack.c.b16 %v211, %v210
    %v258 = vpack.c.b16 %v213, %v212
    %v259 = vpack.c.b16 %v215, %v214
    %v260 = vpack.c.b16 %v217, %v216
    %v261 = vpack.c.b16 %v219, %v218
    %v262 = vpack.c.b16 %v221, %v220
    %v263 = vpack.c.b16 %v223, %v222
    %v264 = vpack.c.b16 %v225, %v224
    %v265 = vpack.c.b16 %v227, %v226
    %v266 = vpack.c.b16 %v229, %v228
    %v267 = vpack.c.b16 %v231, %v230
    %v268 = vpack.c.b16 %v233, %v232
    %v269 = vpack.c.b16 %v235, %v234
    %v270 = vpack.c.b16 %v237, %v236
    %v271 = vpack.c.b16 %v239, %v238
    %304 = vmatpush.bf16.msra.mxu0 %v247
    %305 = vmatpush.bf16.msra.mxu0 %v246
    %306 = vmatpush.bf16.msra.mxu0 %v245
    %307 = vmatpush.bf16.msra.mxu0 %v244
    %308 = vmatpush.bf16.msra.mxu0 %v243
    %309 = vmatpush.bf16.msra.mxu0 %v242
    %310 = vmatpush.bf16.msra.mxu0 %v241
    %311 = vmatpush.bf16.msra.mxu0 %v240
    %312 = vmatmul.bf16.gmra.mxu0 %v104
    %v313 = vpop.f32.mrf.mxu0
    %v314 = vadd.f32 %v96, %v313
    %v315 = vpop.f32.mrf.mxu0
    %316 = vdwg.mxu0
    %317 = vmatpush.bf16.msra.mxu0 %v255
    %318 = vmatpush.bf16.msra.mxu0 %v254
    %319 = vmatpush.bf16.msra.mxu0 %v253
    %320 = vmatpush.bf16.msra.mxu0 %v252
    %321 = vmatpush.bf16.msra.mxu0 %v251
    %322 = vmatpush.bf16.msra.mxu0 %v250
    %323 = vmatpush.bf16.msra.mxu0 %v249
    %324 = vmatpush.bf16.msra.mxu0 %v248
    %325 = vmatmul.bf16.gmra.mxu0 %v105
    %v326 = vpop.f32.mrf.mxu0
    %v327 = vadd.f32 %v314, %v326
    %v328 = vpop.f32.mrf.mxu0
    %329 = vdwg.mxu0
    %330 = vmatpush.bf16.msra.mxu0 %v263
    %331 = vmatpush.bf16.msra.mxu0 %v262
    %332 = vmatpush.bf16.msra.mxu0 %v261
    %333 = vmatpush.bf16.msra.mxu0 %v260
    %334 = vmatpush.bf16.msra.mxu0 %v259
    %335 = vmatpush.bf16.msra.mxu0 %v258
    %336 = vmatpush.bf16.msra.mxu0 %v257
    %337 = vmatpush.bf16.msra.mxu0 %v256
    %338 = vmatmul.bf16.gmra.mxu0 %v106
    %v339 = vpop.f32.mrf.mxu0
    %v340 = vadd.f32 %v327, %v339
    %v341 = vpop.f32.mrf.mxu0
    %342 = vdwg.mxu0
    %343 = vmatpush.bf16.msra.mxu0 %v271
    %344 = vmatpush.bf16.msra.mxu0 %v270
    %345 = vmatpush.bf16.msra.mxu0 %v269
    %346 = vmatpush.bf16.msra.mxu0 %v268
    %347 = vmatpush.bf16.msra.mxu0 %v267
    %348 = vmatpush.bf16.msra.mxu0 %v266
    %349 = vmatpush.bf16.msra.mxu0 %v265
    %350 = vmatpush.bf16.msra.mxu0 %v264
    %351 = vmatmul.bf16.gmra.mxu0 %v107
    %v352 = vpop.f32.mrf.mxu0
    %v353 = vadd.f32 %v340, %v352
    %v354 = vpop.f32.mrf.mxu0
    %355 = vdwg.mxu0
    %v356 = vpack.c.bf16 %v353, %v353
    %357 = vst [vmem:[%s3] sm:$0xf] %v356
    // Predicated region
    $region18: #{convnextv2_forward.19} parent=1 // pred_check
      _
    $region19: #{convnextv2_forward.19} parent=1 // pred_check_branch
      %359 = sbr.rel (0) target = $region21
    $region20: #{convnextv2_forward.19} parent=1 // pred_region
      _
    $region21: #{convnextv2_forward.19} parent=1 // pred_fallthru
      _
    // Predicated region
    $region22: #{convnextv2_forward.19} parent=1 // pred_check
      _
    $region23: #{convnextv2_forward.19} parent=1 // pred_check_branch
      %361 = sbr.rel (0) target = $region25
    $region24: #{convnextv2_forward.19} parent=1 // pred_region
      _
    $region25: #{convnextv2_forward.19} parent=1 // pred_fallthru
      _
    %362 = vsyncpa [#allocation3], 1

// kernel: convnextv2_forward.16
$region0: #{convnextv2_forward.16}
  #allocation0 [shape = 'u32[]', space=smem, size = 0x4, offset = 0x4, fixed_abs, tag = 'smem constant byte address 0x4 - core index']
  #allocation1 [shape = 'u32[72,128]{1,0:T(1,128)}', space=vmem, size = 0x9000, scoped, tag = 'internal scratch']
  #allocation2 [shape = 'f32[10,10,128]{2,1,0:T(8,128)}', space=vmem, size = 0x14000, scoped, tag = 'scratch operand']
  %s0 = inlined_call_operand.vmem [shape: bf16[2,4,4,128], index: 0, kind: input, shape index: {}]
  %s1 = inlined_call_operand.hbm [shape: f32[49,128], index: 1, kind: input, shape index: {}]
  %s2 = inlined_call_operand.vmem [shape: f32[1,128], index: 2, kind: input, shape index: {}]
  %s3 = inlined_call_operand.vmem [shape: bf16[2,4,4,128], index: 3, kind: output, shape index: {}]
  %s4 = sld [smem:[#allocation0]]
  $region49: #{convnextv2_forward.16} parent=0
    _
  %s6 = ssub.s32 1, %s4
  %s7 = scalar_select 0, %s6, %s4
  $region1: #{convnextv2_forward.16} parent=0
    #allocation3 [shape = 'u8[28672]{0}', space=vmem, size = 0x7000, scoped, tag = 'input window, operand 1, single buffered']
    #allocation4 [shape = 's32[2]{0}', space=sflag, size = 0x8, scoped, tag = 'scoped memory for convnextv2_forward.16']
    %8 = vsyncpa [#allocation4], 0
    loop: start=0, step=1, limit=4
    $region2: #{convnextv2_forward.16} parent=1 // loop_pre_header
      _
    $region3: #{convnextv2_forward.16} parent=1 // loop_header
      %s10 = sphi 0, %s14
      %p11 = scmp.ge.s32.totalorder %s10, 4
      %s20 = sphi 0, %s22
      %s23 = sphi 0, %s20
      %s24 = sphi 0, %s23
      %s40 = sphi 0, %s24
      %s44 = sphi 0, %s44
      %s46 = sphi 0, %s44
      %s47 = sphi 0, %s46
      %s61 = sphi 0, %s47
      %s65 = sphi 0, %s65
      %s67 = sphi 0, %s65
      %s68 = sphi 0, %s67
      %s82 = sphi 0, %s68
      %s88 = sphi 0, %s90
      %s91 = sphi 0, %s88
      %s92 = sphi 0, %s91
      %s108 = sphi 0, %s92
    $region4: #{convnextv2_forward.16} parent=1 // loop_header_branch
      %13 = sbr.rel (%p11) target = $region8
    $region5: #{convnextv2_forward.16} parent=1 // loop_body
      %s15 = ssub.s32 %s10, 1
      %s16 = ssub.s32 %s10, 2
      %s17 = sadd.s32 %s10, 1
      %s18 = ssub.s32 %s10, %s17
      %p19 = scmp.eq.s32.totalorder %s18, 0
      %s21 = sadd.s32 %s20, 1
      %s22 = scalar_select %p19, %s20, %s21
      %p25 = pneg %p19
      %p26 = scmp.eq.s32.totalorder %s10, 1
      %p27 = por %p25, %p26
      %p28 = scmp.ne.s32.totalorder %s20, %s23
      %p29 = scmp.eq.s32.totalorder %s10, 0
      %p30 = por %p28, %p29
      %p31 = scmp.ne.s32.totalorder %s20, %s23
      %p32 = scmp.eq.s32.totalorder %s15, 1
      %p33 = por %p31, %p32
      %p34 = scmp.ne.s32.totalorder %s23, %s24
      %p35 = scmp.eq.s32.totalorder %s15, 0
      %p36 = por %p34, %p35
      %p37 = scmp.ne.s32.totalorder %s23, %s24
      %p38 = scmp.eq.s32.totalorder %s16, 1
      %p39 = por %p37, %p38
      %p41 = scmp.ne.s32.totalorder %s24, %s40
      %p42 = scmp.eq.s32.totalorder %s16, 0
      %p43 = por %p41, %p42
      %s45 = sadd.s32 %s44, 1
      %p48 = scmp.eq.s32.totalorder %s10, 1
      %p49 = scmp.ne.s32.totalorder %s44, %s46
      %p50 = scmp.eq.s32.totalorder %s10, 0
      %p51 = por %p49, %p50
      %p52 = scmp.ne.s32.totalorder %s44, %s46
      %p53 = scmp.eq.s32.totalorder %s15, 1
      %p54 = por %p52, %p53
      %p55 = scmp.ne.s32.totalorder %s46, %s47
      %p56 = scmp.eq.s32.totalorder %s15, 0
      %p57 = por %p55, %p56
      %p58 = scmp.ne.s32.totalorder %s46, %s47
      %p59 = scmp.eq.s32.totalorder %s16, 1
      %p60 = por %p58, %p59
      %p62 = scmp.ne.s32.totalorder %s47, %s61
      %p63 = scmp.eq.s32.totalorder %s16, 0
      %p64 = por %p62, %p63
      %s66 = sadd.s32 %s65, 1
      %p69 = scmp.eq.s32.totalorder %s10, 1
      %p70 = scmp.ne.s32.totalorder %s65, %s67
      %p71 = scmp.eq.s32.totalorder %s10, 0
      %p72 = por %p70, %p71
      %p73 = scmp.ne.s32.totalorder %s65, %s67
      %p74 = scmp.eq.s32.totalorder %s15, 1
      %p75 = por %p73, %p74
      %p76 = scmp.ne.s32.totalorder %s67, %s68
      %p77 = scmp.eq.s32.totalorder %s15, 0
      %p78 = por %p76, %p77
      %p79 = scmp.ne.s32.totalorder %s67, %s68
      %p80 = scmp.eq.s32.totalorder %s16, 1
      %p81 = por %p79, %p80
      %p83 = scmp.ne.s32.totalorder %s68, %s82
      %p84 = scmp.eq.s32.totalorder %s16, 0
      %p85 = por %p83, %p84
      %s86 = ssub.s32 %s10, %s17
      %p87 = scmp.eq.s32.totalorder %s86, 0
      %s89 = sadd.s32 %s88, 1
      %s90 = scalar_select %p87, %s88, %s89
      %p93 = pneg %p87
      %p94 = scmp.eq.s32.totalorder %s10, 1
      %p95 = por %p93, %p94
      %p96 = scmp.ne.s32.totalorder %s88, %s91
      %p97 = scmp.eq.s32.totalorder %s10, 0
      %p98 = por %p96, %p97
      %p99 = scmp.ne.s32.totalorder %s88, %s91
      %p100 = scmp.eq.s32.totalorder %s15, 1
      %p101 = por %p99, %p100
      %p102 = scmp.ne.s32.totalorder %s91, %s92
      %p103 = scmp.eq.s32.totalorder %s15, 0
      %p104 = por %p102, %p103
      %p105 = scmp.ne.s32.totalorder %s91, %s92
      %p106 = scmp.eq.s32.totalorder %s16, 1
      %p107 = por %p105, %p106
      %p109 = scmp.ne.s32.totalorder %s92, %s108
      %p110 = scmp.eq.s32.totalorder %s16, 0
      %p111 = por %p109, %p110
      %p112 = scmp.le.s32.totalorder 1, %s10
      %p113 = scmp.lt.s32.totalorder %s10, 3
      %p114 = pnand %p112, %p113
      %p115 = pneg %p114
      // Predicated region
      $region9: #{convnextv2_forward.16} parent=5 // pred_check
        _
      $region10: #{convnextv2_forward.16} parent=5 // pred_check_branch
        %117 = sbr.rel (%p114) target = $region12
      $region11: #{convnextv2_forward.16} parent=5 // pred_region
        %s118 = ssub.s32 %s10, 1
        // Predicated region
        $region13: #{convnextv2_forward.16} parent=11 // pred_check
          %p119 = pneg %p57
        $region14: #{convnextv2_forward.16} parent=11 // pred_check_branch
          %121 = sbr.rel (%p119) target = $region16
        $region15: #{convnextv2_forward.16} parent=11 // pred_region
          %123 = vsyncadd [#allocation4], 0
          %s124 = sshll.u32 %s1, 4
          %s125 = int_to_ptr.hbm [resolvable:$true] %s124
          %s126 = sshll.u32 [#allocation3], 4
          %s127 = int_to_ptr.vmem [resolvable:$true] %s126
          %132 = dma.hbm_to_vmem [thread:$0]  %s125, 896, %s127, [#allocation4], 128, 128, 8
        $region16: #{convnextv2_forward.16} parent=11 // pred_fallthru
          _
        // Predicated region
        $region17: #{convnextv2_forward.16} parent=11 // pred_check
          %p133 = pneg %p78
        $region18: #{convnextv2_forward.16} parent=11 // pred_check_branch
          %135 = sbr.rel (%p133) target = $region20
        $region19: #{convnextv2_forward.16} parent=11 // pred_region
          _
        $region20: #{convnextv2_forward.16} parent=11 // pred_fallthru
          _
      $region12: #{convnextv2_forward.16} parent=5 // pred_fallthru
        _
      %p136 = scmp.lt.s32.totalorder %s10, 2
      // Predicated region
      $region21: #{convnextv2_forward.16} parent=5 // pred_check
        %p137 = pneg %p136
      $region22: #{convnextv2_forward.16} parent=5 // pred_check_branch
        %139 = sbr.rel (%p137) target = $region24
      $region23: #{convnextv2_forward.16} parent=5 // pred_region
        // Predicated region
        $region25: #{convnextv2_forward.16} parent=23 // pred_check
          %p140 = pneg %p30
        $region26: #{convnextv2_forward.16} parent=23 // pred_check_branch
          %142 = sbr.rel (%p140) target = $region28
        $region27: #{convnextv2_forward.16} parent=23 // pred_region
          %p143 = scmp.lt.s32.totalorder %s10, 1
          %s144 = scalar_select %p143, %s10, 1
          %s145 = smul.addr %s144, 4
          %s146 = smul.addr %s145, 2
          %s147 = scalar_lea.vmem %s0, %s146
        $region28: #{convnextv2_forward.16} parent=23 // pred_fallthru
          _
      $region24: #{convnextv2_forward.16} parent=5 // pred_fallthru
        _
      %p148 = scmp.le.s32.totalorder 1, %s10
      %p149 = scmp.lt.s32.totalorder %s10, 3
      %p150 = pnand %p148, %p149
      %p151 = pneg %p150
      // Predicated region
      $region29: #{convnextv2_forward.16} parent=5 // pred_check
        _
      $region30: #{convnextv2_forward.16} parent=5 // pred_check_branch
        %153 = sbr.rel (%p150) target = $region32
      $region31: #{convnextv2_forward.16} parent=5 // pred_region
        %s154 = ssub.s32 %s10, 1
        // Predicated region
        $region33: #{convnextv2_forward.16} parent=31 // pred_check
          %p155 = pneg %p57
        $region34: #{convnextv2_forward.16} parent=31 // pred_check_branch
          %157 = sbr.rel (%p155) target = $region36
        $region35: #{convnextv2_forward.16} parent=31 // pred_region
          %159 = dma.done [#allocation4], 896
        $region36: #{convnextv2_forward.16} parent=31 // pred_fallthru
          _
        %p160 = scmp.lt.s32.totalorder %s15, 1
        %s161 = scalar_select %p160, %s15, 1
        %s162 = smul.addr %s161, 4
        %s163 = smul.addr %s162, 2
        %s164 = scalar_lea.vmem %s0, %s163
        %p165 = pneg %p36
        %p166 = pneg %p33
        %p167 = pneg %p57
        %p168 = pneg %p54
        %p169 = pneg %p78
        %p170 = pneg %p75
        %p171 = pneg %p104
        %p172 = pneg %p101
        %p173 = scmp.lt.s32.totalorder %s15, 1
        %s174 = scalar_select %p173, %s15, 1
        %s175 = smul.addr %s174, 4
        %s176 = smul.addr %s175, 2
        %s177 = scalar_lea.vmem %s3, %s176
        %p178 = scmp.lt.s32.totalorder %s15, 1
        %s179 = scalar_select %p178, %s15, 1
        %s180 = smul.addr %s179, 4
        %s181 = smul.addr %s180, 2
        %s182 = scalar_lea.vmem %s0, %s181
        %p183 = scmp.lt.s32.totalorder %s15, 1
        %s184 = scalar_select %p183, %s15, 1
        %s185 = smul.addr %s184, 4
        %s186 = smul.addr %s185, 2
        %s187 = scalar_lea.vmem %s3, %s186
        %188 = vst [vmem:[#allocation2] sm:$0xff] 0.0
        %189 = vst [vmem:[#allocation2 + $0x8] sm:$0x3] 0.0
        %190 = vst [vmem:[#allocation2 + $0x10] sm:$0xff] 0.0
        %191 = vst [vmem:[#allocation2 + $0x18] sm:$0x3] 0.0
        %192 = vst [vmem:[#allocation2 + $0x20] sm:$0xff] 0.0
        %193 = vst [vmem:[#allocation2 + $0x28] sm:$0x3] 0.0
        %s194 = scalar_lea.vmem [#allocation2], 112
        %195 = vst [vmem:[%s194] sm:$0xff] 0.0
        %196 = vst [vmem:[%s194 + $0x8] sm:$0x3] 0.0
        %197 = vst [vmem:[%s194 + $0x10] sm:$0xff] 0.0
        %198 = vst [vmem:[%s194 + $0x18] sm:$0x3] 0.0
        %199 = vst [vmem:[%s194 + $0x20] sm:$0xff] 0.0
        %200 = vst [vmem:[%s194 + $0x28] sm:$0x3] 0.0
        %s201 = scalar_lea.vmem [#allocation2], 48
        %202 = vst [vmem:[%s201] sm:$0x7] 0.0
        %203 = vst [vmem:[%s201 + $0x10] sm:$0x7] 0.0
        %204 = vst [vmem:[%s201 + $0x20] sm:$0x7] 0.0
        %205 = vst [vmem:[%s201 + $0x30] sm:$0x7] 0.0
        %206 = vst [vmem:[%s201 + $0x7] sm:$0x7] 0.0
        %207 = vst [vmem:[%s201 + $0x17] sm:$0x7] 0.0
        %208 = vst [vmem:[%s201 + $0x27] sm:$0x7] 0.0
        %209 = vst [vmem:[%s201 + $0x37] sm:$0x7] 0.0
        %v210 = vld [vmem:[%s182] sm:$0x3]
        %v211 = vld [vmem:[%s182 + $0x2] sm:$0x3]
        %v212 = vld [vmem:[%s182 + $0x4] sm:$0x3]
        %v213 = vld [vmem:[%s182 + $0x6] sm:$0x3]
        %v214 = vunpack.c.l.bf16 %v210
        %v215 = vunpack.c.l.bf16 %v211
        %v216 = vunpack.c.l.bf16 %v212
        %v217 = vunpack.c.l.bf16 %v213
        %218 = vst [vmem:[%s201 + $0x3] sm:$0xf] %v214
        %219 = vst [vmem:[%s201 + $0x13] sm:$0xf] %v215
        %220 = vst [vmem:[%s201 + $0x23] sm:$0xf] %v216
        %221 = vst [vmem:[%s201 + $0x33] sm:$0xf] %v217
        %v222 = vld [vmem:[#allocation3] sm:$0xff]
        %v223 = vld [vmem:[#allocation3 + $0x8] sm:$0xff]
        %v224 = vld [vmem:[#allocation3 + $0x10] sm:$0xff]
        %v225 = vld [vmem:[#allocation3 + $0x18] sm:$0xff]
        %v226 = vld [vmem:[#allocation3 + $0x20] sm:$0xff]
        %v227 = vld [vmem:[#allocation3 + $0x28] sm:$0xff]
        %v228 = vld [vmem:[#allocation3 + $0x30] sm:$0x1]
        %v229 = vld [vmem:[#allocation2] sm:$0xf]
        %v230 = vld [vmem:[#allocation2 + $0x10] sm:$0xf]
        %v231 = vld [vmem:[#allocation2 + $0x20] sm:$0xf]
        %v232 = vld [vmem:[#allocation2 + $0x30] sm:$0xf]
        %v233 = vperm.slane %v222, 0
        %v234 = vmul.f32 %v229, %v233
        %v235 = vmul.f32 %v230, %v233
        %v236 = vmul.f32 %v231, %v233
        %v237 = vmul.f32 %v232, %v233
        %v238 = vld [vmem:[#allocation2 + $0x1] sm:$0xf]
        %v239 = vld [vmem:[#allocation2 + $0x11] sm:$0xf]
        %v240 = vld [vmem:[#allocation2 + $0x21] sm:$0xf]
        %v241 = vld [vmem:[#allocation2 + $0x31] sm:$0xf]
        %v242 = vperm.slane %v222, 1
        %v243 = vmul.f32 %v238, %v242
        %v244 = vmul.f32 %v239, %v242
        %v245 = vmul.f32 %v240, %v242
        %v246 = vmul.f32 %v241, %v242
        %v247 = vld [vmem:[#allocation2 + $0x2] sm:$0xf]
        %v248 = vld [vmem:[#allocation2 + $0x12] sm:$0xf]
        %v249 = vld [vmem:[#allocation2 + $0x22] sm:$0xf]
        %v250 = vld [vmem:[#allocation2 + $0x32] sm:$0xf]
        %v251 = vperm.slane %v222, 2
        %v252 = vmul.f32 %v247, %v251
        %v253 = vmul.f32 %v248, %v251
        %v254 = vmul.f32 %v249, %v251
        %v255 = vmul.f32 %v250, %v251
        %v256 = vld [vmem:[#allocation2 + $0x3] sm:$0xf]
        %v257 = vld [vmem:[#allocation2 + $0x13] sm:$0xf]
        %v258 = vld [vmem:[#allocation2 + $0x23] sm:$0xf]
        %v259 = vld [vmem:[#allocation2 + $0x33] sm:$0xf]
        %v260 = vperm.slane %v222, 3
        %v261 = vmul.f32 %v256, %v260
        %v262 = vmul.f32 %v257, %v260
        %v263 = vmul.f32 %v258, %v260
        %v264 = vmul.f32 %v259, %v260
        %v265 = vld [vmem:[#allocation2 + $0x4] sm:$0xf]
        %v266 = vld [vmem:[#allocation2 + $0x14] sm:$0xf]
        %v267 = vld [vmem:[#allocation2 + $0x24] sm:$0xf]
        %v268 = vld [vmem:[#allocation2 + $0x34] sm:$0xf]
        %v269 = vperm.slane %v222, 4
        %v270 = vmul.f32 %v265, %v269
        %v271 = vmul.f32 %v266, %v269
        %v272 = vmul.f32 %v267, %v269
        %v273 = vmul.f32 %v268, %v269
        %v274 = vadd.f32 %v234, %v270
        %v275 = vadd.f32 %v235, %v271
        %v276 = vadd.f32 %v236, %v272
        %v277 = vadd.f32 %v237, %v273
        %v278 = vld [vmem:[#allocation2 + $0x5] sm:$0xf]
        %v279 = vld [vmem:[#allocation2 + $0x15] sm:$0xf]
        %v280 = vld [vmem:[#allocation2 + $0x25] sm:$0xf]
        %v281 = vld [vmem:[#allocation2 + $0x35] sm:$0xf]
        %v282 = vperm.slane %v222, 5
        %v283 = vmul.f32 %v278, %v282
        %v284 = vmul.f32 %v279, %v282
        %v285 = vmul.f32 %v280, %v282
        %v286 = vmul.f32 %v281, %v282
        %v287 = vadd.f32 %v243, %v283
        %v288 = vadd.f32 %v244, %v284
        %v289 = vadd.f32 %v245, %v285
        %v290 = vadd.f32 %v246, %v286
        %v291 = vld [vmem:[#allocation2 + $0x6] sm:$0xf]
        %v292 = vld [vmem:[#allocation2 + $0x16] sm:$0xf]
        %v293 = vld [vmem:[#allocation2 + $0x26] sm:$0xf]
        %v294 = vld [vmem:[#allocation2 + $0x36] sm:$0xf]
        %v295 = vperm.slane %v222, 6
        %v296 = vmul.f32 %v291, %v295
        %v297 = vmul.f32 %v292, %v295
        %v298 = vmul.f32 %v293, %v295
        %v299 = vmul.f32 %v294, %v295
        %v300 = vadd.f32 %v252, %v296
        %v301 = vadd.f32 %v253, %v297
        %v302 = vadd.f32 %v254, %v298
        %v303 = vadd.f32 %v255, %v299
        %s304 = scalar_lea.vmem [#allocation2], 16
        %v305 = vld [vmem:[%s304] sm:$0xf]
        %v306 = vld [vmem:[%s304 + $0x10] sm:$0xf]
        %v307 = vld [vmem:[%s304 + $0x20] sm:$0xf]
        %v308 = vld [vmem:[%s304 + $0x30] sm:$0xf]
        %v309 = vperm.slane %v222, 7
        %v310 = vmul.f32 %v305, %v309
        %v311 = vmul.f32 %v306, %v309
        %v312 = vmul.f32 %v307, %v309
        %v313 = vmul.f32 %v308, %v309
        %v314 = vadd.f32 %v261, %v310
        %v315 = vadd.f32 %v262, %v311
        %v316 = vadd.f32 %v263, %v312
        %v317 = vadd.f32 %v264, %v313
        %v318 = vld [vmem:[%s304 + $0x1] sm:$0xf]
        %v319 = vld [vmem:[%s304 + $0x11] sm:$0xf]
        %v320 = vld [vmem:[%s304 + $0x21] sm:$0xf]
        %v321 = vld [vmem:[%s304 + $0x31] sm:$0xf]
        %v322 = vperm.slane %v223, 0
        %v323 = vmul.f32 %v318, %v322
        %v324 = vmul.f32 %v319, %v322
        %v325 = vmul.f32 %v320, %v322
        %v326 = vmul.f32 %v321, %v322
        %v327 = vadd.f32 %v274, %v323
        %v328 = vadd.f32 %v275, %v324
        %v329 = vadd.f32 %v276, %v325
        %v330 = vadd.f32 %v277, %v326
        %v331 = vld [vmem:[%s304 + $0x2] sm:$0xf]
        %v332 = vld [vmem:[%s304 + $0x12] sm:$0xf]
        %v333 = vld [vmem:[%s304 + $0x22] sm:$0xf]
        %v334 = vld [vmem:[%s304 + $0x32] sm:$0xf]
        %v335 = vperm.slane %v223, 1
        %v336 = vmul.f32 %v331, %v335
        %v337 = vmul.f32 %v332, %v335
        %v338 = vmul.f32 %v333, %v335
        %v339 = vmul.f32 %v334, %v335
        %v340 = vadd.f32 %v287, %v336
        %v341 = vadd.f32 %v288, %v337
        %v342 = vadd.f32 %v289, %v338
        %v343 = vadd.f32 %v290, %v339
        %v344 = vld [vmem:[%s304 + $0x3] sm:$0xf]
        %v345 = vld [vmem:[%s304 + $0x13] sm:$0xf]
        %v346 = vld [vmem:[%s304 + $0x23] sm:$0xf]
        %v347 = vld [vmem:[%s304 + $0x33] sm:$0xf]
        %v348 = vperm.slane %v223, 2
        %v349 = vmul.f32 %v344, %v348
        %v350 = vmul.f32 %v345, %v348
        %v351 = vmul.f32 %v346, %v348
        %v352 = vmul.f32 %v347, %v348
        %v353 = vadd.f32 %v300, %v349
        %v354 = vadd.f32 %v301, %v350
        %v355 = vadd.f32 %v302, %v351
        %v356 = vadd.f32 %v303, %v352
        %v357 = vld [vmem:[%s304 + $0x4] sm:$0xf]
        %v358 = vld [vmem:[%s304 + $0x14] sm:$0xf]
        %v359 = vld [vmem:[%s304 + $0x24] sm:$0xf]
        %v360 = vld [vmem:[%s304 + $0x34] sm:$0xf]
        %v361 = vperm.slane %v223, 3
        %v362 = vmul.f32 %v357, %v361
        %v363 = vmul.f32 %v358, %v361
        %v364 = vmul.f32 %v359, %v361
        %v365 = vmul.f32 %v360, %v361
        %v366 = vadd.f32 %v314, %v362
        %v367 = vadd.f32 %v315, %v363
        %v368 = vadd.f32 %v316, %v364
        %v369 = vadd.f32 %v317, %v365
        %v370 = vld [vmem:[%s304 + $0x5] sm:$0xf]
        %v371 = vld [vmem:[%s304 + $0x15] sm:$0xf]
        %v372 = vld [vmem:[%s304 + $0x25] sm:$0xf]
        %v373 = vld [vmem:[%s304 + $0x35] sm:$0xf]
        %v374 = vperm.slane %v223, 4
        %v375 = vmul.f32 %v370, %v374
        %v376 = vmul.f32 %v371, %v374
        %v377 = vmul.f32 %v372, %v374
        %v378 = vmul.f32 %v373, %v374
        %v379 = vadd.f32 %v327, %v375
        %v380 = vadd.f32 %v328, %v376
        %v381 = vadd.f32 %v329, %v377
        %v382 = vadd.f32 %v330, %v378
        %v383 = vld [vmem:[%s304 + $0x6] sm:$0xf]
        %v384 = vld [vmem:[%s304 + $0x16] sm:$0xf]
        %v385 = vld [vmem:[%s304 + $0x26] sm:$0xf]
        %v386 = vld [vmem:[%s304 + $0x36] sm:$0xf]
        %v387 = vperm.slane %v223, 5
        %v388 = vmul.f32 %v383, %v387
        %v389 = vmul.f32 %v384, %v387
        %v390 = vmul.f32 %v385, %v387
        %v391 = vmul.f32 %v386, %v387
        %v392 = vadd.f32 %v340, %v388
        %v393 = vadd.f32 %v341, %v389
        %v394 = vadd.f32 %v342, %v390
        %v395 = vadd.f32 %v343, %v391
        %s396 = scalar_lea.vmem [#allocation2], 32
        %v397 = vld [vmem:[%s396] sm:$0xf]
        %v398 = vld [vmem:[%s396 + $0x10] sm:$0xf]
        %v399 = vld [vmem:[%s396 + $0x20] sm:$0xf]
        %v400 = vld [vmem:[%s396 + $0x30] sm:$0xf]
        %v401 = vperm.slane %v223, 6
        %v402 = vmul.f32 %v397, %v401
        %v403 = vmul.f32 %v398, %v401
        %v404 = vmul.f32 %v399, %v401
        %v405 = vmul.f32 %v400, %v401
        %v406 = vadd.f32 %v353, %v402
        %v407 = vadd.f32 %v354, %v403
        %v408 = vadd.f32 %v355, %v404
        %v409 = vadd.f32 %v356, %v405
        %v410 = vld [vmem:[%s396 + $0x1] sm:$0xf]
        %v411 = vld [vmem:[%s396 + $0x11] sm:$0xf]
        %v412 = vld [vmem:[%s396 + $0x21] sm:$0xf]
        %v413 = vld [vmem:[%s396 + $0x31] sm:$0xf]
        %v414 = vperm.slane %v223, 7
        %v415 = vmul.f32 %v410, %v414
        %v416 = vmul.f32 %v411, %v414
        %v417 = vmul.f32 %v412, %v414
        %v418 = vmul.f32 %v413, %v414
        %v419 = vadd.f32 %v366, %v415
        %v420 = vadd.f32 %v367, %v416
        %v421 = vadd.f32 %v368, %v417
        %v422 = vadd.f32 %v369, %v418
        %v423 = vld [vmem:[%s396 + $0x2] sm:$0xf]
        %v424 = vld [vmem:[%s396 + $0x12] sm:$0xf]
        %v425 = vld [vmem:[%s396 + $0x22] sm:$0xf]
        %v426 = vld [vmem:[%s396 + $0x32] sm:$0xf]
        %v427 = vperm.slane %v224, 0
        %v428 = vmul.f32 %v423, %v427
        %v429 = vmul.f32 %v424, %v427
        %v430 = vmul.f32 %v425, %v427
        %v431 = vmul.f32 %v426, %v427
        %v432 = vadd.f32 %v379, %v428
        %v433 = vadd.f32 %v380, %v429
        %v434 = vadd.f32 %v381, %v430
        %v435 = vadd.f32 %v382, %v431
        %v436 = vld [vmem:[%s396 + $0x3] sm:$0xf]
        %v437 = vld [vmem:[%s396 + $0x13] sm:$0xf]
        %v438 = vld [vmem:[%s396 + $0x23] sm:$0xf]
        %v439 = vld [vmem:[%s396 + $0x33] sm:$0xf]
        %v440 = vperm.slane %v224, 1
        %v441 = vmul.f32 %v436, %v440
        %v442 = vmul.f32 %v437, %v440
        %v443 = vmul.f32 %v438, %v440
        %v444 = vmul.f32 %v439, %v440
        %v445 = vadd.f32 %v392, %v441
        %v446 = vadd.f32 %v393, %v442
        %v447 = vadd.f32 %v394, %v443
        %v448 = vadd.f32 %v395, %v444
        %v449 = vld [vmem:[%s396 + $0x4] sm:$0xf]
        %v450 = vld [vmem:[%s396 + $0x14] sm:$0xf]
        %v451 = vld [vmem:[%s396 + $0x24] sm:$0xf]
        %v452 = vld [vmem:[%s396 + $0x34] sm:$0xf]
        %v453 = vperm.slane %v224, 2
        %v454 = vmul.f32 %v449, %v453
        %v455 = vmul.f32 %v450, %v453
        %v456 = vmul.f32 %v451, %v453
        %v457 = vmul.f32 %v452, %v453
        %v458 = vadd.f32 %v406, %v454
        %v459 = vadd.f32 %v407, %v455
        %v460 = vadd.f32 %v408, %v456
        %v461 = vadd.f32 %v409, %v457
        %v462 = vld [vmem:[%s396 + $0x5] sm:$0xf]
        %v463 = vld [vmem:[%s396 + $0x15] sm:$0xf]
        %v464 = vld [vmem:[%s396 + $0x25] sm:$0xf]
        %v465 = vld [vmem:[%s396 + $0x35] sm:$0xf]
        %v466 = vperm.slane %v224, 3
        %v467 = vmul.f32 %v462, %v466
        %v468 = vmul.f32 %v463, %v466
        %v469 = vmul.f32 %v464, %v466
        %v470 = vmul.f32 %v465, %v466
        %v471 = vadd.f32 %v419, %v467
        %v472 = vadd.f32 %v420, %v468
        %v473 = vadd.f32 %v421, %v469
        %v474 = vadd.f32 %v422, %v470
        %v475 = vld [vmem:[%s396 + $0x6] sm:$0xf]
        %v476 = vld [vmem:[%s396 + $0x16] sm:$0xf]
        %v477 = vld [vmem:[%s396 + $0x26] sm:$0xf]
        %v478 = vld [vmem:[%s396 + $0x36] sm:$0xf]
        %v479 = vperm.slane %v224, 4
        %v480 = vmul.f32 %v475, %v479
        %v481 = vmul.f32 %v476, %v479
        %v482 = vmul.f32 %v477, %v479
        %v483 = vmul.f32 %v478, %v479
        %v484 = vadd.f32 %v432, %v480
        %v485 = vadd.f32 %v433, %v481
        %v486 = vadd.f32 %v434, %v482
        %v487 = vadd.f32 %v435, %v483
        %v488 = vld [vmem:[%s201] sm:$0xf]
        %v489 = vld [vmem:[%s201 + $0x10] sm:$0xf]
        %v490 = vld [vmem:[%s201 + $0x20] sm:$0xf]
        %v491 = vld [vmem:[%s201 + $0x30] sm:$0xf]
        %v492 = vperm.slane %v224, 5
        %v493 = vmul.f32 %v488, %v492
        %v494 = vmul.f32 %v489, %v492
        %v495 = vmul.f32 %v490, %v492
        %v496 = vmul.f32 %v491, %v492
        %v497 = vadd.f32 %v445, %v493
        %v498 = vadd.f32 %v446, %v494
        %v499 = vadd.f32 %v447, %v495
        %v500 = vadd.f32 %v448, %v496
        %v501 = vld [vmem:[%s201 + $0x1] sm:$0xf]
        %v502 = vld [vmem:[%s201 + $0x11] sm:$0xf]
        %v503 = vld [vmem:[%s201 + $0x21] sm:$0xf]
        %v504 = vld [vmem:[%s201 + $0x31] sm:$0xf]
        %v505 = vperm.slane %v224, 6
        %v506 = vmul.f32 %v501, %v505
        %v507 = vmul.f32 %v502, %v505
        %v508 = vmul.f32 %v503, %v505
        %v509 = vmul.f32 %v504, %v505
        %v510 = vadd.f32 %v458, %v506
        %v511 = vadd.f32 %v459, %v507
        %v512 = vadd.f32 %v460, %v508
        %v513 = vadd.f32 %v461, %v509
        %v514 = vld [vmem:[%s201 + $0x2] sm:$0xf]
        %v515 = vld [vmem:[%s201 + $0x12] sm:$0xf]
        %v516 = vld [vmem:[%s201 + $0x22] sm:$0xf]
        %v517 = vld [vmem:[%s201 + $0x32] sm:$0xf]
        %v518 = vperm.slane %v224, 7
        %v519 = vmul.f32 %v514, %v518
        %v520 = vmul.f32 %v515, %v518
        %v521 = vmul.f32 %v516, %v518
        %v522 = vmul.f32 %v517, %v518
        %v523 = vadd.f32 %v471, %v519
        %v524 = vadd.f32 %v472, %v520
        %v525 = vadd.f32 %v473, %v521
        %v526 = vadd.f32 %v474, %v522
        %v527 = vld [vmem:[%s201 + $0x3] sm:$0xf]
        %v528 = vld [vmem:[%s201 + $0x13] sm:$0xf]
        %v529 = vld [vmem:[%s201 + $0x23] sm:$0xf]
        %v530 = vld [vmem:[%s201 + $0x33] sm:$0xf]
        %v531 = vperm.slane %v225, 0
        %v532 = vmul.f32 %v527, %v531
        %v533 = vmul.f32 %v528, %v531
        %v534 = vmul.f32 %v529, %v531
        %v535 = vmul.f32 %v530, %v531
        %v536 = vadd.f32 %v484, %v532
        %v537 = vadd.f32 %v485, %v533
        %v538 = vadd.f32 %v486, %v534
        %v539 = vadd.f32 %v487, %v535
        %v540 = vld [vmem:[%s201 + $0x4] sm:$0xf]
        %v541 = vld [vmem:[%s201 + $0x14] sm:$0xf]
        %v542 = vld [vmem:[%s201 + $0x24] sm:$0xf]
        %v543 = vld [vmem:[%s201 + $0x34] sm:$0xf]
        %v544 = vperm.slane %v225, 1
        %v545 = vmul.f32 %v540, %v544
        %v546 = vmul.f32 %v541, %v544
        %v547 = vmul.f32 %v542, %v544
        %v548 = vmul.f32 %v543, %v544
        %v549 = vadd.f32 %v497, %v545
        %v550 = vadd.f32 %v498, %v546
        %v551 = vadd.f32 %v499, %v547
        %v552 = vadd.f32 %v500, %v548
        %v553 = vld [vmem:[%s201 + $0x5] sm:$0xf]
        %v554 = vld [vmem:[%s201 + $0x15] sm:$0xf]
        %v555 = vld [vmem:[%s201 + $0x25] sm:$0xf]
        %v556 = vld [vmem:[%s201 + $0x35] sm:$0xf]
        %v557 = vperm.slane %v225, 2
        %v558 = vmul.f32 %v553, %v557
        %v559 = vmul.f32 %v554, %v557
        %v560 = vmul.f32 %v555, %v557
        %v561 = vmul.f32 %v556, %v557
        %v562 = vadd.f32 %v510, %v558
        %v563 = vadd.f32 %v511, %v559
        %v564 = vadd.f32 %v512, %v560
        %v565 = vadd.f32 %v513, %v561
        %v566 = vld [vmem:[%s201 + $0x6] sm:$0xf]
        %v567 = vld [vmem:[%s201 + $0x16] sm:$0xf]
        %v568 = vld [vmem:[%s201 + $0x26] sm:$0xf]
        %v569 = vld [vmem:[%s201 + $0x36] sm:$0xf]
        %v570 = vperm.slane %v225, 3
        %v571 = vmul.f32 %v566, %v570
        %v572 = vmul.f32 %v567, %v570
        %v573 = vmul.f32 %v568, %v570
        %v574 = vmul.f32 %v569, %v570
        %v575 = vadd.f32 %v523, %v571
        %v576 = vadd.f32 %v524, %v572
        %v577 = vadd.f32 %v525, %v573
        %v578 = vadd.f32 %v526, %v574
        %s579 = scalar_lea.vmem [#allocation2], 64
        %v580 = vld [vmem:[%s579] sm:$0xf]
        %v581 = vld [vmem:[%s579 + $0x10] sm:$0xf]
        %v582 = vld [vmem:[%s579 + $0x20] sm:$0xf]
        %v583 = vld [vmem:[%s579 + $0x30] sm:$0xf]
        %v584 = vperm.slane %v225, 4
        %v585 = vmul.f32 %v580, %v584
        %v586 = vmul.f32 %v581, %v584
        %v587 = vmul.f32 %v582, %v584
        %v588 = vmul.f32 %v583, %v584
        %v589 = vadd.f32 %v536, %v585
        %v590 = vadd.f32 %v537, %v586
        %v591 = vadd.f32 %v538, %v587
        %v592 = vadd.f32 %v539, %v588
        %v593 = vld [vmem:[%s579 + $0x1] sm:$0xf]
        %v594 = vld [vmem:[%s579 + $0x11] sm:$0xf]
        %v595 = vld [vmem:[%s579 + $0x21] sm:$0xf]
        %v596 = vld [vmem:[%s579 + $0x31] sm:$0xf]
        %v597 = vperm.slane %v225, 5
        %v598 = vmul.f32 %v593, %v597
        %v599 = vmul.f32 %v594, %v597
        %v600 = vmul.f32 %v595, %v597
        %v601 = vmul.f32 %v596, %v597
        %v602 = vadd.f32 %v549, %v598
        %v603 = vadd.f32 %v550, %v599
        %v604 = vadd.f32 %v551, %v600
        %v605 = vadd.f32 %v552, %v601
        %v606 = vld [vmem:[%s579 + $0x2] sm:$0xf]
        %v607 = vld [vmem:[%s579 + $0x12] sm:$0xf]
        %v608 = vld [vmem:[%s579 + $0x22] sm:$0xf]
        %v609 = vld [vmem:[%s579 + $0x32] sm:$0xf]
        %v610 = vperm.slane %v225, 6
        %v611 = vmul.f32 %v606, %v610
        %v612 = vmul.f32 %v607, %v610
        %v613 = vmul.f32 %v608, %v610
        %v614 = vmul.f32 %v609, %v610
        %v615 = vadd.f32 %v562, %v611
        %v616 = vadd.f32 %v563, %v612
        %v617 = vadd.f32 %v564, %v613
        %v618 = vadd.f32 %v565, %v614
        %v619 = vld [vmem:[%s579 + $0x3] sm:$0xf]
        %v620 = vld [vmem:[%s579 + $0x13] sm:$0xf]
        %v621 = vld [vmem:[%s579 + $0x23] sm:$0xf]
        %v622 = vld [vmem:[%s579 + $0x33] sm:$0xf]
        %v623 = vperm.slane %v225, 7
        %v624 = vmul.f32 %v619, %v623
        %v625 = vmul.f32 %v620, %v623
        %v626 = vmul.f32 %v621, %v623
        %v627 = vmul.f32 %v622, %v623
        %v628 = vadd.f32 %v575, %v624
        %v629 = vadd.f32 %v576, %v625
        %v630 = vadd.f32 %v577, %v626
        %v631 = vadd.f32 %v578, %v627
        %v632 = vld [vmem:[%s579 + $0x4] sm:$0xf]
        %v633 = vld [vmem:[%s579 + $0x14] sm:$0xf]
        %v634 = vld [vmem:[%s579 + $0x24] sm:$0xf]
        %v635 = vld [vmem:[%s579 + $0x34] sm:$0xf]
        %v636 = vperm.slane %v226, 0
        %v637 = vmul.f32 %v632, %v636
        %v638 = vmul.f32 %v633, %v636
        %v639 = vmul.f32 %v634, %v636
        %v640 = vmul.f32 %v635, %v636
        %v641 = vadd.f32 %v589, %v637
        %v642 = vadd.f32 %v590, %v638
        %v643 = vadd.f32 %v591, %v639
        %v644 = vadd.f32 %v592, %v640
        %v645 = vld [vmem:[%s579 + $0x5] sm:$0xf]
        %v646 = vld [vmem:[%s579 + $0x15] sm:$0xf]
        %v647 = vld [vmem:[%s579 + $0x25] sm:$0xf]
        %v648 = vld [vmem:[%s579 + $0x35] sm:$0xf]
        %v649 = vperm.slane %v226, 1
        %v650 = vmul.f32 %v645, %v649
        %v651 = vmul.f32 %v646, %v649
        %v652 = vmul.f32 %v647, %v649
        %v653 = vmul.f32 %v648, %v649
        %v654 = vadd.f32 %v602, %v650
        %v655 = vadd.f32 %v603, %v651
        %v656 = vadd.f32 %v604, %v652
        %v657 = vadd.f32 %v605, %v653
        %v658 = vld [vmem:[%s579 + $0x6] sm:$0xf]
        %v659 = vld [vmem:[%s579 + $0x16] sm:$0xf]
        %v660 = vld [vmem:[%s579 + $0x26] sm:$0xf]
        %v661 = vld [vmem:[%s579 + $0x36] sm:$0xf]
        %v662 = vperm.slane %v226, 2
        %v663 = vmul.f32 %v658, %v662
        %v664 = vmul.f32 %v659, %v662
        %v665 = vmul.f32 %v660, %v662
        %v666 = vmul.f32 %v661, %v662
        %v667 = vadd.f32 %v615, %v663
        %v668 = vadd.f32 %v616, %v664
        %v669 = vadd.f32 %v617, %v665
        %v670 = vadd.f32 %v618, %v666
        %s671 = scalar_lea.vmem [#allocation2], 80
        %v672 = vld [vmem:[%s671] sm:$0xf]
        %v673 = vld [vmem:[%s671 + $0x10] sm:$0xf]
        %v674 = vld [vmem:[%s671 + $0x20] sm:$0xf]
        %v675 = vld [vmem:[%s671 + $0x30] sm:$0xf]
        %v676 = vperm.slane %v226, 3
        %v677 = vmul.f32 %v672, %v676
        %v678 = vmul.f32 %v673, %v676
        %v679 = vmul.f32 %v674, %v676
        %v680 = vmul.f32 %v675, %v676
        %v681 = vadd.f32 %v628, %v677
        %v682 = vadd.f32 %v629, %v678
        %v683 = vadd.f32 %v630, %v679
        %v684 = vadd.f32 %v631, %v680
        %v685 = vld [vmem:[%s671 + $0x1] sm:$0xf]
        %v686 = vld [vmem:[%s671 + $0x11] sm:$0xf]
        %v687 = vld [vmem:[%s671 + $0x21] sm:$0xf]
        %v688 = vld [vmem:[%s671 + $0x31] sm:$0xf]
        %v689 = vperm.slane %v226, 4
        %v690 = vmul.f32 %v685, %v689
        %v691 = vmul.f32 %v686, %v689
        %v692 = vmul.f32 %v687, %v689
        %v693 = vmul.f32 %v688, %v689
        %v694 = vadd.f32 %v641, %v690
        %v695 = vadd.f32 %v642, %v691
        %v696 = vadd.f32 %v643, %v692
        %v697 = vadd.f32 %v644, %v693
        %v698 = vld [vmem:[%s671 + $0x2] sm:$0xf]
        %v699 = vld [vmem:[%s671 + $0x12] sm:$0xf]
        %v700 = vld [vmem:[%s671 + $0x22] sm:$0xf]
        %v701 = vld [vmem:[%s671 + $0x32] sm:$0xf]
        %v702 = vperm.slane %v226, 5
        %v703 = vmul.f32 %v698, %v702
        %v704 = vmul.f32 %v699, %v702
        %v705 = vmul.f32 %v700, %v702
        %v706 = vmul.f32 %v701, %v702
        %v707 = vadd.f32 %v654, %v703
        %v708 = vadd.f32 %v655, %v704
        %v709 = vadd.f32 %v656, %v705
        %v710 = vadd.f32 %v657, %v706
        %v711 = vld [vmem:[%s671 + $0x3] sm:$0xf]
        %v712 = vld [vmem:[%s671 + $0x13] sm:$0xf]
        %v713 = vld [vmem:[%s671 + $0x23] sm:$0xf]
        %v714 = vld [vmem:[%s671 + $0x33] sm:$0xf]
        %v715 = vperm.slane %v226, 6
        %v716 = vmul.f32 %v711, %v715
        %v717 = vmul.f32 %v712, %v715
        %v718 = vmul.f32 %v713, %v715
        %v719 = vmul.f32 %v714, %v715
        %v720 = vadd.f32 %v667, %v716
        %v721 = vadd.f32 %v668, %v717
        %v722 = vadd.f32 %v669, %v718
        %v723 = vadd.f32 %v670, %v719
        %v724 = vld [vmem:[%s671 + $0x4] sm:$0xf]
        %v725 = vld [vmem:[%s671 + $0x14] sm:$0xf]
        %v726 = vld [vmem:[%s671 + $0x24] sm:$0xf]
        %v727 = vld [vmem:[%s671 + $0x34] sm:$0xf]
        %v728 = vperm.slane %v226, 7
        %v729 = vmul.f32 %v724, %v728
        %v730 = vmul.f32 %v725, %v728
        %v731 = vmul.f32 %v726, %v728
        %v732 = vmul.f32 %v727, %v728
        %v733 = vadd.f32 %v681, %v729
        %v734 = vadd.f32 %v682, %v730
        %v735 = vadd.f32 %v683, %v731
        %v736 = vadd.f32 %v684, %v732
        %v737 = vld [vmem:[%s671 + $0x5] sm:$0xf]
        %v738 = vld [vmem:[%s671 + $0x15] sm:$0xf]
        %v739 = vld [vmem:[%s671 + $0x25] sm:$0xf]
        %v740 = vld [vmem:[%s671 + $0x35] sm:$0xf]
        %v741 = vperm.slane %v227, 0
        %v742 = vmul.f32 %v737, %v741
        %v743 = vmul.f32 %v738, %v741
        %v744 = vmul.f32 %v739, %v741
        %v745 = vmul.f32 %v740, %v741
        %v746 = vadd.f32 %v694, %v742
        %v747 = vadd.f32 %v695, %v743
        %v748 = vadd.f32 %v696, %v744
        %v749 = vadd.f32 %v697, %v745
        %v750 = vld [vmem:[%s671 + $0x6] sm:$0xf]
        %v751 = vld [vmem:[%s671 + $0x16] sm:$0xf]
        %v752 = vld [vmem:[%s671 + $0x26] sm:$0xf]
        %v753 = vld [vmem:[%s671 + $0x36] sm:$0xf]
        %v754 = vperm.slane %v227, 1
        %v755 = vmul.f32 %v750, %v754
        %v756 = vmul.f32 %v751, %v754
        %v757 = vmul.f32 %v752, %v754
        %v758 = vmul.f32 %v753, %v754
        %v759 = vadd.f32 %v707, %v755
        %v760 = vadd.f32 %v708, %v756
        %v761 = vadd.f32 %v709, %v757
        %v762 = vadd.f32 %v710, %v758
        %s763 = scalar_lea.vmem [#allocation2], 96
        %v764 = vld [vmem:[%s763] sm:$0xf]
        %v765 = vld [vmem:[%s763 + $0x10] sm:$0xf]
        %v766 = vld [vmem:[%s763 + $0x20] sm:$0xf]
        %v767 = vld [vmem:[%s763 + $0x30] sm:$0xf]
        %v768 = vperm.slane %v227, 2
        %v769 = vmul.f32 %v764, %v768
        %v770 = vmul.f32 %v765, %v768
        %v771 = vmul.f32 %v766, %v768
        %v772 = vmul.f32 %v767, %v768
        %v773 = vadd.f32 %v720, %v769
        %v774 = vadd.f32 %v721, %v770
        %v775 = vadd.f32 %v722, %v771
        %v776 = vadd.f32 %v723, %v772
        %v777 = vld [vmem:[%s763 + $0x1] sm:$0xf]
        %v778 = vld [vmem:[%s763 + $0x11] sm:$0xf]
        %v779 = vld [vmem:[%s763 + $0x21] sm:$0xf]
        %v780 = vld [vmem:[%s763 + $0x31] sm:$0xf]
        %v781 = vperm.slane %v227, 3
        %v782 = vmul.f32 %v777, %v781
        %v783 = vmul.f32 %v778, %v781
        %v784 = vmul.f32 %v779, %v781
        %v785 = vmul.f32 %v780, %v781
        %v786 = vadd.f32 %v733, %v782
        %v787 = vadd.f32 %v734, %v783
        %v788 = vadd.f32 %v735, %v784
        %v789 = vadd.f32 %v736, %v785
        %v790 = vld [vmem:[%s763 + $0x2] sm:$0xf]
        %v791 = vld [vmem:[%s763 + $0x12] sm:$0xf]
        %v792 = vld [vmem:[%s763 + $0x22] sm:$0xf]
        %v793 = vld [vmem:[%s763 + $0x32] sm:$0xf]
        %v794 = vperm.slane %v227, 4
        %v795 = vmul.f32 %v790, %v794
        %v796 = vmul.f32 %v791, %v794
        %v797 = vmul.f32 %v792, %v794
        %v798 = vmul.f32 %v793, %v794
        %v799 = vadd.f32 %v746, %v795
        %v800 = vadd.f32 %v747, %v796
        %v801 = vadd.f32 %v748, %v797
        %v802 = vadd.f32 %v749, %v798
        %v803 = vld [vmem:[%s763 + $0x3] sm:$0xf]
        %v804 = vld [vmem:[%s763 + $0x13] sm:$0xf]
        %v805 = vld [vmem:[%s763 + $0x23] sm:$0xf]
        %v806 = vld [vmem:[%s763 + $0x33] sm:$0xf]
        %v807 = vperm.slane %v227, 5
        %v808 = vmul.f32 %v803, %v807
        %v809 = vmul.f32 %v804, %v807
        %v810 = vmul.f32 %v805, %v807
        %v811 = vmul.f32 %v806, %v807
        %v812 = vadd.f32 %v759, %v808
        %v813 = vadd.f32 %v760, %v809
        %v814 = vadd.f32 %v761, %v810
        %v815 = vadd.f32 %v762, %v811
        %v816 = vld [vmem:[%s763 + $0x4] sm:$0xf]
        %v817 = vld [vmem:[%s763 + $0x14] sm:$0xf]
        %v818 = vld [vmem:[%s763 + $0x24] sm:$0xf]
        %v819 = vld [vmem:[%s763 + $0x34] sm:$0xf]
        %v820 = vperm.slane %v227, 6
        %v821 = vmul.f32 %v816, %v820
        %v822 = vmul.f32 %v817, %v820
        %v823 = vmul.f32 %v818, %v820
        %v824 = vmul.f32 %v819, %v820
        %v825 = vadd.f32 %v773, %v821
        %v826 = vadd.f32 %v774, %v822
        %v827 = vadd.f32 %v775, %v823
        %v828 = vadd.f32 %v776, %v824
        %v829 = vld [vmem:[%s763 + $0x5] sm:$0xf]
        %v830 = vld [vmem:[%s763 + $0x15] sm:$0xf]
        %v831 = vld [vmem:[%s763 + $0x25] sm:$0xf]
        %v832 = vld [vmem:[%s763 + $0x35] sm:$0xf]
        %v833 = vperm.slane %v227, 7
        %v834 = vmul.f32 %v829, %v833
        %v835 = vmul.f32 %v830, %v833
        %v836 = vmul.f32 %v831, %v833
        %v837 = vmul.f32 %v832, %v833
        %v838 = vadd.f32 %v786, %v834
        %v839 = vadd.f32 %v787, %v835
        %v840 = vadd.f32 %v788, %v836
        %v841 = vadd.f32 %v789, %v837
        %v842 = vld [vmem:[%s763 + $0x6] sm:$0xf]
        %v843 = vld [vmem:[%s763 + $0x16] sm:$0xf]
        %v844 = vld [vmem:[%s763 + $0x26] sm:$0xf]
        %v845 = vld [vmem:[%s763 + $0x36] sm:$0xf]
        %v846 = vperm.slane %v228, 0
        %v847 = vmul.f32 %v842, %v846
        %v848 = vmul.f32 %v843, %v846
        %v849 = vmul.f32 %v844, %v846
        %v850 = vmul.f32 %v845, %v846
        %v851 = vadd.f32 %v799, %v847
        %v852 = vadd.f32 %v800, %v848
        %v853 = vadd.f32 %v801, %v849
        %v854 = vadd.f32 %v802, %v850
        %v855 = vadd.f32 %v851, %v812
        %v856 = vadd.f32 %v852, %v813
        %v857 = vadd.f32 %v853, %v814
        %v858 = vadd.f32 %v854, %v815
        %v859 = vadd.f32 %v825, %v838
        %v860 = vadd.f32 %v826, %v839
        %v861 = vadd.f32 %v827, %v840
        %v862 = vadd.f32 %v828, %v841
        %v863 = vadd.f32 %v855, %v859
        %v864 = vadd.f32 %v856, %v860
        %v865 = vadd.f32 %v857, %v861
        %v866 = vadd.f32 %v858, %v862
        %v867 = vld [vmem:[%s2] sm:$0x1]
        %v869 = vperm.slane %v867, 0
        %v871 = vadd.f32 %v863, %v869
        %v872 = vadd.f32 %v864, %v869
        %v873 = vadd.f32 %v865, %v869
        %v874 = vadd.f32 %v866, %v869
        %v875 = vpack.c.bf16 %v871, %v871
        %v876 = vpack.c.bf16 %v872, %v872
        %v877 = vpack.c.bf16 %v873, %v873
        %v878 = vpack.c.bf16 %v874, %v874
        %879 = vst [vmem:[%s187] sm:$0x3] %v875
        %880 = vst [vmem:[%s187 + $0x2] sm:$0x3] %v876
        %881 = vst [vmem:[%s187 + $0x4] sm:$0x3] %v877
        %882 = vst [vmem:[%s187 + $0x6] sm:$0x3] %v878
        %p883 = scmp.lt.s32.totalorder %s15, 1
        %s884 = scalar_select %p883, %s15, 1
        %s885 = smul.addr %s884, 4
        %s886 = smul.addr %s885, 2
        %s887 = scalar_lea.vmem %s3, %s886
        // Predicated region
        $region37: #{convnextv2_forward.16} parent=31 // pred_check
          %p888 = pneg %p101
        $region38: #{convnextv2_forward.16} parent=31 // pred_check_branch
          %890 = sbr.rel (%p888) target = $region40
        $region39: #{convnextv2_forward.16} parent=31 // pred_region
          _
        $region40: #{convnextv2_forward.16} parent=31 // pred_fallthru
          _
      $region32: #{convnextv2_forward.16} parent=5 // pred_fallthru
        _
      %p891 = scmp.le.s32.totalorder 2, %s10
      // Predicated region
      $region41: #{convnextv2_forward.16} parent=5 // pred_check
        %p892 = pneg %p891
      $region42: #{convnextv2_forward.16} parent=5 // pred_check_branch
        %894 = sbr.rel (%p892) target = $region44
      $region43: #{convnextv2_forward.16} parent=5 // pred_region
        %s895 = ssub.s32 %s10, 2
        // Predicated region
        $region45: #{convnextv2_forward.16} parent=43 // pred_check
          %p896 = pneg %p107
        $region46: #{convnextv2_forward.16} parent=43 // pred_check_branch
          %898 = sbr.rel (%p896) target = $region48
        $region47: #{convnextv2_forward.16} parent=43 // pred_region
          %p899 = scmp.lt.s32.totalorder %s16, 1
          %s900 = scalar_select %p899, %s16, 1
          %s901 = smul.addr %s900, 4
          %s902 = smul.addr %s901, 2
          %s903 = scalar_lea.vmem %s3, %s902
        $region48: #{convnextv2_forward.16} parent=43 // pred_fallthru
          _
      $region44: #{convnextv2_forward.16} parent=5 // pred_fallthru
        _
    $region6: #{convnextv2_forward.16} parent=1 // loop_footer
      %s14 = sadd.s32 1, %s10
    $region7: #{convnextv2_forward.16} parent=1 // loop_footer_branch
      %9 = sbr.rel target = $region3
    $region8: #{convnextv2_forward.16} parent=1 // loop_exit
      _
    %904 = vsyncpa [#allocation4], 1
    %s905 = scalar_lea.sflag [#allocation4], 1
    %906 = vsyncpa %s905, 1

// kernel: convnextv2_forward.21
$region0: #{convnextv2_forward.21}
  #allocation0 [shape = 'u32[]', space=smem, size = 0x4, offset = 0x4, fixed_abs, tag = 'smem constant byte address 0x4 - core index']
  #allocation1 [shape = 'u32[72,128]{1,0:T(1,128)}', space=vmem, size = 0x9000, scoped, tag = 'internal scratch']
  #allocation2 [shape = 'f32[1,256]{1,0:T(1,128)}', space=vmem, size = 0x400, scoped, tag = 'scratch operand']
  #allocation3 [shape = 'bf16[4,256]{1,0:T(4,128)(2,1)}', space=vmem, size = 0x800, scoped, tag = 'scratch operand']
  %s0 = inlined_call_operand.vmem [shape: bf16[2,4,128], index: 0, kind: input, shape index: {}]
  %s1 = inlined_call_operand.vmem [shape: bf16[2,4,128], index: 1, kind: input, shape index: {}]
  %s2 = inlined_call_operand.vmem [shape: f32[1,128], index: 2, kind: input, shape index: {}]
  %s3 = inlined_call_operand.vmem [shape: f32[1,128], index: 3, kind: input, shape index: {}]
  %s4 = inlined_call_operand.vmem [shape: bf16[128,256], index: 4, kind: input, shape index: {}]
  %s5 = inlined_call_operand.vmem [shape: f32[1,256], index: 5, kind: input, shape index: {}]
  %s6 = inlined_call_operand.vmem [shape: f32[1,256], index: 6, kind: input, shape index: {}]
  %s7 = inlined_call_operand.vmem [shape: f32[1,256], index: 7, kind: input, shape index: {}]
  %s8 = inlined_call_operand.vmem [shape: bf16[256,128], index: 8, kind: input, shape index: {}]
  %s9 = inlined_call_operand.vmem [shape: f32[1,128], index: 9, kind: input, shape index: {}]
  %s10 = inlined_call_operand.vmem [shape: bf16[2,4,128], index: 10, kind: output, shape index: {}]
  %s11 = sld [smem:[#allocation0]]
  $region85: #{convnextv2_forward.21} parent=0
    _
  %s13 = ssub.s32 1, %s11
  %s14 = scalar_select 0, %s13, %s11
  loop: start=0, step=1, limit=6
  $region2: #{convnextv2_forward.21} parent=0 // loop_pre_header
    _
  $region3: #{convnextv2_forward.21} parent=0 // loop_header
    %s16 = sphi 0, %s20
    %p17 = scmp.ge.s32.totalorder %s16, 6
    %s23 = sphi 0, %s42
    %s24 = sphi 0, %s38
    %s25 = sphi 0, %s34
    %s26 = sphi 0, %s23
    %s27 = sphi 0, %s24
    %s28 = sphi 0, %s25
    %s29 = sphi 0, %s26
    %s30 = sphi 0, %s27
    %s31 = sphi 0, %s28
    %s47 = sphi 0, %s49
    %s50 = sphi 0, %s47
    %s51 = sphi 0, %s50
    %s67 = sphi 0, %s51
    %s75 = sphi 0, %s77
    %s78 = sphi 0, %s75
    %s79 = sphi 0, %s78
    %s95 = sphi 0, %s79
    %s99 = sphi 0, %s99
    %s101 = sphi 0, %s99
    %s102 = sphi 0, %s101
    %s116 = sphi 0, %s102
    %s120 = sphi 0, %s120
    %s122 = sphi 0, %s120
    %s123 = sphi 0, %s122
    %s137 = sphi 0, %s123
    %s141 = sphi 0, %s141
    %s143 = sphi 0, %s141
    %s144 = sphi 0, %s143
    %s158 = sphi 0, %s144
    %s162 = sphi 0, %s162
    %s164 = sphi 0, %s162
    %s165 = sphi 0, %s164
    %s179 = sphi 0, %s165
    %s183 = sphi 0, %s183
    %s185 = sphi 0, %s183
    %s186 = sphi 0, %s185
    %s200 = sphi 0, %s186
    %s204 = sphi 0, %s204
    %s206 = sphi 0, %s204
    %s207 = sphi 0, %s206
    %s221 = sphi 0, %s207
    %s225 = sphi 0, %s225
    %s227 = sphi 0, %s225
    %s228 = sphi 0, %s227
    %s242 = sphi 0, %s228
    %s246 = sphi 0, %s246
    %s248 = sphi 0, %s246
    %s249 = sphi 0, %s248
    %s263 = sphi 0, %s249
    %s273 = sphi 0, %s275
    %s276 = sphi 0, %s273
    %s277 = sphi 0, %s276
    %s293 = sphi 0, %s277
  $region4: #{convnextv2_forward.21} parent=0 // loop_header_branch
    %19 = sbr.rel (%p17) target = $region8
  $region5: #{convnextv2_forward.21} parent=0 // loop_body
    %s21 = ssub.s32 %s16, 1
    %s22 = ssub.s32 %s16, 2
    %s32 = sadd.s32 1, %s25
    %p33 = scmp.ge.s32.totalorder %s32, 1
    %s34 = scalar_select %p33, 0, %s32
    %s35 = sadd.s32 1, %s24
    %s36 = scalar_select %p33, %s35, %s24
    %p37 = scmp.ge.s32.totalorder %s36, 2
    %s38 = scalar_select %p37, 0, %s36
    %s39 = sadd.s32 1, %s23
    %s40 = scalar_select %p37, %s39, %s23
    %p41 = scmp.ge.s32.totalorder %s40, 2
    %s42 = scalar_select %p41, 0, %s40
    %s43 = ssub.s32 %s23, %s42
    %s44 = ssub.s32 %s25, %s34
    %s45 = sor.u32 %s43, %s44
    %p46 = scmp.eq.s32.totalorder %s45, 0
    %s48 = sadd.s32 %s47, 1
    %s49 = scalar_select %p46, %s47, %s48
    %p52 = pneg %p46
    %p53 = scmp.eq.s32.totalorder %s16, 3
    %p54 = por %p52, %p53
    %p55 = scmp.ne.s32.totalorder %s47, %s50
    %p56 = scmp.eq.s32.totalorder %s16, 0
    %p57 = por %p55, %p56
    %p58 = scmp.ne.s32.totalorder %s47, %s50
    %p59 = scmp.eq.s32.totalorder %s21, 3
    %p60 = por %p58, %p59
    %p61 = scmp.ne.s32.totalorder %s50, %s51
    %p62 = scmp.eq.s32.totalorder %s21, 0
    %p63 = por %p61, %p62
    %p64 = scmp.ne.s32.totalorder %s50, %s51
    %p65 = scmp.eq.s32.totalorder %s22, 3
    %p66 = por %p64, %p65
    %p68 = scmp.ne.s32.totalorder %s51, %s67
    %p69 = scmp.eq.s32.totalorder %s22, 0
    %p70 = por %p68, %p69
    %s71 = ssub.s32 %s23, %s42
    %s72 = ssub.s32 %s25, %s34
    %s73 = sor.u32 %s71, %s72
    %p74 = scmp.eq.s32.totalorder %s73, 0
    %s76 = sadd.s32 %s75, 1
    %s77 = scalar_select %p74, %s75, %s76
    %p80 = pneg %p74
    %p81 = scmp.eq.s32.totalorder %s16, 3
    %p82 = por %p80, %p81
    %p83 = scmp.ne.s32.totalorder %s75, %s78
    %p84 = scmp.eq.s32.totalorder %s16, 0
    %p85 = por %p83, %p84
    %p86 = scmp.ne.s32.totalorder %s75, %s78
    %p87 = scmp.eq.s32.totalorder %s21, 3
    %p88 = por %p86, %p87
    %p89 = scmp.ne.s32.totalorder %s78, %s79
    %p90 = scmp.eq.s32.totalorder %s21, 0
    %p91 = por %p89, %p90
    %p92 = scmp.ne.s32.totalorder %s78, %s79
    %p93 = scmp.eq.s32.totalorder %s22, 3
    %p94 = por %p92, %p93
    %p96 = scmp.ne.s32.totalorder %s79, %s95
    %p97 = scmp.eq.s32.totalorder %s22, 0
    %p98 = por %p96, %p97
    %s100 = sadd.s32 %s99, 1
    %p103 = scmp.eq.s32.totalorder %s16, 3
    %p104 = scmp.ne.s32.totalorder %s99, %s101
    %p105 = scmp.eq.s32.totalorder %s16, 0
    %p106 = por %p104, %p105
    %p107 = scmp.ne.s32.totalorder %s99, %s101
    %p108 = scmp.eq.s32.totalorder %s21, 3
    %p109 = por %p107, %p108
    %p110 = scmp.ne.s32.totalorder %s101, %s102
    %p111 = scmp.eq.s32.totalorder %s21, 0
    %p112 = por %p110, %p111
    %p113 = scmp.ne.s32.totalorder %s101, %s102
    %p114 = scmp.eq.s32.totalorder %s22, 3
    %p115 = por %p113, %p114
    %p117 = scmp.ne.s32.totalorder %s102, %s116
    %p118 = scmp.eq.s32.totalorder %s22, 0
    %p119 = por %p117, %p118
    %s121 = sadd.s32 %s120, 1
    %p124 = scmp.eq.s32.totalorder %s16, 3
    %p125 = scmp.ne.s32.totalorder %s120, %s122
    %p126 = scmp.eq.s32.totalorder %s16, 0
    %p127 = por %p125, %p126
    %p128 = scmp.ne.s32.totalorder %s120, %s122
    %p129 = scmp.eq.s32.totalorder %s21, 3
    %p130 = por %p128, %p129
    %p131 = scmp.ne.s32.totalorder %s122, %s123
    %p132 = scmp.eq.s32.totalorder %s21, 0
    %p133 = por %p131, %p132
    %p134 = scmp.ne.s32.totalorder %s122, %s123
    %p135 = scmp.eq.s32.totalorder %s22, 3
    %p136 = por %p134, %p135
    %p138 = scmp.ne.s32.totalorder %s123, %s137
    %p139 = scmp.eq.s32.totalorder %s22, 0
    %p140 = por %p138, %p139
    %s142 = sadd.s32 %s141, 1
    %p145 = scmp.eq.s32.totalorder %s16, 3
    %p146 = scmp.ne.s32.totalorder %s141, %s143
    %p147 = scmp.eq.s32.totalorder %s16, 0
    %p148 = por %p146, %p147
    %p149 = scmp.ne.s32.totalorder %s141, %s143
    %p150 = scmp.eq.s32.totalorder %s21, 3
    %p151 = por %p149, %p150
    %p152 = scmp.ne.s32.totalorder %s143, %s144
    %p153 = scmp.eq.s32.totalorder %s21, 0
    %p154 = por %p152, %p153
    %p155 = scmp.ne.s32.totalorder %s143, %s144
    %p156 = scmp.eq.s32.totalorder %s22, 3
    %p157 = por %p155, %p156
    %p159 = scmp.ne.s32.totalorder %s144, %s158
    %p160 = scmp.eq.s32.totalorder %s22, 0
    %p161 = por %p159, %p160
    %s163 = sadd.s32 %s162, 1
    %p166 = scmp.eq.s32.totalorder %s16, 3
    %p167 = scmp.ne.s32.totalorder %s162, %s164
    %p168 = scmp.eq.s32.totalorder %s16, 0
    %p169 = por %p167, %p168
    %p170 = scmp.ne.s32.totalorder %s162, %s164
    %p171 = scmp.eq.s32.totalorder %s21, 3
    %p172 = por %p170, %p171
    %p173 = scmp.ne.s32.totalorder %s164, %s165
    %p174 = scmp.eq.s32.totalorder %s21, 0
    %p175 = por %p173, %p174
    %p176 = scmp.ne.s32.totalorder %s164, %s165
    %p177 = scmp.eq.s32.totalorder %s22, 3
    %p178 = por %p176, %p177
    %p180 = scmp.ne.s32.totalorder %s165, %s179
    %p181 = scmp.eq.s32.totalorder %s22, 0
    %p182 = por %p180, %p181
    %s184 = sadd.s32 %s183, 1
    %p187 = scmp.eq.s32.totalorder %s16, 3
    %p188 = scmp.ne.s32.totalorder %s183, %s185
    %p189 = scmp.eq.s32.totalorder %s16, 0
    %p190 = por %p188, %p189
    %p191 = scmp.ne.s32.totalorder %s183, %s185
    %p192 = scmp.eq.s32.totalorder %s21, 3
    %p193 = por %p191, %p192
    %p194 = scmp.ne.s32.totalorder %s185, %s186
    %p195 = scmp.eq.s32.totalorder %s21, 0
    %p196 = por %p194, %p195
    %p197 = scmp.ne.s32.totalorder %s185, %s186
    %p198 = scmp.eq.s32.totalorder %s22, 3
    %p199 = por %p197, %p198
    %p201 = scmp.ne.s32.totalorder %s186, %s200
    %p202 = scmp.eq.s32.totalorder %s22, 0
    %p203 = por %p201, %p202
    %s205 = sadd.s32 %s204, 1
    %p208 = scmp.eq.s32.totalorder %s16, 3
    %p209 = scmp.ne.s32.totalorder %s204, %s206
    %p210 = scmp.eq.s32.totalorder %s16, 0
    %p211 = por %p209, %p210
    %p212 = scmp.ne.s32.totalorder %s204, %s206
    %p213 = scmp.eq.s32.totalorder %s21, 3
    %p214 = por %p212, %p213
    %p215 = scmp.ne.s32.totalorder %s206, %s207
    %p216 = scmp.eq.s32.totalorder %s21, 0
    %p217 = por %p215, %p216
    %p218 = scmp.ne.s32.totalorder %s206, %s207
    %p219 = scmp.eq.s32.totalorder %s22, 3
    %p220 = por %p218, %p219
    %p222 = scmp.ne.s32.totalorder %s207, %s221
    %p223 = scmp.eq.s32.totalorder %s22, 0
    %p224 = por %p222, %p223
    %s226 = sadd.s32 %s225, 1
    %p229 = scmp.eq.s32.totalorder %s16, 3
    %p230 = scmp.ne.s32.totalorder %s225, %s227
    %p231 = scmp.eq.s32.totalorder %s16, 0
    %p232 = por %p230, %p231
    %p233 = scmp.ne.s32.totalorder %s225, %s227
    %p234 = scmp.eq.s32.totalorder %s21, 3
    %p235 = por %p233, %p234
    %p236 = scmp.ne.s32.totalorder %s227, %s228
    %p237 = scmp.eq.s32.totalorder %s21, 0
    %p238 = por %p236, %p237
    %p239 = scmp.ne.s32.totalorder %s227, %s228
    %p240 = scmp.eq.s32.totalorder %s22, 3
    %p241 = por %p239, %p240
    %p243 = scmp.ne.s32.totalorder %s228, %s242
    %p244 = scmp.eq.s32.totalorder %s22, 0
    %p245 = por %p243, %p244
    %s247 = sadd.s32 %s246, 1
    %p250 = scmp.eq.s32.totalorder %s16, 3
    %p251 = scmp.ne.s32.totalorder %s246, %s248
    %p252 = scmp.eq.s32.totalorder %s16, 0
    %p253 = por %p251, %p252
    %p254 = scmp.ne.s32.totalorder %s246, %s248
    %p255 = scmp.eq.s32.totalorder %s21, 3
    %p256 = por %p254, %p255
    %p257 = scmp.ne.s32.totalorder %s248, %s249
    %p258 = scmp.eq.s32.totalorder %s21, 0
    %p259 = por %p257, %p258
    %p260 = scmp.ne.s32.totalorder %s248, %s249
    %p261 = scmp.eq.s32.totalorder %s22, 3
    %p262 = por %p260, %p261
    %p264 = scmp.ne.s32.totalorder %s249, %s263
    %p265 = scmp.eq.s32.totalorder %s22, 0
    %p266 = por %p264, %p265
    %s267 = smul.u32 %s24, %s25
    %s268 = smul.u32 %s38, %s34
    %s269 = ssub.s32 %s23, %s42
    %s270 = ssub.s32 %s267, %s268
    %s271 = sor.u32 %s269, %s270
    %p272 = scmp.eq.s32.totalorder %s271, 0
    %s274 = sadd.s32 %s273, 1
    %s275 = scalar_select %p272, %s273, %s274
    %p278 = pneg %p272
    %p279 = scmp.eq.s32.totalorder %s16, 3
    %p280 = por %p278, %p279
    %p281 = scmp.ne.s32.totalorder %s273, %s276
    %p282 = scmp.eq.s32.totalorder %s16, 0
    %p283 = por %p281, %p282
    %p284 = scmp.ne.s32.totalorder %s273, %s276
    %p285 = scmp.eq.s32.totalorder %s21, 3
    %p286 = por %p284, %p285
    %p287 = scmp.ne.s32.totalorder %s276, %s277
    %p288 = scmp.eq.s32.totalorder %s21, 0
    %p289 = por %p287, %p288
    %p290 = scmp.ne.s32.totalorder %s276, %s277
    %p291 = scmp.eq.s32.totalorder %s22, 3
    %p292 = por %p290, %p291
    %p294 = scmp.ne.s32.totalorder %s277, %s293
    %p295 = scmp.eq.s32.totalorder %s22, 0
    %p296 = por %p294, %p295
    %p297 = scmp.le.s32.totalorder 1, %s16
    %p298 = scmp.lt.s32.totalorder %s16, 5
    %p299 = pnand %p297, %p298
    %p300 = pneg %p299
    // Predicated region
    $region9: #{convnextv2_forward.21} parent=5 // pred_check
      _
    $region10: #{convnextv2_forward.21} parent=5 // pred_check_branch
      %302 = sbr.rel (%p299) target = $region12
    $region11: #{convnextv2_forward.21} parent=5 // pred_region
      %s303 = ssub.s32 %s16, 1
      // Predicated region
      $region13: #{convnextv2_forward.21} parent=11 // pred_check
        %p304 = pneg %p112
      $region14: #{convnextv2_forward.21} parent=11 // pred_check_branch
        %306 = sbr.rel (%p304) target = $region16
      $region15: #{convnextv2_forward.21} parent=11 // pred_region
        _
      $region16: #{convnextv2_forward.21} parent=11 // pred_fallthru
        _
      // Predicated region
      $region17: #{convnextv2_forward.21} parent=11 // pred_check
        %p307 = pneg %p133
      $region18: #{convnextv2_forward.21} parent=11 // pred_check_branch
        %309 = sbr.rel (%p307) target = $region20
      $region19: #{convnextv2_forward.21} parent=11 // pred_region
        _
      $region20: #{convnextv2_forward.21} parent=11 // pred_fallthru
        _
      // Predicated region
      $region21: #{convnextv2_forward.21} parent=11 // pred_check
        %p310 = pneg %p154
      $region22: #{convnextv2_forward.21} parent=11 // pred_check_branch
        %312 = sbr.rel (%p310) target = $region24
      $region23: #{convnextv2_forward.21} parent=11 // pred_region
        _
      $region24: #{convnextv2_forward.21} parent=11 // pred_fallthru
        _
      // Predicated region
      $region25: #{convnextv2_forward.21} parent=11 // pred_check
        %p313 = pneg %p175
      $region26: #{convnextv2_forward.21} parent=11 // pred_check_branch
        %315 = sbr.rel (%p313) target = $region28
      $region27: #{convnextv2_forward.21} parent=11 // pred_region
        _
      $region28: #{convnextv2_forward.21} parent=11 // pred_fallthru
        _
      // Predicated region
      $region29: #{convnextv2_forward.21} parent=11 // pred_check
        %p316 = pneg %p196
      $region30: #{convnextv2_forward.21} parent=11 // pred_check_branch
        %318 = sbr.rel (%p316) target = $region32
      $region31: #{convnextv2_forward.21} parent=11 // pred_region
        _
      $region32: #{convnextv2_forward.21} parent=11 // pred_fallthru
        _
      // Predicated region
      $region33: #{convnextv2_forward.21} parent=11 // pred_check
        %p319 = pneg %p217
      $region34: #{convnextv2_forward.21} parent=11 // pred_check_branch
        %321 = sbr.rel (%p319) target = $region36
      $region35: #{convnextv2_forward.21} parent=11 // pred_region
        _
      $region36: #{convnextv2_forward.21} parent=11 // pred_fallthru
        _
      // Predicated region
      $region37: #{convnextv2_forward.21} parent=11 // pred_check
        %p322 = pneg %p238
      $region38: #{convnextv2_forward.21} parent=11 // pred_check_branch
        %324 = sbr.rel (%p322) target = $region40
      $region39: #{convnextv2_forward.21} parent=11 // pred_region
        _
      $region40: #{convnextv2_forward.21} parent=11 // pred_fallthru
        _
      // Predicated region
      $region41: #{convnextv2_forward.21} parent=11 // pred_check
        %p325 = pneg %p259
      $region42: #{convnextv2_forward.21} parent=11 // pred_check_branch
        %327 = sbr.rel (%p325) target = $region44
      $region43: #{convnextv2_forward.21} parent=11 // pred_region
        _
      $region44: #{convnextv2_forward.21} parent=11 // pred_fallthru
        _
    $region12: #{convnextv2_forward.21} parent=5 // pred_fallthru
      _
    %p328 = scmp.lt.s32.totalorder %s16, 4
    // Predicated region
    $region45: #{convnextv2_forward.21} parent=5 // pred_check
      %p329 = pneg %p328
    $region46: #{convnextv2_forward.21} parent=5 // pred_check_branch
      %331 = sbr.rel (%p329) target = $region48
    $region47: #{convnextv2_forward.21} parent=5 // pred_region
      // Predicated region
      $region49: #{convnextv2_forward.21} parent=47 // pred_check
        %p332 = pneg %p57
      $region50: #{convnextv2_forward.21} parent=47 // pred_check_branch
        %334 = sbr.rel (%p332) target = $region52
      $region51: #{convnextv2_forward.21} parent=47 // pred_region
        %p335 = scmp.lt.s32.totalorder %s23, 1
        %s336 = scalar_select %p335, %s23, 1
        %p337 = scmp.lt.s32.totalorder %s25, 0
        %s338 = scalar_select %p337, %s25, 0
        %s339 = sadd.s32 %s338, %s336
        %s340 = smul.addr %s339, 2
        %s341 = scalar_lea.vmem %s0, %s340
      $region52: #{convnextv2_forward.21} parent=47 // pred_fallthru
        _
      // Predicated region
      $region53: #{convnextv2_forward.21} parent=47 // pred_check
        %p342 = pneg %p85
      $region54: #{convnextv2_forward.21} parent=47 // pred_check_branch
        %344 = sbr.rel (%p342) target = $region56
      $region55: #{convnextv2_forward.21} parent=47 // pred_region
        %p345 = scmp.lt.s32.totalorder %s23, 1
        %s346 = scalar_select %p345, %s23, 1
        %p347 = scmp.lt.s32.totalorder %s25, 0
        %s348 = scalar_select %p347, %s25, 0
        %s349 = sadd.s32 %s348, %s346
        %s350 = smul.addr %s349, 2
        %s351 = scalar_lea.vmem %s1, %s350
      $region56: #{convnextv2_forward.21} parent=47 // pred_fallthru
        _
    $region48: #{convnextv2_forward.21} parent=5 // pred_fallthru
      _
    %p352 = scmp.le.s32.totalorder 1, %s16
    %p353 = scmp.lt.s32.totalorder %s16, 5
    %p354 = pnand %p352, %p353
    %p355 = pneg %p354
    // Predicated region
    $region57: #{convnextv2_forward.21} parent=5 // pred_check
      _
    $region58: #{convnextv2_forward.21} parent=5 // pred_check_branch
      %357 = sbr.rel (%p354) target = $region60
    $region59: #{convnextv2_forward.21} parent=5 // pred_region
      %s358 = ssub.s32 %s16, 1
      %p359 = scmp.lt.s32.totalorder %s26, 1
      %s360 = scalar_select %p359, %s26, 1
      %p361 = scmp.lt.s32.totalorder %s28, 0
      %s362 = scalar_select %p361, %s28, 0
      %s363 = sadd.s32 %s362, %s360
      %s364 = smul.addr %s363, 2
      %s365 = scalar_lea.vmem %s0, %s364
      %p366 = pneg %p63
      %p367 = pneg %p60
      %p368 = scmp.lt.s32.totalorder %s26, 1
      %s369 = scalar_select %p368, %s26, 1
      %p370 = scmp.lt.s32.totalorder %s28, 0
      %s371 = scalar_select %p370, %s28, 0
      %s372 = sadd.s32 %s371, %s369
      %s373 = smul.addr %s372, 2
      %s374 = scalar_lea.vmem %s1, %s373
      %p375 = pneg %p91
      %p376 = pneg %p88
      %p377 = pneg %p112
      %p378 = pneg %p109
      %p379 = pneg %p133
      %p380 = pneg %p130
      %p381 = pneg %p154
      %p382 = pneg %p151
      %p383 = pneg %p175
      %p384 = pneg %p172
      %p385 = pneg %p196
      %p386 = pneg %p193
      %p387 = pneg %p217
      %p388 = pneg %p214
      %p389 = pneg %p238
      %p390 = pneg %p235
      %p391 = pneg %p259
      %p392 = pneg %p256
      %p393 = pneg %p289
      %p394 = pneg %p286
      %s395 = smul.u32 %s27, %s28
      %p396 = scmp.lt.s32.totalorder %s26, 1
      %s397 = scalar_select %p396, %s26, 1
      %p398 = scmp.lt.s32.totalorder %s395, 0
      %s399 = scalar_select %p398, %s395, 0
      %s400 = sadd.s32 %s399, %s397
      %s401 = smul.addr %s400, 2
      %s402 = scalar_lea.vmem %s10, %s401
      %p403 = scmp.lt.s32.totalorder %s26, 1
      %s404 = scalar_select %p403, %s26, 1
      %p405 = scmp.lt.s32.totalorder %s28, 0
      %s406 = scalar_select %p405, %s28, 0
      %s407 = sadd.s32 %s406, %s404
      %s408 = smul.addr %s407, 2
      %s409 = scalar_lea.vmem %s0, %s408
      %p410 = scmp.lt.s32.totalorder %s26, 1
      %s411 = scalar_select %p410, %s26, 1
      %p412 = scmp.lt.s32.totalorder %s28, 0
      %s413 = scalar_select %p412, %s28, 0
      %s414 = sadd.s32 %s413, %s411
      %s415 = smul.addr %s414, 2
      %s416 = scalar_lea.vmem %s1, %s415
      %s417 = smul.u32 %s27, %s28
      %p418 = scmp.lt.s32.totalorder %s26, 1
      %s419 = scalar_select %p418, %s26, 1
      %p420 = scmp.lt.s32.totalorder %s417, 0
      %s421 = scalar_select %p420, %s417, 0
      %s422 = sadd.s32 %s421, %s419
      %s423 = smul.addr %s422, 2
      %s424 = scalar_lea.vmem %s10, %s423
      %s425 = smul.u32 %s27, %s28
      %s426 = smul.u32 %s28, 4
      %p427 = scmp.eq.s32.totalorder %s27, 0
      // Predicated region
      $region61: #{convnextv2_forward.21} parent=59 // pred_check
        %p428 = pneg %p427
      $region62: #{convnextv2_forward.21} parent=59 // pred_check_branch
        %430 = sbr.rel (%p428) target = $region64
      $region63: #{convnextv2_forward.21} parent=59 // pred_region
        %p431 = scmp.eq.s32.totalorder %s28, 0
        // Predicated region
        $region65: #{convnextv2_forward.21} parent=63 // pred_check
          %p432 = pneg %p431
        $region66: #{convnextv2_forward.21} parent=63 // pred_check_branch
          %434 = sbr.rel (%p432) target = $region68
        $region67: #{convnextv2_forward.21} parent=63 // pred_region
          %v435 = vlaneseq
          %vm436 = vcmp.ge.s32.totalorder %v435, 0
          %vm437 = vcmp.lt.s32.totalorder %v435, 256
          %vm438 = vmand %vm436, %vm437
          %439 = vst.msk [vmem:[#allocation2] sm:$0x3] %vm438, 0.0
        $region68: #{convnextv2_forward.21} parent=63 // pred_fallthru
          _
        %v440 = vld [vmem:[%s409] sm:$0x3]
        %v441 = vunpack.c.l.bf16 %v440
        %vm442 = vcmask 1043456
        %v443 = vsel %vm442, %v441, 0.0
        %444 = vadd.xlane.f32.xlu0 %v443
        %v445 = vpop.xlane.xlu0 %444
        %v446 = vmul.f32 %v445, 0.015625
        %v447 = vmul.f32 %v441, %v441
        %v448 = vsel %vm442, %v447, 0.0
        %449 = vadd.xlane.f32.xlu0 %v448
        %v450 = vpop.xlane.xlu0 %449
        %v451 = vmul.f32 %v450, 0.015625
        %v452 = vmul.f32 %v446, %v446
        %v453 = vsub.f32 %v451, %v452
        %v454 = vmax.f32 %v453, 0.0
        %v455 = vsub.f32 %v441, %v446
        %v456 = vadd.f32 %v454, 1e-06
        %v457 = vrsqrt.pop %v456
        %v458 = vmul.f32 %v457, %v456
        %v459 = vmul.f32 %v458, %v457
        %v460 = vmul.f32 0.5, %v459
        %v461 = vsub.f32 1.5, %v460
        %v462 = vmul.f32 %v457, %v461
        %vm463 = vweird.f32 %v456
        %vm464 = vweird.f32 %v457
        %vm465 = vmor %vm463, %vm464
        %v466 = vsel %vm465, %v457, %v462
        %v467 = vmul.f32 %v455, %v466
        %v468 = vld [vmem:[%s2] sm:$0x1]
        %v470 = vperm.slane %v468, 0
        %v472 = vmul.f32 %v467, %v470
        %v473 = vld [vmem:[%s3] sm:$0x1]
        %v475 = vperm.slane %v473, 0
        %v477 = vadd.f32 %v472, %v475
        %v478 = vpack.c.bf16 %v477, %v477
        %v479 = vld [vmem:[%s4] sm:$0xff]
        %v480 = vld [vmem:[%s4 + $0x8] sm:$0xff]
        %v481 = vld [vmem:[%s4 + $0x10] sm:$0xff]
        %v482 = vld [vmem:[%s4 + $0x18] sm:$0xff]
        %v483 = vld [vmem:[%s4 + $0x20] sm:$0xff]
        %v484 = vld [vmem:[%s4 + $0x28] sm:$0xff]
        %v485 = vld [vmem:[%s4 + $0x30] sm:$0xff]
        %v486 = vld [vmem:[%s4 + $0x38] sm:$0xff]
        %v487 = vld [vmem:[%s4 + $0x40] sm:$0xff]
        %v488 = vld [vmem:[%s4 + $0x48] sm:$0xff]
        %v489 = vld [vmem:[%s4 + $0x50] sm:$0xff]
        %v490 = vld [vmem:[%s4 + $0x58] sm:$0xff]
        %v491 = vld [vmem:[%s4 + $0x60] sm:$0xff]
        %v492 = vld [vmem:[%s4 + $0x68] sm:$0xff]
        %v493 = vld [vmem:[%s4 + $0x70] sm:$0xff]
        %v494 = vld [vmem:[%s4 + $0x78] sm:$0xff]
        %v495 = vld [vmem:[%s5] sm:$0x3]
        %v497 = vperm.slane %v495, 0
        %v498 = vperm.slane %v495, 1
        %v517 = vunpack.c.l.b16 %v479
        %v518 = vunpack.c.h.b16 %v479
        %v519 = vunpack.c.l.b16 %v480
        %v520 = vunpack.c.h.b16 %v480
        %v521 = vunpack.c.l.b16 %v481
        %v522 = vunpack.c.h.b16 %v481
        %v523 = vunpack.c.l.b16 %v482
        %v524 = vunpack.c.h.b16 %v482
        %v525 = vunpack.c.l.b16 %v483
        %v526 = vunpack.c.h.b16 %v483
        %v527 = vunpack.c.l.b16 %v484
        %v528 = vunpack.c.h.b16 %v484
        %v529 = vunpack.c.l.b16 %v485
        %v530 = vunpack.c.h.b16 %v485
        %v531 = vunpack.c.l.b16 %v486
        %v532 = vunpack.c.h.b16 %v486
        %v533 = vunpack.c.l.b16 %v487
        %v534 = vunpack.c.h.b16 %v487
        %v535 = vunpack.c.l.b16 %v488
        %v536 = vunpack.c.h.b16 %v488
        %v537 = vunpack.c.l.b16 %v489
        %v538 = vunpack.c.h.b16 %v489
        %v539 = vunpack.c.l.b16 %v490
        %v540 = vunpack.c.h.b16 %v490
        %v541 = vunpack.c.l.b16 %v491
        %v542 = vunpack.c.h.b16 %v491
        %v543 = vunpack.c.l.b16 %v492
        %v544 = vunpack.c.h.b16 %v492
        %v545 = vunpack.c.l.b16 %v493
        %v546 = vunpack.c.h.b16 %v493
        %v547 = vunpack.c.l.b16 %v494
        %v548 = vunpack.c.h.b16 %v494
        %v549 = vpack.c.b16 %v519, %v517
        %v550 = vpack.c.b16 %v520, %v518
        %v551 = vpack.c.b16 %v523, %v521
        %v552 = vpack.c.b16 %v524, %v522
        %v553 = vpack.c.b16 %v527, %v525
        %v554 = vpack.c.b16 %v528, %v526
        %v555 = vpack.c.b16 %v531, %v529
        %v556 = vpack.c.b16 %v532, %v530
        %v557 = vpack.c.b16 %v535, %v533
        %v558 = vpack.c.b16 %v536, %v534
        %v559 = vpack.c.b16 %v539, %v537
        %v560 = vpack.c.b16 %v540, %v538
        %v561 = vpack.c.b16 %v543, %v541
        %v562 = vpack.c.b16 %v544, %v542
        %v563 = vpack.c.b16 %v547, %v545
        %v564 = vpack.c.b16 %v548, %v546
        %581 = vmatpush.bf16.msra.mxu0 %v563
        %582 = vmatpush.bf16.msra.mxu0 %v561
        %583 = vmatpush.bf16.msra.mxu0 %v559
        %584 = vmatpush.bf16.msra.mxu0 %v557
        %585 = vmatpush.bf16.msra.mxu0 %v555
        %586 = vmatpush.bf16.msra.mxu0 %v553
        %587 = vmatpush.bf16.msra.mxu0 %v551
        %588 = vmatpush.bf16.msra.mxu0 %v549
        %589 = vmatmul.bf16.gmra.mxu0 %v478
        %v590 = vpop.f32.mrf.mxu0
        %v591 = vadd.f32 %v497, %v590
        %v592 = vpop.f32.mrf.mxu0
        %593 = vdwg.mxu0
        %594 = vmatpush.bf16.msra.mxu0 %v564
        %595 = vmatpush.bf16.msra.mxu0 %v562
        %596 = vmatpush.bf16.msra.mxu0 %v560
        %597 = vmatpush.bf16.msra.mxu0 %v558
        %598 = vmatpush.bf16.msra.mxu0 %v556
        %599 = vmatpush.bf16.msra.mxu0 %v554
        %600 = vmatpush.bf16.msra.mxu0 %v552
        %601 = vmatpush.bf16.msra.mxu0 %v550
        %602 = vmatmul.bf16.gmra.mxu0 %v478
        %v603 = vpop.f32.mrf.mxu0
        %v604 = vadd.f32 %v498, %v603
        %v605 = vpop.f32.mrf.mxu0
        %606 = vdwg.mxu0
        %v607 = vmul.f32 %v591, 0.5
        %v608 = vmul.f32 %v604, 0.5
        %v609 = vmul.f32 %v591, 0.70710677
        %v610 = vmul.f32 %v604, 0.70710677
        %v611 = vmul.f32 %v609, %v609
        %v612 = vmin.f32 16.0, %v611
        %v613 = vmul.f32 %v612, 2.1237322e-06
        %v614 = vadd.f32 %v613, 0.00028619796
        %v615 = vmul.f32 %v612, %v614
        %v616 = vadd.f32 %v615, 0.0036580483
        %v617 = vmul.f32 %v612, %v616
        %v618 = vadd.f32 %v617, 0.05243302
        %v619 = vmul.f32 %v612, %v618
        %v620 = vadd.f32 %v619, 0.18741608
        %v621 = vmul.f32 %v612, %v620
        %v622 = vadd.f32 %v621, 1.1283791
        %v623 = vmul.f32 %v609, %v622
        %v624 = vmul.f32 %v612, 3.8918573e-05
        %v625 = vadd.f32 %v624, 0.001143296
        %v626 = vmul.f32 %v612, %v625
        %v627 = vadd.f32 %v626, 0.014752088
        %v628 = vmul.f32 %v612, %v627
        %v629 = vadd.f32 %v628, 0.112945676
        %v630 = vmul.f32 %v612, %v629
        %v631 = vadd.f32 %v630, 0.4994258
        %v632 = vmul.f32 %v612, %v631
        %v633 = vadd.f32 %v632, 1.0
        %v634 = vrcp.pop %v633
        %v635 = vmul.f32 %v633, %v634
        %v636 = vsub.f32 1.0, %v635
        %v637 = vmul.f32 %v634, %v636
        %v638 = vadd.f32 %v634, %v637
        %vm639 = vweird.f32 %v633
        %vm640 = vweird.f32 %v634
        %vm641 = vmor %vm639, %vm640
        %v642 = vsel %vm641, %v634, %v638
        %v643 = vand.u32 2147483647, %v633
        %vm644 = vcmp.eq.f32.partialorder %v643, 8.507059e+37
        %v645 = vand.u32 %v633, 2147483648
        %v646 = vor.u32 1.1754944e-38, %v645
        %v647 = vsel %vm644, %v646, %v642
        %v648 = vmul.f32 %v623, %v647
        %v649 = vmin.f32 %v648, 1.0
        %v650 = vmax.f32 %v649, -1.0
        %v651 = vmul.f32 %v610, %v610
        %v652 = vmin.f32 16.0, %v651
        %v653 = vmul.f32 %v652, 2.1237322e-06
        %v654 = vadd.f32 %v653, 0.00028619796
        %v655 = vmul.f32 %v652, %v654
        %v656 = vadd.f32 %v655, 0.0036580483
        %v657 = vmul.f32 %v652, %v656
        %v658 = vadd.f32 %v657, 0.05243302
        %v659 = vmul.f32 %v652, %v658
        %v660 = vadd.f32 %v659, 0.18741608
        %v661 = vmul.f32 %v652, %v660
        %v662 = vadd.f32 %v661, 1.1283791
        %v663 = vmul.f32 %v610, %v662
        %v664 = vmul.f32 %v652, 3.8918573e-05
        %v665 = vadd.f32 %v664, 0.001143296
        %v666 = vmul.f32 %v652, %v665
        %v667 = vadd.f32 %v666, 0.014752088
        %v668 = vmul.f32 %v652, %v667
        %v669 = vadd.f32 %v668, 0.112945676
        %v670 = vmul.f32 %v652, %v669
        %v671 = vadd.f32 %v670, 0.4994258
        %v672 = vmul.f32 %v652, %v671
        %v673 = vadd.f32 %v672, 1.0
        %v674 = vrcp.pop %v673
        %v675 = vmul.f32 %v673, %v674
        %v676 = vsub.f32 1.0, %v675
        %v677 = vmul.f32 %v674, %v676
        %v678 = vadd.f32 %v674, %v677
        %vm679 = vweird.f32 %v673
        %vm680 = vweird.f32 %v674
        %vm681 = vmor %vm679, %vm680
        %v682 = vsel %vm681, %v674, %v678
        %v683 = vand.u32 2147483647, %v673
        %vm684 = vcmp.eq.f32.partialorder %v683, 8.507059e+37
        %v685 = vand.u32 %v673, 2147483648
        %v686 = vor.u32 1.1754944e-38, %v685
        %v687 = vsel %vm684, %v686, %v682
        %v688 = vmul.f32 %v663, %v687
        %v689 = vmin.f32 %v688, 1.0
        %v690 = vmax.f32 %v689, -1.0
        %v691 = vadd.f32 %v650, 1.0
        %v692 = vadd.f32 %v690, 1.0
        %v693 = vmul.f32 %v607, %v691
        %v694 = vmul.f32 %v608, %v692
        %v695 = vld [vmem:[#allocation2] sm:$0x3]
        %v696 = vmul.f32 %v693, %v693
        %v697 = vmul.f32 %v694, %v694
        %v698 = vsel %vm442, %v696, 0.0
        %v699 = vrot.slane %v698, 4
        %v700 = vadd.f32 %v698, %v699
        %v701 = vrot.slane %v700, 2
        %v702 = vadd.f32 %v700, %v701
        %v703 = vrot.slane %v702, 1
        %v704 = vadd.f32 %v702, %v703
        %v705 = vsel %vm442, %v697, 0.0
        %v706 = vrot.slane %v705, 4
        %v707 = vadd.f32 %v705, %v706
        %v708 = vrot.slane %v707, 2
        %v709 = vadd.f32 %v707, %v708
        %v710 = vrot.slane %v709, 1
        %v711 = vadd.f32 %v709, %v710
        %v714 = vrot.slane %v711, 7
        %vm715 = vcmask 1040384
        %v716 = vsel %vm715, %v704, %v714
        %v718 = vadd.f32 %v695, %v716
        %v719 = vlaneseq
        %vm720 = vcmp.ge.s32.totalorder %v719, 0
        %vm721 = vcmp.lt.s32.totalorder %v719, 256
        %vm722 = vmand %vm720, %vm721
        %723 = vst.msk [vmem:[#allocation2] sm:$0x3] %vm722, %v718
        %v724 = vpack.c.bf16 %v694, %v693
        %v726 = vrot.slane %v724, 2
        %vm727 = vcmask 1041408
        %v730 = vsel %vm727, %v724, %v726
        %s732 = sshra.s32 %s426, 2
        %s733 = sand.u32 %s426, 3
        %s734 = smul.u32 %s732, 2
        %s735 = smul.addr %s734, 2
        %s736 = scalar_lea.vmem [#allocation3], %s735
        %737 = vst [vmem:[%s736] sm:$0xf] %v730
      $region64: #{convnextv2_forward.21} parent=59 // pred_fallthru
        _
      %p738 = scmp.eq.s32.totalorder %s27, 1
      // Predicated region
      $region69: #{convnextv2_forward.21} parent=59 // pred_check
        %p739 = pneg %p738
      $region70: #{convnextv2_forward.21} parent=59 // pred_check_branch
        %741 = sbr.rel (%p739) target = $region72
      $region71: #{convnextv2_forward.21} parent=59 // pred_region
        %s742 = sshra.s32 %s426, 2
        %s743 = sand.u32 %s426, 3
        %s744 = smul.u32 %s742, 2
        %s745 = smul.addr %s744, 2
        %s746 = scalar_lea.vmem [#allocation3], %s745
        %v747 = vld [vmem:[%s746] sm:$0xf]
        %v748 = vunpack.c.l.bf16 %v747
        %v749 = vld [vmem:[#allocation2] sm:$0x3]
        %v750 = vrsqrt.pop %v749
        %v751 = vmul.f32 %v750, %v749
        %v752 = vmul.f32 %v751, %v750
        %v753 = vmul.f32 0.5, %v752
        %v754 = vsub.f32 1.5, %v753
        %v755 = vmul.f32 %v750, %v754
        %v756 = vmul.f32 %v749, %v755
        %vm757 = vcmp.eq.f32.partialorder %v749, inf
        %v758 = vsel %vm757, %v749, %v756
        %vm759 = vcmp.eq.f32.partialorder %v749, 0.0
        %v760 = vand.u32 %v749, 2147483648
        %v761 = vsel %vm759, %v760, %v758
        %v763 = vperm.slane %v761, 0
        %v764 = vperm.slane %v761, 1
        %vm767 = vcmask 1040384
        %v768 = vsel %vm767, %v763, 0.0
        %v769 = vsel %vm767, %v764, 0.0
        %v770 = vadd.f32 %v768, %v769
        %771 = vadd.xlane.f32.xlu0 %v770
        %v772 = vpop.xlane.xlu0 %771
        %v773 = vmul.f32 %v772, 0.00390625
        %v774 = vadd.f32 %v773, 1e-06
        %v776 = vperm.slane %v774, 0
        %v778 = vrcp.pop %v776
        %v779 = vmul.f32 %v776, %v778
        %v780 = vsub.f32 1.0, %v779
        %v781 = vmul.f32 %v778, %v780
        %v782 = vadd.f32 %v778, %v781
        %vm783 = vweird.f32 %v776
        %vm784 = vweird.f32 %v778
        %vm785 = vmor %vm783, %vm784
        %v786 = vsel %vm785, %v778, %v782
        %v787 = vand.u32 2147483647, %v776
        %vm788 = vcmp.eq.f32.partialorder %v787, 8.507059e+37
        %v789 = vand.u32 %v776, 2147483648
        %v790 = vor.u32 1.1754944e-38, %v789
        %v791 = vsel %vm788, %v790, %v786
        %v792 = vmul.f32 %v761, %v791
        %v793 = vld [vmem:[%s6] sm:$0x3]
        %v795 = vperm.slane %v792, 0
        %v796 = vperm.slane %v792, 1
        %v797 = vrot.slane %v796, 4
        %vm798 = vcmask 1043456
        %v799 = vsel %vm798, %v795, %v797
        %v801 = vmul.f32 %v748, %v799
        %v803 = vperm.slane %v793, 0
        %v804 = vperm.slane %v793, 1
        %808 = vst [vmem:[#allocation1] ss:$2 sm:$0xff] %v801
        %v809 = vld.sshfl [vmem:[#allocation1] sm:$0xff pattern:$0x75316420]
        %v810 = vld.sshfl [vmem:[#allocation1 + $0x8] sm:$0xff pattern:$0x75316420]
        %v813 = vmul.f32 %v803, %v809
        %v814 = vmul.f32 %v804, %v810
        %v815 = vld [vmem:[%s7] sm:$0x3]
        %v817 = vperm.slane %v815, 0
        %v818 = vperm.slane %v815, 1
        %v821 = vadd.f32 %v813, %v817
        %v822 = vadd.f32 %v814, %v818
        %824 = vst [vmem:[#allocation1] ss:$2 sm:$0xff] %v748
        %v825 = vld.sshfl [vmem:[#allocation1] sm:$0xff pattern:$0x75316420]
        %v826 = vld.sshfl [vmem:[#allocation1 + $0x8] sm:$0xff pattern:$0x75316420]
        %v829 = vadd.f32 %v821, %v825
        %v830 = vadd.f32 %v822, %v826
        %v831 = vpack.c.bf16 %v829, %v829
        %v832 = vpack.c.bf16 %v830, %v830
        %v833 = vld [vmem:[%s8] sm:$0xf]
        %v834 = vld [vmem:[%s8 + $0x4] sm:$0xf]
        %v835 = vld [vmem:[%s8 + $0x8] sm:$0xf]
        %v836 = vld [vmem:[%s8 + $0xc] sm:$0xf]
        %v837 = vld [vmem:[%s8 + $0x10] sm:$0xf]
        %v838 = vld [vmem:[%s8 + $0x14] sm:$0xf]
        %v839 = vld [vmem:[%s8 + $0x18] sm:$0xf]
        %v840 = vld [vmem:[%s8 + $0x1c] sm:$0xf]
        %v841 = vld [vmem:[%s8 + $0x20] sm:$0xf]
        %v842 = vld [vmem:[%s8 + $0x24] sm:$0xf]
        %v843 = vld [vmem:[%s8 + $0x28] sm:$0xf]
        %v844 = vld [vmem:[%s8 + $0x2c] sm:$0xf]
        %v845 = vld [vmem:[%s8 + $0x30] sm:$0xf]
        %v846 = vld [vmem:[%s8 + $0x34] sm:$0xf]
        %v847 = vld [vmem:[%s8 + $0x38] sm:$0xf]
        %v848 = vld [vmem:[%s8 + $0x3c] sm:$0xf]
        %v849 = vld [vmem:[%s8 + $0x40] sm:$0xf]
        %v850 = vld [vmem:[%s8 + $0x44] sm:$0xf]
        %v851 = vld [vmem:[%s8 + $0x48] sm:$0xf]
        %v852 = vld [vmem:[%s8 + $0x4c] sm:$0xf]
        %v853 = vld [vmem:[%s8 + $0x50] sm:$0xf]
        %v854 = vld [vmem:[%s8 + $0x54] sm:$0xf]
        %v855 = vld [vmem:[%s8 + $0x58] sm:$0xf]
        %v856 = vld [vmem:[%s8 + $0x5c] sm:$0xf]
        %v857 = vld [vmem:[%s8 + $0x60] sm:$0xf]
        %v858 = vld [vmem:[%s8 + $0x64] sm:$0xf]
        %v859 = vld [vmem:[%s8 + $0x68] sm:$0xf]
        %v860 = vld [vmem:[%s8 + $0x6c] sm:$0xf]
        %v861 = vld [vmem:[%s8 + $0x70] sm:$0xf]
        %v862 = vld [vmem:[%s8 + $0x74] sm:$0xf]
        %v863 = vld [vmem:[%s8 + $0x78] sm:$0xf]
        %v864 = vld [vmem:[%s8 + $0x7c] sm:$0xf]
        %v865 = vld [vmem:[%s9] sm:$0x1]
        %v867 = vperm.slane %v865, 0
        %v901 = vunpack.c.l.b16 %v833
        %v902 = vunpack.c.l.b16 %v834
        %v903 = vunpack.c.l.b16 %v835
        %v904 = vunpack.c.l.b16 %v836
        %v905 = vunpack.c.l.b16 %v837
        %v906 = vunpack.c.l.b16 %v838
        %v907 = vunpack.c.l.b16 %v839
        %v908 = vunpack.c.l.b16 %v840
        %v909 = vunpack.c.l.b16 %v841
        %v910 = vunpack.c.l.b16 %v842
        %v911 = vunpack.c.l.b16 %v843
        %v912 = vunpack.c.l.b16 %v844
        %v913 = vunpack.c.l.b16 %v845
        %v914 = vunpack.c.l.b16 %v846
        %v915 = vunpack.c.l.b16 %v847
        %v916 = vunpack.c.l.b16 %v848
        %v917 = vunpack.c.l.b16 %v849
        %v918 = vunpack.c.l.b16 %v850
        %v919 = vunpack.c.l.b16 %v851
        %v920 = vunpack.c.l.b16 %v852
        %v921 = vunpack.c.l.b16 %v853
        %v922 = vunpack.c.l.b16 %v854
        %v923 = vunpack.c.l.b16 %v855
        %v924 = vunpack.c.l.b16 %v856
        %v925 = vunpack.c.l.b16 %v857
        %v926 = vunpack.c.l.b16 %v858
        %v927 = vunpack.c.l.b16 %v859
        %v928 = vunpack.c.l.b16 %v860
        %v929 = vunpack.c.l.b16 %v861
        %v930 = vunpack.c.l.b16 %v862
        %v931 = vunpack.c.l.b16 %v863
        %v932 = vunpack.c.l.b16 %v864
        %v933 = vpack.c.b16 %v902, %v901
        %v934 = vpack.c.b16 %v904, %v903
        %v935 = vpack.c.b16 %v906, %v905
        %v936 = vpack.c.b16 %v908, %v907
        %v937 = vpack.c.b16 %v910, %v909
        %v938 = vpack.c.b16 %v912, %v911
        %v939 = vpack.c.b16 %v914, %v913
        %v940 = vpack.c.b16 %v916, %v915
        %v941 = vpack.c.b16 %v918, %v917
        %v942 = vpack.c.b16 %v920, %v919
        %v943 = vpack.c.b16 %v922, %v921
        %v944 = vpack.c.b16 %v924, %v923
        %v945 = vpack.c.b16 %v926, %v925
        %v946 = vpack.c.b16 %v928, %v927
        %v947 = vpack.c.b16 %v930, %v929
        %v948 = vpack.c.b16 %v932, %v931
        %965 = vmatpush.bf16.msra.mxu0 %v940
        %966 = vmatpush.bf16.msra.mxu0 %v939
        %967 = vmatpush.bf16.msra.mxu0 %v938
        %968 = vmatpush.bf16.msra.mxu0 %v937
        %969 = vmatpush.bf16.msra.mxu0 %v936
        %970 = vmatpush.bf16.msra.mxu0 %v935
        %971 = vmatpush.bf16.msra.mxu0 %v934
        %972 = vmatpush.bf16.msra.mxu0 %v933
        %973 = vmatmul.bf16.gmra.mxu0 %v831
        %v974 = vpop.f32.mrf.mxu0
        %v975 = vadd.f32 %v867, %v974
        %v976 = vpop.f32.mrf.mxu0
        %977 = vdwg.mxu0
        %978 = vmatpush.bf16.msra.mxu0 %v948
        %979 = vmatpush.bf16.msra.mxu0 %v947
        %980 = vmatpush.bf16.msra.mxu0 %v946
        %981 = vmatpush.bf16.msra.mxu0 %v945
        %982 = vmatpush.bf16.msra.mxu0 %v944
        %983 = vmatpush.bf16.msra.mxu0 %v943
        %984 = vmatpush.bf16.msra.mxu0 %v942
        %985 = vmatpush.bf16.msra.mxu0 %v941
        %986 = vmatmul.bf16.gmra.mxu0 %v832
        %v987 = vpop.f32.mrf.mxu0
        %v988 = vadd.f32 %v975, %v987
        %v989 = vpop.f32.mrf.mxu0
        %990 = vdwg.mxu0
        %v991 = vld [vmem:[%s416] sm:$0x3]
        %v992 = vunpack.c.l.bf16 %v991
        %v993 = vadd.f32 %v992, %v988
        %v994 = vpack.c.bf16 %v993, %v993
        %995 = vst [vmem:[%s424] sm:$0x3] %v994
      $region72: #{convnextv2_forward.21} parent=59 // pred_fallthru
        _
      %s996 = smul.u32 %s27, %s28
      %p997 = scmp.lt.s32.totalorder %s26, 1
      %s998 = scalar_select %p997, %s26, 1
      %p999 = scmp.lt.s32.totalorder %s996, 0
      %s1000 = scalar_select %p999, %s996, 0
      %s1001 = sadd.s32 %s1000, %s998
      %s1002 = smul.addr %s1001, 2
      %s1003 = scalar_lea.vmem %s10, %s1002
      // Predicated region
      $region73: #{convnextv2_forward.21} parent=59 // pred_check
        %p1004 = pneg %p286
      $region74: #{convnextv2_forward.21} parent=59 // pred_check_branch
        %1006 = sbr.rel (%p1004) target = $region76
      $region75: #{convnextv2_forward.21} parent=59 // pred_region
        %s1007 = smul.u32 %s27, %s28
      $region76: #{convnextv2_forward.21} parent=59 // pred_fallthru
        _
    $region60: #{convnextv2_forward.21} parent=5 // pred_fallthru
      _
    %p1008 = scmp.le.s32.totalorder 2, %s16
    // Predicated region
    $region77: #{convnextv2_forward.21} parent=5 // pred_check
      %p1009 = pneg %p1008
    $region78: #{convnextv2_forward.21} parent=5 // pred_check_branch
      %1011 = sbr.rel (%p1009) target = $region80
    $region79: #{convnextv2_forward.21} parent=5 // pred_region
      %s1012 = ssub.s32 %s16, 2
      // Predicated region
      $region81: #{convnextv2_forward.21} parent=79 // pred_check
        %p1013 = pneg %p292
      $region82: #{convnextv2_forward.21} parent=79 // pred_check_branch
        %1015 = sbr.rel (%p1013) target = $region84
      $region83: #{convnextv2_forward.21} parent=79 // pred_region
        %s1016 = smul.u32 %s30, %s31
        %p1017 = scmp.lt.s32.totalorder %s29, 1
        %s1018 = scalar_select %p1017, %s29, 1
        %p1019 = scmp.lt.s32.totalorder %s1016, 0
        %s1020 = scalar_select %p1019, %s1016, 0
        %s1021 = sadd.s32 %s1020, %s1018
        %s1022 = smul.addr %s1021, 2
        %s1023 = scalar_lea.vmem %s10, %s1022
      $region84: #{convnextv2_forward.21} parent=79 // pred_fallthru
        _
    $region80: #{convnextv2_forward.21} parent=5 // pred_fallthru
      _
  $region6: #{convnextv2_forward.21} parent=0 // loop_footer
    %s20 = sadd.s32 1, %s16
  $region7: #{convnextv2_forward.21} parent=0 // loop_footer_branch
    %15 = sbr.rel target = $region3
  $region8: #{convnextv2_forward.21} parent=0 // loop_exit
    _

// kernel: convnextv2_forward.20
$region0: #{convnextv2_forward.20}
  #allocation0 [shape = 'u32[]', space=smem, size = 0x4, offset = 0x4, fixed_abs, tag = 'smem constant byte address 0x4 - core index']
  #allocation1 [shape = 'u32[72,128]{1,0:T(1,128)}', space=vmem, size = 0x9000, scoped, tag = 'internal scratch']
  #allocation2 [shape = 'f32[8,8,128]{2,1,0:T(8,128)}', space=vmem, size = 0x8000, scoped, tag = 'scratch operand']
  %s0 = inlined_call_operand.vmem [shape: bf16[2,2,2,128], index: 0, kind: input, shape index: {}]
  %s1 = inlined_call_operand.hbm [shape: f32[49,128], index: 1, kind: input, shape index: {}]
  %s2 = inlined_call_operand.vmem [shape: f32[1,128], index: 2, kind: input, shape index: {}]
  %s3 = inlined_call_operand.vmem [shape: bf16[2,2,2,128], index: 3, kind: output, shape index: {}]
  %s4 = sld [smem:[#allocation0]]
  $region49: #{convnextv2_forward.20} parent=0
    _
  %s6 = ssub.s32 1, %s4
  %s7 = scalar_select 0, %s6, %s4
  $region1: #{convnextv2_forward.20} parent=0
    #allocation3 [shape = 'u8[28672]{0}', space=vmem, size = 0x7000, scoped, tag = 'input window, operand 1, single buffered']
    #allocation4 [shape = 's32[2]{0}', space=sflag, size = 0x8, scoped, tag = 'scoped memory for convnextv2_forward.20']
    %8 = vsyncpa [#allocation4], 0
    loop: start=0, step=1, limit=4
    $region2: #{convnextv2_forward.20} parent=1 // loop_pre_header
      _
    $region3: #{convnextv2_forward.20} parent=1 // loop_header
      %s10 = sphi 0, %s14
      %p11 = scmp.ge.s32.totalorder %s10, 4
      %s20 = sphi 0, %s22
      %s23 = sphi 0, %s20
      %s24 = sphi 0, %s23
      %s40 = sphi 0, %s24
      %s44 = sphi 0, %s44
      %s46 = sphi 0, %s44
      %s47 = sphi 0, %s46
      %s61 = sphi 0, %s47
      %s65 = sphi 0, %s65
      %s67 = sphi 0, %s65
      %s68 = sphi 0, %s67
      %s82 = sphi 0, %s68
      %s88 = sphi 0, %s90
      %s91 = sphi 0, %s88
      %s92 = sphi 0, %s91
      %s108 = sphi 0, %s92
    $region4: #{convnextv2_forward.20} parent=1 // loop_header_branch
      %13 = sbr.rel (%p11) target = $region8
    $region5: #{convnextv2_forward.20} parent=1 // loop_body
      %s15 = ssub.s32 %s10, 1
      %s16 = ssub.s32 %s10, 2
      %s17 = sadd.s32 %s10, 1
      %s18 = ssub.s32 %s10, %s17
      %p19 = scmp.eq.s32.totalorder %s18, 0
      %s21 = sadd.s32 %s20, 1
      %s22 = scalar_select %p19, %s20, %s21
      %p25 = pneg %p19
      %p26 = scmp.eq.s32.totalorder %s10, 1
      %p27 = por %p25, %p26
      %p28 = scmp.ne.s32.totalorder %s20, %s23
      %p29 = scmp.eq.s32.totalorder %s10, 0
      %p30 = por %p28, %p29
      %p31 = scmp.ne.s32.totalorder %s20, %s23
      %p32 = scmp.eq.s32.totalorder %s15, 1
      %p33 = por %p31, %p32
      %p34 = scmp.ne.s32.totalorder %s23, %s24
      %p35 = scmp.eq.s32.totalorder %s15, 0
      %p36 = por %p34, %p35
      %p37 = scmp.ne.s32.totalorder %s23, %s24
      %p38 = scmp.eq.s32.totalorder %s16, 1
      %p39 = por %p37, %p38
      %p41 = scmp.ne.s32.totalorder %s24, %s40
      %p42 = scmp.eq.s32.totalorder %s16, 0
      %p43 = por %p41, %p42
      %s45 = sadd.s32 %s44, 1
      %p48 = scmp.eq.s32.totalorder %s10, 1
      %p49 = scmp.ne.s32.totalorder %s44, %s46
      %p50 = scmp.eq.s32.totalorder %s10, 0
      %p51 = por %p49, %p50
      %p52 = scmp.ne.s32.totalorder %s44, %s46
      %p53 = scmp.eq.s32.totalorder %s15, 1
      %p54 = por %p52, %p53
      %p55 = scmp.ne.s32.totalorder %s46, %s47
      %p56 = scmp.eq.s32.totalorder %s15, 0
      %p57 = por %p55, %p56
      %p58 = scmp.ne.s32.totalorder %s46, %s47
      %p59 = scmp.eq.s32.totalorder %s16, 1
      %p60 = por %p58, %p59
      %p62 = scmp.ne.s32.totalorder %s47, %s61
      %p63 = scmp.eq.s32.totalorder %s16, 0
      %p64 = por %p62, %p63
      %s66 = sadd.s32 %s65, 1
      %p69 = scmp.eq.s32.totalorder %s10, 1
      %p70 = scmp.ne.s32.totalorder %s65, %s67
      %p71 = scmp.eq.s32.totalorder %s10, 0
      %p72 = por %p70, %p71
      %p73 = scmp.ne.s32.totalorder %s65, %s67
      %p74 = scmp.eq.s32.totalorder %s15, 1
      %p75 = por %p73, %p74
      %p76 = scmp.ne.s32.totalorder %s67, %s68
      %p77 = scmp.eq.s32.totalorder %s15, 0
      %p78 = por %p76, %p77
      %p79 = scmp.ne.s32.totalorder %s67, %s68
      %p80 = scmp.eq.s32.totalorder %s16, 1
      %p81 = por %p79, %p80
      %p83 = scmp.ne.s32.totalorder %s68, %s82
      %p84 = scmp.eq.s32.totalorder %s16, 0
      %p85 = por %p83, %p84
      %s86 = ssub.s32 %s10, %s17
      %p87 = scmp.eq.s32.totalorder %s86, 0
      %s89 = sadd.s32 %s88, 1
      %s90 = scalar_select %p87, %s88, %s89
      %p93 = pneg %p87
      %p94 = scmp.eq.s32.totalorder %s10, 1
      %p95 = por %p93, %p94
      %p96 = scmp.ne.s32.totalorder %s88, %s91
      %p97 = scmp.eq.s32.totalorder %s10, 0
      %p98 = por %p96, %p97
      %p99 = scmp.ne.s32.totalorder %s88, %s91
      %p100 = scmp.eq.s32.totalorder %s15, 1
      %p101 = por %p99, %p100
      %p102 = scmp.ne.s32.totalorder %s91, %s92
      %p103 = scmp.eq.s32.totalorder %s15, 0
      %p104 = por %p102, %p103
      %p105 = scmp.ne.s32.totalorder %s91, %s92
      %p106 = scmp.eq.s32.totalorder %s16, 1
      %p107 = por %p105, %p106
      %p109 = scmp.ne.s32.totalorder %s92, %s108
      %p110 = scmp.eq.s32.totalorder %s16, 0
      %p111 = por %p109, %p110
      %p112 = scmp.le.s32.totalorder 1, %s10
      %p113 = scmp.lt.s32.totalorder %s10, 3
      %p114 = pnand %p112, %p113
      %p115 = pneg %p114
      // Predicated region
      $region9: #{convnextv2_forward.20} parent=5 // pred_check
        _
      $region10: #{convnextv2_forward.20} parent=5 // pred_check_branch
        %117 = sbr.rel (%p114) target = $region12
      $region11: #{convnextv2_forward.20} parent=5 // pred_region
        %s118 = ssub.s32 %s10, 1
        // Predicated region
        $region13: #{convnextv2_forward.20} parent=11 // pred_check
          %p119 = pneg %p57
        $region14: #{convnextv2_forward.20} parent=11 // pred_check_branch
          %121 = sbr.rel (%p119) target = $region16
        $region15: #{convnextv2_forward.20} parent=11 // pred_region
          %123 = vsyncadd [#allocation4], 0
          %s124 = sshll.u32 %s1, 4
          %s125 = int_to_ptr.hbm [resolvable:$true] %s124
          %s126 = sshll.u32 [#allocation3], 4
          %s127 = int_to_ptr.vmem [resolvable:$true] %s126
          %132 = dma.hbm_to_vmem [thread:$0]  %s125, 896, %s127, [#allocation4], 128, 128, 8
        $region16: #{convnextv2_forward.20} parent=11 // pred_fallthru
          _
        // Predicated region
        $region17: #{convnextv2_forward.20} parent=11 // pred_check
          %p133 = pneg %p78
        $region18: #{convnextv2_forward.20} parent=11 // pred_check_branch
          %135 = sbr.rel (%p133) target = $region20
        $region19: #{convnextv2_forward.20} parent=11 // pred_region
          _
        $region20: #{convnextv2_forward.20} parent=11 // pred_fallthru
          _
      $region12: #{convnextv2_forward.20} parent=5 // pred_fallthru
        _
      %p136 = scmp.lt.s32.totalorder %s10, 2
      // Predicated region
      $region21: #{convnextv2_forward.20} parent=5 // pred_check
        %p137 = pneg %p136
      $region22: #{convnextv2_forward.20} parent=5 // pred_check_branch
        %139 = sbr.rel (%p137) target = $region24
      $region23: #{convnextv2_forward.20} parent=5 // pred_region
        // Predicated region
        $region25: #{convnextv2_forward.20} parent=23 // pred_check
          %p140 = pneg %p30
        $region26: #{convnextv2_forward.20} parent=23 // pred_check_branch
          %142 = sbr.rel (%p140) target = $region28
        $region27: #{convnextv2_forward.20} parent=23 // pred_region
          %p143 = scmp.lt.s32.totalorder %s10, 1
          %s144 = scalar_select %p143, %s10, 1
          %s145 = smul.addr %s144, 2
          %s146 = scalar_lea.vmem %s0, %s145
        $region28: #{convnextv2_forward.20} parent=23 // pred_fallthru
          _
      $region24: #{convnextv2_forward.20} parent=5 // pred_fallthru
        _
      %p147 = scmp.le.s32.totalorder 1, %s10
      %p148 = scmp.lt.s32.totalorder %s10, 3
      %p149 = pnand %p147, %p148
      %p150 = pneg %p149
      // Predicated region
      $region29: #{convnextv2_forward.20} parent=5 // pred_check
        _
      $region30: #{convnextv2_forward.20} parent=5 // pred_check_branch
        %152 = sbr.rel (%p149) target = $region32
      $region31: #{convnextv2_forward.20} parent=5 // pred_region
        %s153 = ssub.s32 %s10, 1
        // Predicated region
        $region33: #{convnextv2_forward.20} parent=31 // pred_check
          %p154 = pneg %p57
        $region34: #{convnextv2_forward.20} parent=31 // pred_check_branch
          %156 = sbr.rel (%p154) target = $region36
        $region35: #{convnextv2_forward.20} parent=31 // pred_region
          %158 = dma.done [#allocation4], 896
        $region36: #{convnextv2_forward.20} parent=31 // pred_fallthru
          _
        %p159 = scmp.lt.s32.totalorder %s15, 1
        %s160 = scalar_select %p159, %s15, 1
        %s161 = smul.addr %s160, 2
        %s162 = scalar_lea.vmem %s0, %s161
        %p163 = pneg %p36
        %p164 = pneg %p33
        %p165 = pneg %p57
        %p166 = pneg %p54
        %p167 = pneg %p78
        %p168 = pneg %p75
        %p169 = pneg %p104
        %p170 = pneg %p101
        %p171 = scmp.lt.s32.totalorder %s15, 1
        %s172 = scalar_select %p171, %s15, 1
        %s173 = smul.addr %s172, 2
        %s174 = scalar_lea.vmem %s3, %s173
        %p175 = scmp.lt.s32.totalorder %s15, 1
        %s176 = scalar_select %p175, %s15, 1
        %s177 = smul.addr %s176, 2
        %s178 = scalar_lea.vmem %s0, %s177
        %p179 = scmp.lt.s32.totalorder %s15, 1
        %s180 = scalar_select %p179, %s15, 1
        %s181 = smul.addr %s180, 2
        %s182 = scalar_lea.vmem %s3, %s181
        %183 = vst [vmem:[#allocation2] sm:$0xff] 0.0
        %184 = vst [vmem:[#allocation2 + $0x8] sm:$0xff] 0.0
        %185 = vst [vmem:[#allocation2 + $0x10] sm:$0xff] 0.0
        %s186 = scalar_lea.vmem [#allocation2], 40
        %187 = vst [vmem:[%s186] sm:$0xff] 0.0
        %188 = vst [vmem:[%s186 + $0x8] sm:$0xff] 0.0
        %189 = vst [vmem:[%s186 + $0x10] sm:$0xff] 0.0
        %s190 = scalar_lea.vmem [#allocation2], 24
        %191 = vst [vmem:[%s190] sm:$0x7] 0.0
        %192 = vst [vmem:[%s190 + $0x8] sm:$0x7] 0.0
        %193 = vst [vmem:[%s190 + $0x5] sm:$0x7] 0.0
        %194 = vst [vmem:[%s190 + $0xd] sm:$0x7] 0.0
        %v195 = vld [vmem:[%s178] sm:$0x1]
        %v196 = vld [vmem:[%s178 + $0x1] sm:$0x1]
        %v197 = vunpack.c.l.bf16 %v195
        %v198 = vunpack.c.l.bf16 %v196
        %199 = vst [vmem:[%s190 + $0x3] sm:$0x3] %v197
        %200 = vst [vmem:[%s190 + $0xb] sm:$0x3] %v198
        %v201 = vld [vmem:[#allocation3] sm:$0xff]
        %v202 = vld [vmem:[#allocation3 + $0x8] sm:$0xff]
        %v203 = vld [vmem:[#allocation3 + $0x10] sm:$0xff]
        %v204 = vld [vmem:[#allocation3 + $0x18] sm:$0xff]
        %v205 = vld [vmem:[#allocation3 + $0x20] sm:$0xff]
        %v206 = vld [vmem:[#allocation3 + $0x28] sm:$0xff]
        %v207 = vld [vmem:[#allocation3 + $0x30] sm:$0x1]
        %v208 = vld [vmem:[#allocation2] sm:$0x3]
        %v209 = vld [vmem:[#allocation2 + $0x8] sm:$0x3]
        %v210 = vperm.slane %v201, 0
        %v211 = vmul.f32 %v208, %v210
        %v212 = vmul.f32 %v209, %v210
        %v213 = vld [vmem:[#allocation2 + $0x1] sm:$0x3]
        %v214 = vld [vmem:[#allocation2 + $0x9] sm:$0x3]
        %v215 = vperm.slane %v201, 1
        %v216 = vmul.f32 %v213, %v215
        %v217 = vmul.f32 %v214, %v215
        %v218 = vld [vmem:[#allocation2 + $0x2] sm:$0x3]
        %v219 = vld [vmem:[#allocation2 + $0xa] sm:$0x3]
        %v220 = vperm.slane %v201, 2
        %v221 = vmul.f32 %v218, %v220
        %v222 = vmul.f32 %v219, %v220
        %v223 = vld [vmem:[#allocation2 + $0x3] sm:$0x3]
        %v224 = vld [vmem:[#allocation2 + $0xb] sm:$0x3]
        %v225 = vperm.slane %v201, 3
        %v226 = vmul.f32 %v223, %v225
        %v227 = vmul.f32 %v224, %v225
        %v228 = vld [vmem:[#allocation2 + $0x4] sm:$0x3]
        %v229 = vld [vmem:[#allocation2 + $0xc] sm:$0x3]
        %v230 = vperm.slane %v201, 4
        %v231 = vmul.f32 %v228, %v230
        %v232 = vmul.f32 %v229, %v230
        %v233 = vadd.f32 %v211, %v231
        %v234 = vadd.f32 %v212, %v232
        %v235 = vld [vmem:[#allocation2 + $0x5] sm:$0x3]
        %v236 = vld [vmem:[#allocation2 + $0xd] sm:$0x3]
        %v237 = vperm.slane %v201, 5
        %v238 = vmul.f32 %v235, %v237
        %v239 = vmul.f32 %v236, %v237
        %v240 = vadd.f32 %v216, %v238
        %v241 = vadd.f32 %v217, %v239
        %v242 = vld [vmem:[#allocation2 + $0x6] sm:$0x3]
        %v243 = vld [vmem:[#allocation2 + $0xe] sm:$0x3]
        %v244 = vperm.slane %v201, 6
        %v245 = vmul.f32 %v242, %v244
        %v246 = vmul.f32 %v243, %v244
        %v247 = vadd.f32 %v221, %v245
        %v248 = vadd.f32 %v222, %v246
        %s249 = scalar_lea.vmem [#allocation2], 8
        %v250 = vld [vmem:[%s249] sm:$0x3]
        %v251 = vld [vmem:[%s249 + $0x8] sm:$0x3]
        %v252 = vperm.slane %v201, 7
        %v253 = vmul.f32 %v250, %v252
        %v254 = vmul.f32 %v251, %v252
        %v255 = vadd.f32 %v226, %v253
        %v256 = vadd.f32 %v227, %v254
        %v257 = vld [vmem:[%s249 + $0x1] sm:$0x3]
        %v258 = vld [vmem:[%s249 + $0x9] sm:$0x3]
        %v259 = vperm.slane %v202, 0
        %v260 = vmul.f32 %v257, %v259
        %v261 = vmul.f32 %v258, %v259
        %v262 = vadd.f32 %v233, %v260
        %v263 = vadd.f32 %v234, %v261
        %v264 = vld [vmem:[%s249 + $0x2] sm:$0x3]
        %v265 = vld [vmem:[%s249 + $0xa] sm:$0x3]
        %v266 = vperm.slane %v202, 1
        %v267 = vmul.f32 %v264, %v266
        %v268 = vmul.f32 %v265, %v266
        %v269 = vadd.f32 %v240, %v267
        %v270 = vadd.f32 %v241, %v268
        %v271 = vld [vmem:[%s249 + $0x3] sm:$0x3]
        %v272 = vld [vmem:[%s249 + $0xb] sm:$0x3]
        %v273 = vperm.slane %v202, 2
        %v274 = vmul.f32 %v271, %v273
        %v275 = vmul.f32 %v272, %v273
        %v276 = vadd.f32 %v247, %v274
        %v277 = vadd.f32 %v248, %v275
        %v278 = vld [vmem:[%s249 + $0x4] sm:$0x3]
        %v279 = vld [vmem:[%s249 + $0xc] sm:$0x3]
        %v280 = vperm.slane %v202, 3
        %v281 = vmul.f32 %v278, %v280
        %v282 = vmul.f32 %v279, %v280
        %v283 = vadd.f32 %v255, %v281
        %v284 = vadd.f32 %v256, %v282
        %v285 = vld [vmem:[%s249 + $0x5] sm:$0x3]
        %v286 = vld [vmem:[%s249 + $0xd] sm:$0x3]
        %v287 = vperm.slane %v202, 4
        %v288 = vmul.f32 %v285, %v287
        %v289 = vmul.f32 %v286, %v287
        %v290 = vadd.f32 %v262, %v288
        %v291 = vadd.f32 %v263, %v289
        %v292 = vld [vmem:[%s249 + $0x6] sm:$0x3]
        %v293 = vld [vmem:[%s249 + $0xe] sm:$0x3]
        %v294 = vperm.slane %v202, 5
        %v295 = vmul.f32 %v292, %v294
        %v296 = vmul.f32 %v293, %v294
        %v297 = vadd.f32 %v269, %v295
        %v298 = vadd.f32 %v270, %v296
        %s299 = scalar_lea.vmem [#allocation2], 16
        %v300 = vld [vmem:[%s299] sm:$0x3]
        %v301 = vld [vmem:[%s299 + $0x8] sm:$0x3]
        %v302 = vperm.slane %v202, 6
        %v303 = vmul.f32 %v300, %v302
        %v304 = vmul.f32 %v301, %v302
        %v305 = vadd.f32 %v276, %v303
        %v306 = vadd.f32 %v277, %v304
        %v307 = vld [vmem:[%s299 + $0x1] sm:$0x3]
        %v308 = vld [vmem:[%s299 + $0x9] sm:$0x3]
        %v309 = vperm.slane %v202, 7
        %v310 = vmul.f32 %v307, %v309
        %v311 = vmul.f32 %v308, %v309
        %v312 = vadd.f32 %v283, %v310
        %v313 = vadd.f32 %v284, %v311
        %v314 = vld [vmem:[%s299 + $0x2] sm:$0x3]
        %v315 = vld [vmem:[%s299 + $0xa] sm:$0x3]
        %v316 = vperm.slane %v203, 0
        %v317 = vmul.f32 %v314, %v316
        %v318 = vmul.f32 %v315, %v316
        %v319 = vadd.f32 %v290, %v317
        %v320 = vadd.f32 %v291, %v318
        %v321 = vld [vmem:[%s299 + $0x3] sm:$0x3]
        %v322 = vld [vmem:[%s299 + $0xb] sm:$0x3]
        %v323 = vperm.slane %v203, 1
        %v324 = vmul.f32 %v321, %v323
        %v325 = vmul.f32 %v322, %v323
        %v326 = vadd.f32 %v297, %v324
        %v327 = vadd.f32 %v298, %v325
        %v328 = vld [vmem:[%s299 + $0x4] sm:$0x3]
        %v329 = vld [vmem:[%s299 + $0xc] sm:$0x3]
        %v330 = vperm.slane %v203, 2
        %v331 = vmul.f32 %v328, %v330
        %v332 = vmul.f32 %v329, %v330
        %v333 = vadd.f32 %v305, %v331
        %v334 = vadd.f32 %v306, %v332
        %v335 = vld [vmem:[%s299 + $0x5] sm:$0x3]
        %v336 = vld [vmem:[%s299 + $0xd] sm:$0x3]
        %v337 = vperm.slane %v203, 3
        %v338 = vmul.f32 %v335, %v337
        %v339 = vmul.f32 %v336, %v337
        %v340 = vadd.f32 %v312, %v338
        %v341 = vadd.f32 %v313, %v339
        %v342 = vld [vmem:[%s299 + $0x6] sm:$0x3]
        %v343 = vld [vmem:[%s299 + $0xe] sm:$0x3]
        %v344 = vperm.slane %v203, 4
        %v345 = vmul.f32 %v342, %v344
        %v346 = vmul.f32 %v343, %v344
        %v347 = vadd.f32 %v319, %v345
        %v348 = vadd.f32 %v320, %v346
        %v349 = vld [vmem:[%s190] sm:$0x3]
        %v350 = vld [vmem:[%s190 + $0x8] sm:$0x3]
        %v351 = vperm.slane %v203, 5
        %v352 = vmul.f32 %v349, %v351
        %v353 = vmul.f32 %v350, %v351
        %v354 = vadd.f32 %v326, %v352
        %v355 = vadd.f32 %v327, %v353
        %v356 = vld [vmem:[%s190 + $0x1] sm:$0x3]
        %v357 = vld [vmem:[%s190 + $0x9] sm:$0x3]
        %v358 = vperm.slane %v203, 6
        %v359 = vmul.f32 %v356, %v358
        %v360 = vmul.f32 %v357, %v358
        %v361 = vadd.f32 %v333, %v359
        %v362 = vadd.f32 %v334, %v360
        %v363 = vld [vmem:[%s190 + $0x2] sm:$0x3]
        %v364 = vld [vmem:[%s190 + $0xa] sm:$0x3]
        %v365 = vperm.slane %v203, 7
        %v366 = vmul.f32 %v363, %v365
        %v367 = vmul.f32 %v364, %v365
        %v368 = vadd.f32 %v340, %v366
        %v369 = vadd.f32 %v341, %v367
        %v370 = vld [vmem:[%s190 + $0x3] sm:$0x3]
        %v371 = vld [vmem:[%s190 + $0xb] sm:$0x3]
        %v372 = vperm.slane %v204, 0
        %v373 = vmul.f32 %v370, %v372
        %v374 = vmul.f32 %v371, %v372
        %v375 = vadd.f32 %v347, %v373
        %v376 = vadd.f32 %v348, %v374
        %v377 = vld [vmem:[%s190 + $0x4] sm:$0x3]
        %v378 = vld [vmem:[%s190 + $0xc] sm:$0x3]
        %v379 = vperm.slane %v204, 1
        %v380 = vmul.f32 %v377, %v379
        %v381 = vmul.f32 %v378, %v379
        %v382 = vadd.f32 %v354, %v380
        %v383 = vadd.f32 %v355, %v381
        %v384 = vld [vmem:[%s190 + $0x5] sm:$0x3]
        %v385 = vld [vmem:[%s190 + $0xd] sm:$0x3]
        %v386 = vperm.slane %v204, 2
        %v387 = vmul.f32 %v384, %v386
        %v388 = vmul.f32 %v385, %v386
        %v389 = vadd.f32 %v361, %v387
        %v390 = vadd.f32 %v362, %v388
        %v391 = vld [vmem:[%s190 + $0x6] sm:$0x3]
        %v392 = vld [vmem:[%s190 + $0xe] sm:$0x3]
        %v393 = vperm.slane %v204, 3
        %v394 = vmul.f32 %v391, %v393
        %v395 = vmul.f32 %v392, %v393
        %v396 = vadd.f32 %v368, %v394
        %v397 = vadd.f32 %v369, %v395
        %s398 = scalar_lea.vmem [#allocation2], 32
        %v399 = vld [vmem:[%s398] sm:$0x3]
        %v400 = vld [vmem:[%s398 + $0x8] sm:$0x3]
        %v401 = vperm.slane %v204, 4
        %v402 = vmul.f32 %v399, %v401
        %v403 = vmul.f32 %v400, %v401
        %v404 = vadd.f32 %v375, %v402
        %v405 = vadd.f32 %v376, %v403
        %v406 = vld [vmem:[%s398 + $0x1] sm:$0x3]
        %v407 = vld [vmem:[%s398 + $0x9] sm:$0x3]
        %v408 = vperm.slane %v204, 5
        %v409 = vmul.f32 %v406, %v408
        %v410 = vmul.f32 %v407, %v408
        %v411 = vadd.f32 %v382, %v409
        %v412 = vadd.f32 %v383, %v410
        %v413 = vld [vmem:[%s398 + $0x2] sm:$0x3]
        %v414 = vld [vmem:[%s398 + $0xa] sm:$0x3]
        %v415 = vperm.slane %v204, 6
        %v416 = vmul.f32 %v413, %v415
        %v417 = vmul.f32 %v414, %v415
        %v418 = vadd.f32 %v389, %v416
        %v419 = vadd.f32 %v390, %v417
        %v420 = vld [vmem:[%s398 + $0x3] sm:$0x3]
        %v421 = vld [vmem:[%s398 + $0xb] sm:$0x3]
        %v422 = vperm.slane %v204, 7
        %v423 = vmul.f32 %v420, %v422
        %v424 = vmul.f32 %v421, %v422
        %v425 = vadd.f32 %v396, %v423
        %v426 = vadd.f32 %v397, %v424
        %v427 = vld [vmem:[%s398 + $0x4] sm:$0x3]
        %v428 = vld [vmem:[%s398 + $0xc] sm:$0x3]
        %v429 = vperm.slane %v205, 0
        %v430 = vmul.f32 %v427, %v429
        %v431 = vmul.f32 %v428, %v429
        %v432 = vadd.f32 %v404, %v430
        %v433 = vadd.f32 %v405, %v431
        %v434 = vld [vmem:[%s398 + $0x5] sm:$0x3]
        %v435 = vld [vmem:[%s398 + $0xd] sm:$0x3]
        %v436 = vperm.slane %v205, 1
        %v437 = vmul.f32 %v434, %v436
        %v438 = vmul.f32 %v435, %v436
        %v439 = vadd.f32 %v411, %v437
        %v440 = vadd.f32 %v412, %v438
        %v441 = vld [vmem:[%s398 + $0x6] sm:$0x3]
        %v442 = vld [vmem:[%s398 + $0xe] sm:$0x3]
        %v443 = vperm.slane %v205, 2
        %v444 = vmul.f32 %v441, %v443
        %v445 = vmul.f32 %v442, %v443
        %v446 = vadd.f32 %v418, %v444
        %v447 = vadd.f32 %v419, %v445
        %v448 = vld [vmem:[%s186] sm:$0x3]
        %v449 = vld [vmem:[%s186 + $0x8] sm:$0x3]
        %v450 = vperm.slane %v205, 3
        %v451 = vmul.f32 %v448, %v450
        %v452 = vmul.f32 %v449, %v450
        %v453 = vadd.f32 %v425, %v451
        %v454 = vadd.f32 %v426, %v452
        %v455 = vld [vmem:[%s186 + $0x1] sm:$0x3]
        %v456 = vld [vmem:[%s186 + $0x9] sm:$0x3]
        %v457 = vperm.slane %v205, 4
        %v458 = vmul.f32 %v455, %v457
        %v459 = vmul.f32 %v456, %v457
        %v460 = vadd.f32 %v432, %v458
        %v461 = vadd.f32 %v433, %v459
        %v462 = vld [vmem:[%s186 + $0x2] sm:$0x3]
        %v463 = vld [vmem:[%s186 + $0xa] sm:$0x3]
        %v464 = vperm.slane %v205, 5
        %v465 = vmul.f32 %v462, %v464
        %v466 = vmul.f32 %v463, %v464
        %v467 = vadd.f32 %v439, %v465
        %v468 = vadd.f32 %v440, %v466
        %v469 = vld [vmem:[%s186 + $0x3] sm:$0x3]
        %v470 = vld [vmem:[%s186 + $0xb] sm:$0x3]
        %v471 = vperm.slane %v205, 6
        %v472 = vmul.f32 %v469, %v471
        %v473 = vmul.f32 %v470, %v471
        %v474 = vadd.f32 %v446, %v472
        %v475 = vadd.f32 %v447, %v473
        %v476 = vld [vmem:[%s186 + $0x4] sm:$0x3]
        %v477 = vld [vmem:[%s186 + $0xc] sm:$0x3]
        %v478 = vperm.slane %v205, 7
        %v479 = vmul.f32 %v476, %v478
        %v480 = vmul.f32 %v477, %v478
        %v481 = vadd.f32 %v453, %v479
        %v482 = vadd.f32 %v454, %v480
        %v483 = vld [vmem:[%s186 + $0x5] sm:$0x3]
        %v484 = vld [vmem:[%s186 + $0xd] sm:$0x3]
        %v485 = vperm.slane %v206, 0
        %v486 = vmul.f32 %v483, %v485
        %v487 = vmul.f32 %v484, %v485
        %v488 = vadd.f32 %v460, %v486
        %v489 = vadd.f32 %v461, %v487
        %v490 = vld [vmem:[%s186 + $0x6] sm:$0x3]
        %v491 = vld [vmem:[%s186 + $0xe] sm:$0x3]
        %v492 = vperm.slane %v206, 1
        %v493 = vmul.f32 %v490, %v492
        %v494 = vmul.f32 %v491, %v492
        %v495 = vadd.f32 %v467, %v493
        %v496 = vadd.f32 %v468, %v494
        %s497 = scalar_lea.vmem [#allocation2], 48
        %v498 = vld [vmem:[%s497] sm:$0x3]
        %v499 = vld [vmem:[%s497 + $0x8] sm:$0x3]
        %v500 = vperm.slane %v206, 2
        %v501 = vmul.f32 %v498, %v500
        %v502 = vmul.f32 %v499, %v500
        %v503 = vadd.f32 %v474, %v501
        %v504 = vadd.f32 %v475, %v502
        %v505 = vld [vmem:[%s497 + $0x1] sm:$0x3]
        %v506 = vld [vmem:[%s497 + $0x9] sm:$0x3]
        %v507 = vperm.slane %v206, 3
        %v508 = vmul.f32 %v505, %v507
        %v509 = vmul.f32 %v506, %v507
        %v510 = vadd.f32 %v481, %v508
        %v511 = vadd.f32 %v482, %v509
        %v512 = vld [vmem:[%s497 + $0x2] sm:$0x3]
        %v513 = vld [vmem:[%s497 + $0xa] sm:$0x3]
        %v514 = vperm.slane %v206, 4
        %v515 = vmul.f32 %v512, %v514
        %v516 = vmul.f32 %v513, %v514
        %v517 = vadd.f32 %v488, %v515
        %v518 = vadd.f32 %v489, %v516
        %v519 = vld [vmem:[%s497 + $0x3] sm:$0x3]
        %v520 = vld [vmem:[%s497 + $0xb] sm:$0x3]
        %v521 = vperm.slane %v206, 5
        %v522 = vmul.f32 %v519, %v521
        %v523 = vmul.f32 %v520, %v521
        %v524 = vadd.f32 %v495, %v522
        %v525 = vadd.f32 %v496, %v523
        %v526 = vld [vmem:[%s497 + $0x4] sm:$0x3]
        %v527 = vld [vmem:[%s497 + $0xc] sm:$0x3]
        %v528 = vperm.slane %v206, 6
        %v529 = vmul.f32 %v526, %v528
        %v530 = vmul.f32 %v527, %v528
        %v531 = vadd.f32 %v503, %v529
        %v532 = vadd.f32 %v504, %v530
        %v533 = vld [vmem:[%s497 + $0x5] sm:$0x3]
        %v534 = vld [vmem:[%s497 + $0xd] sm:$0x3]
        %v535 = vperm.slane %v206, 7
        %v536 = vmul.f32 %v533, %v535
        %v537 = vmul.f32 %v534, %v535
        %v538 = vadd.f32 %v510, %v536
        %v539 = vadd.f32 %v511, %v537
        %v540 = vld [vmem:[%s497 + $0x6] sm:$0x3]
        %v541 = vld [vmem:[%s497 + $0xe] sm:$0x3]
        %v542 = vperm.slane %v207, 0
        %v543 = vmul.f32 %v540, %v542
        %v544 = vmul.f32 %v541, %v542
        %v545 = vadd.f32 %v517, %v543
        %v546 = vadd.f32 %v518, %v544
        %v547 = vadd.f32 %v545, %v524
        %v548 = vadd.f32 %v546, %v525
        %v549 = vadd.f32 %v531, %v538
        %v550 = vadd.f32 %v532, %v539
        %v551 = vadd.f32 %v547, %v549
        %v552 = vadd.f32 %v548, %v550
        %v553 = vld [vmem:[%s2] sm:$0x1]
        %v555 = vperm.slane %v553, 0
        %v557 = vadd.f32 %v551, %v555
        %v558 = vadd.f32 %v552, %v555
        %v559 = vpack.c.bf16 %v557, %v557
        %v560 = vpack.c.bf16 %v558, %v558
        %561 = vst [vmem:[%s182] sm:$0x1] %v559
        %562 = vst [vmem:[%s182 + $0x1] sm:$0x1] %v560
        %p563 = scmp.lt.s32.totalorder %s15, 1
        %s564 = scalar_select %p563, %s15, 1
        %s565 = smul.addr %s564, 2
        %s566 = scalar_lea.vmem %s3, %s565
        // Predicated region
        $region37: #{convnextv2_forward.20} parent=31 // pred_check
          %p567 = pneg %p101
        $region38: #{convnextv2_forward.20} parent=31 // pred_check_branch
          %569 = sbr.rel (%p567) target = $region40
        $region39: #{convnextv2_forward.20} parent=31 // pred_region
          _
        $region40: #{convnextv2_forward.20} parent=31 // pred_fallthru
          _
      $region32: #{convnextv2_forward.20} parent=5 // pred_fallthru
        _
      %p570 = scmp.le.s32.totalorder 2, %s10
      // Predicated region
      $region41: #{convnextv2_forward.20} parent=5 // pred_check
        %p571 = pneg %p570
      $region42: #{convnextv2_forward.20} parent=5 // pred_check_branch
        %573 = sbr.rel (%p571) target = $region44
      $region43: #{convnextv2_forward.20} parent=5 // pred_region
        %s574 = ssub.s32 %s10, 2
        // Predicated region
        $region45: #{convnextv2_forward.20} parent=43 // pred_check
          %p575 = pneg %p107
        $region46: #{convnextv2_forward.20} parent=43 // pred_check_branch
          %577 = sbr.rel (%p575) target = $region48
        $region47: #{convnextv2_forward.20} parent=43 // pred_region
          %p578 = scmp.lt.s32.totalorder %s16, 1
          %s579 = scalar_select %p578, %s16, 1
          %s580 = smul.addr %s579, 2
          %s581 = scalar_lea.vmem %s3, %s580
        $region48: #{convnextv2_forward.20} parent=43 // pred_fallthru
          _
      $region44: #{convnextv2_forward.20} parent=5 // pred_fallthru
        _
    $region6: #{convnextv2_forward.20} parent=1 // loop_footer
      %s14 = sadd.s32 1, %s10
    $region7: #{convnextv2_forward.20} parent=1 // loop_footer_branch
      %9 = sbr.rel target = $region3
    $region8: #{convnextv2_forward.20} parent=1 // loop_exit
      _
    %582 = vsyncpa [#allocation4], 1
    %s583 = scalar_lea.sflag [#allocation4], 1
    %584 = vsyncpa %s583, 1

// kernel: convnextv2_forward.23
$region0: #{convnextv2_forward.23}
  #allocation0 [shape = 'u32[]', space=smem, size = 0x4, offset = 0x4, fixed_abs, tag = 'smem constant byte address 0x4 - core index']
  #allocation1 [shape = 'u32[72,128]{1,0:T(1,128)}', space=vmem, size = 0x9000, scoped, tag = 'internal scratch']
  #allocation2 [shape = 'f32[1,256]{1,0:T(1,128)}', space=vmem, size = 0x400, scoped, tag = 'scratch operand']
  #allocation3 [shape = 'bf16[4,256]{1,0:T(4,128)(2,1)}', space=vmem, size = 0x800, scoped, tag = 'scratch operand']
  %s0 = inlined_call_operand.vmem [shape: bf16[2,4,128], index: 0, kind: input, shape index: {}]
  %s1 = inlined_call_operand.vmem [shape: bf16[2,4,128], index: 1, kind: input, shape index: {}]
  %s2 = inlined_call_operand.hbm [shape: f32[1,128], index: 2, kind: input, shape index: {}]
  %s3 = inlined_call_operand.hbm [shape: f32[1,128], index: 3, kind: input, shape index: {}]
  %s4 = inlined_call_operand.vmem [shape: bf16[128,256], index: 4, kind: input, shape index: {}]
  %s5 = inlined_call_operand.vmem [shape: f32[1,256], index: 5, kind: input, shape index: {}]
  %s6 = inlined_call_operand.vmem [shape: f32[1,256], index: 6, kind: input, shape index: {}]
  %s7 = inlined_call_operand.vmem [shape: f32[1,256], index: 7, kind: input, shape index: {}]
  %s8 = inlined_call_operand.vmem [shape: bf16[256,128], index: 8, kind: input, shape index: {}]
  %s9 = inlined_call_operand.hbm [shape: f32[1,128], index: 9, kind: input, shape index: {}]
  %s10 = inlined_call_operand.vmem [shape: bf16[2,4,128], index: 10, kind: output, shape index: {}]
  %s11 = sld [smem:[#allocation0]]
  $region97: #{convnextv2_forward.23} parent=0
    _
  %s13 = ssub.s32 1, %s11
  %s14 = scalar_select 0, %s13, %s11
  $region1: #{convnextv2_forward.23} parent=0
    #allocation4 [shape = 'u8[512]{0}', space=vmem, size = 0x400, scoped, tag = 'input window, operand 2, single buffered']
    #allocation5 [shape = 's32[2]{0}', space=sflag, size = 0x8, scoped, tag = 'scoped memory for convnextv2_forward.23']
    #allocation6 [shape = 'u8[512]{0}', space=vmem, size = 0x400, scoped, tag = 'input window, operand 3, single buffered']
    #allocation7 [shape = 's32[1]{0}', space=sflag, size = 0x4, scoped, tag = 'scoped memory for convnextv2_forward.23']
    #allocation8 [shape = 'u8[512]{0}', space=vmem, size = 0x400, scoped, tag = 'input window, operand 9, single buffered']
    %15 = vsyncpa [#allocation5], 0
    %16 = vsyncpa [#allocation7], 0
    loop: start=0, step=1, limit=6
    $region2: #{convnextv2_forward.23} parent=1 // loop_pre_header
      _
    $region3: #{convnextv2_forward.23} parent=1 // loop_header
      %s18 = sphi 0, %s22
      %p19 = scmp.ge.s32.totalorder %s18, 6
      %s25 = sphi 0, %s44
      %s26 = sphi 0, %s40
      %s27 = sphi 0, %s36
      %s28 = sphi 0, %s25
      %s29 = sphi 0, %s26
      %s30 = sphi 0, %s27
      %s31 = sphi 0, %s28
      %s32 = sphi 0, %s29
      %s33 = sphi 0, %s30
      %s49 = sphi 0, %s51
      %s52 = sphi 0, %s49
      %s53 = sphi 0, %s52
      %s69 = sphi 0, %s53
      %s77 = sphi 0, %s79
      %s80 = sphi 0, %s77
      %s81 = sphi 0, %s80
      %s97 = sphi 0, %s81
      %s101 = sphi 0, %s101
      %s103 = sphi 0, %s101
      %s104 = sphi 0, %s103
      %s118 = sphi 0, %s104
      %s122 = sphi 0, %s122
      %s124 = sphi 0, %s122
      %s125 = sphi 0, %s124
      %s139 = sphi 0, %s125
      %s143 = sphi 0, %s143
      %s145 = sphi 0, %s143
      %s146 = sphi 0, %s145
      %s160 = sphi 0, %s146
      %s164 = sphi 0, %s164
      %s166 = sphi 0, %s164
      %s167 = sphi 0, %s166
      %s181 = sphi 0, %s167
      %s185 = sphi 0, %s185
      %s187 = sphi 0, %s185
      %s188 = sphi 0, %s187
      %s202 = sphi 0, %s188
      %s206 = sphi 0, %s206
      %s208 = sphi 0, %s206
      %s209 = sphi 0, %s208
      %s223 = sphi 0, %s209
      %s227 = sphi 0, %s227
      %s229 = sphi 0, %s227
      %s230 = sphi 0, %s229
      %s244 = sphi 0, %s230
      %s248 = sphi 0, %s248
      %s250 = sphi 0, %s248
      %s251 = sphi 0, %s250
      %s265 = sphi 0, %s251
      %s275 = sphi 0, %s277
      %s278 = sphi 0, %s275
      %s279 = sphi 0, %s278
      %s295 = sphi 0, %s279
    $region4: #{convnextv2_forward.23} parent=1 // loop_header_branch
      %21 = sbr.rel (%p19) target = $region8
    $region5: #{convnextv2_forward.23} parent=1 // loop_body
      %s23 = ssub.s32 %s18, 1
      %s24 = ssub.s32 %s18, 2
      %s34 = sadd.s32 1, %s27
      %p35 = scmp.ge.s32.totalorder %s34, 1
      %s36 = scalar_select %p35, 0, %s34
      %s37 = sadd.s32 1, %s26
      %s38 = scalar_select %p35, %s37, %s26
      %p39 = scmp.ge.s32.totalorder %s38, 2
      %s40 = scalar_select %p39, 0, %s38
      %s41 = sadd.s32 1, %s25
      %s42 = scalar_select %p39, %s41, %s25
      %p43 = scmp.ge.s32.totalorder %s42, 2
      %s44 = scalar_select %p43, 0, %s42
      %s45 = ssub.s32 %s25, %s44
      %s46 = ssub.s32 %s27, %s36
      %s47 = sor.u32 %s45, %s46
      %p48 = scmp.eq.s32.totalorder %s47, 0
      %s50 = sadd.s32 %s49, 1
      %s51 = scalar_select %p48, %s49, %s50
      %p54 = pneg %p48
      %p55 = scmp.eq.s32.totalorder %s18, 3
      %p56 = por %p54, %p55
      %p57 = scmp.ne.s32.totalorder %s49, %s52
      %p58 = scmp.eq.s32.totalorder %s18, 0
      %p59 = por %p57, %p58
      %p60 = scmp.ne.s32.totalorder %s49, %s52
      %p61 = scmp.eq.s32.totalorder %s23, 3
      %p62 = por %p60, %p61
      %p63 = scmp.ne.s32.totalorder %s52, %s53
      %p64 = scmp.eq.s32.totalorder %s23, 0
      %p65 = por %p63, %p64
      %p66 = scmp.ne.s32.totalorder %s52, %s53
      %p67 = scmp.eq.s32.totalorder %s24, 3
      %p68 = por %p66, %p67
      %p70 = scmp.ne.s32.totalorder %s53, %s69
      %p71 = scmp.eq.s32.totalorder %s24, 0
      %p72 = por %p70, %p71
      %s73 = ssub.s32 %s25, %s44
      %s74 = ssub.s32 %s27, %s36
      %s75 = sor.u32 %s73, %s74
      %p76 = scmp.eq.s32.totalorder %s75, 0
      %s78 = sadd.s32 %s77, 1
      %s79 = scalar_select %p76, %s77, %s78
      %p82 = pneg %p76
      %p83 = scmp.eq.s32.totalorder %s18, 3
      %p84 = por %p82, %p83
      %p85 = scmp.ne.s32.totalorder %s77, %s80
      %p86 = scmp.eq.s32.totalorder %s18, 0
      %p87 = por %p85, %p86
      %p88 = scmp.ne.s32.totalorder %s77, %s80
      %p89 = scmp.eq.s32.totalorder %s23, 3
      %p90 = por %p88, %p89
      %p91 = scmp.ne.s32.totalorder %s80, %s81
      %p92 = scmp.eq.s32.totalorder %s23, 0
      %p93 = por %p91, %p92
      %p94 = scmp.ne.s32.totalorder %s80, %s81
      %p95 = scmp.eq.s32.totalorder %s24, 3
      %p96 = por %p94, %p95
      %p98 = scmp.ne.s32.totalorder %s81, %s97
      %p99 = scmp.eq.s32.totalorder %s24, 0
      %p100 = por %p98, %p99
      %s102 = sadd.s32 %s101, 1
      %p105 = scmp.eq.s32.totalorder %s18, 3
      %p106 = scmp.ne.s32.totalorder %s101, %s103
      %p107 = scmp.eq.s32.totalorder %s18, 0
      %p108 = por %p106, %p107
      %p109 = scmp.ne.s32.totalorder %s101, %s103
      %p110 = scmp.eq.s32.totalorder %s23, 3
      %p111 = por %p109, %p110
      %p112 = scmp.ne.s32.totalorder %s103, %s104
      %p113 = scmp.eq.s32.totalorder %s23, 0
      %p114 = por %p112, %p113
      %p115 = scmp.ne.s32.totalorder %s103, %s104
      %p116 = scmp.eq.s32.totalorder %s24, 3
      %p117 = por %p115, %p116
      %p119 = scmp.ne.s32.totalorder %s104, %s118
      %p120 = scmp.eq.s32.totalorder %s24, 0
      %p121 = por %p119, %p120
      %s123 = sadd.s32 %s122, 1
      %p126 = scmp.eq.s32.totalorder %s18, 3
      %p127 = scmp.ne.s32.totalorder %s122, %s124
      %p128 = scmp.eq.s32.totalorder %s18, 0
      %p129 = por %p127, %p128
      %p130 = scmp.ne.s32.totalorder %s122, %s124
      %p131 = scmp.eq.s32.totalorder %s23, 3
      %p132 = por %p130, %p131
      %p133 = scmp.ne.s32.totalorder %s124, %s125
      %p134 = scmp.eq.s32.totalorder %s23, 0
      %p135 = por %p133, %p134
      %p136 = scmp.ne.s32.totalorder %s124, %s125
      %p137 = scmp.eq.s32.totalorder %s24, 3
      %p138 = por %p136, %p137
      %p140 = scmp.ne.s32.totalorder %s125, %s139
      %p141 = scmp.eq.s32.totalorder %s24, 0
      %p142 = por %p140, %p141
      %s144 = sadd.s32 %s143, 1
      %p147 = scmp.eq.s32.totalorder %s18, 3
      %p148 = scmp.ne.s32.totalorder %s143, %s145
      %p149 = scmp.eq.s32.totalorder %s18, 0
      %p150 = por %p148, %p149
      %p151 = scmp.ne.s32.totalorder %s143, %s145
      %p152 = scmp.eq.s32.totalorder %s23, 3
      %p153 = por %p151, %p152
      %p154 = scmp.ne.s32.totalorder %s145, %s146
      %p155 = scmp.eq.s32.totalorder %s23, 0
      %p156 = por %p154, %p155
      %p157 = scmp.ne.s32.totalorder %s145, %s146
      %p158 = scmp.eq.s32.totalorder %s24, 3
      %p159 = por %p157, %p158
      %p161 = scmp.ne.s32.totalorder %s146, %s160
      %p162 = scmp.eq.s32.totalorder %s24, 0
      %p163 = por %p161, %p162
      %s165 = sadd.s32 %s164, 1
      %p168 = scmp.eq.s32.totalorder %s18, 3
      %p169 = scmp.ne.s32.totalorder %s164, %s166
      %p170 = scmp.eq.s32.totalorder %s18, 0
      %p171 = por %p169, %p170
      %p172 = scmp.ne.s32.totalorder %s164, %s166
      %p173 = scmp.eq.s32.totalorder %s23, 3
      %p174 = por %p172, %p173
      %p175 = scmp.ne.s32.totalorder %s166, %s167
      %p176 = scmp.eq.s32.totalorder %s23, 0
      %p177 = por %p175, %p176
      %p178 = scmp.ne.s32.totalorder %s166, %s167
      %p179 = scmp.eq.s32.totalorder %s24, 3
      %p180 = por %p178, %p179
      %p182 = scmp.ne.s32.totalorder %s167, %s181
      %p183 = scmp.eq.s32.totalorder %s24, 0
      %p184 = por %p182, %p183
      %s186 = sadd.s32 %s185, 1
      %p189 = scmp.eq.s32.totalorder %s18, 3
      %p190 = scmp.ne.s32.totalorder %s185, %s187
      %p191 = scmp.eq.s32.totalorder %s18, 0
      %p192 = por %p190, %p191
      %p193 = scmp.ne.s32.totalorder %s185, %s187
      %p194 = scmp.eq.s32.totalorder %s23, 3
      %p195 = por %p193, %p194
      %p196 = scmp.ne.s32.totalorder %s187, %s188
      %p197 = scmp.eq.s32.totalorder %s23, 0
      %p198 = por %p196, %p197
      %p199 = scmp.ne.s32.totalorder %s187, %s188
      %p200 = scmp.eq.s32.totalorder %s24, 3
      %p201 = por %p199, %p200
      %p203 = scmp.ne.s32.totalorder %s188, %s202
      %p204 = scmp.eq.s32.totalorder %s24, 0
      %p205 = por %p203, %p204
      %s207 = sadd.s32 %s206, 1
      %p210 = scmp.eq.s32.totalorder %s18, 3
      %p211 = scmp.ne.s32.totalorder %s206, %s208
      %p212 = scmp.eq.s32.totalorder %s18, 0
      %p213 = por %p211, %p212
      %p214 = scmp.ne.s32.totalorder %s206, %s208
      %p215 = scmp.eq.s32.totalorder %s23, 3
      %p216 = por %p214, %p215
      %p217 = scmp.ne.s32.totalorder %s208, %s209
      %p218 = scmp.eq.s32.totalorder %s23, 0
      %p219 = por %p217, %p218
      %p220 = scmp.ne.s32.totalorder %s208, %s209
      %p221 = scmp.eq.s32.totalorder %s24, 3
      %p222 = por %p220, %p221
      %p224 = scmp.ne.s32.totalorder %s209, %s223
      %p225 = scmp.eq.s32.totalorder %s24, 0
      %p226 = por %p224, %p225
      %s228 = sadd.s32 %s227, 1
      %p231 = scmp.eq.s32.totalorder %s18, 3
      %p232 = scmp.ne.s32.totalorder %s227, %s229
      %p233 = scmp.eq.s32.totalorder %s18, 0
      %p234 = por %p232, %p233
      %p235 = scmp.ne.s32.totalorder %s227, %s229
      %p236 = scmp.eq.s32.totalorder %s23, 3
      %p237 = por %p235, %p236
      %p238 = scmp.ne.s32.totalorder %s229, %s230
      %p239 = scmp.eq.s32.totalorder %s23, 0
      %p240 = por %p238, %p239
      %p241 = scmp.ne.s32.totalorder %s229, %s230
      %p242 = scmp.eq.s32.totalorder %s24, 3
      %p243 = por %p241, %p242
      %p245 = scmp.ne.s32.totalorder %s230, %s244
      %p246 = scmp.eq.s32.totalorder %s24, 0
      %p247 = por %p245, %p246
      %s249 = sadd.s32 %s248, 1
      %p252 = scmp.eq.s32.totalorder %s18, 3
      %p253 = scmp.ne.s32.totalorder %s248, %s250
      %p254 = scmp.eq.s32.totalorder %s18, 0
      %p255 = por %p253, %p254
      %p256 = scmp.ne.s32.totalorder %s248, %s250
      %p257 = scmp.eq.s32.totalorder %s23, 3
      %p258 = por %p256, %p257
      %p259 = scmp.ne.s32.totalorder %s250, %s251
      %p260 = scmp.eq.s32.totalorder %s23, 0
      %p261 = por %p259, %p260
      %p262 = scmp.ne.s32.totalorder %s250, %s251
      %p263 = scmp.eq.s32.totalorder %s24, 3
      %p264 = por %p262, %p263
      %p266 = scmp.ne.s32.totalorder %s251, %s265
      %p267 = scmp.eq.s32.totalorder %s24, 0
      %p268 = por %p266, %p267
      %s269 = smul.u32 %s26, %s27
      %s270 = smul.u32 %s40, %s36
      %s271 = ssub.s32 %s25, %s44
      %s272 = ssub.s32 %s269, %s270
      %s273 = sor.u32 %s271, %s272
      %p274 = scmp.eq.s32.totalorder %s273, 0
      %s276 = sadd.s32 %s275, 1
      %s277 = scalar_select %p274, %s275, %s276
      %p280 = pneg %p274
      %p281 = scmp.eq.s32.totalorder %s18, 3
      %p282 = por %p280, %p281
      %p283 = scmp.ne.s32.totalorder %s275, %s278
      %p284 = scmp.eq.s32.totalorder %s18, 0
      %p285 = por %p283, %p284
      %p286 = scmp.ne.s32.totalorder %s275, %s278
      %p287 = scmp.eq.s32.totalorder %s23, 3
      %p288 = por %p286, %p287
      %p289 = scmp.ne.s32.totalorder %s278, %s279
      %p290 = scmp.eq.s32.totalorder %s23, 0
      %p291 = por %p289, %p290
      %p292 = scmp.ne.s32.totalorder %s278, %s279
      %p293 = scmp.eq.s32.totalorder %s24, 3
      %p294 = por %p292, %p293
      %p296 = scmp.ne.s32.totalorder %s279, %s295
      %p297 = scmp.eq.s32.totalorder %s24, 0
      %p298 = por %p296, %p297
      %p299 = scmp.le.s32.totalorder 1, %s18
      %p300 = scmp.lt.s32.totalorder %s18, 5
      %p301 = pnand %p299, %p300
      %p302 = pneg %p301
      // Predicated region
      $region9: #{convnextv2_forward.23} parent=5 // pred_check
        _
      $region10: #{convnextv2_forward.23} parent=5 // pred_check_branch
        %304 = sbr.rel (%p301) target = $region12
      $region11: #{convnextv2_forward.23} parent=5 // pred_region
        %s305 = ssub.s32 %s18, 1
        // Predicated region
        $region13: #{convnextv2_forward.23} parent=11 // pred_check
          %p306 = pneg %p114
        $region14: #{convnextv2_forward.23} parent=11 // pred_check_branch
          %308 = sbr.rel (%p306) target = $region16
        $region15: #{convnextv2_forward.23} parent=11 // pred_region
          %310 = vsyncadd [#allocation5], 0
          %s312 = sshll.u32 %s2, 4
          %s313 = int_to_ptr.hbm [resolvable:$true] %s312
          %s314 = sshll.u32 [#allocation4], 4
          %s315 = int_to_ptr.vmem [resolvable:$true] %s314
          %317 = dma.hbm_to_vmem [thread:$0]  %s313, 16, %s315, [#allocation5]
        $region16: #{convnextv2_forward.23} parent=11 // pred_fallthru
          _
        // Predicated region
        $region17: #{convnextv2_forward.23} parent=11 // pred_check
          %p318 = pneg %p135
        $region18: #{convnextv2_forward.23} parent=11 // pred_check_branch
          %320 = sbr.rel (%p318) target = $region20
        $region19: #{convnextv2_forward.23} parent=11 // pred_region
          %322 = vsyncadd [#allocation7], 0
          %s324 = sshll.u32 %s3, 4
          %s325 = int_to_ptr.hbm [resolvable:$true] %s324
          %s326 = sshll.u32 [#allocation6], 4
          %s327 = int_to_ptr.vmem [resolvable:$true] %s326
          %329 = dma.hbm_to_vmem [thread:$0]  %s325, 16, %s327, [#allocation7]
        $region20: #{convnextv2_forward.23} parent=11 // pred_fallthru
          _
        // Predicated region
        $region21: #{convnextv2_forward.23} parent=11 // pred_check
          %p330 = pneg %p156
        $region22: #{convnextv2_forward.23} parent=11 // pred_check_branch
          %332 = sbr.rel (%p330) target = $region24
        $region23: #{convnextv2_forward.23} parent=11 // pred_region
          _
        $region24: #{convnextv2_forward.23} parent=11 // pred_fallthru
          _
        // Predicated region
        $region25: #{convnextv2_forward.23} parent=11 // pred_check
          %p333 = pneg %p177
        $region26: #{convnextv2_forward.23} parent=11 // pred_check_branch
          %335 = sbr.rel (%p333) target = $region28
        $region27: #{convnextv2_forward.23} parent=11 // pred_region
          _
        $region28: #{convnextv2_forward.23} parent=11 // pred_fallthru
          _
        // Predicated region
        $region29: #{convnextv2_forward.23} parent=11 // pred_check
          %p336 = pneg %p198
        $region30: #{convnextv2_forward.23} parent=11 // pred_check_branch
          %338 = sbr.rel (%p336) target = $region32
        $region31: #{convnextv2_forward.23} parent=11 // pred_region
          _
        $region32: #{convnextv2_forward.23} parent=11 // pred_fallthru
          _
        // Predicated region
        $region33: #{convnextv2_forward.23} parent=11 // pred_check
          %p339 = pneg %p219
        $region34: #{convnextv2_forward.23} parent=11 // pred_check_branch
          %341 = sbr.rel (%p339) target = $region36
        $region35: #{convnextv2_forward.23} parent=11 // pred_region
          _
        $region36: #{convnextv2_forward.23} parent=11 // pred_fallthru
          _
        // Predicated region
        $region37: #{convnextv2_forward.23} parent=11 // pred_check
          %p342 = pneg %p240
        $region38: #{convnextv2_forward.23} parent=11 // pred_check_branch
          %344 = sbr.rel (%p342) target = $region40
        $region39: #{convnextv2_forward.23} parent=11 // pred_region
          _
        $region40: #{convnextv2_forward.23} parent=11 // pred_fallthru
          _
        // Predicated region
        $region41: #{convnextv2_forward.23} parent=11 // pred_check
          %p345 = pneg %p261
        $region42: #{convnextv2_forward.23} parent=11 // pred_check_branch
          %347 = sbr.rel (%p345) target = $region44
        $region43: #{convnextv2_forward.23} parent=11 // pred_region
          %349 = vsyncadd [#allocation7], 0
          %s351 = sshll.u32 %s9, 4
          %s352 = int_to_ptr.hbm [resolvable:$true] %s351
          %s353 = sshll.u32 [#allocation8], 4
          %s354 = int_to_ptr.vmem [resolvable:$true] %s353
          %356 = dma.hbm_to_vmem [thread:$0]  %s352, 16, %s354, [#allocation7]
        $region44: #{convnextv2_forward.23} parent=11 // pred_fallthru
          _
      $region12: #{convnextv2_forward.23} parent=5 // pred_fallthru
        _
      %p357 = scmp.lt.s32.totalorder %s18, 4
      // Predicated region
      $region45: #{convnextv2_forward.23} parent=5 // pred_check
        %p358 = pneg %p357
      $region46: #{convnextv2_forward.23} parent=5 // pred_check_branch
        %360 = sbr.rel (%p358) target = $region48
      $region47: #{convnextv2_forward.23} parent=5 // pred_region
        // Predicated region
        $region49: #{convnextv2_forward.23} parent=47 // pred_check
          %p361 = pneg %p59
        $region50: #{convnextv2_forward.23} parent=47 // pred_check_branch
          %363 = sbr.rel (%p361) target = $region52
        $region51: #{convnextv2_forward.23} parent=47 // pred_region
          %p364 = scmp.lt.s32.totalorder %s25, 1
          %s365 = scalar_select %p364, %s25, 1
          %p366 = scmp.lt.s32.totalorder %s27, 0
          %s367 = scalar_select %p366, %s27, 0
          %s368 = sadd.s32 %s367, %s365
          %s369 = smul.addr %s368, 2
          %s370 = scalar_lea.vmem %s0, %s369
        $region52: #{convnextv2_forward.23} parent=47 // pred_fallthru
          _
        // Predicated region
        $region53: #{convnextv2_forward.23} parent=47 // pred_check
          %p371 = pneg %p87
        $region54: #{convnextv2_forward.23} parent=47 // pred_check_branch
          %373 = sbr.rel (%p371) target = $region56
        $region55: #{convnextv2_forward.23} parent=47 // pred_region
          %p374 = scmp.lt.s32.totalorder %s25, 1
          %s375 = scalar_select %p374, %s25, 1
          %p376 = scmp.lt.s32.totalorder %s27, 0
          %s377 = scalar_select %p376, %s27, 0
          %s378 = sadd.s32 %s377, %s375
          %s379 = smul.addr %s378, 2
          %s380 = scalar_lea.vmem %s1, %s379
        $region56: #{convnextv2_forward.23} parent=47 // pred_fallthru
          _
      $region48: #{convnextv2_forward.23} parent=5 // pred_fallthru
        _
      %p381 = scmp.le.s32.totalorder 1, %s18
      %p382 = scmp.lt.s32.totalorder %s18, 5
      %p383 = pnand %p381, %p382
      %p384 = pneg %p383
      // Predicated region
      $region57: #{convnextv2_forward.23} parent=5 // pred_check
        _
      $region58: #{convnextv2_forward.23} parent=5 // pred_check_branch
        %386 = sbr.rel (%p383) target = $region60
      $region59: #{convnextv2_forward.23} parent=5 // pred_region
        %s387 = ssub.s32 %s18, 1
        // Predicated region
        $region61: #{convnextv2_forward.23} parent=59 // pred_check
          %p388 = pneg %p114
        $region62: #{convnextv2_forward.23} parent=59 // pred_check_branch
          %390 = sbr.rel (%p388) target = $region64
        $region63: #{convnextv2_forward.23} parent=59 // pred_region
          %392 = dma.done [#allocation5], 16
        $region64: #{convnextv2_forward.23} parent=59 // pred_fallthru
          _
        // Predicated region
        $region65: #{convnextv2_forward.23} parent=59 // pred_check
          %p393 = pneg %p135
        $region66: #{convnextv2_forward.23} parent=59 // pred_check_branch
          %395 = sbr.rel (%p393) target = $region68
        $region67: #{convnextv2_forward.23} parent=59 // pred_region
          %397 = dma.done [#allocation7], 16
        $region68: #{convnextv2_forward.23} parent=59 // pred_fallthru
          _
        // Predicated region
        $region69: #{convnextv2_forward.23} parent=59 // pred_check
          %p398 = pneg %p261
        $region70: #{convnextv2_forward.23} parent=59 // pred_check_branch
          %400 = sbr.rel (%p398) target = $region72
        $region71: #{convnextv2_forward.23} parent=59 // pred_region
          %402 = dma.done [#allocation7], 16
        $region72: #{convnextv2_forward.23} parent=59 // pred_fallthru
          _
        %p403 = scmp.lt.s32.totalorder %s28, 1
        %s404 = scalar_select %p403, %s28, 1
        %p405 = scmp.lt.s32.totalorder %s30, 0
        %s406 = scalar_select %p405, %s30, 0
        %s407 = sadd.s32 %s406, %s404
        %s408 = smul.addr %s407, 2
        %s409 = scalar_lea.vmem %s0, %s408
        %p410 = pneg %p65
        %p411 = pneg %p62
        %p412 = scmp.lt.s32.totalorder %s28, 1
        %s413 = scalar_select %p412, %s28, 1
        %p414 = scmp.lt.s32.totalorder %s30, 0
        %s415 = scalar_select %p414, %s30, 0
        %s416 = sadd.s32 %s415, %s413
        %s417 = smul.addr %s416, 2
        %s418 = scalar_lea.vmem %s1, %s417
        %p419 = pneg %p93
        %p420 = pneg %p90
        %p421 = pneg %p114
        %p422 = pneg %p111
        %p423 = pneg %p135
        %p424 = pneg %p132
        %p425 = pneg %p156
        %p426 = pneg %p153
        %p427 = pneg %p177
        %p428 = pneg %p174
        %p429 = pneg %p198
        %p430 = pneg %p195
        %p431 = pneg %p219
        %p432 = pneg %p216
        %p433 = pneg %p240
        %p434 = pneg %p237
        %p435 = pneg %p261
        %p436 = pneg %p258
        %p437 = pneg %p291
        %p438 = pneg %p288
        %s439 = smul.u32 %s29, %s30
        %p440 = scmp.lt.s32.totalorder %s28, 1
        %s441 = scalar_select %p440, %s28, 1
        %p442 = scmp.lt.s32.totalorder %s439, 0
        %s443 = scalar_select %p442, %s439, 0
        %s444 = sadd.s32 %s443, %s441
        %s445 = smul.addr %s444, 2
        %s446 = scalar_lea.vmem %s10, %s445
        %p447 = scmp.lt.s32.totalorder %s28, 1
        %s448 = scalar_select %p447, %s28, 1
        %p449 = scmp.lt.s32.totalorder %s30, 0
        %s450 = scalar_select %p449, %s30, 0
        %s451 = sadd.s32 %s450, %s448
        %s452 = smul.addr %s451, 2
        %s453 = scalar_lea.vmem %s0, %s452
        %p454 = scmp.lt.s32.totalorder %s28, 1
        %s455 = scalar_select %p454, %s28, 1
        %p456 = scmp.lt.s32.totalorder %s30, 0
        %s457 = scalar_select %p456, %s30, 0
        %s458 = sadd.s32 %s457, %s455
        %s459 = smul.addr %s458, 2
        %s460 = scalar_lea.vmem %s1, %s459
        %s461 = smul.u32 %s29, %s30
        %p462 = scmp.lt.s32.totalorder %s28, 1
        %s463 = scalar_select %p462, %s28, 1
        %p464 = scmp.lt.s32.totalorder %s461, 0
        %s465 = scalar_select %p464, %s461, 0
        %s466 = sadd.s32 %s465, %s463
        %s467 = smul.addr %s466, 2
        %s468 = scalar_lea.vmem %s10, %s467
        %s469 = smul.u32 %s29, %s30
        %s470 = smul.u32 %s30, 4
        %p471 = scmp.eq.s32.totalorder %s29, 0
        // Predicated region
        $region73: #{convnextv2_forward.23} parent=59 // pred_check
          %p472 = pneg %p471
        $region74: #{convnextv2_forward.23} parent=59 // pred_check_branch
          %474 = sbr.rel (%p472) target = $region76
        $region75: #{convnextv2_forward.23} parent=59 // pred_region
          %p475 = scmp.eq.s32.totalorder %s30, 0
          // Predicated region
          $region77: #{convnextv2_forward.23} parent=75 // pred_check
            %p476 = pneg %p475
          $region78: #{convnextv2_forward.23} parent=75 // pred_check_branch
            %478 = sbr.rel (%p476) target = $region80
          $region79: #{convnextv2_forward.23} parent=75 // pred_region
            %v479 = vlaneseq
            %vm480 = vcmp.ge.s32.totalorder %v479, 0
            %vm481 = vcmp.lt.s32.totalorder %v479, 256
            %vm482 = vmand %vm480, %vm481
            %483 = vst.msk [vmem:[#allocation2] sm:$0x3] %vm482, 0.0
          $region80: #{convnextv2_forward.23} parent=75 // pred_fallthru
            _
          %v484 = vld [vmem:[%s453] sm:$0x3]
          %v485 = vunpack.c.l.bf16 %v484
          %vm486 = vcmask 1043456
          %v487 = vsel %vm486, %v485, 0.0
          %488 = vadd.xlane.f32.xlu0 %v487
          %v489 = vpop.xlane.xlu0 %488
          %v490 = vmul.f32 %v489, 0.015625
          %v491 = vmul.f32 %v485, %v485
          %v492 = vsel %vm486, %v491, 0.0
          %493 = vadd.xlane.f32.xlu0 %v492
          %v494 = vpop.xlane.xlu0 %493
          %v495 = vmul.f32 %v494, 0.015625
          %v496 = vmul.f32 %v490, %v490
          %v497 = vsub.f32 %v495, %v496
          %v498 = vmax.f32 %v497, 0.0
          %v499 = vsub.f32 %v485, %v490
          %v500 = vadd.f32 %v498, 1e-06
          %v501 = vrsqrt.pop %v500
          %v502 = vmul.f32 %v501, %v500
          %v503 = vmul.f32 %v502, %v501
          %v504 = vmul.f32 0.5, %v503
          %v505 = vsub.f32 1.5, %v504
          %v506 = vmul.f32 %v501, %v505
          %vm507 = vweird.f32 %v500
          %vm508 = vweird.f32 %v501
          %vm509 = vmor %vm507, %vm508
          %v510 = vsel %vm509, %v501, %v506
          %v511 = vmul.f32 %v499, %v510
          %v512 = vld [vmem:[#allocation4] sm:$0x1]
          %v514 = vperm.slane %v512, 0
          %v516 = vmul.f32 %v511, %v514
          %v517 = vld [vmem:[#allocation6] sm:$0x1]
          %v519 = vperm.slane %v517, 0
          %v521 = vadd.f32 %v516, %v519
          %v522 = vpack.c.bf16 %v521, %v521
          %v523 = vld [vmem:[%s4] sm:$0xff]
          %v524 = vld [vmem:[%s4 + $0x8] sm:$0xff]
          %v525 = vld [vmem:[%s4 + $0x10] sm:$0xff]
          %v526 = vld [vmem:[%s4 + $0x18] sm:$0xff]
          %v527 = vld [vmem:[%s4 + $0x20] sm:$0xff]
          %v528 = vld [vmem:[%s4 + $0x28] sm:$0xff]
          %v529 = vld [vmem:[%s4 + $0x30] sm:$0xff]
          %v530 = vld [vmem:[%s4 + $0x38] sm:$0xff]
          %v531 = vld [vmem:[%s4 + $0x40] sm:$0xff]
          %v532 = vld [vmem:[%s4 + $0x48] sm:$0xff]
          %v533 = vld [vmem:[%s4 + $0x50] sm:$0xff]
          %v534 = vld [vmem:[%s4 + $0x58] sm:$0xff]
          %v535 = vld [vmem:[%s4 + $0x60] sm:$0xff]
          %v536 = vld [vmem:[%s4 + $0x68] sm:$0xff]
          %v537 = vld [vmem:[%s4 + $0x70] sm:$0xff]
          %v538 = vld [vmem:[%s4 + $0x78] sm:$0xff]
          %v539 = vld [vmem:[%s5] sm:$0x3]
          %v541 = vperm.slane %v539, 0
          %v542 = vperm.slane %v539, 1
          %v561 = vunpack.c.l.b16 %v523
          %v562 = vunpack.c.h.b16 %v523
          %v563 = vunpack.c.l.b16 %v524
          %v564 = vunpack.c.h.b16 %v524
          %v565 = vunpack.c.l.b16 %v525
          %v566 = vunpack.c.h.b16 %v525
          %v567 = vunpack.c.l.b16 %v526
          %v568 = vunpack.c.h.b16 %v526
          %v569 = vunpack.c.l.b16 %v527
          %v570 = vunpack.c.h.b16 %v527
          %v571 = vunpack.c.l.b16 %v528
          %v572 = vunpack.c.h.b16 %v528
          %v573 = vunpack.c.l.b16 %v529
          %v574 = vunpack.c.h.b16 %v529
          %v575 = vunpack.c.l.b16 %v530
          %v576 = vunpack.c.h.b16 %v530
          %v577 = vunpack.c.l.b16 %v531
          %v578 = vunpack.c.h.b16 %v531
          %v579 = vunpack.c.l.b16 %v532
          %v580 = vunpack.c.h.b16 %v532
          %v581 = vunpack.c.l.b16 %v533
          %v582 = vunpack.c.h.b16 %v533
          %v583 = vunpack.c.l.b16 %v534
          %v584 = vunpack.c.h.b16 %v534
          %v585 = vunpack.c.l.b16 %v535
          %v586 = vunpack.c.h.b16 %v535
          %v587 = vunpack.c.l.b16 %v536
          %v588 = vunpack.c.h.b16 %v536
          %v589 = vunpack.c.l.b16 %v537
          %v590 = vunpack.c.h.b16 %v537
          %v591 = vunpack.c.l.b16 %v538
          %v592 = vunpack.c.h.b16 %v538
          %v593 = vpack.c.b16 %v563, %v561
          %v594 = vpack.c.b16 %v564, %v562
          %v595 = vpack.c.b16 %v567, %v565
          %v596 = vpack.c.b16 %v568, %v566
          %v597 = vpack.c.b16 %v571, %v569
          %v598 = vpack.c.b16 %v572, %v570
          %v599 = vpack.c.b16 %v575, %v573
          %v600 = vpack.c.b16 %v576, %v574
          %v601 = vpack.c.b16 %v579, %v577
          %v602 = vpack.c.b16 %v580, %v578
          %v603 = vpack.c.b16 %v583, %v581
          %v604 = vpack.c.b16 %v584, %v582
          %v605 = vpack.c.b16 %v587, %v585
          %v606 = vpack.c.b16 %v588, %v586
          %v607 = vpack.c.b16 %v591, %v589
          %v608 = vpack.c.b16 %v592, %v590
          %625 = vmatpush.bf16.msra.mxu0 %v607
          %626 = vmatpush.bf16.msra.mxu0 %v605
          %627 = vmatpush.bf16.msra.mxu0 %v603
          %628 = vmatpush.bf16.msra.mxu0 %v601
          %629 = vmatpush.bf16.msra.mxu0 %v599
          %630 = vmatpush.bf16.msra.mxu0 %v597
          %631 = vmatpush.bf16.msra.mxu0 %v595
          %632 = vmatpush.bf16.msra.mxu0 %v593
          %633 = vmatmul.bf16.gmra.mxu0 %v522
          %v634 = vpop.f32.mrf.mxu0
          %v635 = vadd.f32 %v541, %v634
          %v636 = vpop.f32.mrf.mxu0
          %637 = vdwg.mxu0
          %638 = vmatpush.bf16.msra.mxu0 %v608
          %639 = vmatpush.bf16.msra.mxu0 %v606
          %640 = vmatpush.bf16.msra.mxu0 %v604
          %641 = vmatpush.bf16.msra.mxu0 %v602
          %642 = vmatpush.bf16.msra.mxu0 %v600
          %643 = vmatpush.bf16.msra.mxu0 %v598
          %644 = vmatpush.bf16.msra.mxu0 %v596
          %645 = vmatpush.bf16.msra.mxu0 %v594
          %646 = vmatmul.bf16.gmra.mxu0 %v522
          %v647 = vpop.f32.mrf.mxu0
          %v648 = vadd.f32 %v542, %v647
          %v649 = vpop.f32.mrf.mxu0
          %650 = vdwg.mxu0
          %v651 = vmul.f32 %v635, 0.5
          %v652 = vmul.f32 %v648, 0.5
          %v653 = vmul.f32 %v635, 0.70710677
          %v654 = vmul.f32 %v648, 0.70710677
          %v655 = vmul.f32 %v653, %v653
          %v656 = vmin.f32 16.0, %v655
          %v657 = vmul.f32 %v656, 2.1237322e-06
          %v658 = vadd.f32 %v657, 0.00028619796
          %v659 = vmul.f32 %v656, %v658
          %v660 = vadd.f32 %v659, 0.0036580483
          %v661 = vmul.f32 %v656, %v660
          %v662 = vadd.f32 %v661, 0.05243302
          %v663 = vmul.f32 %v656, %v662
          %v664 = vadd.f32 %v663, 0.18741608
          %v665 = vmul.f32 %v656, %v664
          %v666 = vadd.f32 %v665, 1.1283791
          %v667 = vmul.f32 %v653, %v666
          %v668 = vmul.f32 %v656, 3.8918573e-05
          %v669 = vadd.f32 %v668, 0.001143296
          %v670 = vmul.f32 %v656, %v669
          %v671 = vadd.f32 %v670, 0.014752088
          %v672 = vmul.f32 %v656, %v671
          %v673 = vadd.f32 %v672, 0.112945676
          %v674 = vmul.f32 %v656, %v673
          %v675 = vadd.f32 %v674, 0.4994258
          %v676 = vmul.f32 %v656, %v675
          %v677 = vadd.f32 %v676, 1.0
          %v678 = vrcp.pop %v677
          %v679 = vmul.f32 %v677, %v678
          %v680 = vsub.f32 1.0, %v679
          %v681 = vmul.f32 %v678, %v680
          %v682 = vadd.f32 %v678, %v681
          %vm683 = vweird.f32 %v677
          %vm684 = vweird.f32 %v678
          %vm685 = vmor %vm683, %vm684
          %v686 = vsel %vm685, %v678, %v682
          %v687 = vand.u32 2147483647, %v677
          %vm688 = vcmp.eq.f32.partialorder %v687, 8.507059e+37
          %v689 = vand.u32 %v677, 2147483648
          %v690 = vor.u32 1.1754944e-38, %v689
          %v691 = vsel %vm688, %v690, %v686
          %v692 = vmul.f32 %v667, %v691
          %v693 = vmin.f32 %v692, 1.0
          %v694 = vmax.f32 %v693, -1.0
          %v695 = vmul.f32 %v654, %v654
          %v696 = vmin.f32 16.0, %v695
          %v697 = vmul.f32 %v696, 2.1237322e-06
          %v698 = vadd.f32 %v697, 0.00028619796
          %v699 = vmul.f32 %v696, %v698
          %v700 = vadd.f32 %v699, 0.0036580483
          %v701 = vmul.f32 %v696, %v700
          %v702 = vadd.f32 %v701, 0.05243302
          %v703 = vmul.f32 %v696, %v702
          %v704 = vadd.f32 %v703, 0.18741608
          %v705 = vmul.f32 %v696, %v704
          %v706 = vadd.f32 %v705, 1.1283791
          %v707 = vmul.f32 %v654, %v706
          %v708 = vmul.f32 %v696, 3.8918573e-05
          %v709 = vadd.f32 %v708, 0.001143296
          %v710 = vmul.f32 %v696, %v709
          %v711 = vadd.f32 %v710, 0.014752088
          %v712 = vmul.f32 %v696, %v711
          %v713 = vadd.f32 %v712, 0.112945676
          %v714 = vmul.f32 %v696, %v713
          %v715 = vadd.f32 %v714, 0.4994258
          %v716 = vmul.f32 %v696, %v715
          %v717 = vadd.f32 %v716, 1.0
          %v718 = vrcp.pop %v717
          %v719 = vmul.f32 %v717, %v718
          %v720 = vsub.f32 1.0, %v719
          %v721 = vmul.f32 %v718, %v720
          %v722 = vadd.f32 %v718, %v721
          %vm723 = vweird.f32 %v717
          %vm724 = vweird.f32 %v718
          %vm725 = vmor %vm723, %vm724
          %v726 = vsel %vm725, %v718, %v722
          %v727 = vand.u32 2147483647, %v717
          %vm728 = vcmp.eq.f32.partialorder %v727, 8.507059e+37
          %v729 = vand.u32 %v717, 2147483648
          %v730 = vor.u32 1.1754944e-38, %v729
          %v731 = vsel %vm728, %v730, %v726
          %v732 = vmul.f32 %v707, %v731
          %v733 = vmin.f32 %v732, 1.0
          %v734 = vmax.f32 %v733, -1.0
          %v735 = vadd.f32 %v694, 1.0
          %v736 = vadd.f32 %v734, 1.0
          %v737 = vmul.f32 %v651, %v735
          %v738 = vmul.f32 %v652, %v736
          %v739 = vld [vmem:[#allocation2] sm:$0x3]
          %v740 = vmul.f32 %v737, %v737
          %v741 = vmul.f32 %v738, %v738
          %v742 = vsel %vm486, %v740, 0.0
          %v743 = vrot.slane %v742, 4
          %v744 = vadd.f32 %v742, %v743
          %v745 = vrot.slane %v744, 2
          %v746 = vadd.f32 %v744, %v745
          %v747 = vrot.slane %v746, 1
          %v748 = vadd.f32 %v746, %v747
          %v749 = vsel %vm486, %v741, 0.0
          %v750 = vrot.slane %v749, 4
          %v751 = vadd.f32 %v749, %v750
          %v752 = vrot.slane %v751, 2
          %v753 = vadd.f32 %v751, %v752
          %v754 = vrot.slane %v753, 1
          %v755 = vadd.f32 %v753, %v754
          %v758 = vrot.slane %v755, 7
          %vm759 = vcmask 1040384
          %v760 = vsel %vm759, %v748, %v758
          %v762 = vadd.f32 %v739, %v760
          %v763 = vlaneseq
          %vm764 = vcmp.ge.s32.totalorder %v763, 0
          %vm765 = vcmp.lt.s32.totalorder %v763, 256
          %vm766 = vmand %vm764, %vm765
          %767 = vst.msk [vmem:[#allocation2] sm:$0x3] %vm766, %v762
          %v768 = vpack.c.bf16 %v738, %v737
          %v770 = vrot.slane %v768, 2
          %vm771 = vcmask 1041408
          %v774 = vsel %vm771, %v768, %v770
          %s776 = sshra.s32 %s470, 2
          %s777 = sand.u32 %s470, 3
          %s778 = smul.u32 %s776, 2
          %s779 = smul.addr %s778, 2
          %s780 = scalar_lea.vmem [#allocation3], %s779
          %781 = vst [vmem:[%s780] sm:$0xf] %v774
        $region76: #{convnextv2_forward.23} parent=59 // pred_fallthru
          _
        %p782 = scmp.eq.s32.totalorder %s29, 1
        // Predicated region
        $region81: #{convnextv2_forward.23} parent=59 // pred_check
          %p783 = pneg %p782
        $region82: #{convnextv2_forward.23} parent=59 // pred_check_branch
          %785 = sbr.rel (%p783) target = $region84
        $region83: #{convnextv2_forward.23} parent=59 // pred_region
          %s786 = sshra.s32 %s470, 2
          %s787 = sand.u32 %s470, 3
          %s788 = smul.u32 %s786, 2
          %s789 = smul.addr %s788, 2
          %s790 = scalar_lea.vmem [#allocation3], %s789
          %v791 = vld [vmem:[%s790] sm:$0xf]
          %v792 = vunpack.c.l.bf16 %v791
          %v793 = vld [vmem:[#allocation2] sm:$0x3]
          %v794 = vrsqrt.pop %v793
          %v795 = vmul.f32 %v794, %v793
          %v796 = vmul.f32 %v795, %v794
          %v797 = vmul.f32 0.5, %v796
          %v798 = vsub.f32 1.5, %v797
          %v799 = vmul.f32 %v794, %v798
          %v800 = vmul.f32 %v793, %v799
          %vm801 = vcmp.eq.f32.partialorder %v793, inf
          %v802 = vsel %vm801, %v793, %v800
          %vm803 = vcmp.eq.f32.partialorder %v793, 0.0
          %v804 = vand.u32 %v793, 2147483648
          %v805 = vsel %vm803, %v804, %v802
          %v807 = vperm.slane %v805, 0
          %v808 = vperm.slane %v805, 1
          %vm811 = vcmask 1040384
          %v812 = vsel %vm811, %v807, 0.0
          %v813 = vsel %vm811, %v808, 0.0
          %v814 = vadd.f32 %v812, %v813
          %815 = vadd.xlane.f32.xlu0 %v814
          %v816 = vpop.xlane.xlu0 %815
          %v817 = vmul.f32 %v816, 0.00390625
          %v818 = vadd.f32 %v817, 1e-06
          %v820 = vperm.slane %v818, 0
          %v822 = vrcp.pop %v820
          %v823 = vmul.f32 %v820, %v822
          %v824 = vsub.f32 1.0, %v823
          %v825 = vmul.f32 %v822, %v824
          %v826 = vadd.f32 %v822, %v825
          %vm827 = vweird.f32 %v820
          %vm828 = vweird.f32 %v822
          %vm829 = vmor %vm827, %vm828
          %v830 = vsel %vm829, %v822, %v826
          %v831 = vand.u32 2147483647, %v820
          %vm832 = vcmp.eq.f32.partialorder %v831, 8.507059e+37
          %v833 = vand.u32 %v820, 2147483648
          %v834 = vor.u32 1.1754944e-38, %v833
          %v835 = vsel %vm832, %v834, %v830
          %v836 = vmul.f32 %v805, %v835
          %v837 = vld [vmem:[%s6] sm:$0x3]
          %v839 = vperm.slane %v836, 0
          %v840 = vperm.slane %v836, 1
          %v841 = vrot.slane %v840, 4
          %vm842 = vcmask 1043456
          %v843 = vsel %vm842, %v839, %v841
          %v845 = vmul.f32 %v792, %v843
          %v847 = vperm.slane %v837, 0
          %v848 = vperm.slane %v837, 1
          %852 = vst [vmem:[#allocation1] ss:$2 sm:$0xff] %v845
          %v853 = vld.sshfl [vmem:[#allocation1] sm:$0xff pattern:$0x75316420]
          %v854 = vld.sshfl [vmem:[#allocation1 + $0x8] sm:$0xff pattern:$0x75316420]
          %v857 = vmul.f32 %v847, %v853
          %v858 = vmul.f32 %v848, %v854
          %v859 = vld [vmem:[%s7] sm:$0x3]
          %v861 = vperm.slane %v859, 0
          %v862 = vperm.slane %v859, 1
          %v865 = vadd.f32 %v857, %v861
          %v866 = vadd.f32 %v858, %v862
          %868 = vst [vmem:[#allocation1] ss:$2 sm:$0xff] %v792
          %v869 = vld.sshfl [vmem:[#allocation1] sm:$0xff pattern:$0x75316420]
          %v870 = vld.sshfl [vmem:[#allocation1 + $0x8] sm:$0xff pattern:$0x75316420]
          %v873 = vadd.f32 %v865, %v869
          %v874 = vadd.f32 %v866, %v870
          %v875 = vpack.c.bf16 %v873, %v873
          %v876 = vpack.c.bf16 %v874, %v874
          %v877 = vld [vmem:[%s8] sm:$0xf]
          %v878 = vld [vmem:[%s8 + $0x4] sm:$0xf]
          %v879 = vld [vmem:[%s8 + $0x8] sm:$0xf]
          %v880 = vld [vmem:[%s8 + $0xc] sm:$0xf]
          %v881 = vld [vmem:[%s8 + $0x10] sm:$0xf]
          %v882 = vld [vmem:[%s8 + $0x14] sm:$0xf]
          %v883 = vld [vmem:[%s8 + $0x18] sm:$0xf]
          %v884 = vld [vmem:[%s8 + $0x1c] sm:$0xf]
          %v885 = vld [vmem:[%s8 + $0x20] sm:$0xf]
          %v886 = vld [vmem:[%s8 + $0x24] sm:$0xf]
          %v887 = vld [vmem:[%s8 + $0x28] sm:$0xf]
          %v888 = vld [vmem:[%s8 + $0x2c] sm:$0xf]
          %v889 = vld [vmem:[%s8 + $0x30] sm:$0xf]
          %v890 = vld [vmem:[%s8 + $0x34] sm:$0xf]
          %v891 = vld [vmem:[%s8 + $0x38] sm:$0xf]
          %v892 = vld [vmem:[%s8 + $0x3c] sm:$0xf]
          %v893 = vld [vmem:[%s8 + $0x40] sm:$0xf]
          %v894 = vld [vmem:[%s8 + $0x44] sm:$0xf]
          %v895 = vld [vmem:[%s8 + $0x48] sm:$0xf]
          %v896 = vld [vmem:[%s8 + $0x4c] sm:$0xf]
          %v897 = vld [vmem:[%s8 + $0x50] sm:$0xf]
          %v898 = vld [vmem:[%s8 + $0x54] sm:$0xf]
          %v899 = vld [vmem:[%s8 + $0x58] sm:$0xf]
          %v900 = vld [vmem:[%s8 + $0x5c] sm:$0xf]
          %v901 = vld [vmem:[%s8 + $0x60] sm:$0xf]
          %v902 = vld [vmem:[%s8 + $0x64] sm:$0xf]
          %v903 = vld [vmem:[%s8 + $0x68] sm:$0xf]
          %v904 = vld [vmem:[%s8 + $0x6c] sm:$0xf]
          %v905 = vld [vmem:[%s8 + $0x70] sm:$0xf]
          %v906 = vld [vmem:[%s8 + $0x74] sm:$0xf]
          %v907 = vld [vmem:[%s8 + $0x78] sm:$0xf]
          %v908 = vld [vmem:[%s8 + $0x7c] sm:$0xf]
          %v909 = vld [vmem:[#allocation8] sm:$0x1]
          %v911 = vperm.slane %v909, 0
          %v945 = vunpack.c.l.b16 %v877
          %v946 = vunpack.c.l.b16 %v878
          %v947 = vunpack.c.l.b16 %v879
          %v948 = vunpack.c.l.b16 %v880
          %v949 = vunpack.c.l.b16 %v881
          %v950 = vunpack.c.l.b16 %v882
          %v951 = vunpack.c.l.b16 %v883
          %v952 = vunpack.c.l.b16 %v884
          %v953 = vunpack.c.l.b16 %v885
          %v954 = vunpack.c.l.b16 %v886
          %v955 = vunpack.c.l.b16 %v887
          %v956 = vunpack.c.l.b16 %v888
          %v957 = vunpack.c.l.b16 %v889
          %v958 = vunpack.c.l.b16 %v890
          %v959 = vunpack.c.l.b16 %v891
          %v960 = vunpack.c.l.b16 %v892
          %v961 = vunpack.c.l.b16 %v893
          %v962 = vunpack.c.l.b16 %v894
          %v963 = vunpack.c.l.b16 %v895
          %v964 = vunpack.c.l.b16 %v896
          %v965 = vunpack.c.l.b16 %v897
          %v966 = vunpack.c.l.b16 %v898
          %v967 = vunpack.c.l.b16 %v899
          %v968 = vunpack.c.l.b16 %v900
          %v969 = vunpack.c.l.b16 %v901
          %v970 = vunpack.c.l.b16 %v902
          %v971 = vunpack.c.l.b16 %v903
          %v972 = vunpack.c.l.b16 %v904
          %v973 = vunpack.c.l.b16 %v905
          %v974 = vunpack.c.l.b16 %v906
          %v975 = vunpack.c.l.b16 %v907
          %v976 = vunpack.c.l.b16 %v908
          %v977 = vpack.c.b16 %v946, %v945
          %v978 = vpack.c.b16 %v948, %v947
          %v979 = vpack.c.b16 %v950, %v949
          %v980 = vpack.c.b16 %v952, %v951
          %v981 = vpack.c.b16 %v954, %v953
          %v982 = vpack.c.b16 %v956, %v955
          %v983 = vpack.c.b16 %v958, %v957
          %v984 = vpack.c.b16 %v960, %v959
          %v985 = vpack.c.b16 %v962, %v961
          %v986 = vpack.c.b16 %v964, %v963
          %v987 = vpack.c.b16 %v966, %v965
          %v988 = vpack.c.b16 %v968, %v967
          %v989 = vpack.c.b16 %v970, %v969
          %v990 = vpack.c.b16 %v972, %v971
          %v991 = vpack.c.b16 %v974, %v973
          %v992 = vpack.c.b16 %v976, %v975
          %1009 = vmatpush.bf16.msra.mxu0 %v984
          %1010 = vmatpush.bf16.msra.mxu0 %v983
          %1011 = vmatpush.bf16.msra.mxu0 %v982
          %1012 = vmatpush.bf16.msra.mxu0 %v981
          %1013 = vmatpush.bf16.msra.mxu0 %v980
          %1014 = vmatpush.bf16.msra.mxu0 %v979
          %1015 = vmatpush.bf16.msra.mxu0 %v978
          %1016 = vmatpush.bf16.msra.mxu0 %v977
          %1017 = vmatmul.bf16.gmra.mxu0 %v875
          %v1018 = vpop.f32.mrf.mxu0
          %v1019 = vadd.f32 %v911, %v1018
          %v1020 = vpop.f32.mrf.mxu0
          %1021 = vdwg.mxu0
          %1022 = vmatpush.bf16.msra.mxu0 %v992
          %1023 = vmatpush.bf16.msra.mxu0 %v991
          %1024 = vmatpush.bf16.msra.mxu0 %v990
          %1025 = vmatpush.bf16.msra.mxu0 %v989
          %1026 = vmatpush.bf16.msra.mxu0 %v988
          %1027 = vmatpush.bf16.msra.mxu0 %v987
          %1028 = vmatpush.bf16.msra.mxu0 %v986
          %1029 = vmatpush.bf16.msra.mxu0 %v985
          %1030 = vmatmul.bf16.gmra.mxu0 %v876
          %v1031 = vpop.f32.mrf.mxu0
          %v1032 = vadd.f32 %v1019, %v1031
          %v1033 = vpop.f32.mrf.mxu0
          %1034 = vdwg.mxu0
          %v1035 = vld [vmem:[%s460] sm:$0x3]
          %v1036 = vunpack.c.l.bf16 %v1035
          %v1037 = vadd.f32 %v1036, %v1032
          %v1038 = vpack.c.bf16 %v1037, %v1037
          %1039 = vst [vmem:[%s468] sm:$0x3] %v1038
        $region84: #{convnextv2_forward.23} parent=59 // pred_fallthru
          _
        %s1040 = smul.u32 %s29, %s30
        %p1041 = scmp.lt.s32.totalorder %s28, 1
        %s1042 = scalar_select %p1041, %s28, 1
        %p1043 = scmp.lt.s32.totalorder %s1040, 0
        %s1044 = scalar_select %p1043, %s1040, 0
        %s1045 = sadd.s32 %s1044, %s1042
        %s1046 = smul.addr %s1045, 2
        %s1047 = scalar_lea.vmem %s10, %s1046
        // Predicated region
        $region85: #{convnextv2_forward.23} parent=59 // pred_check
          %p1048 = pneg %p288
        $region86: #{convnextv2_forward.23} parent=59 // pred_check_branch
          %1050 = sbr.rel (%p1048) target = $region88
        $region87: #{convnextv2_forward.23} parent=59 // pred_region
          %s1051 = smul.u32 %s29, %s30
        $region88: #{convnextv2_forward.23} parent=59 // pred_fallthru
          _
      $region60: #{convnextv2_forward.23} parent=5 // pred_fallthru
        _
      %p1052 = scmp.le.s32.totalorder 2, %s18
      // Predicated region
      $region89: #{convnextv2_forward.23} parent=5 // pred_check
        %p1053 = pneg %p1052
      $region90: #{convnextv2_forward.23} parent=5 // pred_check_branch
        %1055 = sbr.rel (%p1053) target = $region92
      $region91: #{convnextv2_forward.23} parent=5 // pred_region
        %s1056 = ssub.s32 %s18, 2
        // Predicated region
        $region93: #{convnextv2_forward.23} parent=91 // pred_check
          %p1057 = pneg %p294
        $region94: #{convnextv2_forward.23} parent=91 // pred_check_branch
          %1059 = sbr.rel (%p1057) target = $region96
        $region95: #{convnextv2_forward.23} parent=91 // pred_region
          %s1060 = smul.u32 %s32, %s33
          %p1061 = scmp.lt.s32.totalorder %s31, 1
          %s1062 = scalar_select %p1061, %s31, 1
          %p1063 = scmp.lt.s32.totalorder %s1060, 0
          %s1064 = scalar_select %p1063, %s1060, 0
          %s1065 = sadd.s32 %s1064, %s1062
          %s1066 = smul.addr %s1065, 2
          %s1067 = scalar_lea.vmem %s10, %s1066
        $region96: #{convnextv2_forward.23} parent=91 // pred_fallthru
          _
      $region92: #{convnextv2_forward.23} parent=5 // pred_fallthru
        _
    $region6: #{convnextv2_forward.23} parent=1 // loop_footer
      %s22 = sadd.s32 1, %s18
    $region7: #{convnextv2_forward.23} parent=1 // loop_footer_branch
      %17 = sbr.rel target = $region3
    $region8: #{convnextv2_forward.23} parent=1 // loop_exit
      _
    %1068 = vsyncpa [#allocation5], 1
    %s1069 = scalar_lea.sflag [#allocation5], 1
    %1070 = vsyncpa %s1069, 1
    %1071 = vsyncpa [#allocation7], 1

</llo_original>
